<compile_context>
chip_gen: v7x
topology: tpu7x:2x2x1
jax: 0.10.0
libtpu: 0.0.40
codegen_flags: <defaults>
</compile_context>

<pallas_src>
import functools

import jax
import jax.numpy as jnp
from jax.experimental import pallas as pl
from jax.experimental.pallas import tpu as pltpu

FEATURE_SIZE = 48  # hardcoded in the reference module


def _silu(y):
    # sigmoid via tanh: stable for very negative y, lowers to one EUP op.
    return y * (0.5 * (jnp.tanh(0.5 * y) + 1.0))


def _pick_spatial_tile(s, bytes_per_lane, target_bytes=2 * 1024 * 1024, align=128):
    """Pick a lane tile for streaming a (C, S) feature map.

    Returns (tile, needs_mask).  Aims for ~target_bytes per grid step; prefers a
    128-aligned divisor of `s` (no ragged tail); otherwise uses an aligned tile
    with a masked final tile (cdiv grid), never a full-extent fallback."""
    max_lanes = max(align, (int(target_bytes) // int(bytes_per_lane)) // align * align)
    if s <= max_lanes:
        return s, False
    # Prefer a 128-multiple divisor of s in [max_lanes/2, max_lanes] (big, no mask).
    t = max_lanes
    while t >= max(align, max_lanes // 2):
        if s % t == 0:
            return t, False
        t -= align
    return max_lanes, (s % max_lanes != 0)


# ---------------------------- Fused Pallas kernel ----------------------------

def _fused_head_kernel(e1_ref, e2_ref, e3_ref, e4_ref, e5_ref,
                       w_ref, b_ref, wo_ref, bo_ref,
                       out_ref, acc1_ref, acc2_ref, *,
                       c1, c2, c3, c4, c5, fs,
                       s1, t1, inv_s1, inv_s2,
                       mask_e1, stream_e2):
    t = pl.program_id(1)
    nt = pl.num_programs(1)

    @pl.when(t == 0)
    def _init():
        acc1_ref[...] = jnp.zeros_like(acc1_ref)
        acc2_ref[...] = jnp.zeros_like(acc2_ref)

    # ---- streaming partial spatial sums (bf16 tiles up-cast to f32) -----------
    x1 = e1_ref[...].astype(jnp.float32)                       # (1, c1, t1)
    if mask_e1:  # ragged last tile: zero out-of-range lanes
        lane = jax.lax.broadcasted_iota(jnp.int32, x1.shape, 2) + t * t1
        x1 = jnp.where(lane < s1, x1, 0.0)
    acc1_ref[...] += jnp.sum(x1, axis=-1)

    if stream_e2:
        x2 = e2_ref[...].astype(jnp.float32)                    # (1, c2, t2)
        acc2_ref[...] += jnp.sum(x2, axis=-1)

    # ---- epilogue: per-branch Linear+SiLU, fc(cat), out_class ------------------
    @pl.when(t == nt - 1)
    def _finalize():
        # adaptive_avg_pool3d((1,1,1)).view(B,-1) == mean over spatial per channel.
        p5 = jnp.mean(e5_ref[0].astype(jnp.float32), axis=0, keepdims=True)  # (1, c5) channels-last
        p4 = jnp.mean(e4_ref[0].astype(jnp.float32), axis=0, keepdims=True)  # (1, c4) channels-last
        p3 = jnp.mean(e3_ref[...].astype(jnp.float32), axis=-1)              # (1, c3) native
        if stream_e2:
            p2 = acc2_ref[...] * inv_s2
        else:
            p2 = jnp.mean(e2_ref[...].astype(jnp.float32), axis=-1)
        p1 = acc1_ref[...] * inv_s1                                          # pool(enc1): no fc / silu

        # Static row offsets into the packed weight block.
        r1 = 0
        r2 = r1 + c5
        r3 = r2 + c4
        r4 = r3 + c3
        rf = r4 + c2

        def branch(p, r, n, row):  # silu(p @ W_block + b_row)
            y = jnp.dot(p, w_ref[r:r + n, :], preferred_element_type=jnp.float32)
            return _silu(y + b_ref[row:row + 1, :])

        o1 = branch(p5, r1, c5, 0)   # silu(fc1(pool(enc5)))
        o2 = branch(p4, r2, c4, 1)   # silu(fc2(pool(enc4)))
        o3 = branch(p3, r3, c3, 2)   # silu(fc3(pool(enc3)))
        o4 = branch(p2, r4, c2, 3)   # silu(fc4(pool(enc2)))

        # fc(concat([o1,o2,o3,o4,pool(enc1)])) as a sum of five 48x48 row blocks.
        z = b_ref[4:5, :]
        for k, o in enumerate((o1, o2, o3, o4, p1)):
            z = z + jnp.dot(o, w_ref[rf + k * fs: rf + (k + 1) * fs, :],
                            preferred_element_type=jnp.float32)
        z = _silu(z)                                                          # silu(fc(cat))
        logits = jnp.dot(z, wo_ref[...], preferred_element_type=jnp.float32) + bo_ref[...]
        out_ref[0] = logits                                                   # out_class(z)


def swinvit_head(enc1, enc2, enc3, enc4, enc5, params, *,
                 stream_dtype=jnp.bfloat16, target_tile_bytes=2 * 1024 * 1024):
    """enc_i: (B, C_i, S_i) feature maps (native NCDHW, flattened over D*H*W)."""
    B, c1, s1 = enc1.shape
    _, c2, s2 = enc2.shape
    _, c3, s3 = enc3.shape
    _, c4, s4 = enc4.shape
    _, c5, s5 = enc5.shape

    w1, b1 = params["fc1"]
    w2, b2 = params["fc2"]
    w3, b3 = params["fc3"]
    w4, b4 = params["fc4"]
    wf, bf = params["fc"]
    wo, bo = params["out_class"]
    fs = w1.shape[0]
    n_classes = wo.shape[0]

    # enc1 (~75%) and enc2 (~19%) dominate streamed bytes -> stream them as bf16.
    if stream_dtype is not None:
        enc1 = enc1.astype(stream_dtype)
        enc2 = enc2.astype(stream_dtype)
    # Tiny enc4/enc5: present channels-last (lane-dense fetch + sublane-axis pool).
    enc4_t = jnp.transpose(enc4, (0, 2, 1))   # (B, s4, c4)
    enc5_t = jnp.transpose(enc5, (0, 2, 1))   # (B, s5, c5)

    bytes_per_lane = c1 * jnp.dtype(enc1.dtype).itemsize
    t1, mask_e1 = _pick_spatial_tile(s1, bytes_per_lane, target_bytes=target_tile_bytes)
    nt = -(-s1 // t1)

    # Stream enc2 on the same reduction axis when its extent splits cleanly;
    # otherwise keep it resident (small inputs only).
    stream_e2 = (nt > 1) and (s2 % nt == 0) and ((s2 // nt) % 128 == 0)
    t2 = (s2 // nt) if stream_e2 else s2

    # Pack all small Linear weights / biases into two resident operands.
    w_pack = jnp.concatenate([w1.T, w2.T, w3.T, w4.T, wf.T],
                             axis=0).astype(jnp.float32)             # (c5+c4+c3+c2+5fs, fs)
    b_pack = jnp.stack([b1, b2, b3, b4, bf], axis=0).astype(jnp.float32)  # (5, fs)

    def resident(shape):  # constant block index over the whole grid (fetched once)
        return pl.BlockSpec(shape, lambda b, t: (0, 0))

    if stream_e2:
        e2_spec = pl.BlockSpec((1, c2, t2), lambda b, t: (b, 0, t))
    else:
        e2_spec = pl.BlockSpec((1, c2, s2), lambda b, t: (b, 0, 0))

    grid_spec = pltpu.PrefetchScalarGridSpec(
        num_scalar_prefetch=0,
        grid=(B, nt),
        in_specs=[
            pl.BlockSpec((1, c1, t1), lambda b, t: (b, 0, t)),   # enc1: streamed bf16 tiles
            e2_spec,                                             # enc2: streamed or resident
            pl.BlockSpec((1, c3, s3), lambda b, t: (b, 0, 0)),   # enc3: resident, lane-dense
            pl.BlockSpec((1, s4, c4), lambda b, t: (b, 0, 0)),   # enc4: resident, channels-last
            pl.BlockSpec((1, s5, c5), lambda b, t: (b, 0, 0)),   # enc5: resident, channels-last
            resident(w_pack.shape),                              # packed branch + fc weights
            resident(b_pack.shape),                              # packed biases
            resident((fs, n_classes)),                           # out_class weight
            resident((1, n_classes)),                            # out_class bias
        ],
        out_specs=pl.BlockSpec((1, 1, n_classes), lambda b, t: (b, 0, 0)),
        scratch_shapes=[pltpu.VMEM((1, c1), jnp.float32),        # enc1 channel-sum accumulator
                        pltpu.VMEM((1, c2), jnp.float32)],       # enc2 channel-sum accumulator
    )

    kernel = functools.partial(
        _fused_head_kernel,
        c1=c1, c2=c2, c3=c3, c4=c4, c5=c5, fs=fs,
        s1=s1, t1=t1,
        inv_s1=1.0 / float(s1), inv_s2=1.0 / float(s2),
        mask_e1=bool(mask_e1), stream_e2=bool(stream_e2))

    out = pl.pallas_call(
        kernel,
        out_shape=jax.ShapeDtypeStruct((B, 1, n_classes), jnp.float32),
        grid_spec=grid_spec,
        compiler_params=pltpu.CompilerParams(
            dimension_semantics=("parallel", "arbitrary"),
            vmem_limit_bytes=48 * 1024 * 1024),
    )(enc1, enc2, enc3, enc4_t, enc5_t,
      w_pack, b_pack,
      wo.T.astype(jnp.float32), bo.reshape(1, -1).astype(jnp.float32))
    return out.reshape(B, n_classes)


# ---------------------------- Parameters ----------------------------

def init_params(key, in_channels=1, n_classes=2, feature_size=FEATURE_SIZE):
    ks = jax.random.split(key, 11)

    def linear(k, fan_in, fan_out):  # nn.Linear default init (uniform +-1/sqrt(fan_in))
        kw, kb = jax.random.split(k)
        lim = 1.0 / jnp.sqrt(jnp.float32(fan_in))
        w = jax.random.uniform(kw, (fan_out, fan_in), jnp.float32, -lim, lim)
        b = jax.random.uniform(kb, (fan_out,), jnp.float32, -lim, lim)
        return w, b

    fs = feature_size
    params = {
        "fc1": linear(ks[0], 16 * fs, fs),       # enc5 (768) -> 48
        "fc2": linear(ks[1], 8 * fs, fs),        # enc4 (384) -> 48
        "fc3": linear(ks[2], 4 * fs, fs),        # enc3 (192) -> 48
        "fc4": linear(ks[3], 2 * fs, fs),        # enc2 (96)  -> 48
        "fc": linear(ks[4], 5 * fs, fs),         # concat (240) -> 48
        "out_class": linear(ks[5], fs, n_classes),
    }
    chans = [fs, 2 * fs, 4 * fs, 8 * fs, 16 * fs]
    params["stub_proj"] = [
        0.1 * jax.random.normal(ks[6 + i], (in_channels, c), jnp.float32)
        for i, c in enumerate(chans)
    ]
    return params


def _stub_backbone(x, params):
    # TODO(synk): the MONAI SwinUNETR backbone (swinViT 3D windowed attention,
    # UnetrBasicBlock conv3d + instance-norm residual encoders 2/3/4/10 and the
    # custom encoder5) has no compact Pallas equivalent here; this deterministic
    # strided-mean-pool + channel-lift stand-in only supplies feature maps of the
    # correct shapes/scales (C_i = fs*2^i at spatial /2^(i+1)) for the head.
    B, Cin, D, H, W = x.shape
    feats = []
    for i, proj in enumerate(params["stub_proj"]):
        f = 2 ** (i + 1)
        xr = x.reshape(B, Cin, D // f, f, H // f, f, W // f, f)
        pooled = xr.mean(axis=(3, 5, 7)).reshape(B, Cin, -1)   # (B, Cin, S_i)
        feat = jnp.einsum("bcs,co->bos", pooled, proj)         # (B, C_i, S_i) native layout
        feats.append(feat)
    return feats  # stand-ins for [enc1, enc2, enc3, enc4, enc5]


# ---------------------------- Forward & reference ----------------------------

def swinvit_mlp_v3_forward(x, params):
    enc1, enc2, enc3, enc4, enc5 = _stub_backbone(x, params)
    return swinvit_head(enc1, enc2, enc3, enc4, enc5, params)


def _reference_head(enc1, enc2, enc3, enc4, enc5, params, stream_dtype=jnp.bfloat16):
    # Pure-JAX reference of the head (same bf16 streaming cast for apples-to-apples).
    if stream_dtype is not None:
        enc1 = enc1.astype(stream_dtype).astype(jnp.float32)
        enc2 = enc2.astype(stream_dtype).astype(jnp.float32)
    w1, b1 = params["fc1"]; w2, b2 = params["fc2"]
    w3, b3 = params["fc3"]; w4, b4 = params["fc4"]
    wf, bf = params["fc"]; wo, bo = params["out_class"]
    pool = lambda e: e.astype(jnp.float32).mean(axis=-1)
    o1 = jax.nn.silu(pool(enc5) @ w1.T + b1)
    o2 = jax.nn.silu(pool(enc4) @ w2.T + b2)
    o3 = jax.nn.silu(pool(enc3) @ w3.T + b3)
    o4 = jax.nn.silu(pool(enc2) @ w4.T + b4)
    o5 = pool(enc1)
    cat = jnp.concatenate([o1, o2, o3, o4, o5], axis=1)
    z = jax.nn.silu(cat @ wf.T + bf)
    return z @ wo.T + bo


if __name__ == "__main__":
    key = jax.random.PRNGKey(0)
    kx, kp = jax.random.split(key)
    # img_size must be divisible by 32 (SwinUNETR requirement); 64^3 keeps things
    # small but still exercises multi-tile streaming (enc1: 48 x 32768 lanes -> two
    # 16384-lane bf16 tiles; enc2 streamed alongside in 2048-lane tiles).
    B, Cin, D, H, W = 2, 1, 64, 64, 64
    n_classes = 2
    x = jax.random.normal(kx, (B, Cin, D, H, W), jnp.float32)
    params = init_params(kp, in_channels=Cin, n_classes=n_classes)

    fwd = jax.jit(swinvit_mlp_v3_forward)
    logits = jax.block_until_ready(fwd(x, params))

    assert logits.shape == (B, n_classes), logits.shape
    assert bool(jnp.all(jnp.isfinite(logits)))

    encs = _stub_backbone(x, params)
    ref = _reference_head(*encs, params)
    assert bool(jnp.allclose(logits, ref, atol=5e-4, rtol=5e-4)), (logits, ref)

    print("KERNEL_OK")
</pallas_src>

<mosaic_0001>
module attributes {stable_mosaic.version = 11 : i64} {
  func.func @_fused_head_kernel(%arg0: i32, %arg1: i32, %arg2: memref<1x48x16384xbf16, #tpu.memory_space<vmem>>, %arg3: memref<1x96x2048xbf16, #tpu.memory_space<vmem>>, %arg4: memref<1x192x512xf32, #tpu.memory_space<vmem>>, %arg5: memref<1x64x384xf32, #tpu.memory_space<vmem>>, %arg6: memref<1x8x768xf32, #tpu.memory_space<vmem>>, %arg7: memref<1680x48xf32, #tpu.memory_space<vmem>>, %arg8: memref<5x48xf32, #tpu.memory_space<vmem>>, %arg9: memref<48x2xf32, #tpu.memory_space<vmem>>, %arg10: memref<1x2xf32, #tpu.memory_space<vmem>>, %arg11: memref<1x1x2xf32, #tpu.memory_space<vmem>>, %arg12: memref<1x48xf32, #tpu.memory_space<vmem>>, %arg13: memref<1x96xf32, #tpu.memory_space<vmem>>) attributes {dimension_semantics = [#tpu.dimension_semantics<parallel>, #tpu.dimension_semantics<arbitrary>], iteration_bounds = array<i64: 2, 2>, scalar_prefetch = 0 : i64, scratch_operands = 2 : i64, tpu.core_type = #tpu.core_type<tc>, window_params = [{transform_indices = @transform_0, window_bounds = array<i64: 1, 48, 16384>}, {transform_indices = @transform_1, window_bounds = array<i64: 1, 96, 2048>}, {transform_indices = @transform_2, window_bounds = array<i64: 1, 192, 512>}, {transform_indices = @transform_3, window_bounds = array<i64: 1, 64, 384>}, {transform_indices = @transform_4, window_bounds = array<i64: 1, 8, 768>}, {pipeline_mode = #tpu.pipeline_mode<synchronous>, transform_indices = @transform_5, window_bounds = array<i64: 1680, 48>}, {pipeline_mode = #tpu.pipeline_mode<synchronous>, transform_indices = @transform_6, window_bounds = array<i64: 5, 48>}, {pipeline_mode = #tpu.pipeline_mode<synchronous>, transform_indices = @transform_7, window_bounds = array<i64: 48, 2>}, {pipeline_mode = #tpu.pipeline_mode<synchronous>, transform_indices = @transform_8, window_bounds = array<i64: 1, 2>}, {transform_indices = @transform_9, window_bounds = array<i64: 1, 1, 2>}]} {
    %c0_i32 = arith.constant 0 : i32
    %0 = arith.cmpi eq, %arg1, %c0_i32 : i32
    %1 = arith.extui %0 : i1 to i32
    %c0_i32_0 = arith.constant 0 : i32
    %2 = arith.cmpi ne, %1, %c0_i32_0 : i32
    scf.if %2 {
      %cst_16 = arith.constant 0.000000e+00 : f32
      %18 = vector.broadcast %cst_16 : f32 to vector<1x48xf32>
      %c0_17 = arith.constant 0 : index
      %c0_18 = arith.constant 0 : index
      %19 = vector.load %arg12[%c0_17, %c0_18] : memref<1x48xf32, #tpu.memory_space<vmem>>, vector<1x48xf32>
      tpu.vector_store %arg12[%c0_17, %c0_18], %18 {strides = array<i32>} : memref<1x48xf32, #tpu.memory_space<vmem>>, vector<1x48xf32>,
      %cst_19 = arith.constant 0.000000e+00 : f32
      %20 = vector.broadcast %cst_19 : f32 to vector<1x96xf32>
      %c0_20 = arith.constant 0 : index
      %c0_21 = arith.constant 0 : index
      %21 = vector.load %arg13[%c0_20, %c0_21] : memref<1x96xf32, #tpu.memory_space<vmem>>, vector<1x96xf32>
      tpu.vector_store %arg13[%c0_20, %c0_21], %20 {strides = array<i32>} : memref<1x96xf32, #tpu.memory_space<vmem>>, vector<1x96xf32>,
    } else {
    }
    %c0 = arith.constant 0 : index
    %c0_1 = arith.constant 0 : index
    %c0_2 = arith.constant 0 : index
    %3 = vector.load %arg2[%c0, %c0_1, %c0_2] : memref<1x48x16384xbf16, #tpu.memory_space<vmem>>, vector<1x48x16384xbf16>
    %4 = arith.extf %3 : vector<1x48x16384xbf16> to vector<1x48x16384xf32>
    %c0_3 = arith.constant 0 : index
    %c0_4 = arith.constant 0 : index
    %5 = vector.load %arg12[%c0_3, %c0_4] : memref<1x48xf32, #tpu.memory_space<vmem>>, vector<1x48xf32>
    %cst = arith.constant dense<0.000000e+00> : vector<1x48xf32>
    %6 = vector.multi_reduction <add>, %4, %cst [2] : vector<1x48x16384xf32> to vector<1x48xf32>
    %7 = arith.addf %5, %6 : vector<1x48xf32>
    %c0_5 = arith.constant 0 : index
    %c0_6 = arith.constant 0 : index
    %8 = vector.load %arg12[%c0_5, %c0_6] : memref<1x48xf32, #tpu.memory_space<vmem>>, vector<1x48xf32>
    tpu.vector_store %arg12[%c0_5, %c0_6], %7 {strides = array<i32>} : memref<1x48xf32, #tpu.memory_space<vmem>>, vector<1x48xf32>,
    %c0_7 = arith.constant 0 : index
    %c0_8 = arith.constant 0 : index
    %c0_9 = arith.constant 0 : index
    %9 = vector.load %arg3[%c0_7, %c0_8, %c0_9] : memref<1x96x2048xbf16, #tpu.memory_space<vmem>>, vector<1x96x2048xbf16>
    %10 = arith.extf %9 : vector<1x96x2048xbf16> to vector<1x96x2048xf32>
    %c0_10 = arith.constant 0 : index
    %c0_11 = arith.constant 0 : index
    %11 = vector.load %arg13[%c0_10, %c0_11] : memref<1x96xf32, #tpu.memory_space<vmem>>, vector<1x96xf32>
    %cst_12 = arith.constant dense<0.000000e+00> : vector<1x96xf32>
    %12 = vector.multi_reduction <add>, %10, %cst_12 [2] : vector<1x96x2048xf32> to vector<1x96xf32>
    %13 = arith.addf %11, %12 : vector<1x96xf32>
    %c0_13 = arith.constant 0 : index
    %c0_14 = arith.constant 0 : index
    %14 = vector.load %arg13[%c0_13, %c0_14] : memref<1x96xf32, #tpu.memory_space<vmem>>, vector<1x96xf32>
    tpu.vector_store %arg13[%c0_13, %c0_14], %13 {strides = array<i32>} : memref<1x96xf32, #tpu.memory_space<vmem>>, vector<1x96xf32>,
    %c1_i32 = arith.constant 1 : i32
    %15 = arith.cmpi eq, %arg1, %c1_i32 : i32
    %16 = arith.extui %15 : i1 to i32
    %c0_i32_15 = arith.constant 0 : i32
    %17 = arith.cmpi ne, %16, %c0_i32_15 : i32
    scf.if %17 {
      %c0_16 = arith.constant 0 : index
      %c0_17 = arith.constant 0 : index
      %c0_18 = arith.constant 0 : index
      %18 = vector.load %arg6[%c0_16, %c0_17, %c0_18] : memref<1x8x768xf32, #tpu.memory_space<vmem>>, vector<1x8x768xf32>
      %19 = vector.shape_cast %18 : vector<1x8x768xf32> to vector<8x768xf32>
      %cst_19 = arith.constant dense<0.000000e+00> : vector<768xf32>
      %20 = vector.multi_reduction <add>, %19, %cst_19 [0] : vector<8x768xf32> to vector<768xf32>
      %21 = vector.shape_cast %20 : vector<768xf32> to vector<1x768xf32>
      %cst_20 = arith.constant 8.000000e+00 : f32
      %22 = vector.broadcast %cst_20 : f32 to vector<1x768xf32>
      %23 = arith.divf %21, %22 : vector<1x768xf32>
      %c0_21 = arith.constant 0 : index
      %c0_22 = arith.constant 0 : index
      %c0_23 = arith.constant 0 : index
      %24 = vector.load %arg5[%c0_21, %c0_22, %c0_23] : memref<1x64x384xf32, #tpu.memory_space<vmem>>, vector<1x64x384xf32>
      %25 = vector.shape_cast %24 : vector<1x64x384xf32> to vector<64x384xf32>
      %cst_24 = arith.constant dense<0.000000e+00> : vector<384xf32>
      %26 = vector.multi_reduction <add>, %25, %cst_24 [0] : vector<64x384xf32> to vector<384xf32>
      %27 = vector.shape_cast %26 : vector<384xf32> to vector<1x384xf32>
      %cst_25 = arith.constant 6.400000e+01 : f32
      %28 = vector.broadcast %cst_25 : f32 to vector<1x384xf32>
      %29 = arith.divf %27, %28 : vector<1x384xf32>
      %c0_26 = arith.constant 0 : index
      %c0_27 = arith.constant 0 : index
      %c0_28 = arith.constant 0 : index
      %30 = vector.load %arg4[%c0_26, %c0_27, %c0_28] : memref<1x192x512xf32, #tpu.memory_space<vmem>>, vector<1x192x512xf32>
      %cst_29 = arith.constant dense<0.000000e+00> : vector<1x192xf32>
      %31 = vector.multi_reduction <add>, %30, %cst_29 [2] : vector<1x192x512xf32> to vector<1x192xf32>
      %cst_30 = arith.constant 5.120000e+02 : f32
      %32 = vector.broadcast %cst_30 : f32 to vector<1x192xf32>
      %33 = arith.divf %31, %32 : vector<1x192xf32>
      %c0_31 = arith.constant 0 : index
      %c0_32 = arith.constant 0 : index
      %34 = vector.load %arg13[%c0_31, %c0_32] : memref<1x96xf32, #tpu.memory_space<vmem>>, vector<1x96xf32>
      %cst_33 = arith.constant 2.44140625E-4 : f32
      %35 = vector.broadcast %cst_33 : f32 to vector<1x96xf32>
      %36 = arith.mulf %34, %35 : vector<1x96xf32>
      %c0_34 = arith.constant 0 : index
      %c0_35 = arith.constant 0 : index
      %37 = vector.load %arg12[%c0_34, %c0_35] : memref<1x48xf32, #tpu.memory_space<vmem>>, vector<1x48xf32>
      %cst_36 = arith.constant 3.05175781E-5 : f32
      %38 = vector.broadcast %cst_36 : f32 to vector<1x48xf32>
      %39 = arith.mulf %37, %38 : vector<1x48xf32>
      %c0_37 = arith.constant 0 : index
      %c0_38 = arith.constant 0 : index
      %40 = vector.load %arg7[%c0_37, %c0_38] : memref<1680x48xf32, #tpu.memory_space<vmem>>, vector<768x48xf32>
      %cst_39 = arith.constant dense<0.000000e+00> : vector<1x48xf32>
      %41 = tpu.matmul %23, %40, %cst_39 {dimension_numbers = #tpu.dot_dimension_numbers<[1], [0], [0], [1], [0, 0, 1, 1], [], []>} : vector<1x768xf32>, vector<768x48xf32>, vector<1x48xf32> -> vector<1x48xf32>
      %c0_40 = arith.constant 0 : index
      %c0_41 = arith.constant 0 : index
      %42 = vector.load %arg8[%c0_40, %c0_41] : memref<5x48xf32, #tpu.memory_space<vmem>>, vector<1x48xf32>
      %43 = arith.addf %41, %42 : vector<1x48xf32>
      %cst_42 = arith.constant 5.000000e-01 : f32
      %44 = vector.broadcast %cst_42 : f32 to vector<1x48xf32>
      %45 = arith.mulf %44, %43 : vector<1x48xf32>
      %46 = math.tanh %45 : vector<1x48xf32>
      %cst_43 = arith.constant 1.000000e+00 : f32
      %47 = vector.broadcast %cst_43 : f32 to vector<1x48xf32>
      %48 = arith.addf %46, %47 : vector<1x48xf32>
      %cst_44 = arith.constant 5.000000e-01 : f32
      %49 = vector.broadcast %cst_44 : f32 to vector<1x48xf32>
      %50 = arith.mulf %49, %48 : vector<1x48xf32>
      %51 = arith.mulf %43, %50 : vector<1x48xf32>
      %c768 = arith.constant 768 : index
      %c0_45 = arith.constant 0 : index
      %52 = vector.load %arg7[%c768, %c0_45] : memref<1680x48xf32, #tpu.memory_space<vmem>>, vector<384x48xf32>
      %cst_46 = arith.constant dense<0.000000e+00> : vector<1x48xf32>
      %53 = tpu.matmul %29, %52, %cst_46 {dimension_numbers = #tpu.dot_dimension_numbers<[1], [0], [0], [1], [0, 0, 1, 1], [], []>} : vector<1x384xf32>, vector<384x48xf32>, vector<1x48xf32> -> vector<1x48xf32>
      %c1 = arith.constant 1 : index
      %c0_47 = arith.constant 0 : index
      %54 = vector.load %arg8[%c1, %c0_47] : memref<5x48xf32, #tpu.memory_space<vmem>>, vector<1x48xf32>
      %55 = arith.addf %53, %54 : vector<1x48xf32>
      %cst_48 = arith.constant 5.000000e-01 : f32
      %56 = vector.broadcast %cst_48 : f32 to vector<1x48xf32>
      %57 = arith.mulf %56, %55 : vector<1x48xf32>
      %58 = math.tanh %57 : vector<1x48xf32>
      %cst_49 = arith.constant 1.000000e+00 : f32
      %59 = vector.broadcast %cst_49 : f32 to vector<1x48xf32>
      %60 = arith.addf %58, %59 : vector<1x48xf32>
      %cst_50 = arith.constant 5.000000e-01 : f32
      %61 = vector.broadcast %cst_50 : f32 to vector<1x48xf32>
      %62 = arith.mulf %61, %60 : vector<1x48xf32>
      %63 = arith.mulf %55, %62 : vector<1x48xf32>
      %c1152 = arith.constant 1152 : index
      %c0_51 = arith.constant 0 : index
      %64 = vector.load %arg7[%c1152, %c0_51] : memref<1680x48xf32, #tpu.memory_space<vmem>>, vector<192x48xf32>
      %cst_52 = arith.constant dense<0.000000e+00> : vector<1x48xf32>
      %65 = tpu.matmul %33, %64, %cst_52 {dimension_numbers = #tpu.dot_dimension_numbers<[1], [0], [0], [1], [0, 0, 1, 1], [], []>} : vector<1x192xf32>, vector<192x48xf32>, vector<1x48xf32> -> vector<1x48xf32>
      %c2 = arith.constant 2 : index
      %c0_53 = arith.constant 0 : index
      %66 = vector.load %arg8[%c2, %c0_53] : memref<5x48xf32, #tpu.memory_space<vmem>>, vector<1x48xf32>
      %67 = arith.addf %65, %66 : vector<1x48xf32>
      %cst_54 = arith.constant 5.000000e-01 : f32
      %68 = vector.broadcast %cst_54 : f32 to vector<1x48xf32>
      %69 = arith.mulf %68, %67 : vector<1x48xf32>
      %70 = math.tanh %69 : vector<1x48xf32>
      %cst_55 = arith.constant 1.000000e+00 : f32
      %71 = vector.broadcast %cst_55 : f32 to vector<1x48xf32>
      %72 = arith.addf %70, %71 : vector<1x48xf32>
      %cst_56 = arith.constant 5.000000e-01 : f32
      %73 = vector.broadcast %cst_56 : f32 to vector<1x48xf32>
      %74 = arith.mulf %73, %72 : vector<1x48xf32>
      %75 = arith.mulf %67, %74 : vector<1x48xf32>
      %c1344 = arith.constant 1344 : index
      %c0_57 = arith.constant 0 : index
      %76 = vector.load %arg7[%c1344, %c0_57] : memref<1680x48xf32, #tpu.memory_space<vmem>>, vector<96x48xf32>
      %cst_58 = arith.constant dense<0.000000e+00> : vector<1x48xf32>
      %77 = tpu.matmul %36, %76, %cst_58 {dimension_numbers = #tpu.dot_dimension_numbers<[1], [0], [0], [1], [0, 0, 1, 1], [], []>} : vector<1x96xf32>, vector<96x48xf32>, vector<1x48xf32> -> vector<1x48xf32>
      %c3 = arith.constant 3 : index
      %c0_59 = arith.constant 0 : index
      %78 = vector.load %arg8[%c3, %c0_59] : memref<5x48xf32, #tpu.memory_space<vmem>>, vector<1x48xf32>
      %79 = arith.addf %77, %78 : vector<1x48xf32>
      %cst_60 = arith.constant 5.000000e-01 : f32
      %80 = vector.broadcast %cst_60 : f32 to vector<1x48xf32>
      %81 = arith.mulf %80, %79 : vector<1x48xf32>
      %82 = math.tanh %81 : vector<1x48xf32>
      %cst_61 = arith.constant 1.000000e+00 : f32
      %83 = vector.broadcast %cst_61 : f32 to vector<1x48xf32>
      %84 = arith.addf %82, %83 : vector<1x48xf32>
      %cst_62 = arith.constant 5.000000e-01 : f32
      %85 = vector.broadcast %cst_62 : f32 to vector<1x48xf32>
      %86 = arith.mulf %85, %84 : vector<1x48xf32>
      %87 = arith.mulf %79, %86 : vector<1x48xf32>
      %c4 = arith.constant 4 : index
      %c0_63 = arith.constant 0 : index
      %88 = vector.load %arg8[%c4, %c0_63] : memref<5x48xf32, #tpu.memory_space<vmem>>, vector<1x48xf32>
      %c1440 = arith.constant 1440 : index
      %c0_64 = arith.constant 0 : index
      %89 = vector.load %arg7[%c1440, %c0_64] : memref<1680x48xf32, #tpu.memory_space<vmem>>, vector<48x48xf32>
      %cst_65 = arith.constant dense<0.000000e+00> : vector<1x48xf32>
      %90 = tpu.matmul %51, %89, %cst_65 {dimension_numbers = #tpu.dot_dimension_numbers<[1], [0], [0], [1], [0, 0, 1, 1], [], []>} : vector<1x48xf32>, vector<48x48xf32>, vector<1x48xf32> -> vector<1x48xf32>
      %91 = arith.addf %88, %90 : vector<1x48xf32>
      %c1488 = arith.constant 1488 : index
      %c0_66 = arith.constant 0 : index
      %92 = vector.load %arg7[%c1488, %c0_66] : memref<1680x48xf32, #tpu.memory_space<vmem>>, vector<48x48xf32>
      %cst_67 = arith.constant dense<0.000000e+00> : vector<1x48xf32>
      %93 = tpu.matmul %63, %92, %cst_67 {dimension_numbers = #tpu.dot_dimension_numbers<[1], [0], [0], [1], [0, 0, 1, 1], [], []>} : vector<1x48xf32>, vector<48x48xf32>, vector<1x48xf32> -> vector<1x48xf32>
      %94 = arith.addf %91, %93 : vector<1x48xf32>
      %c1536 = arith.constant 1536 : index
      %c0_68 = arith.constant 0 : index
      %95 = vector.load %arg7[%c1536, %c0_68] : memref<1680x48xf32, #tpu.memory_space<vmem>>, vector<48x48xf32>
      %cst_69 = arith.constant dense<0.000000e+00> : vector<1x48xf32>
      %96 = tpu.matmul %75, %95, %cst_69 {dimension_numbers = #tpu.dot_dimension_numbers<[1], [0], [0], [1], [0, 0, 1, 1], [], []>} : vector<1x48xf32>, vector<48x48xf32>, vector<1x48xf32> -> vector<1x48xf32>
      %97 = arith.addf %94, %96 : vector<1x48xf32>
      %c1584 = arith.constant 1584 : index
      %c0_70 = arith.constant 0 : index
      %98 = vector.load %arg7[%c1584, %c0_70] : memref<1680x48xf32, #tpu.memory_space<vmem>>, vector<48x48xf32>
      %cst_71 = arith.constant dense<0.000000e+00> : vector<1x48xf32>
      %99 = tpu.matmul %87, %98, %cst_71 {dimension_numbers = #tpu.dot_dimension_numbers<[1], [0], [0], [1], [0, 0, 1, 1], [], []>} : vector<1x48xf32>, vector<48x48xf32>, vector<1x48xf32> -> vector<1x48xf32>
      %100 = arith.addf %97, %99 : vector<1x48xf32>
      %c1632 = arith.constant 1632 : index
      %c0_72 = arith.constant 0 : index
      %101 = vector.load %arg7[%c1632, %c0_72] : memref<1680x48xf32, #tpu.memory_space<vmem>>, vector<48x48xf32>
      %cst_73 = arith.constant dense<0.000000e+00> : vector<1x48xf32>
      %102 = tpu.matmul %39, %101, %cst_73 {dimension_numbers = #tpu.dot_dimension_numbers<[1], [0], [0], [1], [0, 0, 1, 1], [], []>} : vector<1x48xf32>, vector<48x48xf32>, vector<1x48xf32> -> vector<1x48xf32>
      %103 = arith.addf %100, %102 : vector<1x48xf32>
      %cst_74 = arith.constant 5.000000e-01 : f32
      %104 = vector.broadcast %cst_74 : f32 to vector<1x48xf32>
      %105 = arith.mulf %104, %103 : vector<1x48xf32>
      %106 = math.tanh %105 : vector<1x48xf32>
      %cst_75 = arith.constant 1.000000e+00 : f32
      %107 = vector.broadcast %cst_75 : f32 to vector<1x48xf32>
      %108 = arith.addf %106, %107 : vector<1x48xf32>
      %cst_76 = arith.constant 5.000000e-01 : f32
      %109 = vector.broadcast %cst_76 : f32 to vector<1x48xf32>
      %110 = arith.mulf %109, %108 : vector<1x48xf32>
      %111 = arith.mulf %103, %110 : vector<1x48xf32>
      %c0_77 = arith.constant 0 : index
      %c0_78 = arith.constant 0 : index
      %112 = vector.load %arg9[%c0_77, %c0_78] : memref<48x2xf32, #tpu.memory_space<vmem>>, vector<48x2xf32>
      %cst_79 = arith.constant dense<0.000000e+00> : vector<1x2xf32>
      %113 = tpu.matmul %111, %112, %cst_79 {dimension_numbers = #tpu.dot_dimension_numbers<[1], [0], [0], [1], [0, 0, 1, 1], [], []>} : vector<1x48xf32>, vector<48x2xf32>, vector<1x2xf32> -> vector<1x2xf32>
      %c0_80 = arith.constant 0 : index
      %c0_81 = arith.constant 0 : index
      %114 = vector.load %arg10[%c0_80, %c0_81] : memref<1x2xf32, #tpu.memory_space<vmem>>, vector<1x2xf32>
      %115 = arith.addf %113, %114 : vector<1x2xf32>
      %c0_82 = arith.constant 0 : index
      %c0_83 = arith.constant 0 : index
      %c0_84 = arith.constant 0 : index
      %116 = vector.load %arg11[%c0_82, %c0_83, %c0_84] : memref<1x1x2xf32, #tpu.memory_space<vmem>>, vector<1x1x2xf32>
      %117 = vector.shape_cast %116 : vector<1x1x2xf32> to vector<1x2xf32>
      %118 = vector.shape_cast %115 : vector<1x2xf32> to vector<1x1x2xf32>
      tpu.vector_store %arg11[%c0_82, %c0_83, %c0_84], %118 {strides = array<i32>} : memref<1x1x2xf32, #tpu.memory_space<vmem>>, vector<1x1x2xf32>,
    } else {
    }
    return
  }
  func.func @transform_0(%arg0: i32, %arg1: i32) -> (i32, i32, i32) {
    %c0_i32 = arith.constant 0 : i32
    %c0_i32_0 = arith.constant 0 : i32
    return %arg0, %c0_i32, %arg1 : i32, i32, i32
  }
  func.func @transform_1(%arg0: i32, %arg1: i32) -> (i32, i32, i32) {
    %c0_i32 = arith.constant 0 : i32
    %c0_i32_0 = arith.constant 0 : i32
    return %arg0, %c0_i32, %arg1 : i32, i32, i32
  }
  func.func @transform_2(%arg0: i32, %arg1: i32) -> (i32, i32, i32) {
    %c0_i32 = arith.constant 0 : i32
    %c0_i32_0 = arith.constant 0 : i32
    %c0_i32_1 = arith.constant 0 : i32
    return %arg0, %c0_i32, %c0_i32_0 : i32, i32, i32
  }
  func.func @transform_3(%arg0: i32, %arg1: i32) -> (i32, i32, i32) {
    %c0_i32 = arith.constant 0 : i32
    %c0_i32_0 = arith.constant 0 : i32
    %c0_i32_1 = arith.constant 0 : i32
    return %arg0, %c0_i32, %c0_i32_0 : i32, i32, i32
  }
  func.func @transform_4(%arg0: i32, %arg1: i32) -> (i32, i32, i32) {
    %c0_i32 = arith.constant 0 : i32
    %c0_i32_0 = arith.constant 0 : i32
    %c0_i32_1 = arith.constant 0 : i32
    return %arg0, %c0_i32, %c0_i32_0 : i32, i32, i32
  }
  func.func @transform_5(%arg0: i32, %arg1: i32) -> (i32, i32) {
    %c0_i32 = arith.constant 0 : i32
    %c0_i32_0 = arith.constant 0 : i32
    %c0_i32_1 = arith.constant 0 : i32
    return %c0_i32, %c0_i32_0 : i32, i32
  }
  func.func @transform_6(%arg0: i32, %arg1: i32) -> (i32, i32) {
    %c0_i32 = arith.constant 0 : i32
    %c0_i32_0 = arith.constant 0 : i32
    %c0_i32_1 = arith.constant 0 : i32
    return %c0_i32, %c0_i32_0 : i32, i32
  }
  func.func @transform_7(%arg0: i32, %arg1: i32) -> (i32, i32) {
    %c0_i32 = arith.constant 0 : i32
    %c0_i32_0 = arith.constant 0 : i32
    %c0_i32_1 = arith.constant 0 : i32
    return %c0_i32, %c0_i32_0 : i32, i32
  }
  func.func @transform_8(%arg0: i32, %arg1: i32) -> (i32, i32) {
    %c0_i32 = arith.constant 0 : i32
    %c0_i32_0 = arith.constant 0 : i32
    %c0_i32_1 = arith.constant 0 : i32
    return %c0_i32, %c0_i32_0 : i32, i32
  }
  func.func @transform_9(%arg0: i32, %arg1: i32) -> (i32, i32, i32) {
    %c0_i32 = arith.constant 0 : i32
    %c0_i32_0 = arith.constant 0 : i32
    %c0_i32_1 = arith.constant 0 : i32
    return %arg0, %c0_i32, %c0_i32_0 : i32, i32, i32
  }
}

</mosaic_0001>

<llo_original>
// kernel: swinvit_mlp_v3_forward.1
$region0: #{swinvit_mlp_v3_forward.1}
  #allocation0 [shape = 'u32[]', space=smem, size = 0x4, offset = 0x4, fixed_abs, tag = 'smem constant byte address 0x4 - core index']
  #allocation1 [shape = 'u32[144,128]{1,0:T(1,128)}', space=vmem, size = 0x12000, scoped, tag = 'internal scratch']
  #allocation2 [shape = 'f32[1,48]{1,0:T(1,128)}', space=vmem, size = 0x200, scoped, tag = 'scratch operand']
  #allocation3 [shape = 'f32[1,96]{1,0:T(1,128)}', space=vmem, size = 0x200, scoped, tag = 'scratch operand']
  %s0 = inlined_call_operand.vmem [shape: bf16[2,48,32768], index: 0, kind: input, shape index: {}]
  %s1 = inlined_call_operand.vmem [shape: bf16[2,96,4096], index: 1, kind: input, shape index: {}]
  %s2 = inlined_call_operand.vmem [shape: f32[2,192,512], index: 2, kind: input, shape index: {}]
  %s3 = inlined_call_operand.vmem [shape: f32[2,64,384], index: 3, kind: input, shape index: {}]
  %s4 = inlined_call_operand.vmem [shape: f32[2,8,768], index: 4, kind: input, shape index: {}]
  %s5 = inlined_call_operand.vmem [shape: f32[1680,48], index: 5, kind: input, shape index: {}]
  %s6 = inlined_call_operand.vmem [shape: f32[5,48], index: 6, kind: input, shape index: {}]
  %s7 = inlined_call_operand.vmem [shape: f32[48,2], index: 7, kind: input, shape index: {}]
  %s8 = inlined_call_operand.vmem [shape: f32[1,2], index: 8, kind: input, shape index: {}]
  %s9 = inlined_call_operand.hbm [shape: f32[2,1,2], index: 9, kind: output, shape index: {}]
  %s10 = sld [smem:[#allocation0]]
  $region123: #{swinvit_mlp_v3_forward.1} parent=0
    _
  %s12 = ssub.s32 1, %s10
  %s13 = scalar_select 0, %s12, %s10
  $region1: #{swinvit_mlp_v3_forward.1} parent=0
    #allocation4 [shape = 'u8[3145728]{0}', space=vmem, size = 0x300000, scoped, tag = 'input window, operand 0']
    #allocation5 [shape = 'u8[786432]{0}', space=vmem, size = 0xc0000, scoped, tag = 'input window, operand 1']
    #allocation6 [shape = 'u8[1024]{0}', space=vmem, size = 0x400, scoped, tag = 'output window, operand 0']
    #allocation7 [shape = 's32[2]{0}', space=sflag, size = 0x8, scoped, tag = 'scoped memory for swinvit_mlp_v3_forward.1']
    %14 = vsyncpa [#allocation7], 0
    %s15 = scalar_lea.sflag [#allocation7], 1
    %16 = vsyncpa %s15, 0
    loop: start=0, step=1, limit=6
    $region2: #{swinvit_mlp_v3_forward.1} parent=1 // loop_pre_header
      _
    $region3: #{swinvit_mlp_v3_forward.1} parent=1 // loop_header
      %s18 = sphi 0, %s22
      %p19 = scmp.ge.s32.totalorder %s18, 6
      %s25 = sphi 0, %s37
      %s26 = sphi 0, %s33
      %s27 = sphi 0, %s25
      %s28 = sphi 0, %s26
      %s29 = sphi 0, %s27
      %s30 = sphi 0, %s28
      %s42 = sphi 0, %s44
      %s45 = sphi 0, %s42
      %s46 = sphi 0, %s45
      %s62 = sphi 0, %s46
      %s70 = sphi 0, %s72
      %s73 = sphi 0, %s70
      %s74 = sphi 0, %s73
      %s90 = sphi 0, %s74
      %s96 = sphi 0, %s98
      %s99 = sphi 0, %s96
      %s100 = sphi 0, %s99
      %s116 = sphi 0, %s100
      %s122 = sphi 0, %s124
      %s125 = sphi 0, %s122
      %s126 = sphi 0, %s125
      %s142 = sphi 0, %s126
      %s148 = sphi 0, %s150
      %s151 = sphi 0, %s148
      %s152 = sphi 0, %s151
      %s168 = sphi 0, %s152
      %s172 = sphi 0, %s172
      %s174 = sphi 0, %s172
      %s175 = sphi 0, %s174
      %s189 = sphi 0, %s175
      %s193 = sphi 0, %s193
      %s195 = sphi 0, %s193
      %s196 = sphi 0, %s195
      %s210 = sphi 0, %s196
      %s214 = sphi 0, %s214
      %s216 = sphi 0, %s214
      %s217 = sphi 0, %s216
      %s231 = sphi 0, %s217
      %s235 = sphi 0, %s235
      %s237 = sphi 0, %s235
      %s238 = sphi 0, %s237
      %s252 = sphi 0, %s238
      %s258 = sphi 0, %s260
      %s261 = sphi 0, %s258
      %s262 = sphi 0, %s261
      %s278 = sphi 0, %s262
    $region4: #{swinvit_mlp_v3_forward.1} parent=1 // loop_header_branch
      %21 = sbr.rel (%p19) target = $region8
    $region5: #{swinvit_mlp_v3_forward.1} parent=1 // loop_body
      %s23 = ssub.s32 %s18, 1
      %s24 = ssub.s32 %s18, 2
      %s31 = sadd.s32 1, %s26
      %p32 = scmp.ge.s32.totalorder %s31, 2
      %s33 = scalar_select %p32, 0, %s31
      %s34 = sadd.s32 1, %s25
      %s35 = scalar_select %p32, %s34, %s25
      %p36 = scmp.ge.s32.totalorder %s35, 2
      %s37 = scalar_select %p36, 0, %s35
      %s38 = ssub.s32 %s25, %s37
      %s39 = ssub.s32 %s26, %s33
      %s40 = sor.u32 %s38, %s39
      %p41 = scmp.eq.s32.totalorder %s40, 0
      %s43 = sadd.s32 %s42, 1
      %s44 = scalar_select %p41, %s42, %s43
      %p47 = pneg %p41
      %p48 = scmp.eq.s32.totalorder %s18, 3
      %p49 = por %p47, %p48
      %p50 = scmp.ne.s32.totalorder %s42, %s45
      %p51 = scmp.eq.s32.totalorder %s18, 0
      %p52 = por %p50, %p51
      %p53 = scmp.ne.s32.totalorder %s42, %s45
      %p54 = scmp.eq.s32.totalorder %s23, 3
      %p55 = por %p53, %p54
      %p56 = scmp.ne.s32.totalorder %s45, %s46
      %p57 = scmp.eq.s32.totalorder %s23, 0
      %p58 = por %p56, %p57
      %p59 = scmp.ne.s32.totalorder %s45, %s46
      %p60 = scmp.eq.s32.totalorder %s24, 3
      %p61 = por %p59, %p60
      %p63 = scmp.ne.s32.totalorder %s46, %s62
      %p64 = scmp.eq.s32.totalorder %s24, 0
      %p65 = por %p63, %p64
      %s66 = ssub.s32 %s25, %s37
      %s67 = ssub.s32 %s26, %s33
      %s68 = sor.u32 %s66, %s67
      %p69 = scmp.eq.s32.totalorder %s68, 0
      %s71 = sadd.s32 %s70, 1
      %s72 = scalar_select %p69, %s70, %s71
      %p75 = pneg %p69
      %p76 = scmp.eq.s32.totalorder %s18, 3
      %p77 = por %p75, %p76
      %p78 = scmp.ne.s32.totalorder %s70, %s73
      %p79 = scmp.eq.s32.totalorder %s18, 0
      %p80 = por %p78, %p79
      %p81 = scmp.ne.s32.totalorder %s70, %s73
      %p82 = scmp.eq.s32.totalorder %s23, 3
      %p83 = por %p81, %p82
      %p84 = scmp.ne.s32.totalorder %s73, %s74
      %p85 = scmp.eq.s32.totalorder %s23, 0
      %p86 = por %p84, %p85
      %p87 = scmp.ne.s32.totalorder %s73, %s74
      %p88 = scmp.eq.s32.totalorder %s24, 3
      %p89 = por %p87, %p88
      %p91 = scmp.ne.s32.totalorder %s74, %s90
      %p92 = scmp.eq.s32.totalorder %s24, 0
      %p93 = por %p91, %p92
      %s94 = ssub.s32 %s25, %s37
      %p95 = scmp.eq.s32.totalorder %s94, 0
      %s97 = sadd.s32 %s96, 1
      %s98 = scalar_select %p95, %s96, %s97
      %p101 = pneg %p95
      %p102 = scmp.eq.s32.totalorder %s18, 3
      %p103 = por %p101, %p102
      %p104 = scmp.ne.s32.totalorder %s96, %s99
      %p105 = scmp.eq.s32.totalorder %s18, 0
      %p106 = por %p104, %p105
      %p107 = scmp.ne.s32.totalorder %s96, %s99
      %p108 = scmp.eq.s32.totalorder %s23, 3
      %p109 = por %p107, %p108
      %p110 = scmp.ne.s32.totalorder %s99, %s100
      %p111 = scmp.eq.s32.totalorder %s23, 0
      %p112 = por %p110, %p111
      %p113 = scmp.ne.s32.totalorder %s99, %s100
      %p114 = scmp.eq.s32.totalorder %s24, 3
      %p115 = por %p113, %p114
      %p117 = scmp.ne.s32.totalorder %s100, %s116
      %p118 = scmp.eq.s32.totalorder %s24, 0
      %p119 = por %p117, %p118
      %s120 = ssub.s32 %s25, %s37
      %p121 = scmp.eq.s32.totalorder %s120, 0
      %s123 = sadd.s32 %s122, 1
      %s124 = scalar_select %p121, %s122, %s123
      %p127 = pneg %p121
      %p128 = scmp.eq.s32.totalorder %s18, 3
      %p129 = por %p127, %p128
      %p130 = scmp.ne.s32.totalorder %s122, %s125
      %p131 = scmp.eq.s32.totalorder %s18, 0
      %p132 = por %p130, %p131
      %p133 = scmp.ne.s32.totalorder %s122, %s125
      %p134 = scmp.eq.s32.totalorder %s23, 3
      %p135 = por %p133, %p134
      %p136 = scmp.ne.s32.totalorder %s125, %s126
      %p137 = scmp.eq.s32.totalorder %s23, 0
      %p138 = por %p136, %p137
      %p139 = scmp.ne.s32.totalorder %s125, %s126
      %p140 = scmp.eq.s32.totalorder %s24, 3
      %p141 = por %p139, %p140
      %p143 = scmp.ne.s32.totalorder %s126, %s142
      %p144 = scmp.eq.s32.totalorder %s24, 0
      %p145 = por %p143, %p144
      %s146 = ssub.s32 %s25, %s37
      %p147 = scmp.eq.s32.totalorder %s146, 0
      %s149 = sadd.s32 %s148, 1
      %s150 = scalar_select %p147, %s148, %s149
      %p153 = pneg %p147
      %p154 = scmp.eq.s32.totalorder %s18, 3
      %p155 = por %p153, %p154
      %p156 = scmp.ne.s32.totalorder %s148, %s151
      %p157 = scmp.eq.s32.totalorder %s18, 0
      %p158 = por %p156, %p157
      %p159 = scmp.ne.s32.totalorder %s148, %s151
      %p160 = scmp.eq.s32.totalorder %s23, 3
      %p161 = por %p159, %p160
      %p162 = scmp.ne.s32.totalorder %s151, %s152
      %p163 = scmp.eq.s32.totalorder %s23, 0
      %p164 = por %p162, %p163
      %p165 = scmp.ne.s32.totalorder %s151, %s152
      %p166 = scmp.eq.s32.totalorder %s24, 3
      %p167 = por %p165, %p166
      %p169 = scmp.ne.s32.totalorder %s152, %s168
      %p170 = scmp.eq.s32.totalorder %s24, 0
      %p171 = por %p169, %p170
      %s173 = sadd.s32 %s172, 1
      %p176 = scmp.eq.s32.totalorder %s18, 3
      %p177 = scmp.ne.s32.totalorder %s172, %s174
      %p178 = scmp.eq.s32.totalorder %s18, 0
      %p179 = por %p177, %p178
      %p180 = scmp.ne.s32.totalorder %s172, %s174
      %p181 = scmp.eq.s32.totalorder %s23, 3
      %p182 = por %p180, %p181
      %p183 = scmp.ne.s32.totalorder %s174, %s175
      %p184 = scmp.eq.s32.totalorder %s23, 0
      %p185 = por %p183, %p184
      %p186 = scmp.ne.s32.totalorder %s174, %s175
      %p187 = scmp.eq.s32.totalorder %s24, 3
      %p188 = por %p186, %p187
      %p190 = scmp.ne.s32.totalorder %s175, %s189
      %p191 = scmp.eq.s32.totalorder %s24, 0
      %p192 = por %p190, %p191
      %s194 = sadd.s32 %s193, 1
      %p197 = scmp.eq.s32.totalorder %s18, 3
      %p198 = scmp.ne.s32.totalorder %s193, %s195
      %p199 = scmp.eq.s32.totalorder %s18, 0
      %p200 = por %p198, %p199
      %p201 = scmp.ne.s32.totalorder %s193, %s195
      %p202 = scmp.eq.s32.totalorder %s23, 3
      %p203 = por %p201, %p202
      %p204 = scmp.ne.s32.totalorder %s195, %s196
      %p205 = scmp.eq.s32.totalorder %s23, 0
      %p206 = por %p204, %p205
      %p207 = scmp.ne.s32.totalorder %s195, %s196
      %p208 = scmp.eq.s32.totalorder %s24, 3
      %p209 = por %p207, %p208
      %p211 = scmp.ne.s32.totalorder %s196, %s210
      %p212 = scmp.eq.s32.totalorder %s24, 0
      %p213 = por %p211, %p212
      %s215 = sadd.s32 %s214, 1
      %p218 = scmp.eq.s32.totalorder %s18, 3
      %p219 = scmp.ne.s32.totalorder %s214, %s216
      %p220 = scmp.eq.s32.totalorder %s18, 0
      %p221 = por %p219, %p220
      %p222 = scmp.ne.s32.totalorder %s214, %s216
      %p223 = scmp.eq.s32.totalorder %s23, 3
      %p224 = por %p222, %p223
      %p225 = scmp.ne.s32.totalorder %s216, %s217
      %p226 = scmp.eq.s32.totalorder %s23, 0
      %p227 = por %p225, %p226
      %p228 = scmp.ne.s32.totalorder %s216, %s217
      %p229 = scmp.eq.s32.totalorder %s24, 3
      %p230 = por %p228, %p229
      %p232 = scmp.ne.s32.totalorder %s217, %s231
      %p233 = scmp.eq.s32.totalorder %s24, 0
      %p234 = por %p232, %p233
      %s236 = sadd.s32 %s235, 1
      %p239 = scmp.eq.s32.totalorder %s18, 3
      %p240 = scmp.ne.s32.totalorder %s235, %s237
      %p241 = scmp.eq.s32.totalorder %s18, 0
      %p242 = por %p240, %p241
      %p243 = scmp.ne.s32.totalorder %s235, %s237
      %p244 = scmp.eq.s32.totalorder %s23, 3
      %p245 = por %p243, %p244
      %p246 = scmp.ne.s32.totalorder %s237, %s238
      %p247 = scmp.eq.s32.totalorder %s23, 0
      %p248 = por %p246, %p247
      %p249 = scmp.ne.s32.totalorder %s237, %s238
      %p250 = scmp.eq.s32.totalorder %s24, 3
      %p251 = por %p249, %p250
      %p253 = scmp.ne.s32.totalorder %s238, %s252
      %p254 = scmp.eq.s32.totalorder %s24, 0
      %p255 = por %p253, %p254
      %s256 = ssub.s32 %s25, %s37
      %p257 = scmp.eq.s32.totalorder %s256, 0
      %s259 = sadd.s32 %s258, 1
      %s260 = scalar_select %p257, %s258, %s259
      %p263 = pneg %p257
      %p264 = scmp.eq.s32.totalorder %s18, 3
      %p265 = por %p263, %p264
      %p266 = scmp.ne.s32.totalorder %s258, %s261
      %p267 = scmp.eq.s32.totalorder %s18, 0
      %p268 = por %p266, %p267
      %p269 = scmp.ne.s32.totalorder %s258, %s261
      %p270 = scmp.eq.s32.totalorder %s23, 3
      %p271 = por %p269, %p270
      %p272 = scmp.ne.s32.totalorder %s261, %s262
      %p273 = scmp.eq.s32.totalorder %s23, 0
      %p274 = por %p272, %p273
      %p275 = scmp.ne.s32.totalorder %s261, %s262
      %p276 = scmp.eq.s32.totalorder %s24, 3
      %p277 = por %p275, %p276
      %p279 = scmp.ne.s32.totalorder %s262, %s278
      %p280 = scmp.eq.s32.totalorder %s24, 0
      %p281 = por %p279, %p280
      %p282 = scmp.le.s32.totalorder 1, %s18
      %p283 = scmp.lt.s32.totalorder %s18, 5
      %p284 = pnand %p282, %p283
      %p285 = pneg %p284
      // Predicated region
      $region9: #{swinvit_mlp_v3_forward.1} parent=5 // pred_check
        _
      $region10: #{swinvit_mlp_v3_forward.1} parent=5 // pred_check_branch
        %287 = sbr.rel (%p284) target = $region12
      $region11: #{swinvit_mlp_v3_forward.1} parent=5 // pred_region
        %s288 = ssub.s32 %s18, 1
        // Predicated region
        $region13: #{swinvit_mlp_v3_forward.1} parent=11 // pred_check
          %p289 = pneg %p185
        $region14: #{swinvit_mlp_v3_forward.1} parent=11 // pred_check_branch
          %291 = sbr.rel (%p289) target = $region16
        $region15: #{swinvit_mlp_v3_forward.1} parent=11 // pred_region
          _
        $region16: #{swinvit_mlp_v3_forward.1} parent=11 // pred_fallthru
          _
        // Predicated region
        $region17: #{swinvit_mlp_v3_forward.1} parent=11 // pred_check
          %p292 = pneg %p206
        $region18: #{swinvit_mlp_v3_forward.1} parent=11 // pred_check_branch
          %294 = sbr.rel (%p292) target = $region20
        $region19: #{swinvit_mlp_v3_forward.1} parent=11 // pred_region
          _
        $region20: #{swinvit_mlp_v3_forward.1} parent=11 // pred_fallthru
          _
        // Predicated region
        $region21: #{swinvit_mlp_v3_forward.1} parent=11 // pred_check
          %p295 = pneg %p227
        $region22: #{swinvit_mlp_v3_forward.1} parent=11 // pred_check_branch
          %297 = sbr.rel (%p295) target = $region24
        $region23: #{swinvit_mlp_v3_forward.1} parent=11 // pred_region
          _
        $region24: #{swinvit_mlp_v3_forward.1} parent=11 // pred_fallthru
          _
        // Predicated region
        $region25: #{swinvit_mlp_v3_forward.1} parent=11 // pred_check
          %p298 = pneg %p248
        $region26: #{swinvit_mlp_v3_forward.1} parent=11 // pred_check_branch
          %300 = sbr.rel (%p298) target = $region28
        $region27: #{swinvit_mlp_v3_forward.1} parent=11 // pred_region
          _
        $region28: #{swinvit_mlp_v3_forward.1} parent=11 // pred_fallthru
          _
      $region12: #{swinvit_mlp_v3_forward.1} parent=5 // pred_fallthru
        _
      %p301 = scmp.lt.s32.totalorder %s18, 4
      // Predicated region
      $region29: #{swinvit_mlp_v3_forward.1} parent=5 // pred_check
        %p302 = pneg %p301
      $region30: #{swinvit_mlp_v3_forward.1} parent=5 // pred_check_branch
        %304 = sbr.rel (%p302) target = $region32
      $region31: #{swinvit_mlp_v3_forward.1} parent=5 // pred_region
        // Predicated region
        $region33: #{swinvit_mlp_v3_forward.1} parent=31 // pred_check
          %p305 = pneg %p52
        $region34: #{swinvit_mlp_v3_forward.1} parent=31 // pred_check_branch
          %307 = sbr.rel (%p305) target = $region36
        $region35: #{swinvit_mlp_v3_forward.1} parent=31 // pred_region
          %s308 = sand.u32 %s42, 1
          %s309 = sand.u32 %s42, 1
          %s310 = smul.addr %s309, 3072
          %s311 = scalar_lea.vmem [#allocation4], %s310
          %s312 = smul.u32 128, %s26
          %s313 = smul.addr %s25, 1536
          %s314 = sadd.s32 %s312, %s313
          %s315 = smul.addr %s314, 4
          %s316 = scalar_lea.vmem %s0, %s315
          // Predicated region
          $region37: #{swinvit_mlp_v3_forward.1} parent=35 // pred_check
            _
          $region38: #{swinvit_mlp_v3_forward.1} parent=35 // pred_check_branch
            %318 = sbr.rel (0) target = $region40
          $region39: #{swinvit_mlp_v3_forward.1} parent=35 // pred_region
            // Predicated region
            $region41: #{swinvit_mlp_v3_forward.1} parent=39 // pred_check
              _
            $region42: #{swinvit_mlp_v3_forward.1} parent=39 // pred_check_branch
              %320 = sbr.rel (0) target = $region44
            $region43: #{swinvit_mlp_v3_forward.1} parent=39 // pred_region
              loop: start=0, step=1, limit=1
              $region45: #{swinvit_mlp_v3_forward.1} parent=43 // loop_pre_header
                _
              $region46: #{swinvit_mlp_v3_forward.1} parent=43 // loop_header
                %s322 = sphi 0, %s326
                %p323 = scmp.ge.s32.totalorder %s322, 1
                %s327 = sphi %s316, %s316
                %s328 = sphi %s311, %s311
              $region47: #{swinvit_mlp_v3_forward.1} parent=43 // loop_header_branch
                %325 = sbr.rel (%p323) target = $region51
              $region48: #{swinvit_mlp_v3_forward.1} parent=43 // loop_body
                %v329 = vld [vmem:[%s327] sm:$0xff]
                %330 = vst [vmem:[%s328] sm:$0xff] %v329
                %v331 = vld [vmem:[%s327 + $0x8] sm:$0xff]
                %332 = vst [vmem:[%s328 + $0x8] sm:$0xff] %v331
                %v333 = vld [vmem:[%s327 + $0x10] sm:$0xff]
                %334 = vst [vmem:[%s328 + $0x10] sm:$0xff] %v333
                %v335 = vld [vmem:[%s327 + $0x18] sm:$0xff]
                %336 = vst [vmem:[%s328 + $0x18] sm:$0xff] %v335
                %v337 = vld [vmem:[%s327 + $0x20] sm:$0xff]
                %338 = vst [vmem:[%s328 + $0x20] sm:$0xff] %v337
                %v339 = vld [vmem:[%s327 + $0x28] sm:$0xff]
                %340 = vst [vmem:[%s328 + $0x28] sm:$0xff] %v339
                %v341 = vld [vmem:[%s327 + $0x30] sm:$0xff]
                %342 = vst [vmem:[%s328 + $0x30] sm:$0xff] %v341
                %v343 = vld [vmem:[%s327 + $0x38] sm:$0xff]
                %344 = vst [vmem:[%s328 + $0x38] sm:$0xff] %v343
                %v345 = vld [vmem:[%s327 + $0x40] sm:$0xff]
                %346 = vst [vmem:[%s328 + $0x40] sm:$0xff] %v345
                %v347 = vld [vmem:[%s327 + $0x48] sm:$0xff]
                %348 = vst [vmem:[%s328 + $0x48] sm:$0xff] %v347
                %v349 = vld [vmem:[%s327 + $0x50] sm:$0xff]
                %350 = vst [vmem:[%s328 + $0x50] sm:$0xff] %v349
                %v351 = vld [vmem:[%s327 + $0x58] sm:$0xff]
                %352 = vst [vmem:[%s328 + $0x58] sm:$0xff] %v351
                %v353 = vld [vmem:[%s327 + $0x60] sm:$0xff]
                %354 = vst [vmem:[%s328 + $0x60] sm:$0xff] %v353
                %v355 = vld [vmem:[%s327 + $0x68] sm:$0xff]
                %356 = vst [vmem:[%s328 + $0x68] sm:$0xff] %v355
                %v357 = vld [vmem:[%s327 + $0x70] sm:$0xff]
                %358 = vst [vmem:[%s328 + $0x70] sm:$0xff] %v357
                %v359 = vld [vmem:[%s327 + $0x78] sm:$0xff]
                %360 = vst [vmem:[%s328 + $0x78] sm:$0xff] %v359
                %v361 = vld [vmem:[%s327 + $0x80] sm:$0xff]
                %362 = vst [vmem:[%s328 + $0x80] sm:$0xff] %v361
                %v363 = vld [vmem:[%s327 + $0x88] sm:$0xff]
                %364 = vst [vmem:[%s328 + $0x88] sm:$0xff] %v363
                %v365 = vld [vmem:[%s327 + $0x90] sm:$0xff]
                %366 = vst [vmem:[%s328 + $0x90] sm:$0xff] %v365
                %v367 = vld [vmem:[%s327 + $0x98] sm:$0xff]
                %368 = vst [vmem:[%s328 + $0x98] sm:$0xff] %v367
                %v369 = vld [vmem:[%s327 + $0xa0] sm:$0xff]
                %370 = vst [vmem:[%s328 + $0xa0] sm:$0xff] %v369
                %v371 = vld [vmem:[%s327 + $0xa8] sm:$0xff]
                %372 = vst [vmem:[%s328 + $0xa8] sm:$0xff] %v371
                %v373 = vld [vmem:[%s327 + $0xb0] sm:$0xff]
                %374 = vst [vmem:[%s328 + $0xb0] sm:$0xff] %v373
                %v375 = vld [vmem:[%s327 + $0xb8] sm:$0xff]
                %376 = vst [vmem:[%s328 + $0xb8] sm:$0xff] %v375
                %v377 = vld [vmem:[%s327 + $0xc0] sm:$0xff]
                %378 = vst [vmem:[%s328 + $0xc0] sm:$0xff] %v377
                %v379 = vld [vmem:[%s327 + $0xc8] sm:$0xff]
                %380 = vst [vmem:[%s328 + $0xc8] sm:$0xff] %v379
                %v381 = vld [vmem:[%s327 + $0xd0] sm:$0xff]
                %382 = vst [vmem:[%s328 + $0xd0] sm:$0xff] %v381
                %v383 = vld [vmem:[%s327 + $0xd8] sm:$0xff]
                %384 = vst [vmem:[%s328 + $0xd8] sm:$0xff] %v383
                %v385 = vld [vmem:[%s327 + $0xe0] sm:$0xff]
                %386 = vst [vmem:[%s328 + $0xe0] sm:$0xff] %v385
                %v387 = vld [vmem:[%s327 + $0xe8] sm:$0xff]
                %388 = vst [vmem:[%s328 + $0xe8] sm:$0xff] %v387
                %v389 = vld [vmem:[%s327 + $0xf0] sm:$0xff]
                %390 = vst [vmem:[%s328 + $0xf0] sm:$0xff] %v389
                %v391 = vld [vmem:[%s327 + $0xf8] sm:$0xff]
                %392 = vst [vmem:[%s328 + $0xf8] sm:$0xff] %v391
                %v393 = vld [vmem:[%s327 + $0x100] sm:$0xff]
                %394 = vst [vmem:[%s328 + $0x100] sm:$0xff] %v393
                %v395 = vld [vmem:[%s327 + $0x108] sm:$0xff]
                %396 = vst [vmem:[%s328 + $0x108] sm:$0xff] %v395
                %v397 = vld [vmem:[%s327 + $0x110] sm:$0xff]
                %398 = vst [vmem:[%s328 + $0x110] sm:$0xff] %v397
                %v399 = vld [vmem:[%s327 + $0x118] sm:$0xff]
                %400 = vst [vmem:[%s328 + $0x118] sm:$0xff] %v399
                %v401 = vld [vmem:[%s327 + $0x120] sm:$0xff]
                %402 = vst [vmem:[%s328 + $0x120] sm:$0xff] %v401
                %v403 = vld [vmem:[%s327 + $0x128] sm:$0xff]
                %404 = vst [vmem:[%s328 + $0x128] sm:$0xff] %v403
                %v405 = vld [vmem:[%s327 + $0x130] sm:$0xff]
                %406 = vst [vmem:[%s328 + $0x130] sm:$0xff] %v405
                %v407 = vld [vmem:[%s327 + $0x138] sm:$0xff]
                %408 = vst [vmem:[%s328 + $0x138] sm:$0xff] %v407
                %v409 = vld [vmem:[%s327 + $0x140] sm:$0xff]
                %410 = vst [vmem:[%s328 + $0x140] sm:$0xff] %v409
                %v411 = vld [vmem:[%s327 + $0x148] sm:$0xff]
                %412 = vst [vmem:[%s328 + $0x148] sm:$0xff] %v411
                %v413 = vld [vmem:[%s327 + $0x150] sm:$0xff]
                %414 = vst [vmem:[%s328 + $0x150] sm:$0xff] %v413
                %v415 = vld [vmem:[%s327 + $0x158] sm:$0xff]
                %416 = vst [vmem:[%s328 + $0x158] sm:$0xff] %v415
                %v417 = vld [vmem:[%s327 + $0x160] sm:$0xff]
                %418 = vst [vmem:[%s328 + $0x160] sm:$0xff] %v417
                %v419 = vld [vmem:[%s327 + $0x168] sm:$0xff]
                %420 = vst [vmem:[%s328 + $0x168] sm:$0xff] %v419
                %v421 = vld [vmem:[%s327 + $0x170] sm:$0xff]
                %422 = vst [vmem:[%s328 + $0x170] sm:$0xff] %v421
                %v423 = vld [vmem:[%s327 + $0x178] sm:$0xff]
                %424 = vst [vmem:[%s328 + $0x178] sm:$0xff] %v423
                %v425 = vld [vmem:[%s327 + $0x180] sm:$0xff]
                %426 = vst [vmem:[%s328 + $0x180] sm:$0xff] %v425
                %v427 = vld [vmem:[%s327 + $0x188] sm:$0xff]
                %428 = vst [vmem:[%s328 + $0x188] sm:$0xff] %v427
                %v429 = vld [vmem:[%s327 + $0x190] sm:$0xff]
                %430 = vst [vmem:[%s328 + $0x190] sm:$0xff] %v429
                %v431 = vld [vmem:[%s327 + $0x198] sm:$0xff]
                %432 = vst [vmem:[%s328 + $0x198] sm:$0xff] %v431
                %v433 = vld [vmem:[%s327 + $0x1a0] sm:$0xff]
                %434 = vst [vmem:[%s328 + $0x1a0] sm:$0xff] %v433
                %v435 = vld [vmem:[%s327 + $0x1a8] sm:$0xff]
                %436 = vst [vmem:[%s328 + $0x1a8] sm:$0xff] %v435
                %v437 = vld [vmem:[%s327 + $0x1b0] sm:$0xff]
                %438 = vst [vmem:[%s328 + $0x1b0] sm:$0xff] %v437
                %v439 = vld [vmem:[%s327 + $0x1b8] sm:$0xff]
                %440 = vst [vmem:[%s328 + $0x1b8] sm:$0xff] %v439
                %v441 = vld [vmem:[%s327 + $0x1c0] sm:$0xff]
                %442 = vst [vmem:[%s328 + $0x1c0] sm:$0xff] %v441
                %v443 = vld [vmem:[%s327 + $0x1c8] sm:$0xff]
                %444 = vst [vmem:[%s328 + $0x1c8] sm:$0xff] %v443
                %v445 = vld [vmem:[%s327 + $0x1d0] sm:$0xff]
                %446 = vst [vmem:[%s328 + $0x1d0] sm:$0xff] %v445
                %v447 = vld [vmem:[%s327 + $0x1d8] sm:$0xff]
                %448 = vst [vmem:[%s328 + $0x1d8] sm:$0xff] %v447
                %v449 = vld [vmem:[%s327 + $0x1e0] sm:$0xff]
                %450 = vst [vmem:[%s328 + $0x1e0] sm:$0xff] %v449
                %v451 = vld [vmem:[%s327 + $0x1e8] sm:$0xff]
                %452 = vst [vmem:[%s328 + $0x1e8] sm:$0xff] %v451
                %v453 = vld [vmem:[%s327 + $0x1f0] sm:$0xff]
                %454 = vst [vmem:[%s328 + $0x1f0] sm:$0xff] %v453
                %v455 = vld [vmem:[%s327 + $0x1f8] sm:$0xff]
                %456 = vst [vmem:[%s328 + $0x1f8] sm:$0xff] %v455
                %v457 = vld [vmem:[%s327 + $0x400] sm:$0xff]
                %458 = vst [vmem:[%s328 + $0x200] sm:$0xff] %v457
                %v459 = vld [vmem:[%s327 + $0x408] sm:$0xff]
                %460 = vst [vmem:[%s328 + $0x208] sm:$0xff] %v459
                %v461 = vld [vmem:[%s327 + $0x410] sm:$0xff]
                %462 = vst [vmem:[%s328 + $0x210] sm:$0xff] %v461
                %v463 = vld [vmem:[%s327 + $0x418] sm:$0xff]
                %464 = vst [vmem:[%s328 + $0x218] sm:$0xff] %v463
                %v465 = vld [vmem:[%s327 + $0x420] sm:$0xff]
                %466 = vst [vmem:[%s328 + $0x220] sm:$0xff] %v465
                %v467 = vld [vmem:[%s327 + $0x428] sm:$0xff]
                %468 = vst [vmem:[%s328 + $0x228] sm:$0xff] %v467
                %v469 = vld [vmem:[%s327 + $0x430] sm:$0xff]
                %470 = vst [vmem:[%s328 + $0x230] sm:$0xff] %v469
                %v471 = vld [vmem:[%s327 + $0x438] sm:$0xff]
                %472 = vst [vmem:[%s328 + $0x238] sm:$0xff] %v471
                %v473 = vld [vmem:[%s327 + $0x440] sm:$0xff]
                %474 = vst [vmem:[%s328 + $0x240] sm:$0xff] %v473
                %v475 = vld [vmem:[%s327 + $0x448] sm:$0xff]
                %476 = vst [vmem:[%s328 + $0x248] sm:$0xff] %v475
                %v477 = vld [vmem:[%s327 + $0x450] sm:$0xff]
                %478 = vst [vmem:[%s328 + $0x250] sm:$0xff] %v477
                %v479 = vld [vmem:[%s327 + $0x458] sm:$0xff]
                %480 = vst [vmem:[%s328 + $0x258] sm:$0xff] %v479
                %v481 = vld [vmem:[%s327 + $0x460] sm:$0xff]
                %482 = vst [vmem:[%s328 + $0x260] sm:$0xff] %v481
                %v483 = vld [vmem:[%s327 + $0x468] sm:$0xff]
                %484 = vst [vmem:[%s328 + $0x268] sm:$0xff] %v483
                %v485 = vld [vmem:[%s327 + $0x470] sm:$0xff]
                %486 = vst [vmem:[%s328 + $0x270] sm:$0xff] %v485
                %v487 = vld [vmem:[%s327 + $0x478] sm:$0xff]
                %488 = vst [vmem:[%s328 + $0x278] sm:$0xff] %v487
                %v489 = vld [vmem:[%s327 + $0x480] sm:$0xff]
                %490 = vst [vmem:[%s328 + $0x280] sm:$0xff] %v489
                %v491 = vld [vmem:[%s327 + $0x488] sm:$0xff]
                %492 = vst [vmem:[%s328 + $0x288] sm:$0xff] %v491
                %v493 = vld [vmem:[%s327 + $0x490] sm:$0xff]
                %494 = vst [vmem:[%s328 + $0x290] sm:$0xff] %v493
                %v495 = vld [vmem:[%s327 + $0x498] sm:$0xff]
                %496 = vst [vmem:[%s328 + $0x298] sm:$0xff] %v495
                %v497 = vld [vmem:[%s327 + $0x4a0] sm:$0xff]
                %498 = vst [vmem:[%s328 + $0x2a0] sm:$0xff] %v497
                %v499 = vld [vmem:[%s327 + $0x4a8] sm:$0xff]
                %500 = vst [vmem:[%s328 + $0x2a8] sm:$0xff] %v499
                %v501 = vld [vmem:[%s327 + $0x4b0] sm:$0xff]
                %502 = vst [vmem:[%s328 + $0x2b0] sm:$0xff] %v501
                %v503 = vld [vmem:[%s327 + $0x4b8] sm:$0xff]
                %504 = vst [vmem:[%s328 + $0x2b8] sm:$0xff] %v503
                %v505 = vld [vmem:[%s327 + $0x4c0] sm:$0xff]
                %506 = vst [vmem:[%s328 + $0x2c0] sm:$0xff] %v505
                %v507 = vld [vmem:[%s327 + $0x4c8] sm:$0xff]
                %508 = vst [vmem:[%s328 + $0x2c8] sm:$0xff] %v507
                %v509 = vld [vmem:[%s327 + $0x4d0] sm:$0xff]
                %510 = vst [vmem:[%s328 + $0x2d0] sm:$0xff] %v509
                %v511 = vld [vmem:[%s327 + $0x4d8] sm:$0xff]
                %512 = vst [vmem:[%s328 + $0x2d8] sm:$0xff] %v511
                %v513 = vld [vmem:[%s327 + $0x4e0] sm:$0xff]
                %514 = vst [vmem:[%s328 + $0x2e0] sm:$0xff] %v513
                %v515 = vld [vmem:[%s327 + $0x4e8] sm:$0xff]
                %516 = vst [vmem:[%s328 + $0x2e8] sm:$0xff] %v515
                %v517 = vld [vmem:[%s327 + $0x4f0] sm:$0xff]
                %518 = vst [vmem:[%s328 + $0x2f0] sm:$0xff] %v517
                %v519 = vld [vmem:[%s327 + $0x4f8] sm:$0xff]
                %520 = vst [vmem:[%s328 + $0x2f8] sm:$0xff] %v519
                %v521 = vld [vmem:[%s327 + $0x500] sm:$0xff]
                %522 = vst [vmem:[%s328 + $0x300] sm:$0xff] %v521
                %v523 = vld [vmem:[%s327 + $0x508] sm:$0xff]
                %524 = vst [vmem:[%s328 + $0x308] sm:$0xff] %v523
                %v525 = vld [vmem:[%s327 + $0x510] sm:$0xff]
                %526 = vst [vmem:[%s328 + $0x310] sm:$0xff] %v525
                %v527 = vld [vmem:[%s327 + $0x518] sm:$0xff]
                %528 = vst [vmem:[%s328 + $0x318] sm:$0xff] %v527
                %v529 = vld [vmem:[%s327 + $0x520] sm:$0xff]
                %530 = vst [vmem:[%s328 + $0x320] sm:$0xff] %v529
                %v531 = vld [vmem:[%s327 + $0x528] sm:$0xff]
                %532 = vst [vmem:[%s328 + $0x328] sm:$0xff] %v531
                %v533 = vld [vmem:[%s327 + $0x530] sm:$0xff]
                %534 = vst [vmem:[%s328 + $0x330] sm:$0xff] %v533
                %v535 = vld [vmem:[%s327 + $0x538] sm:$0xff]
                %536 = vst [vmem:[%s328 + $0x338] sm:$0xff] %v535
                %v537 = vld [vmem:[%s327 + $0x540] sm:$0xff]
                %538 = vst [vmem:[%s328 + $0x340] sm:$0xff] %v537
                %v539 = vld [vmem:[%s327 + $0x548] sm:$0xff]
                %540 = vst [vmem:[%s328 + $0x348] sm:$0xff] %v539
                %v541 = vld [vmem:[%s327 + $0x550] sm:$0xff]
                %542 = vst [vmem:[%s328 + $0x350] sm:$0xff] %v541
                %v543 = vld [vmem:[%s327 + $0x558] sm:$0xff]
                %544 = vst [vmem:[%s328 + $0x358] sm:$0xff] %v543
                %v545 = vld [vmem:[%s327 + $0x560] sm:$0xff]
                %546 = vst [vmem:[%s328 + $0x360] sm:$0xff] %v545
                %v547 = vld [vmem:[%s327 + $0x568] sm:$0xff]
                %548 = vst [vmem:[%s328 + $0x368] sm:$0xff] %v547
                %v549 = vld [vmem:[%s327 + $0x570] sm:$0xff]
                %550 = vst [vmem:[%s328 + $0x370] sm:$0xff] %v549
                %v551 = vld [vmem:[%s327 + $0x578] sm:$0xff]
                %552 = vst [vmem:[%s328 + $0x378] sm:$0xff] %v551
                %v553 = vld [vmem:[%s327 + $0x580] sm:$0xff]
                %554 = vst [vmem:[%s328 + $0x380] sm:$0xff] %v553
                %v555 = vld [vmem:[%s327 + $0x588] sm:$0xff]
                %556 = vst [vmem:[%s328 + $0x388] sm:$0xff] %v555
                %v557 = vld [vmem:[%s327 + $0x590] sm:$0xff]
                %558 = vst [vmem:[%s328 + $0x390] sm:$0xff] %v557
                %v559 = vld [vmem:[%s327 + $0x598] sm:$0xff]
                %560 = vst [vmem:[%s328 + $0x398] sm:$0xff] %v559
                %v561 = vld [vmem:[%s327 + $0x5a0] sm:$0xff]
                %562 = vst [vmem:[%s328 + $0x3a0] sm:$0xff] %v561
                %v563 = vld [vmem:[%s327 + $0x5a8] sm:$0xff]
                %564 = vst [vmem:[%s328 + $0x3a8] sm:$0xff] %v563
                %v565 = vld [vmem:[%s327 + $0x5b0] sm:$0xff]
                %566 = vst [vmem:[%s328 + $0x3b0] sm:$0xff] %v565
                %v567 = vld [vmem:[%s327 + $0x5b8] sm:$0xff]
                %568 = vst [vmem:[%s328 + $0x3b8] sm:$0xff] %v567
                %v569 = vld [vmem:[%s327 + $0x5c0] sm:$0xff]
                %570 = vst [vmem:[%s328 + $0x3c0] sm:$0xff] %v569
                %v571 = vld [vmem:[%s327 + $0x5c8] sm:$0xff]
                %572 = vst [vmem:[%s328 + $0x3c8] sm:$0xff] %v571
                %v573 = vld [vmem:[%s327 + $0x5d0] sm:$0xff]
                %574 = vst [vmem:[%s328 + $0x3d0] sm:$0xff] %v573
                %v575 = vld [vmem:[%s327 + $0x5d8] sm:$0xff]
                %576 = vst [vmem:[%s328 + $0x3d8] sm:$0xff] %v575
                %v577 = vld [vmem:[%s327 + $0x5e0] sm:$0xff]
                %578 = vst [vmem:[%s328 + $0x3e0] sm:$0xff] %v577
                %v579 = vld [vmem:[%s327 + $0x5e8] sm:$0xff]
                %580 = vst [vmem:[%s328 + $0x3e8] sm:$0xff] %v579
                %v581 = vld [vmem:[%s327 + $0x5f0] sm:$0xff]
                %582 = vst [vmem:[%s328 + $0x3f0] sm:$0xff] %v581
                %v583 = vld [vmem:[%s327 + $0x5f8] sm:$0xff]
                %584 = vst [vmem:[%s328 + $0x3f8] sm:$0xff] %v583
                %v585 = vld [vmem:[%s327 + $0x800] sm:$0xff]
                %586 = vst [vmem:[%s328 + $0x400] sm:$0xff] %v585
                %v587 = vld [vmem:[%s327 + $0x808] sm:$0xff]
                %588 = vst [vmem:[%s328 + $0x408] sm:$0xff] %v587
                %v589 = vld [vmem:[%s327 + $0x810] sm:$0xff]
                %590 = vst [vmem:[%s328 + $0x410] sm:$0xff] %v589
                %v591 = vld [vmem:[%s327 + $0x818] sm:$0xff]
                %592 = vst [vmem:[%s328 + $0x418] sm:$0xff] %v591
                %v593 = vld [vmem:[%s327 + $0x820] sm:$0xff]
                %594 = vst [vmem:[%s328 + $0x420] sm:$0xff] %v593
                %v595 = vld [vmem:[%s327 + $0x828] sm:$0xff]
                %596 = vst [vmem:[%s328 + $0x428] sm:$0xff] %v595
                %v597 = vld [vmem:[%s327 + $0x830] sm:$0xff]
                %598 = vst [vmem:[%s328 + $0x430] sm:$0xff] %v597
                %v599 = vld [vmem:[%s327 + $0x838] sm:$0xff]
                %600 = vst [vmem:[%s328 + $0x438] sm:$0xff] %v599
                %v601 = vld [vmem:[%s327 + $0x840] sm:$0xff]
                %602 = vst [vmem:[%s328 + $0x440] sm:$0xff] %v601
                %v603 = vld [vmem:[%s327 + $0x848] sm:$0xff]
                %604 = vst [vmem:[%s328 + $0x448] sm:$0xff] %v603
                %v605 = vld [vmem:[%s327 + $0x850] sm:$0xff]
                %606 = vst [vmem:[%s328 + $0x450] sm:$0xff] %v605
                %v607 = vld [vmem:[%s327 + $0x858] sm:$0xff]
                %608 = vst [vmem:[%s328 + $0x458] sm:$0xff] %v607
                %v609 = vld [vmem:[%s327 + $0x860] sm:$0xff]
                %610 = vst [vmem:[%s328 + $0x460] sm:$0xff] %v609
                %v611 = vld [vmem:[%s327 + $0x868] sm:$0xff]
                %612 = vst [vmem:[%s328 + $0x468] sm:$0xff] %v611
                %v613 = vld [vmem:[%s327 + $0x870] sm:$0xff]
                %614 = vst [vmem:[%s328 + $0x470] sm:$0xff] %v613
                %v615 = vld [vmem:[%s327 + $0x878] sm:$0xff]
                %616 = vst [vmem:[%s328 + $0x478] sm:$0xff] %v615
                %v617 = vld [vmem:[%s327 + $0x880] sm:$0xff]
                %618 = vst [vmem:[%s328 + $0x480] sm:$0xff] %v617
                %v619 = vld [vmem:[%s327 + $0x888] sm:$0xff]
                %620 = vst [vmem:[%s328 + $0x488] sm:$0xff] %v619
                %v621 = vld [vmem:[%s327 + $0x890] sm:$0xff]
                %622 = vst [vmem:[%s328 + $0x490] sm:$0xff] %v621
                %v623 = vld [vmem:[%s327 + $0x898] sm:$0xff]
                %624 = vst [vmem:[%s328 + $0x498] sm:$0xff] %v623
                %v625 = vld [vmem:[%s327 + $0x8a0] sm:$0xff]
                %626 = vst [vmem:[%s328 + $0x4a0] sm:$0xff] %v625
                %v627 = vld [vmem:[%s327 + $0x8a8] sm:$0xff]
                %628 = vst [vmem:[%s328 + $0x4a8] sm:$0xff] %v627
                %v629 = vld [vmem:[%s327 + $0x8b0] sm:$0xff]
                %630 = vst [vmem:[%s328 + $0x4b0] sm:$0xff] %v629
                %v631 = vld [vmem:[%s327 + $0x8b8] sm:$0xff]
                %632 = vst [vmem:[%s328 + $0x4b8] sm:$0xff] %v631
                %v633 = vld [vmem:[%s327 + $0x8c0] sm:$0xff]
                %634 = vst [vmem:[%s328 + $0x4c0] sm:$0xff] %v633
                %v635 = vld [vmem:[%s327 + $0x8c8] sm:$0xff]
                %636 = vst [vmem:[%s328 + $0x4c8] sm:$0xff] %v635
                %v637 = vld [vmem:[%s327 + $0x8d0] sm:$0xff]
                %638 = vst [vmem:[%s328 + $0x4d0] sm:$0xff] %v637
                %v639 = vld [vmem:[%s327 + $0x8d8] sm:$0xff]
                %640 = vst [vmem:[%s328 + $0x4d8] sm:$0xff] %v639
                %v641 = vld [vmem:[%s327 + $0x8e0] sm:$0xff]
                %642 = vst [vmem:[%s328 + $0x4e0] sm:$0xff] %v641
                %v643 = vld [vmem:[%s327 + $0x8e8] sm:$0xff]
                %644 = vst [vmem:[%s328 + $0x4e8] sm:$0xff] %v643
                %v645 = vld [vmem:[%s327 + $0x8f0] sm:$0xff]
                %646 = vst [vmem:[%s328 + $0x4f0] sm:$0xff] %v645
                %v647 = vld [vmem:[%s327 + $0x8f8] sm:$0xff]
                %648 = vst [vmem:[%s328 + $0x4f8] sm:$0xff] %v647
                %v649 = vld [vmem:[%s327 + $0x900] sm:$0xff]
                %650 = vst [vmem:[%s328 + $0x500] sm:$0xff] %v649
                %v651 = vld [vmem:[%s327 + $0x908] sm:$0xff]
                %652 = vst [vmem:[%s328 + $0x508] sm:$0xff] %v651
                %v653 = vld [vmem:[%s327 + $0x910] sm:$0xff]
                %654 = vst [vmem:[%s328 + $0x510] sm:$0xff] %v653
                %v655 = vld [vmem:[%s327 + $0x918] sm:$0xff]
                %656 = vst [vmem:[%s328 + $0x518] sm:$0xff] %v655
                %v657 = vld [vmem:[%s327 + $0x920] sm:$0xff]
                %658 = vst [vmem:[%s328 + $0x520] sm:$0xff] %v657
                %v659 = vld [vmem:[%s327 + $0x928] sm:$0xff]
                %660 = vst [vmem:[%s328 + $0x528] sm:$0xff] %v659
                %v661 = vld [vmem:[%s327 + $0x930] sm:$0xff]
                %662 = vst [vmem:[%s328 + $0x530] sm:$0xff] %v661
                %v663 = vld [vmem:[%s327 + $0x938] sm:$0xff]
                %664 = vst [vmem:[%s328 + $0x538] sm:$0xff] %v663
                %v665 = vld [vmem:[%s327 + $0x940] sm:$0xff]
                %666 = vst [vmem:[%s328 + $0x540] sm:$0xff] %v665
                %v667 = vld [vmem:[%s327 + $0x948] sm:$0xff]
                %668 = vst [vmem:[%s328 + $0x548] sm:$0xff] %v667
                %v669 = vld [vmem:[%s327 + $0x950] sm:$0xff]
                %670 = vst [vmem:[%s328 + $0x550] sm:$0xff] %v669
                %v671 = vld [vmem:[%s327 + $0x958] sm:$0xff]
                %672 = vst [vmem:[%s328 + $0x558] sm:$0xff] %v671
                %v673 = vld [vmem:[%s327 + $0x960] sm:$0xff]
                %674 = vst [vmem:[%s328 + $0x560] sm:$0xff] %v673
                %v675 = vld [vmem:[%s327 + $0x968] sm:$0xff]
                %676 = vst [vmem:[%s328 + $0x568] sm:$0xff] %v675
                %v677 = vld [vmem:[%s327 + $0x970] sm:$0xff]
                %678 = vst [vmem:[%s328 + $0x570] sm:$0xff] %v677
                %v679 = vld [vmem:[%s327 + $0x978] sm:$0xff]
                %680 = vst [vmem:[%s328 + $0x578] sm:$0xff] %v679
                %v681 = vld [vmem:[%s327 + $0x980] sm:$0xff]
                %682 = vst [vmem:[%s328 + $0x580] sm:$0xff] %v681
                %v683 = vld [vmem:[%s327 + $0x988] sm:$0xff]
                %684 = vst [vmem:[%s328 + $0x588] sm:$0xff] %v683
                %v685 = vld [vmem:[%s327 + $0x990] sm:$0xff]
                %686 = vst [vmem:[%s328 + $0x590] sm:$0xff] %v685
                %v687 = vld [vmem:[%s327 + $0x998] sm:$0xff]
                %688 = vst [vmem:[%s328 + $0x598] sm:$0xff] %v687
                %v689 = vld [vmem:[%s327 + $0x9a0] sm:$0xff]
                %690 = vst [vmem:[%s328 + $0x5a0] sm:$0xff] %v689
                %v691 = vld [vmem:[%s327 + $0x9a8] sm:$0xff]
                %692 = vst [vmem:[%s328 + $0x5a8] sm:$0xff] %v691
                %v693 = vld [vmem:[%s327 + $0x9b0] sm:$0xff]
                %694 = vst [vmem:[%s328 + $0x5b0] sm:$0xff] %v693
                %v695 = vld [vmem:[%s327 + $0x9b8] sm:$0xff]
                %696 = vst [vmem:[%s328 + $0x5b8] sm:$0xff] %v695
                %v697 = vld [vmem:[%s327 + $0x9c0] sm:$0xff]
                %698 = vst [vmem:[%s328 + $0x5c0] sm:$0xff] %v697
                %v699 = vld [vmem:[%s327 + $0x9c8] sm:$0xff]
                %700 = vst [vmem:[%s328 + $0x5c8] sm:$0xff] %v699
                %v701 = vld [vmem:[%s327 + $0x9d0] sm:$0xff]
                %702 = vst [vmem:[%s328 + $0x5d0] sm:$0xff] %v701
                %v703 = vld [vmem:[%s327 + $0x9d8] sm:$0xff]
                %704 = vst [vmem:[%s328 + $0x5d8] sm:$0xff] %v703
                %v705 = vld [vmem:[%s327 + $0x9e0] sm:$0xff]
                %706 = vst [vmem:[%s328 + $0x5e0] sm:$0xff] %v705
                %v707 = vld [vmem:[%s327 + $0x9e8] sm:$0xff]
                %708 = vst [vmem:[%s328 + $0x5e8] sm:$0xff] %v707
                %v709 = vld [vmem:[%s327 + $0x9f0] sm:$0xff]
                %710 = vst [vmem:[%s328 + $0x5f0] sm:$0xff] %v709
                %v711 = vld [vmem:[%s327 + $0x9f8] sm:$0xff]
                %712 = vst [vmem:[%s328 + $0x5f8] sm:$0xff] %v711
                %v713 = vld [vmem:[%s327 + $0xc00] sm:$0xff]
                %714 = vst [vmem:[%s328 + $0x600] sm:$0xff] %v713
                %v715 = vld [vmem:[%s327 + $0xc08] sm:$0xff]
                %716 = vst [vmem:[%s328 + $0x608] sm:$0xff] %v715
                %v717 = vld [vmem:[%s327 + $0xc10] sm:$0xff]
                %718 = vst [vmem:[%s328 + $0x610] sm:$0xff] %v717
                %v719 = vld [vmem:[%s327 + $0xc18] sm:$0xff]
                %720 = vst [vmem:[%s328 + $0x618] sm:$0xff] %v719
                %v721 = vld [vmem:[%s327 + $0xc20] sm:$0xff]
                %722 = vst [vmem:[%s328 + $0x620] sm:$0xff] %v721
                %v723 = vld [vmem:[%s327 + $0xc28] sm:$0xff]
                %724 = vst [vmem:[%s328 + $0x628] sm:$0xff] %v723
                %v725 = vld [vmem:[%s327 + $0xc30] sm:$0xff]
                %726 = vst [vmem:[%s328 + $0x630] sm:$0xff] %v725
                %v727 = vld [vmem:[%s327 + $0xc38] sm:$0xff]
                %728 = vst [vmem:[%s328 + $0x638] sm:$0xff] %v727
                %v729 = vld [vmem:[%s327 + $0xc40] sm:$0xff]
                %730 = vst [vmem:[%s328 + $0x640] sm:$0xff] %v729
                %v731 = vld [vmem:[%s327 + $0xc48] sm:$0xff]
                %732 = vst [vmem:[%s328 + $0x648] sm:$0xff] %v731
                %v733 = vld [vmem:[%s327 + $0xc50] sm:$0xff]
                %734 = vst [vmem:[%s328 + $0x650] sm:$0xff] %v733
                %v735 = vld [vmem:[%s327 + $0xc58] sm:$0xff]
                %736 = vst [vmem:[%s328 + $0x658] sm:$0xff] %v735
                %v737 = vld [vmem:[%s327 + $0xc60] sm:$0xff]
                %738 = vst [vmem:[%s328 + $0x660] sm:$0xff] %v737
                %v739 = vld [vmem:[%s327 + $0xc68] sm:$0xff]
                %740 = vst [vmem:[%s328 + $0x668] sm:$0xff] %v739
                %v741 = vld [vmem:[%s327 + $0xc70] sm:$0xff]
                %742 = vst [vmem:[%s328 + $0x670] sm:$0xff] %v741
                %v743 = vld [vmem:[%s327 + $0xc78] sm:$0xff]
                %744 = vst [vmem:[%s328 + $0x678] sm:$0xff] %v743
                %v745 = vld [vmem:[%s327 + $0xc80] sm:$0xff]
                %746 = vst [vmem:[%s328 + $0x680] sm:$0xff] %v745
                %v747 = vld [vmem:[%s327 + $0xc88] sm:$0xff]
                %748 = vst [vmem:[%s328 + $0x688] sm:$0xff] %v747
                %v749 = vld [vmem:[%s327 + $0xc90] sm:$0xff]
                %750 = vst [vmem:[%s328 + $0x690] sm:$0xff] %v749
                %v751 = vld [vmem:[%s327 + $0xc98] sm:$0xff]
                %752 = vst [vmem:[%s328 + $0x698] sm:$0xff] %v751
                %v753 = vld [vmem:[%s327 + $0xca0] sm:$0xff]
                %754 = vst [vmem:[%s328 + $0x6a0] sm:$0xff] %v753
                %v755 = vld [vmem:[%s327 + $0xca8] sm:$0xff]
                %756 = vst [vmem:[%s328 + $0x6a8] sm:$0xff] %v755
                %v757 = vld [vmem:[%s327 + $0xcb0] sm:$0xff]
                %758 = vst [vmem:[%s328 + $0x6b0] sm:$0xff] %v757
                %v759 = vld [vmem:[%s327 + $0xcb8] sm:$0xff]
                %760 = vst [vmem:[%s328 + $0x6b8] sm:$0xff] %v759
                %v761 = vld [vmem:[%s327 + $0xcc0] sm:$0xff]
                %762 = vst [vmem:[%s328 + $0x6c0] sm:$0xff] %v761
                %v763 = vld [vmem:[%s327 + $0xcc8] sm:$0xff]
                %764 = vst [vmem:[%s328 + $0x6c8] sm:$0xff] %v763
                %v765 = vld [vmem:[%s327 + $0xcd0] sm:$0xff]
                %766 = vst [vmem:[%s328 + $0x6d0] sm:$0xff] %v765
                %v767 = vld [vmem:[%s327 + $0xcd8] sm:$0xff]
                %768 = vst [vmem:[%s328 + $0x6d8] sm:$0xff] %v767
                %v769 = vld [vmem:[%s327 + $0xce0] sm:$0xff]
                %770 = vst [vmem:[%s328 + $0x6e0] sm:$0xff] %v769
                %v771 = vld [vmem:[%s327 + $0xce8] sm:$0xff]
                %772 = vst [vmem:[%s328 + $0x6e8] sm:$0xff] %v771
                %v773 = vld [vmem:[%s327 + $0xcf0] sm:$0xff]
                %774 = vst [vmem:[%s328 + $0x6f0] sm:$0xff] %v773
                %v775 = vld [vmem:[%s327 + $0xcf8] sm:$0xff]
                %776 = vst [vmem:[%s328 + $0x6f8] sm:$0xff] %v775
                %v777 = vld [vmem:[%s327 + $0xd00] sm:$0xff]
                %778 = vst [vmem:[%s328 + $0x700] sm:$0xff] %v777
                %v779 = vld [vmem:[%s327 + $0xd08] sm:$0xff]
                %780 = vst [vmem:[%s328 + $0x708] sm:$0xff] %v779
                %v781 = vld [vmem:[%s327 + $0xd10] sm:$0xff]
                %782 = vst [vmem:[%s328 + $0x710] sm:$0xff] %v781
                %v783 = vld [vmem:[%s327 + $0xd18] sm:$0xff]
                %784 = vst [vmem:[%s328 + $0x718] sm:$0xff] %v783
                %v785 = vld [vmem:[%s327 + $0xd20] sm:$0xff]
                %786 = vst [vmem:[%s328 + $0x720] sm:$0xff] %v785
                %v787 = vld [vmem:[%s327 + $0xd28] sm:$0xff]
                %788 = vst [vmem:[%s328 + $0x728] sm:$0xff] %v787
                %v789 = vld [vmem:[%s327 + $0xd30] sm:$0xff]
                %790 = vst [vmem:[%s328 + $0x730] sm:$0xff] %v789
                %v791 = vld [vmem:[%s327 + $0xd38] sm:$0xff]
                %792 = vst [vmem:[%s328 + $0x738] sm:$0xff] %v791
                %v793 = vld [vmem:[%s327 + $0xd40] sm:$0xff]
                %794 = vst [vmem:[%s328 + $0x740] sm:$0xff] %v793
                %v795 = vld [vmem:[%s327 + $0xd48] sm:$0xff]
                %796 = vst [vmem:[%s328 + $0x748] sm:$0xff] %v795
                %v797 = vld [vmem:[%s327 + $0xd50] sm:$0xff]
                %798 = vst [vmem:[%s328 + $0x750] sm:$0xff] %v797
                %v799 = vld [vmem:[%s327 + $0xd58] sm:$0xff]
                %800 = vst [vmem:[%s328 + $0x758] sm:$0xff] %v799
                %v801 = vld [vmem:[%s327 + $0xd60] sm:$0xff]
                %802 = vst [vmem:[%s328 + $0x760] sm:$0xff] %v801
                %v803 = vld [vmem:[%s327 + $0xd68] sm:$0xff]
                %804 = vst [vmem:[%s328 + $0x768] sm:$0xff] %v803
                %v805 = vld [vmem:[%s327 + $0xd70] sm:$0xff]
                %806 = vst [vmem:[%s328 + $0x770] sm:$0xff] %v805
                %v807 = vld [vmem:[%s327 + $0xd78] sm:$0xff]
                %808 = vst [vmem:[%s328 + $0x778] sm:$0xff] %v807
                %v809 = vld [vmem:[%s327 + $0xd80] sm:$0xff]
                %810 = vst [vmem:[%s328 + $0x780] sm:$0xff] %v809
                %v811 = vld [vmem:[%s327 + $0xd88] sm:$0xff]
                %812 = vst [vmem:[%s328 + $0x788] sm:$0xff] %v811
                %v813 = vld [vmem:[%s327 + $0xd90] sm:$0xff]
                %814 = vst [vmem:[%s328 + $0x790] sm:$0xff] %v813
                %v815 = vld [vmem:[%s327 + $0xd98] sm:$0xff]
                %816 = vst [vmem:[%s328 + $0x798] sm:$0xff] %v815
                %v817 = vld [vmem:[%s327 + $0xda0] sm:$0xff]
                %818 = vst [vmem:[%s328 + $0x7a0] sm:$0xff] %v817
                %v819 = vld [vmem:[%s327 + $0xda8] sm:$0xff]
                %820 = vst [vmem:[%s328 + $0x7a8] sm:$0xff] %v819
                %v821 = vld [vmem:[%s327 + $0xdb0] sm:$0xff]
                %822 = vst [vmem:[%s328 + $0x7b0] sm:$0xff] %v821
                %v823 = vld [vmem:[%s327 + $0xdb8] sm:$0xff]
                %824 = vst [vmem:[%s328 + $0x7b8] sm:$0xff] %v823
                %v825 = vld [vmem:[%s327 + $0xdc0] sm:$0xff]
                %826 = vst [vmem:[%s328 + $0x7c0] sm:$0xff] %v825
                %v827 = vld [vmem:[%s327 + $0xdc8] sm:$0xff]
                %828 = vst [vmem:[%s328 + $0x7c8] sm:$0xff] %v827
                %v829 = vld [vmem:[%s327 + $0xdd0] sm:$0xff]
                %830 = vst [vmem:[%s328 + $0x7d0] sm:$0xff] %v829
                %v831 = vld [vmem:[%s327 + $0xdd8] sm:$0xff]
                %832 = vst [vmem:[%s328 + $0x7d8] sm:$0xff] %v831
                %v833 = vld [vmem:[%s327 + $0xde0] sm:$0xff]
                %834 = vst [vmem:[%s328 + $0x7e0] sm:$0xff] %v833
                %v835 = vld [vmem:[%s327 + $0xde8] sm:$0xff]
                %836 = vst [vmem:[%s328 + $0x7e8] sm:$0xff] %v835
                %v837 = vld [vmem:[%s327 + $0xdf0] sm:$0xff]
                %838 = vst [vmem:[%s328 + $0x7f0] sm:$0xff] %v837
                %v839 = vld [vmem:[%s327 + $0xdf8] sm:$0xff]
                %840 = vst [vmem:[%s328 + $0x7f8] sm:$0xff] %v839
                %v841 = vld [vmem:[%s327 + $0x1000] sm:$0xff]
                %842 = vst [vmem:[%s328 + $0x800] sm:$0xff] %v841
                %v843 = vld [vmem:[%s327 + $0x1008] sm:$0xff]
                %844 = vst [vmem:[%s328 + $0x808] sm:$0xff] %v843
                %v845 = vld [vmem:[%s327 + $0x1010] sm:$0xff]
                %846 = vst [vmem:[%s328 + $0x810] sm:$0xff] %v845
                %v847 = vld [vmem:[%s327 + $0x1018] sm:$0xff]
                %848 = vst [vmem:[%s328 + $0x818] sm:$0xff] %v847
                %v849 = vld [vmem:[%s327 + $0x1020] sm:$0xff]
                %850 = vst [vmem:[%s328 + $0x820] sm:$0xff] %v849
                %v851 = vld [vmem:[%s327 + $0x1028] sm:$0xff]
                %852 = vst [vmem:[%s328 + $0x828] sm:$0xff] %v851
                %v853 = vld [vmem:[%s327 + $0x1030] sm:$0xff]
                %854 = vst [vmem:[%s328 + $0x830] sm:$0xff] %v853
                %v855 = vld [vmem:[%s327 + $0x1038] sm:$0xff]
                %856 = vst [vmem:[%s328 + $0x838] sm:$0xff] %v855
                %v857 = vld [vmem:[%s327 + $0x1040] sm:$0xff]
                %858 = vst [vmem:[%s328 + $0x840] sm:$0xff] %v857
                %v859 = vld [vmem:[%s327 + $0x1048] sm:$0xff]
                %860 = vst [vmem:[%s328 + $0x848] sm:$0xff] %v859
                %v861 = vld [vmem:[%s327 + $0x1050] sm:$0xff]
                %862 = vst [vmem:[%s328 + $0x850] sm:$0xff] %v861
                %v863 = vld [vmem:[%s327 + $0x1058] sm:$0xff]
                %864 = vst [vmem:[%s328 + $0x858] sm:$0xff] %v863
                %v865 = vld [vmem:[%s327 + $0x1060] sm:$0xff]
                %866 = vst [vmem:[%s328 + $0x860] sm:$0xff] %v865
                %v867 = vld [vmem:[%s327 + $0x1068] sm:$0xff]
                %868 = vst [vmem:[%s328 + $0x868] sm:$0xff] %v867
                %v869 = vld [vmem:[%s327 + $0x1070] sm:$0xff]
                %870 = vst [vmem:[%s328 + $0x870] sm:$0xff] %v869
                %v871 = vld [vmem:[%s327 + $0x1078] sm:$0xff]
                %872 = vst [vmem:[%s328 + $0x878] sm:$0xff] %v871
                %v873 = vld [vmem:[%s327 + $0x1080] sm:$0xff]
                %874 = vst [vmem:[%s328 + $0x880] sm:$0xff] %v873
                %v875 = vld [vmem:[%s327 + $0x1088] sm:$0xff]
                %876 = vst [vmem:[%s328 + $0x888] sm:$0xff] %v875
                %v877 = vld [vmem:[%s327 + $0x1090] sm:$0xff]
                %878 = vst [vmem:[%s328 + $0x890] sm:$0xff] %v877
                %v879 = vld [vmem:[%s327 + $0x1098] sm:$0xff]
                %880 = vst [vmem:[%s328 + $0x898] sm:$0xff] %v879
                %v881 = vld [vmem:[%s327 + $0x10a0] sm:$0xff]
                %882 = vst [vmem:[%s328 + $0x8a0] sm:$0xff] %v881
                %v883 = vld [vmem:[%s327 + $0x10a8] sm:$0xff]
                %884 = vst [vmem:[%s328 + $0x8a8] sm:$0xff] %v883
                %v885 = vld [vmem:[%s327 + $0x10b0] sm:$0xff]
                %886 = vst [vmem:[%s328 + $0x8b0] sm:$0xff] %v885
                %v887 = vld [vmem:[%s327 + $0x10b8] sm:$0xff]
                %888 = vst [vmem:[%s328 + $0x8b8] sm:$0xff] %v887
                %v889 = vld [vmem:[%s327 + $0x10c0] sm:$0xff]
                %890 = vst [vmem:[%s328 + $0x8c0] sm:$0xff] %v889
                %v891 = vld [vmem:[%s327 + $0x10c8] sm:$0xff]
                %892 = vst [vmem:[%s328 + $0x8c8] sm:$0xff] %v891
                %v893 = vld [vmem:[%s327 + $0x10d0] sm:$0xff]
                %894 = vst [vmem:[%s328 + $0x8d0] sm:$0xff] %v893
                %v895 = vld [vmem:[%s327 + $0x10d8] sm:$0xff]
                %896 = vst [vmem:[%s328 + $0x8d8] sm:$0xff] %v895
                %v897 = vld [vmem:[%s327 + $0x10e0] sm:$0xff]
                %898 = vst [vmem:[%s328 + $0x8e0] sm:$0xff] %v897
                %v899 = vld [vmem:[%s327 + $0x10e8] sm:$0xff]
                %900 = vst [vmem:[%s328 + $0x8e8] sm:$0xff] %v899
                %v901 = vld [vmem:[%s327 + $0x10f0] sm:$0xff]
                %902 = vst [vmem:[%s328 + $0x8f0] sm:$0xff] %v901
                %v903 = vld [vmem:[%s327 + $0x10f8] sm:$0xff]
                %904 = vst [vmem:[%s328 + $0x8f8] sm:$0xff] %v903
                %v905 = vld [vmem:[%s327 + $0x1100] sm:$0xff]
                %906 = vst [vmem:[%s328 + $0x900] sm:$0xff] %v905
                %v907 = vld [vmem:[%s327 + $0x1108] sm:$0xff]
                %908 = vst [vmem:[%s328 + $0x908] sm:$0xff] %v907
                %v909 = vld [vmem:[%s327 + $0x1110] sm:$0xff]
                %910 = vst [vmem:[%s328 + $0x910] sm:$0xff] %v909
                %v911 = vld [vmem:[%s327 + $0x1118] sm:$0xff]
                %912 = vst [vmem:[%s328 + $0x918] sm:$0xff] %v911
                %v913 = vld [vmem:[%s327 + $0x1120] sm:$0xff]
                %914 = vst [vmem:[%s328 + $0x920] sm:$0xff] %v913
                %v915 = vld [vmem:[%s327 + $0x1128] sm:$0xff]
                %916 = vst [vmem:[%s328 + $0x928] sm:$0xff] %v915
                %v917 = vld [vmem:[%s327 + $0x1130] sm:$0xff]
                %918 = vst [vmem:[%s328 + $0x930] sm:$0xff] %v917
                %v919 = vld [vmem:[%s327 + $0x1138] sm:$0xff]
                %920 = vst [vmem:[%s328 + $0x938] sm:$0xff] %v919
                %v921 = vld [vmem:[%s327 + $0x1140] sm:$0xff]
                %922 = vst [vmem:[%s328 + $0x940] sm:$0xff] %v921
                %v923 = vld [vmem:[%s327 + $0x1148] sm:$0xff]
                %924 = vst [vmem:[%s328 + $0x948] sm:$0xff] %v923
                %v925 = vld [vmem:[%s327 + $0x1150] sm:$0xff]
                %926 = vst [vmem:[%s328 + $0x950] sm:$0xff] %v925
                %v927 = vld [vmem:[%s327 + $0x1158] sm:$0xff]
                %928 = vst [vmem:[%s328 + $0x958] sm:$0xff] %v927
                %v929 = vld [vmem:[%s327 + $0x1160] sm:$0xff]
                %930 = vst [vmem:[%s328 + $0x960] sm:$0xff] %v929
                %v931 = vld [vmem:[%s327 + $0x1168] sm:$0xff]
                %932 = vst [vmem:[%s328 + $0x968] sm:$0xff] %v931
                %v933 = vld [vmem:[%s327 + $0x1170] sm:$0xff]
                %934 = vst [vmem:[%s328 + $0x970] sm:$0xff] %v933
                %v935 = vld [vmem:[%s327 + $0x1178] sm:$0xff]
                %936 = vst [vmem:[%s328 + $0x978] sm:$0xff] %v935
                %v937 = vld [vmem:[%s327 + $0x1180] sm:$0xff]
                %938 = vst [vmem:[%s328 + $0x980] sm:$0xff] %v937
                %v939 = vld [vmem:[%s327 + $0x1188] sm:$0xff]
                %940 = vst [vmem:[%s328 + $0x988] sm:$0xff] %v939
                %v941 = vld [vmem:[%s327 + $0x1190] sm:$0xff]
                %942 = vst [vmem:[%s328 + $0x990] sm:$0xff] %v941
                %v943 = vld [vmem:[%s327 + $0x1198] sm:$0xff]
                %944 = vst [vmem:[%s328 + $0x998] sm:$0xff] %v943
                %v945 = vld [vmem:[%s327 + $0x11a0] sm:$0xff]
                %946 = vst [vmem:[%s328 + $0x9a0] sm:$0xff] %v945
                %v947 = vld [vmem:[%s327 + $0x11a8] sm:$0xff]
                %948 = vst [vmem:[%s328 + $0x9a8] sm:$0xff] %v947
                %v949 = vld [vmem:[%s327 + $0x11b0] sm:$0xff]
                %950 = vst [vmem:[%s328 + $0x9b0] sm:$0xff] %v949
                %v951 = vld [vmem:[%s327 + $0x11b8] sm:$0xff]
                %952 = vst [vmem:[%s328 + $0x9b8] sm:$0xff] %v951
                %v953 = vld [vmem:[%s327 + $0x11c0] sm:$0xff]
                %954 = vst [vmem:[%s328 + $0x9c0] sm:$0xff] %v953
                %v955 = vld [vmem:[%s327 + $0x11c8] sm:$0xff]
                %956 = vst [vmem:[%s328 + $0x9c8] sm:$0xff] %v955
                %v957 = vld [vmem:[%s327 + $0x11d0] sm:$0xff]
                %958 = vst [vmem:[%s328 + $0x9d0] sm:$0xff] %v957
                %v959 = vld [vmem:[%s327 + $0x11d8] sm:$0xff]
                %960 = vst [vmem:[%s328 + $0x9d8] sm:$0xff] %v959
                %v961 = vld [vmem:[%s327 + $0x11e0] sm:$0xff]
                %962 = vst [vmem:[%s328 + $0x9e0] sm:$0xff] %v961
                %v963 = vld [vmem:[%s327 + $0x11e8] sm:$0xff]
                %964 = vst [vmem:[%s328 + $0x9e8] sm:$0xff] %v963
                %v965 = vld [vmem:[%s327 + $0x11f0] sm:$0xff]
                %966 = vst [vmem:[%s328 + $0x9f0] sm:$0xff] %v965
                %v967 = vld [vmem:[%s327 + $0x11f8] sm:$0xff]
                %968 = vst [vmem:[%s328 + $0x9f8] sm:$0xff] %v967
                %v969 = vld [vmem:[%s327 + $0x1400] sm:$0xff]
                %970 = vst [vmem:[%s328 + $0xa00] sm:$0xff] %v969
                %v971 = vld [vmem:[%s327 + $0x1408] sm:$0xff]
                %972 = vst [vmem:[%s328 + $0xa08] sm:$0xff] %v971
                %v973 = vld [vmem:[%s327 + $0x1410] sm:$0xff]
                %974 = vst [vmem:[%s328 + $0xa10] sm:$0xff] %v973
                %v975 = vld [vmem:[%s327 + $0x1418] sm:$0xff]
                %976 = vst [vmem:[%s328 + $0xa18] sm:$0xff] %v975
                %v977 = vld [vmem:[%s327 + $0x1420] sm:$0xff]
                %978 = vst [vmem:[%s328 + $0xa20] sm:$0xff] %v977
                %v979 = vld [vmem:[%s327 + $0x1428] sm:$0xff]
                %980 = vst [vmem:[%s328 + $0xa28] sm:$0xff] %v979
                %v981 = vld [vmem:[%s327 + $0x1430] sm:$0xff]
                %982 = vst [vmem:[%s328 + $0xa30] sm:$0xff] %v981
                %v983 = vld [vmem:[%s327 + $0x1438] sm:$0xff]
                %984 = vst [vmem:[%s328 + $0xa38] sm:$0xff] %v983
                %v985 = vld [vmem:[%s327 + $0x1440] sm:$0xff]
                %986 = vst [vmem:[%s328 + $0xa40] sm:$0xff] %v985
                %v987 = vld [vmem:[%s327 + $0x1448] sm:$0xff]
                %988 = vst [vmem:[%s328 + $0xa48] sm:$0xff] %v987
                %v989 = vld [vmem:[%s327 + $0x1450] sm:$0xff]
                %990 = vst [vmem:[%s328 + $0xa50] sm:$0xff] %v989
                %v991 = vld [vmem:[%s327 + $0x1458] sm:$0xff]
                %992 = vst [vmem:[%s328 + $0xa58] sm:$0xff] %v991
                %v993 = vld [vmem:[%s327 + $0x1460] sm:$0xff]
                %994 = vst [vmem:[%s328 + $0xa60] sm:$0xff] %v993
                %v995 = vld [vmem:[%s327 + $0x1468] sm:$0xff]
                %996 = vst [vmem:[%s328 + $0xa68] sm:$0xff] %v995
                %v997 = vld [vmem:[%s327 + $0x1470] sm:$0xff]
                %998 = vst [vmem:[%s328 + $0xa70] sm:$0xff] %v997
                %v999 = vld [vmem:[%s327 + $0x1478] sm:$0xff]
                %1000 = vst [vmem:[%s328 + $0xa78] sm:$0xff] %v999
                %v1001 = vld [vmem:[%s327 + $0x1480] sm:$0xff]
                %1002 = vst [vmem:[%s328 + $0xa80] sm:$0xff] %v1001
                %v1003 = vld [vmem:[%s327 + $0x1488] sm:$0xff]
                %1004 = vst [vmem:[%s328 + $0xa88] sm:$0xff] %v1003
                %v1005 = vld [vmem:[%s327 + $0x1490] sm:$0xff]
                %1006 = vst [vmem:[%s328 + $0xa90] sm:$0xff] %v1005
                %v1007 = vld [vmem:[%s327 + $0x1498] sm:$0xff]
                %1008 = vst [vmem:[%s328 + $0xa98] sm:$0xff] %v1007
                %v1009 = vld [vmem:[%s327 + $0x14a0] sm:$0xff]
                %1010 = vst [vmem:[%s328 + $0xaa0] sm:$0xff] %v1009
                %v1011 = vld [vmem:[%s327 + $0x14a8] sm:$0xff]
                %1012 = vst [vmem:[%s328 + $0xaa8] sm:$0xff] %v1011
                %v1013 = vld [vmem:[%s327 + $0x14b0] sm:$0xff]
                %1014 = vst [vmem:[%s328 + $0xab0] sm:$0xff] %v1013
                %v1015 = vld [vmem:[%s327 + $0x14b8] sm:$0xff]
                %1016 = vst [vmem:[%s328 + $0xab8] sm:$0xff] %v1015
                %v1017 = vld [vmem:[%s327 + $0x14c0] sm:$0xff]
                %1018 = vst [vmem:[%s328 + $0xac0] sm:$0xff] %v1017
                %v1019 = vld [vmem:[%s327 + $0x14c8] sm:$0xff]
                %1020 = vst [vmem:[%s328 + $0xac8] sm:$0xff] %v1019
                %v1021 = vld [vmem:[%s327 + $0x14d0] sm:$0xff]
                %1022 = vst [vmem:[%s328 + $0xad0] sm:$0xff] %v1021
                %v1023 = vld [vmem:[%s327 + $0x14d8] sm:$0xff]
                %1024 = vst [vmem:[%s328 + $0xad8] sm:$0xff] %v1023
                %v1025 = vld [vmem:[%s327 + $0x14e0] sm:$0xff]
                %1026 = vst [vmem:[%s328 + $0xae0] sm:$0xff] %v1025
                %v1027 = vld [vmem:[%s327 + $0x14e8] sm:$0xff]
                %1028 = vst [vmem:[%s328 + $0xae8] sm:$0xff] %v1027
                %v1029 = vld [vmem:[%s327 + $0x14f0] sm:$0xff]
                %1030 = vst [vmem:[%s328 + $0xaf0] sm:$0xff] %v1029
                %v1031 = vld [vmem:[%s327 + $0x14f8] sm:$0xff]
                %1032 = vst [vmem:[%s328 + $0xaf8] sm:$0xff] %v1031
                %v1033 = vld [vmem:[%s327 + $0x1500] sm:$0xff]
                %1034 = vst [vmem:[%s328 + $0xb00] sm:$0xff] %v1033
                %v1035 = vld [vmem:[%s327 + $0x1508] sm:$0xff]
                %1036 = vst [vmem:[%s328 + $0xb08] sm:$0xff] %v1035
                %v1037 = vld [vmem:[%s327 + $0x1510] sm:$0xff]
                %1038 = vst [vmem:[%s328 + $0xb10] sm:$0xff] %v1037
                %v1039 = vld [vmem:[%s327 + $0x1518] sm:$0xff]
                %1040 = vst [vmem:[%s328 + $0xb18] sm:$0xff] %v1039
                %v1041 = vld [vmem:[%s327 + $0x1520] sm:$0xff]
                %1042 = vst [vmem:[%s328 + $0xb20] sm:$0xff] %v1041
                %v1043 = vld [vmem:[%s327 + $0x1528] sm:$0xff]
                %1044 = vst [vmem:[%s328 + $0xb28] sm:$0xff] %v1043
                %v1045 = vld [vmem:[%s327 + $0x1530] sm:$0xff]
                %1046 = vst [vmem:[%s328 + $0xb30] sm:$0xff] %v1045
                %v1047 = vld [vmem:[%s327 + $0x1538] sm:$0xff]
                %1048 = vst [vmem:[%s328 + $0xb38] sm:$0xff] %v1047
                %v1049 = vld [vmem:[%s327 + $0x1540] sm:$0xff]
                %1050 = vst [vmem:[%s328 + $0xb40] sm:$0xff] %v1049
                %v1051 = vld [vmem:[%s327 + $0x1548] sm:$0xff]
                %1052 = vst [vmem:[%s328 + $0xb48] sm:$0xff] %v1051
                %v1053 = vld [vmem:[%s327 + $0x1550] sm:$0xff]
                %1054 = vst [vmem:[%s328 + $0xb50] sm:$0xff] %v1053
                %v1055 = vld [vmem:[%s327 + $0x1558] sm:$0xff]
                %1056 = vst [vmem:[%s328 + $0xb58] sm:$0xff] %v1055
                %v1057 = vld [vmem:[%s327 + $0x1560] sm:$0xff]
                %1058 = vst [vmem:[%s328 + $0xb60] sm:$0xff] %v1057
                %v1059 = vld [vmem:[%s327 + $0x1568] sm:$0xff]
                %1060 = vst [vmem:[%s328 + $0xb68] sm:$0xff] %v1059
                %v1061 = vld [vmem:[%s327 + $0x1570] sm:$0xff]
                %1062 = vst [vmem:[%s328 + $0xb70] sm:$0xff] %v1061
                %v1063 = vld [vmem:[%s327 + $0x1578] sm:$0xff]
                %1064 = vst [vmem:[%s328 + $0xb78] sm:$0xff] %v1063
                %v1065 = vld [vmem:[%s327 + $0x1580] sm:$0xff]
                %1066 = vst [vmem:[%s328 + $0xb80] sm:$0xff] %v1065
                %v1067 = vld [vmem:[%s327 + $0x1588] sm:$0xff]
                %1068 = vst [vmem:[%s328 + $0xb88] sm:$0xff] %v1067
                %v1069 = vld [vmem:[%s327 + $0x1590] sm:$0xff]
                %1070 = vst [vmem:[%s328 + $0xb90] sm:$0xff] %v1069
                %v1071 = vld [vmem:[%s327 + $0x1598] sm:$0xff]
                %1072 = vst [vmem:[%s328 + $0xb98] sm:$0xff] %v1071
                %v1073 = vld [vmem:[%s327 + $0x15a0] sm:$0xff]
                %1074 = vst [vmem:[%s328 + $0xba0] sm:$0xff] %v1073
                %v1075 = vld [vmem:[%s327 + $0x15a8] sm:$0xff]
                %1076 = vst [vmem:[%s328 + $0xba8] sm:$0xff] %v1075
                %v1077 = vld [vmem:[%s327 + $0x15b0] sm:$0xff]
                %1078 = vst [vmem:[%s328 + $0xbb0] sm:$0xff] %v1077
                %v1079 = vld [vmem:[%s327 + $0x15b8] sm:$0xff]
                %1080 = vst [vmem:[%s328 + $0xbb8] sm:$0xff] %v1079
                %v1081 = vld [vmem:[%s327 + $0x15c0] sm:$0xff]
                %1082 = vst [vmem:[%s328 + $0xbc0] sm:$0xff] %v1081
                %v1083 = vld [vmem:[%s327 + $0x15c8] sm:$0xff]
                %1084 = vst [vmem:[%s328 + $0xbc8] sm:$0xff] %v1083
                %v1085 = vld [vmem:[%s327 + $0x15d0] sm:$0xff]
                %1086 = vst [vmem:[%s328 + $0xbd0] sm:$0xff] %v1085
                %v1087 = vld [vmem:[%s327 + $0x15d8] sm:$0xff]
                %1088 = vst [vmem:[%s328 + $0xbd8] sm:$0xff] %v1087
                %v1089 = vld [vmem:[%s327 + $0x15e0] sm:$0xff]
                %1090 = vst [vmem:[%s328 + $0xbe0] sm:$0xff] %v1089
                %v1091 = vld [vmem:[%s327 + $0x15e8] sm:$0xff]
                %1092 = vst [vmem:[%s328 + $0xbe8] sm:$0xff] %v1091
                %v1093 = vld [vmem:[%s327 + $0x15f0] sm:$0xff]
                %1094 = vst [vmem:[%s328 + $0xbf0] sm:$0xff] %v1093
                %v1095 = vld [vmem:[%s327 + $0x15f8] sm:$0xff]
                %1096 = vst [vmem:[%s328 + $0xbf8] sm:$0xff] %v1095
              $region49: #{swinvit_mlp_v3_forward.1} parent=43 // loop_footer
                %s326 = sadd.s32 1, %s322
              $region50: #{swinvit_mlp_v3_forward.1} parent=43 // loop_footer_branch
                %321 = sbr.rel target = $region46
              $region51: #{swinvit_mlp_v3_forward.1} parent=43 // loop_exit
                _
            $region44: #{swinvit_mlp_v3_forward.1} parent=39 // pred_fallthru
              _
            // Predicated region
            $region52: #{swinvit_mlp_v3_forward.1} parent=39 // pred_check
              _
            $region53: #{swinvit_mlp_v3_forward.1} parent=39 // pred_check_branch
              %1098 = sbr.rel target = $region55
            $region54: #{swinvit_mlp_v3_forward.1} parent=39 // pred_region
              _
            $region55: #{swinvit_mlp_v3_forward.1} parent=39 // pred_fallthru
              _
          $region40: #{swinvit_mlp_v3_forward.1} parent=35 // pred_fallthru
            _
          %1099 = vnop
        $region36: #{swinvit_mlp_v3_forward.1} parent=31 // pred_fallthru
          _
        // Predicated region
        $region56: #{swinvit_mlp_v3_forward.1} parent=31 // pred_check
          %p1100 = pneg %p80
        $region57: #{swinvit_mlp_v3_forward.1} parent=31 // pred_check_branch
          %1102 = sbr.rel (%p1100) target = $region59
        $region58: #{swinvit_mlp_v3_forward.1} parent=31 // pred_region
          %s1103 = sand.u32 %s70, 1
          %s1104 = sand.u32 %s70, 1
          %s1105 = smul.addr %s1104, 768
          %s1106 = scalar_lea.vmem [#allocation5], %s1105
          %s1107 = smul.u32 16, %s26
          %s1108 = smul.addr %s25, 384
          %s1109 = sadd.s32 %s1107, %s1108
          %s1110 = smul.addr %s1109, 4
          %s1111 = scalar_lea.vmem %s1, %s1110
          // Predicated region
          $region60: #{swinvit_mlp_v3_forward.1} parent=58 // pred_check
            _
          $region61: #{swinvit_mlp_v3_forward.1} parent=58 // pred_check_branch
            %1113 = sbr.rel (0) target = $region63
          $region62: #{swinvit_mlp_v3_forward.1} parent=58 // pred_region
            // Predicated region
            $region64: #{swinvit_mlp_v3_forward.1} parent=62 // pred_check
              _
            $region65: #{swinvit_mlp_v3_forward.1} parent=62 // pred_check_branch
              %1115 = sbr.rel (0) target = $region67
            $region66: #{swinvit_mlp_v3_forward.1} parent=62 // pred_region
              loop: start=0, step=1, limit=1
              $region68: #{swinvit_mlp_v3_forward.1} parent=66 // loop_pre_header
                _
              $region69: #{swinvit_mlp_v3_forward.1} parent=66 // loop_header
                %s1117 = sphi 0, %s1121
                %p1118 = scmp.ge.s32.totalorder %s1117, 1
                %s1122 = sphi %s1111, %s1111
                %s1123 = sphi %s1106, %s1106
              $region70: #{swinvit_mlp_v3_forward.1} parent=66 // loop_header_branch
                %1120 = sbr.rel (%p1118) target = $region74
              $region71: #{swinvit_mlp_v3_forward.1} parent=66 // loop_body
                %v1124 = vld [vmem:[%s1122] sm:$0xff]
                %1125 = vst [vmem:[%s1123] sm:$0xff] %v1124
                %v1126 = vld [vmem:[%s1122 + $0x8] sm:$0xff]
                %1127 = vst [vmem:[%s1123 + $0x8] sm:$0xff] %v1126
                %v1128 = vld [vmem:[%s1122 + $0x10] sm:$0xff]
                %1129 = vst [vmem:[%s1123 + $0x10] sm:$0xff] %v1128
                %v1130 = vld [vmem:[%s1122 + $0x18] sm:$0xff]
                %1131 = vst [vmem:[%s1123 + $0x18] sm:$0xff] %v1130
                %v1132 = vld [vmem:[%s1122 + $0x20] sm:$0xff]
                %1133 = vst [vmem:[%s1123 + $0x20] sm:$0xff] %v1132
                %v1134 = vld [vmem:[%s1122 + $0x28] sm:$0xff]
                %1135 = vst [vmem:[%s1123 + $0x28] sm:$0xff] %v1134
                %v1136 = vld [vmem:[%s1122 + $0x30] sm:$0xff]
                %1137 = vst [vmem:[%s1123 + $0x30] sm:$0xff] %v1136
                %v1138 = vld [vmem:[%s1122 + $0x38] sm:$0xff]
                %1139 = vst [vmem:[%s1123 + $0x38] sm:$0xff] %v1138
                %v1140 = vld [vmem:[%s1122 + $0x80] sm:$0xff]
                %1141 = vst [vmem:[%s1123 + $0x40] sm:$0xff] %v1140
                %v1142 = vld [vmem:[%s1122 + $0x88] sm:$0xff]
                %1143 = vst [vmem:[%s1123 + $0x48] sm:$0xff] %v1142
                %v1144 = vld [vmem:[%s1122 + $0x90] sm:$0xff]
                %1145 = vst [vmem:[%s1123 + $0x50] sm:$0xff] %v1144
                %v1146 = vld [vmem:[%s1122 + $0x98] sm:$0xff]
                %1147 = vst [vmem:[%s1123 + $0x58] sm:$0xff] %v1146
                %v1148 = vld [vmem:[%s1122 + $0xa0] sm:$0xff]
                %1149 = vst [vmem:[%s1123 + $0x60] sm:$0xff] %v1148
                %v1150 = vld [vmem:[%s1122 + $0xa8] sm:$0xff]
                %1151 = vst [vmem:[%s1123 + $0x68] sm:$0xff] %v1150
                %v1152 = vld [vmem:[%s1122 + $0xb0] sm:$0xff]
                %1153 = vst [vmem:[%s1123 + $0x70] sm:$0xff] %v1152
                %v1154 = vld [vmem:[%s1122 + $0xb8] sm:$0xff]
                %1155 = vst [vmem:[%s1123 + $0x78] sm:$0xff] %v1154
                %v1156 = vld [vmem:[%s1122 + $0x100] sm:$0xff]
                %1157 = vst [vmem:[%s1123 + $0x80] sm:$0xff] %v1156
                %v1158 = vld [vmem:[%s1122 + $0x108] sm:$0xff]
                %1159 = vst [vmem:[%s1123 + $0x88] sm:$0xff] %v1158
                %v1160 = vld [vmem:[%s1122 + $0x110] sm:$0xff]
                %1161 = vst [vmem:[%s1123 + $0x90] sm:$0xff] %v1160
                %v1162 = vld [vmem:[%s1122 + $0x118] sm:$0xff]
                %1163 = vst [vmem:[%s1123 + $0x98] sm:$0xff] %v1162
                %v1164 = vld [vmem:[%s1122 + $0x120] sm:$0xff]
                %1165 = vst [vmem:[%s1123 + $0xa0] sm:$0xff] %v1164
                %v1166 = vld [vmem:[%s1122 + $0x128] sm:$0xff]
                %1167 = vst [vmem:[%s1123 + $0xa8] sm:$0xff] %v1166
                %v1168 = vld [vmem:[%s1122 + $0x130] sm:$0xff]
                %1169 = vst [vmem:[%s1123 + $0xb0] sm:$0xff] %v1168
                %v1170 = vld [vmem:[%s1122 + $0x138] sm:$0xff]
                %1171 = vst [vmem:[%s1123 + $0xb8] sm:$0xff] %v1170
                %v1172 = vld [vmem:[%s1122 + $0x180] sm:$0xff]
                %1173 = vst [vmem:[%s1123 + $0xc0] sm:$0xff] %v1172
                %v1174 = vld [vmem:[%s1122 + $0x188] sm:$0xff]
                %1175 = vst [vmem:[%s1123 + $0xc8] sm:$0xff] %v1174
                %v1176 = vld [vmem:[%s1122 + $0x190] sm:$0xff]
                %1177 = vst [vmem:[%s1123 + $0xd0] sm:$0xff] %v1176
                %v1178 = vld [vmem:[%s1122 + $0x198] sm:$0xff]
                %1179 = vst [vmem:[%s1123 + $0xd8] sm:$0xff] %v1178
                %v1180 = vld [vmem:[%s1122 + $0x1a0] sm:$0xff]
                %1181 = vst [vmem:[%s1123 + $0xe0] sm:$0xff] %v1180
                %v1182 = vld [vmem:[%s1122 + $0x1a8] sm:$0xff]
                %1183 = vst [vmem:[%s1123 + $0xe8] sm:$0xff] %v1182
                %v1184 = vld [vmem:[%s1122 + $0x1b0] sm:$0xff]
                %1185 = vst [vmem:[%s1123 + $0xf0] sm:$0xff] %v1184
                %v1186 = vld [vmem:[%s1122 + $0x1b8] sm:$0xff]
                %1187 = vst [vmem:[%s1123 + $0xf8] sm:$0xff] %v1186
                %v1188 = vld [vmem:[%s1122 + $0x200] sm:$0xff]
                %1189 = vst [vmem:[%s1123 + $0x100] sm:$0xff] %v1188
                %v1190 = vld [vmem:[%s1122 + $0x208] sm:$0xff]
                %1191 = vst [vmem:[%s1123 + $0x108] sm:$0xff] %v1190
                %v1192 = vld [vmem:[%s1122 + $0x210] sm:$0xff]
                %1193 = vst [vmem:[%s1123 + $0x110] sm:$0xff] %v1192
                %v1194 = vld [vmem:[%s1122 + $0x218] sm:$0xff]
                %1195 = vst [vmem:[%s1123 + $0x118] sm:$0xff] %v1194
                %v1196 = vld [vmem:[%s1122 + $0x220] sm:$0xff]
                %1197 = vst [vmem:[%s1123 + $0x120] sm:$0xff] %v1196
                %v1198 = vld [vmem:[%s1122 + $0x228] sm:$0xff]
                %1199 = vst [vmem:[%s1123 + $0x128] sm:$0xff] %v1198
                %v1200 = vld [vmem:[%s1122 + $0x230] sm:$0xff]
                %1201 = vst [vmem:[%s1123 + $0x130] sm:$0xff] %v1200
                %v1202 = vld [vmem:[%s1122 + $0x238] sm:$0xff]
                %1203 = vst [vmem:[%s1123 + $0x138] sm:$0xff] %v1202
                %v1204 = vld [vmem:[%s1122 + $0x280] sm:$0xff]
                %1205 = vst [vmem:[%s1123 + $0x140] sm:$0xff] %v1204
                %v1206 = vld [vmem:[%s1122 + $0x288] sm:$0xff]
                %1207 = vst [vmem:[%s1123 + $0x148] sm:$0xff] %v1206
                %v1208 = vld [vmem:[%s1122 + $0x290] sm:$0xff]
                %1209 = vst [vmem:[%s1123 + $0x150] sm:$0xff] %v1208
                %v1210 = vld [vmem:[%s1122 + $0x298] sm:$0xff]
                %1211 = vst [vmem:[%s1123 + $0x158] sm:$0xff] %v1210
                %v1212 = vld [vmem:[%s1122 + $0x2a0] sm:$0xff]
                %1213 = vst [vmem:[%s1123 + $0x160] sm:$0xff] %v1212
                %v1214 = vld [vmem:[%s1122 + $0x2a8] sm:$0xff]
                %1215 = vst [vmem:[%s1123 + $0x168] sm:$0xff] %v1214
                %v1216 = vld [vmem:[%s1122 + $0x2b0] sm:$0xff]
                %1217 = vst [vmem:[%s1123 + $0x170] sm:$0xff] %v1216
                %v1218 = vld [vmem:[%s1122 + $0x2b8] sm:$0xff]
                %1219 = vst [vmem:[%s1123 + $0x178] sm:$0xff] %v1218
                %v1220 = vld [vmem:[%s1122 + $0x300] sm:$0xff]
                %1221 = vst [vmem:[%s1123 + $0x180] sm:$0xff] %v1220
                %v1222 = vld [vmem:[%s1122 + $0x308] sm:$0xff]
                %1223 = vst [vmem:[%s1123 + $0x188] sm:$0xff] %v1222
                %v1224 = vld [vmem:[%s1122 + $0x310] sm:$0xff]
                %1225 = vst [vmem:[%s1123 + $0x190] sm:$0xff] %v1224
                %v1226 = vld [vmem:[%s1122 + $0x318] sm:$0xff]
                %1227 = vst [vmem:[%s1123 + $0x198] sm:$0xff] %v1226
                %v1228 = vld [vmem:[%s1122 + $0x320] sm:$0xff]
                %1229 = vst [vmem:[%s1123 + $0x1a0] sm:$0xff] %v1228
                %v1230 = vld [vmem:[%s1122 + $0x328] sm:$0xff]
                %1231 = vst [vmem:[%s1123 + $0x1a8] sm:$0xff] %v1230
                %v1232 = vld [vmem:[%s1122 + $0x330] sm:$0xff]
                %1233 = vst [vmem:[%s1123 + $0x1b0] sm:$0xff] %v1232
                %v1234 = vld [vmem:[%s1122 + $0x338] sm:$0xff]
                %1235 = vst [vmem:[%s1123 + $0x1b8] sm:$0xff] %v1234
                %v1236 = vld [vmem:[%s1122 + $0x380] sm:$0xff]
                %1237 = vst [vmem:[%s1123 + $0x1c0] sm:$0xff] %v1236
                %v1238 = vld [vmem:[%s1122 + $0x388] sm:$0xff]
                %1239 = vst [vmem:[%s1123 + $0x1c8] sm:$0xff] %v1238
                %v1240 = vld [vmem:[%s1122 + $0x390] sm:$0xff]
                %1241 = vst [vmem:[%s1123 + $0x1d0] sm:$0xff] %v1240
                %v1242 = vld [vmem:[%s1122 + $0x398] sm:$0xff]
                %1243 = vst [vmem:[%s1123 + $0x1d8] sm:$0xff] %v1242
                %v1244 = vld [vmem:[%s1122 + $0x3a0] sm:$0xff]
                %1245 = vst [vmem:[%s1123 + $0x1e0] sm:$0xff] %v1244
                %v1246 = vld [vmem:[%s1122 + $0x3a8] sm:$0xff]
                %1247 = vst [vmem:[%s1123 + $0x1e8] sm:$0xff] %v1246
                %v1248 = vld [vmem:[%s1122 + $0x3b0] sm:$0xff]
                %1249 = vst [vmem:[%s1123 + $0x1f0] sm:$0xff] %v1248
                %v1250 = vld [vmem:[%s1122 + $0x3b8] sm:$0xff]
                %1251 = vst [vmem:[%s1123 + $0x1f8] sm:$0xff] %v1250
                %v1252 = vld [vmem:[%s1122 + $0x400] sm:$0xff]
                %1253 = vst [vmem:[%s1123 + $0x200] sm:$0xff] %v1252
                %v1254 = vld [vmem:[%s1122 + $0x408] sm:$0xff]
                %1255 = vst [vmem:[%s1123 + $0x208] sm:$0xff] %v1254
                %v1256 = vld [vmem:[%s1122 + $0x410] sm:$0xff]
                %1257 = vst [vmem:[%s1123 + $0x210] sm:$0xff] %v1256
                %v1258 = vld [vmem:[%s1122 + $0x418] sm:$0xff]
                %1259 = vst [vmem:[%s1123 + $0x218] sm:$0xff] %v1258
                %v1260 = vld [vmem:[%s1122 + $0x420] sm:$0xff]
                %1261 = vst [vmem:[%s1123 + $0x220] sm:$0xff] %v1260
                %v1262 = vld [vmem:[%s1122 + $0x428] sm:$0xff]
                %1263 = vst [vmem:[%s1123 + $0x228] sm:$0xff] %v1262
                %v1264 = vld [vmem:[%s1122 + $0x430] sm:$0xff]
                %1265 = vst [vmem:[%s1123 + $0x230] sm:$0xff] %v1264
                %v1266 = vld [vmem:[%s1122 + $0x438] sm:$0xff]
                %1267 = vst [vmem:[%s1123 + $0x238] sm:$0xff] %v1266
                %v1268 = vld [vmem:[%s1122 + $0x480] sm:$0xff]
                %1269 = vst [vmem:[%s1123 + $0x240] sm:$0xff] %v1268
                %v1270 = vld [vmem:[%s1122 + $0x488] sm:$0xff]
                %1271 = vst [vmem:[%s1123 + $0x248] sm:$0xff] %v1270
                %v1272 = vld [vmem:[%s1122 + $0x490] sm:$0xff]
                %1273 = vst [vmem:[%s1123 + $0x250] sm:$0xff] %v1272
                %v1274 = vld [vmem:[%s1122 + $0x498] sm:$0xff]
                %1275 = vst [vmem:[%s1123 + $0x258] sm:$0xff] %v1274
                %v1276 = vld [vmem:[%s1122 + $0x4a0] sm:$0xff]
                %1277 = vst [vmem:[%s1123 + $0x260] sm:$0xff] %v1276
                %v1278 = vld [vmem:[%s1122 + $0x4a8] sm:$0xff]
                %1279 = vst [vmem:[%s1123 + $0x268] sm:$0xff] %v1278
                %v1280 = vld [vmem:[%s1122 + $0x4b0] sm:$0xff]
                %1281 = vst [vmem:[%s1123 + $0x270] sm:$0xff] %v1280
                %v1282 = vld [vmem:[%s1122 + $0x4b8] sm:$0xff]
                %1283 = vst [vmem:[%s1123 + $0x278] sm:$0xff] %v1282
                %v1284 = vld [vmem:[%s1122 + $0x500] sm:$0xff]
                %1285 = vst [vmem:[%s1123 + $0x280] sm:$0xff] %v1284
                %v1286 = vld [vmem:[%s1122 + $0x508] sm:$0xff]
                %1287 = vst [vmem:[%s1123 + $0x288] sm:$0xff] %v1286
                %v1288 = vld [vmem:[%s1122 + $0x510] sm:$0xff]
                %1289 = vst [vmem:[%s1123 + $0x290] sm:$0xff] %v1288
                %v1290 = vld [vmem:[%s1122 + $0x518] sm:$0xff]
                %1291 = vst [vmem:[%s1123 + $0x298] sm:$0xff] %v1290
                %v1292 = vld [vmem:[%s1122 + $0x520] sm:$0xff]
                %1293 = vst [vmem:[%s1123 + $0x2a0] sm:$0xff] %v1292
                %v1294 = vld [vmem:[%s1122 + $0x528] sm:$0xff]
                %1295 = vst [vmem:[%s1123 + $0x2a8] sm:$0xff] %v1294
                %v1296 = vld [vmem:[%s1122 + $0x530] sm:$0xff]
                %1297 = vst [vmem:[%s1123 + $0x2b0] sm:$0xff] %v1296
                %v1298 = vld [vmem:[%s1122 + $0x538] sm:$0xff]
                %1299 = vst [vmem:[%s1123 + $0x2b8] sm:$0xff] %v1298
                %v1300 = vld [vmem:[%s1122 + $0x580] sm:$0xff]
                %1301 = vst [vmem:[%s1123 + $0x2c0] sm:$0xff] %v1300
                %v1302 = vld [vmem:[%s1122 + $0x588] sm:$0xff]
                %1303 = vst [vmem:[%s1123 + $0x2c8] sm:$0xff] %v1302
                %v1304 = vld [vmem:[%s1122 + $0x590] sm:$0xff]
                %1305 = vst [vmem:[%s1123 + $0x2d0] sm:$0xff] %v1304
                %v1306 = vld [vmem:[%s1122 + $0x598] sm:$0xff]
                %1307 = vst [vmem:[%s1123 + $0x2d8] sm:$0xff] %v1306
                %v1308 = vld [vmem:[%s1122 + $0x5a0] sm:$0xff]
                %1309 = vst [vmem:[%s1123 + $0x2e0] sm:$0xff] %v1308
                %v1310 = vld [vmem:[%s1122 + $0x5a8] sm:$0xff]
                %1311 = vst [vmem:[%s1123 + $0x2e8] sm:$0xff] %v1310
                %v1312 = vld [vmem:[%s1122 + $0x5b0] sm:$0xff]
                %1313 = vst [vmem:[%s1123 + $0x2f0] sm:$0xff] %v1312
                %v1314 = vld [vmem:[%s1122 + $0x5b8] sm:$0xff]
                %1315 = vst [vmem:[%s1123 + $0x2f8] sm:$0xff] %v1314
              $region72: #{swinvit_mlp_v3_forward.1} parent=66 // loop_footer
                %s1121 = sadd.s32 1, %s1117
              $region73: #{swinvit_mlp_v3_forward.1} parent=66 // loop_footer_branch
                %1116 = sbr.rel target = $region69
              $region74: #{swinvit_mlp_v3_forward.1} parent=66 // loop_exit
                _
            $region67: #{swinvit_mlp_v3_forward.1} parent=62 // pred_fallthru
              _
            // Predicated region
            $region75: #{swinvit_mlp_v3_forward.1} parent=62 // pred_check
              _
            $region76: #{swinvit_mlp_v3_forward.1} parent=62 // pred_check_branch
              %1317 = sbr.rel target = $region78
            $region77: #{swinvit_mlp_v3_forward.1} parent=62 // pred_region
              _
            $region78: #{swinvit_mlp_v3_forward.1} parent=62 // pred_fallthru
              _
          $region63: #{swinvit_mlp_v3_forward.1} parent=58 // pred_fallthru
            _
          %1318 = vnop
        $region59: #{swinvit_mlp_v3_forward.1} parent=31 // pred_fallthru
          _
        // Predicated region
        $region79: #{swinvit_mlp_v3_forward.1} parent=31 // pred_check
          %p1319 = pneg %p106
        $region80: #{swinvit_mlp_v3_forward.1} parent=31 // pred_check_branch
          %1321 = sbr.rel (%p1319) target = $region82
        $region81: #{swinvit_mlp_v3_forward.1} parent=31 // pred_region
          %p1322 = scmp.lt.s32.totalorder %s25, 1
          %s1323 = scalar_select %p1322, %s25, 1
          %s1324 = smul.addr %s1323, 96
          %s1325 = smul.addr %s1324, 8
          %s1326 = scalar_lea.vmem %s2, %s1325
        $region82: #{swinvit_mlp_v3_forward.1} parent=31 // pred_fallthru
          _
        // Predicated region
        $region83: #{swinvit_mlp_v3_forward.1} parent=31 // pred_check
          %p1327 = pneg %p132
        $region84: #{swinvit_mlp_v3_forward.1} parent=31 // pred_check_branch
          %1329 = sbr.rel (%p1327) target = $region86
        $region85: #{swinvit_mlp_v3_forward.1} parent=31 // pred_region
          %p1330 = scmp.lt.s32.totalorder %s25, 1
          %s1331 = scalar_select %p1330, %s25, 1
          %s1332 = smul.addr %s1331, 24
          %s1333 = smul.addr %s1332, 8
          %s1334 = scalar_lea.vmem %s3, %s1333
        $region86: #{swinvit_mlp_v3_forward.1} parent=31 // pred_fallthru
          _
        // Predicated region
        $region87: #{swinvit_mlp_v3_forward.1} parent=31 // pred_check
          %p1335 = pneg %p158
        $region88: #{swinvit_mlp_v3_forward.1} parent=31 // pred_check_branch
          %1337 = sbr.rel (%p1335) target = $region90
        $region89: #{swinvit_mlp_v3_forward.1} parent=31 // pred_region
          %p1338 = scmp.lt.s32.totalorder %s25, 1
          %s1339 = scalar_select %p1338, %s25, 1
          %s1340 = smul.addr %s1339, 6
          %s1341 = smul.addr %s1340, 8
          %s1342 = scalar_lea.vmem %s4, %s1341
        $region90: #{swinvit_mlp_v3_forward.1} parent=31 // pred_fallthru
          _
      $region32: #{swinvit_mlp_v3_forward.1} parent=5 // pred_fallthru
        _
      %p1343 = scmp.le.s32.totalorder 1, %s18
      %p1344 = scmp.lt.s32.totalorder %s18, 5
      %p1345 = pnand %p1343, %p1344
      %p1346 = pneg %p1345
      // Predicated region
      $region91: #{swinvit_mlp_v3_forward.1} parent=5 // pred_check
        _
      $region92: #{swinvit_mlp_v3_forward.1} parent=5 // pred_check_branch
        %1348 = sbr.rel (%p1345) target = $region94
      $region93: #{swinvit_mlp_v3_forward.1} parent=5 // pred_region
        %s1349 = ssub.s32 %s18, 1
        %s1350 = sand.u32 %s45, 1
        %s1351 = sand.u32 %s45, 1
        %s1352 = smul.addr %s1351, 3072
        %s1353 = scalar_lea.vmem [#allocation4], %s1352
        // Predicated region
        $region95: #{swinvit_mlp_v3_forward.1} parent=93 // pred_check
          %p1354 = pneg %p58
        $region96: #{swinvit_mlp_v3_forward.1} parent=93 // pred_check_branch
          %1356 = sbr.rel (%p1354) target = $region98
        $region97: #{swinvit_mlp_v3_forward.1} parent=93 // pred_region
          _
        $region98: #{swinvit_mlp_v3_forward.1} parent=93 // pred_fallthru
          _
        %s1357 = sand.u32 %s73, 1
        %s1358 = sand.u32 %s73, 1
        %s1359 = smul.addr %s1358, 768
        %s1360 = scalar_lea.vmem [#allocation5], %s1359
        // Predicated region
        $region99: #{swinvit_mlp_v3_forward.1} parent=93 // pred_check
          %p1361 = pneg %p86
        $region100: #{swinvit_mlp_v3_forward.1} parent=93 // pred_check_branch
          %1363 = sbr.rel (%p1361) target = $region102
        $region101: #{swinvit_mlp_v3_forward.1} parent=93 // pred_region
          _
        $region102: #{swinvit_mlp_v3_forward.1} parent=93 // pred_fallthru
          _
        %s1364 = sand.u32 %s45, 1
        %s1365 = sand.u32 %s45, 1
        %s1366 = smul.addr %s1365, 3072
        %s1367 = scalar_lea.vmem [#allocation4], %s1366
        %p1368 = pneg %p58
        %p1369 = pneg %p55
        %s1370 = sand.u32 %s73, 1
        %s1371 = sand.u32 %s73, 1
        %s1372 = smul.addr %s1371, 768
        %s1373 = scalar_lea.vmem [#allocation5], %s1372
        %p1374 = pneg %p86
        %p1375 = pneg %p83
        %p1376 = scmp.lt.s32.totalorder %s27, 1
        %s1377 = scalar_select %p1376, %s27, 1
        %s1378 = smul.addr %s1377, 96
        %s1379 = smul.addr %s1378, 8
        %s1380 = scalar_lea.vmem %s2, %s1379
        %p1381 = pneg %p112
        %p1382 = pneg %p109
        %p1383 = scmp.lt.s32.totalorder %s27, 1
        %s1384 = scalar_select %p1383, %s27, 1
        %s1385 = smul.addr %s1384, 24
        %s1386 = smul.addr %s1385, 8
        %s1387 = scalar_lea.vmem %s3, %s1386
        %p1388 = pneg %p138
        %p1389 = pneg %p135
        %p1390 = scmp.lt.s32.totalorder %s27, 1
        %s1391 = scalar_select %p1390, %s27, 1
        %s1392 = smul.addr %s1391, 6
        %s1393 = smul.addr %s1392, 8
        %s1394 = scalar_lea.vmem %s4, %s1393
        %p1395 = pneg %p164
        %p1396 = pneg %p161
        %p1397 = pneg %p185
        %p1398 = pneg %p182
        %p1399 = pneg %p206
        %p1400 = pneg %p203
        %p1401 = pneg %p227
        %p1402 = pneg %p224
        %p1403 = pneg %p248
        %p1404 = pneg %p245
        %p1405 = pneg %p274
        %p1406 = pneg %p271
        %s1407 = sand.u32 %s261, 1
        %s1408 = scalar_lea.sflag [#allocation7], %s1407
        %s1409 = sand.u32 %s261, 1
        %s1410 = scalar_lea.vmem [#allocation6], %s1409
        %s1411 = smul.u32 128, %s28
        %s1412 = smul.u32 16, %s28
        %p1413 = scmp.lt.s32.totalorder %s27, 1
        %s1414 = scalar_select %p1413, %s27, 1
        %s1415 = smul.addr %s1414, 96
        %s1416 = smul.addr %s1415, 8
        %s1417 = scalar_lea.vmem %s2, %s1416
        %p1418 = scmp.lt.s32.totalorder %s27, 1
        %s1419 = scalar_select %p1418, %s27, 1
        %s1420 = smul.addr %s1419, 24
        %s1421 = smul.addr %s1420, 8
        %s1422 = scalar_lea.vmem %s3, %s1421
        %p1423 = scmp.lt.s32.totalorder %s27, 1
        %s1424 = scalar_select %p1423, %s27, 1
        %s1425 = smul.addr %s1424, 6
        %s1426 = smul.addr %s1425, 8
        %s1427 = scalar_lea.vmem %s4, %s1426
        %p1428 = scmp.eq.s32.totalorder %s28, 0
        // Predicated region
        $region103: #{swinvit_mlp_v3_forward.1} parent=93 // pred_check
          %p1429 = pneg %p1428
        $region104: #{swinvit_mlp_v3_forward.1} parent=93 // pred_check_branch
          %1431 = sbr.rel (%p1429) target = $region106
        $region105: #{swinvit_mlp_v3_forward.1} parent=93 // pred_region
          %vm1432 = vcmask 385024
          %1433 = vst.msk [vmem:[#allocation2] sm:$0x1] %vm1432, 0.0
          %vm1434 = vcmask 778240
          %1435 = vst.msk [vmem:[#allocation3] sm:$0x1] %vm1434, 0.0
        $region106: #{swinvit_mlp_v3_forward.1} parent=93 // pred_fallthru
          _
        %v1436 = vld [vmem:[%s1353] sm:$0xff]
        %v1437 = vld [vmem:[%s1353 + $0x8] sm:$0xff]
        %v1438 = vld [vmem:[%s1353 + $0x10] sm:$0xff]
        %v1439 = vld [vmem:[%s1353 + $0x18] sm:$0xff]
        %v1440 = vld [vmem:[%s1353 + $0x20] sm:$0xff]
        %v1441 = vld [vmem:[%s1353 + $0x28] sm:$0xff]
        %v1442 = vld [vmem:[%s1353 + $0x30] sm:$0xff]
        %v1443 = vld [vmem:[%s1353 + $0x38] sm:$0xff]
        %v1444 = vld [vmem:[%s1353 + $0x40] sm:$0xff]
        %v1445 = vld [vmem:[%s1353 + $0x48] sm:$0xff]
        %v1446 = vld [vmem:[%s1353 + $0x50] sm:$0xff]
        %v1447 = vld [vmem:[%s1353 + $0x58] sm:$0xff]
        %v1448 = vld [vmem:[%s1353 + $0x60] sm:$0xff]
        %v1449 = vld [vmem:[%s1353 + $0x68] sm:$0xff]
        %v1450 = vld [vmem:[%s1353 + $0x70] sm:$0xff]
        %v1451 = vld [vmem:[%s1353 + $0x78] sm:$0xff]
        %v1452 = vld [vmem:[%s1353 + $0x80] sm:$0xff]
        %v1453 = vld [vmem:[%s1353 + $0x88] sm:$0xff]
        %v1454 = vld [vmem:[%s1353 + $0x90] sm:$0xff]
        %v1455 = vld [vmem:[%s1353 + $0x98] sm:$0xff]
        %v1456 = vld [vmem:[%s1353 + $0xa0] sm:$0xff]
        %v1457 = vld [vmem:[%s1353 + $0xa8] sm:$0xff]
        %v1458 = vld [vmem:[%s1353 + $0xb0] sm:$0xff]
        %v1459 = vld [vmem:[%s1353 + $0xb8] sm:$0xff]
        %v1460 = vld [vmem:[%s1353 + $0xc0] sm:$0xff]
        %v1461 = vld [vmem:[%s1353 + $0xc8] sm:$0xff]
        %v1462 = vld [vmem:[%s1353 + $0xd0] sm:$0xff]
        %v1463 = vld [vmem:[%s1353 + $0xd8] sm:$0xff]
        %v1464 = vld [vmem:[%s1353 + $0xe0] sm:$0xff]
        %v1465 = vld [vmem:[%s1353 + $0xe8] sm:$0xff]
        %v1466 = vld [vmem:[%s1353 + $0xf0] sm:$0xff]
        %v1467 = vld [vmem:[%s1353 + $0xf8] sm:$0xff]
        %v1468 = vld [vmem:[%s1353 + $0x100] sm:$0xff]
        %v1469 = vld [vmem:[%s1353 + $0x108] sm:$0xff]
        %v1470 = vld [vmem:[%s1353 + $0x110] sm:$0xff]
        %v1471 = vld [vmem:[%s1353 + $0x118] sm:$0xff]
        %v1472 = vld [vmem:[%s1353 + $0x120] sm:$0xff]
        %v1473 = vld [vmem:[%s1353 + $0x128] sm:$0xff]
        %v1474 = vld [vmem:[%s1353 + $0x130] sm:$0xff]
        %v1475 = vld [vmem:[%s1353 + $0x138] sm:$0xff]
        %v1476 = vld [vmem:[%s1353 + $0x140] sm:$0xff]
        %v1477 = vld [vmem:[%s1353 + $0x148] sm:$0xff]
        %v1478 = vld [vmem:[%s1353 + $0x150] sm:$0xff]
        %v1479 = vld [vmem:[%s1353 + $0x158] sm:$0xff]
        %v1480 = vld [vmem:[%s1353 + $0x160] sm:$0xff]
        %v1481 = vld [vmem:[%s1353 + $0x168] sm:$0xff]
        %v1482 = vld [vmem:[%s1353 + $0x170] sm:$0xff]
        %v1483 = vld [vmem:[%s1353 + $0x178] sm:$0xff]
        %v1484 = vld [vmem:[%s1353 + $0x180] sm:$0xff]
        %v1485 = vld [vmem:[%s1353 + $0x188] sm:$0xff]
        %v1486 = vld [vmem:[%s1353 + $0x190] sm:$0xff]
        %v1487 = vld [vmem:[%s1353 + $0x198] sm:$0xff]
        %v1488 = vld [vmem:[%s1353 + $0x1a0] sm:$0xff]
        %v1489 = vld [vmem:[%s1353 + $0x1a8] sm:$0xff]
        %v1490 = vld [vmem:[%s1353 + $0x1b0] sm:$0xff]
        %v1491 = vld [vmem:[%s1353 + $0x1b8] sm:$0xff]
        %v1492 = vld [vmem:[%s1353 + $0x1c0] sm:$0xff]
        %v1493 = vld [vmem:[%s1353 + $0x1c8] sm:$0xff]
        %v1494 = vld [vmem:[%s1353 + $0x1d0] sm:$0xff]
        %v1495 = vld [vmem:[%s1353 + $0x1d8] sm:$0xff]
        %v1496 = vld [vmem:[%s1353 + $0x1e0] sm:$0xff]
        %v1497 = vld [vmem:[%s1353 + $0x1e8] sm:$0xff]
        %v1498 = vld [vmem:[%s1353 + $0x1f0] sm:$0xff]
        %v1499 = vld [vmem:[%s1353 + $0x1f8] sm:$0xff]
        %v1500 = vld [vmem:[%s1353 + $0x200] sm:$0xff]
        %v1501 = vld [vmem:[%s1353 + $0x208] sm:$0xff]
        %v1502 = vld [vmem:[%s1353 + $0x210] sm:$0xff]
        %v1503 = vld [vmem:[%s1353 + $0x218] sm:$0xff]
        %v1504 = vld [vmem:[%s1353 + $0x220] sm:$0xff]
        %v1505 = vld [vmem:[%s1353 + $0x228] sm:$0xff]
        %v1506 = vld [vmem:[%s1353 + $0x230] sm:$0xff]
        %v1507 = vld [vmem:[%s1353 + $0x238] sm:$0xff]
        %v1508 = vld [vmem:[%s1353 + $0x240] sm:$0xff]
        %v1509 = vld [vmem:[%s1353 + $0x248] sm:$0xff]
        %v1510 = vld [vmem:[%s1353 + $0x250] sm:$0xff]
        %v1511 = vld [vmem:[%s1353 + $0x258] sm:$0xff]
        %v1512 = vld [vmem:[%s1353 + $0x260] sm:$0xff]
        %v1513 = vld [vmem:[%s1353 + $0x268] sm:$0xff]
        %v1514 = vld [vmem:[%s1353 + $0x270] sm:$0xff]
        %v1515 = vld [vmem:[%s1353 + $0x278] sm:$0xff]
        %v1516 = vld [vmem:[%s1353 + $0x280] sm:$0xff]
        %v1517 = vld [vmem:[%s1353 + $0x288] sm:$0xff]
        %v1518 = vld [vmem:[%s1353 + $0x290] sm:$0xff]
        %v1519 = vld [vmem:[%s1353 + $0x298] sm:$0xff]
        %v1520 = vld [vmem:[%s1353 + $0x2a0] sm:$0xff]
        %v1521 = vld [vmem:[%s1353 + $0x2a8] sm:$0xff]
        %v1522 = vld [vmem:[%s1353 + $0x2b0] sm:$0xff]
        %v1523 = vld [vmem:[%s1353 + $0x2b8] sm:$0xff]
        %v1524 = vld [vmem:[%s1353 + $0x2c0] sm:$0xff]
        %v1525 = vld [vmem:[%s1353 + $0x2c8] sm:$0xff]
        %v1526 = vld [vmem:[%s1353 + $0x2d0] sm:$0xff]
        %v1527 = vld [vmem:[%s1353 + $0x2d8] sm:$0xff]
        %v1528 = vld [vmem:[%s1353 + $0x2e0] sm:$0xff]
        %v1529 = vld [vmem:[%s1353 + $0x2e8] sm:$0xff]
        %v1530 = vld [vmem:[%s1353 + $0x2f0] sm:$0xff]
        %v1531 = vld [vmem:[%s1353 + $0x2f8] sm:$0xff]
        %v1532 = vld [vmem:[%s1353 + $0x300] sm:$0xff]
        %v1533 = vld [vmem:[%s1353 + $0x308] sm:$0xff]
        %v1534 = vld [vmem:[%s1353 + $0x310] sm:$0xff]
        %v1535 = vld [vmem:[%s1353 + $0x318] sm:$0xff]
        %v1536 = vld [vmem:[%s1353 + $0x320] sm:$0xff]
        %v1537 = vld [vmem:[%s1353 + $0x328] sm:$0xff]
        %v1538 = vld [vmem:[%s1353 + $0x330] sm:$0xff]
        %v1539 = vld [vmem:[%s1353 + $0x338] sm:$0xff]
        %v1540 = vld [vmem:[%s1353 + $0x340] sm:$0xff]
        %v1541 = vld [vmem:[%s1353 + $0x348] sm:$0xff]
        %v1542 = vld [vmem:[%s1353 + $0x350] sm:$0xff]
        %v1543 = vld [vmem:[%s1353 + $0x358] sm:$0xff]
        %v1544 = vld [vmem:[%s1353 + $0x360] sm:$0xff]
        %v1545 = vld [vmem:[%s1353 + $0x368] sm:$0xff]
        %v1546 = vld [vmem:[%s1353 + $0x370] sm:$0xff]
        %v1547 = vld [vmem:[%s1353 + $0x378] sm:$0xff]
        %v1548 = vld [vmem:[%s1353 + $0x380] sm:$0xff]
        %v1549 = vld [vmem:[%s1353 + $0x388] sm:$0xff]
        %v1550 = vld [vmem:[%s1353 + $0x390] sm:$0xff]
        %v1551 = vld [vmem:[%s1353 + $0x398] sm:$0xff]
        %v1552 = vld [vmem:[%s1353 + $0x3a0] sm:$0xff]
        %v1553 = vld [vmem:[%s1353 + $0x3a8] sm:$0xff]
        %v1554 = vld [vmem:[%s1353 + $0x3b0] sm:$0xff]
        %v1555 = vld [vmem:[%s1353 + $0x3b8] sm:$0xff]
        %v1556 = vld [vmem:[%s1353 + $0x3c0] sm:$0xff]
        %v1557 = vld [vmem:[%s1353 + $0x3c8] sm:$0xff]
        %v1558 = vld [vmem:[%s1353 + $0x3d0] sm:$0xff]
        %v1559 = vld [vmem:[%s1353 + $0x3d8] sm:$0xff]
        %v1560 = vld [vmem:[%s1353 + $0x3e0] sm:$0xff]
        %v1561 = vld [vmem:[%s1353 + $0x3e8] sm:$0xff]
        %v1562 = vld [vmem:[%s1353 + $0x3f0] sm:$0xff]
        %v1563 = vld [vmem:[%s1353 + $0x3f8] sm:$0xff]
        %v1564 = vld [vmem:[%s1353 + $0x400] sm:$0xff]
        %v1565 = vld [vmem:[%s1353 + $0x408] sm:$0xff]
        %v1566 = vld [vmem:[%s1353 + $0x410] sm:$0xff]
        %v1567 = vld [vmem:[%s1353 + $0x418] sm:$0xff]
        %v1568 = vld [vmem:[%s1353 + $0x420] sm:$0xff]
        %v1569 = vld [vmem:[%s1353 + $0x428] sm:$0xff]
        %v1570 = vld [vmem:[%s1353 + $0x430] sm:$0xff]
        %v1571 = vld [vmem:[%s1353 + $0x438] sm:$0xff]
        %v1572 = vld [vmem:[%s1353 + $0x440] sm:$0xff]
        %v1573 = vld [vmem:[%s1353 + $0x448] sm:$0xff]
        %v1574 = vld [vmem:[%s1353 + $0x450] sm:$0xff]
        %v1575 = vld [vmem:[%s1353 + $0x458] sm:$0xff]
        %v1576 = vld [vmem:[%s1353 + $0x460] sm:$0xff]
        %v1577 = vld [vmem:[%s1353 + $0x468] sm:$0xff]
        %v1578 = vld [vmem:[%s1353 + $0x470] sm:$0xff]
        %v1579 = vld [vmem:[%s1353 + $0x478] sm:$0xff]
        %v1580 = vld [vmem:[%s1353 + $0x480] sm:$0xff]
        %v1581 = vld [vmem:[%s1353 + $0x488] sm:$0xff]
        %v1582 = vld [vmem:[%s1353 + $0x490] sm:$0xff]
        %v1583 = vld [vmem:[%s1353 + $0x498] sm:$0xff]
        %v1584 = vld [vmem:[%s1353 + $0x4a0] sm:$0xff]
        %v1585 = vld [vmem:[%s1353 + $0x4a8] sm:$0xff]
        %v1586 = vld [vmem:[%s1353 + $0x4b0] sm:$0xff]
        %v1587 = vld [vmem:[%s1353 + $0x4b8] sm:$0xff]
        %v1588 = vld [vmem:[%s1353 + $0x4c0] sm:$0xff]
        %v1589 = vld [vmem:[%s1353 + $0x4c8] sm:$0xff]
        %v1590 = vld [vmem:[%s1353 + $0x4d0] sm:$0xff]
        %v1591 = vld [vmem:[%s1353 + $0x4d8] sm:$0xff]
        %v1592 = vld [vmem:[%s1353 + $0x4e0] sm:$0xff]
        %v1593 = vld [vmem:[%s1353 + $0x4e8] sm:$0xff]
        %v1594 = vld [vmem:[%s1353 + $0x4f0] sm:$0xff]
        %v1595 = vld [vmem:[%s1353 + $0x4f8] sm:$0xff]
        %v1596 = vld [vmem:[%s1353 + $0x500] sm:$0xff]
        %v1597 = vld [vmem:[%s1353 + $0x508] sm:$0xff]
        %v1598 = vld [vmem:[%s1353 + $0x510] sm:$0xff]
        %v1599 = vld [vmem:[%s1353 + $0x518] sm:$0xff]
        %v1600 = vld [vmem:[%s1353 + $0x520] sm:$0xff]
        %v1601 = vld [vmem:[%s1353 + $0x528] sm:$0xff]
        %v1602 = vld [vmem:[%s1353 + $0x530] sm:$0xff]
        %v1603 = vld [vmem:[%s1353 + $0x538] sm:$0xff]
        %v1604 = vld [vmem:[%s1353 + $0x540] sm:$0xff]
        %v1605 = vld [vmem:[%s1353 + $0x548] sm:$0xff]
        %v1606 = vld [vmem:[%s1353 + $0x550] sm:$0xff]
        %v1607 = vld [vmem:[%s1353 + $0x558] sm:$0xff]
        %v1608 = vld [vmem:[%s1353 + $0x560] sm:$0xff]
        %v1609 = vld [vmem:[%s1353 + $0x568] sm:$0xff]
        %v1610 = vld [vmem:[%s1353 + $0x570] sm:$0xff]
        %v1611 = vld [vmem:[%s1353 + $0x578] sm:$0xff]
        %v1612 = vld [vmem:[%s1353 + $0x580] sm:$0xff]
        %v1613 = vld [vmem:[%s1353 + $0x588] sm:$0xff]
        %v1614 = vld [vmem:[%s1353 + $0x590] sm:$0xff]
        %v1615 = vld [vmem:[%s1353 + $0x598] sm:$0xff]
        %v1616 = vld [vmem:[%s1353 + $0x5a0] sm:$0xff]
        %v1617 = vld [vmem:[%s1353 + $0x5a8] sm:$0xff]
        %v1618 = vld [vmem:[%s1353 + $0x5b0] sm:$0xff]
        %v1619 = vld [vmem:[%s1353 + $0x5b8] sm:$0xff]
        %v1620 = vld [vmem:[%s1353 + $0x5c0] sm:$0xff]
        %v1621 = vld [vmem:[%s1353 + $0x5c8] sm:$0xff]
        %v1622 = vld [vmem:[%s1353 + $0x5d0] sm:$0xff]
        %v1623 = vld [vmem:[%s1353 + $0x5d8] sm:$0xff]
        %v1624 = vld [vmem:[%s1353 + $0x5e0] sm:$0xff]
        %v1625 = vld [vmem:[%s1353 + $0x5e8] sm:$0xff]
        %v1626 = vld [vmem:[%s1353 + $0x5f0] sm:$0xff]
        %v1627 = vld [vmem:[%s1353 + $0x5f8] sm:$0xff]
        %v1628 = vld [vmem:[%s1353 + $0x600] sm:$0xff]
        %v1629 = vld [vmem:[%s1353 + $0x608] sm:$0xff]
        %v1630 = vld [vmem:[%s1353 + $0x610] sm:$0xff]
        %v1631 = vld [vmem:[%s1353 + $0x618] sm:$0xff]
        %v1632 = vld [vmem:[%s1353 + $0x620] sm:$0xff]
        %v1633 = vld [vmem:[%s1353 + $0x628] sm:$0xff]
        %v1634 = vld [vmem:[%s1353 + $0x630] sm:$0xff]
        %v1635 = vld [vmem:[%s1353 + $0x638] sm:$0xff]
        %v1636 = vld [vmem:[%s1353 + $0x640] sm:$0xff]
        %v1637 = vld [vmem:[%s1353 + $0x648] sm:$0xff]
        %v1638 = vld [vmem:[%s1353 + $0x650] sm:$0xff]
        %v1639 = vld [vmem:[%s1353 + $0x658] sm:$0xff]
        %v1640 = vld [vmem:[%s1353 + $0x660] sm:$0xff]
        %v1641 = vld [vmem:[%s1353 + $0x668] sm:$0xff]
        %v1642 = vld [vmem:[%s1353 + $0x670] sm:$0xff]
        %v1643 = vld [vmem:[%s1353 + $0x678] sm:$0xff]
        %v1644 = vld [vmem:[%s1353 + $0x680] sm:$0xff]
        %v1645 = vld [vmem:[%s1353 + $0x688] sm:$0xff]
        %v1646 = vld [vmem:[%s1353 + $0x690] sm:$0xff]
        %v1647 = vld [vmem:[%s1353 + $0x698] sm:$0xff]
        %v1648 = vld [vmem:[%s1353 + $0x6a0] sm:$0xff]
        %v1649 = vld [vmem:[%s1353 + $0x6a8] sm:$0xff]
        %v1650 = vld [vmem:[%s1353 + $0x6b0] sm:$0xff]
        %v1651 = vld [vmem:[%s1353 + $0x6b8] sm:$0xff]
        %v1652 = vld [vmem:[%s1353 + $0x6c0] sm:$0xff]
        %v1653 = vld [vmem:[%s1353 + $0x6c8] sm:$0xff]
        %v1654 = vld [vmem:[%s1353 + $0x6d0] sm:$0xff]
        %v1655 = vld [vmem:[%s1353 + $0x6d8] sm:$0xff]
        %v1656 = vld [vmem:[%s1353 + $0x6e0] sm:$0xff]
        %v1657 = vld [vmem:[%s1353 + $0x6e8] sm:$0xff]
        %v1658 = vld [vmem:[%s1353 + $0x6f0] sm:$0xff]
        %v1659 = vld [vmem:[%s1353 + $0x6f8] sm:$0xff]
        %v1660 = vld [vmem:[%s1353 + $0x700] sm:$0xff]
        %v1661 = vld [vmem:[%s1353 + $0x708] sm:$0xff]
        %v1662 = vld [vmem:[%s1353 + $0x710] sm:$0xff]
        %v1663 = vld [vmem:[%s1353 + $0x718] sm:$0xff]
        %v1664 = vld [vmem:[%s1353 + $0x720] sm:$0xff]
        %v1665 = vld [vmem:[%s1353 + $0x728] sm:$0xff]
        %v1666 = vld [vmem:[%s1353 + $0x730] sm:$0xff]
        %v1667 = vld [vmem:[%s1353 + $0x738] sm:$0xff]
        %v1668 = vld [vmem:[%s1353 + $0x740] sm:$0xff]
        %v1669 = vld [vmem:[%s1353 + $0x748] sm:$0xff]
        %v1670 = vld [vmem:[%s1353 + $0x750] sm:$0xff]
        %v1671 = vld [vmem:[%s1353 + $0x758] sm:$0xff]
        %v1672 = vld [vmem:[%s1353 + $0x760] sm:$0xff]
        %v1673 = vld [vmem:[%s1353 + $0x768] sm:$0xff]
        %v1674 = vld [vmem:[%s1353 + $0x770] sm:$0xff]
        %v1675 = vld [vmem:[%s1353 + $0x778] sm:$0xff]
        %v1676 = vld [vmem:[%s1353 + $0x780] sm:$0xff]
        %v1677 = vld [vmem:[%s1353 + $0x788] sm:$0xff]
        %v1678 = vld [vmem:[%s1353 + $0x790] sm:$0xff]
        %v1679 = vld [vmem:[%s1353 + $0x798] sm:$0xff]
        %v1680 = vld [vmem:[%s1353 + $0x7a0] sm:$0xff]
        %v1681 = vld [vmem:[%s1353 + $0x7a8] sm:$0xff]
        %v1682 = vld [vmem:[%s1353 + $0x7b0] sm:$0xff]
        %v1683 = vld [vmem:[%s1353 + $0x7b8] sm:$0xff]
        %v1684 = vld [vmem:[%s1353 + $0x7c0] sm:$0xff]
        %v1685 = vld [vmem:[%s1353 + $0x7c8] sm:$0xff]
        %v1686 = vld [vmem:[%s1353 + $0x7d0] sm:$0xff]
        %v1687 = vld [vmem:[%s1353 + $0x7d8] sm:$0xff]
        %v1688 = vld [vmem:[%s1353 + $0x7e0] sm:$0xff]
        %v1689 = vld [vmem:[%s1353 + $0x7e8] sm:$0xff]
        %v1690 = vld [vmem:[%s1353 + $0x7f0] sm:$0xff]
        %v1691 = vld [vmem:[%s1353 + $0x7f8] sm:$0xff]
        %v1692 = vld [vmem:[%s1353 + $0x800] sm:$0xff]
        %v1693 = vld [vmem:[%s1353 + $0x808] sm:$0xff]
        %v1694 = vld [vmem:[%s1353 + $0x810] sm:$0xff]
        %v1695 = vld [vmem:[%s1353 + $0x818] sm:$0xff]
        %v1696 = vld [vmem:[%s1353 + $0x820] sm:$0xff]
        %v1697 = vld [vmem:[%s1353 + $0x828] sm:$0xff]
        %v1698 = vld [vmem:[%s1353 + $0x830] sm:$0xff]
        %v1699 = vld [vmem:[%s1353 + $0x838] sm:$0xff]
        %v1700 = vld [vmem:[%s1353 + $0x840] sm:$0xff]
        %v1701 = vld [vmem:[%s1353 + $0x848] sm:$0xff]
        %v1702 = vld [vmem:[%s1353 + $0x850] sm:$0xff]
        %v1703 = vld [vmem:[%s1353 + $0x858] sm:$0xff]
        %v1704 = vld [vmem:[%s1353 + $0x860] sm:$0xff]
        %v1705 = vld [vmem:[%s1353 + $0x868] sm:$0xff]
        %v1706 = vld [vmem:[%s1353 + $0x870] sm:$0xff]
        %v1707 = vld [vmem:[%s1353 + $0x878] sm:$0xff]
        %v1708 = vld [vmem:[%s1353 + $0x880] sm:$0xff]
        %v1709 = vld [vmem:[%s1353 + $0x888] sm:$0xff]
        %v1710 = vld [vmem:[%s1353 + $0x890] sm:$0xff]
        %v1711 = vld [vmem:[%s1353 + $0x898] sm:$0xff]
        %v1712 = vld [vmem:[%s1353 + $0x8a0] sm:$0xff]
        %v1713 = vld [vmem:[%s1353 + $0x8a8] sm:$0xff]
        %v1714 = vld [vmem:[%s1353 + $0x8b0] sm:$0xff]
        %v1715 = vld [vmem:[%s1353 + $0x8b8] sm:$0xff]
        %v1716 = vld [vmem:[%s1353 + $0x8c0] sm:$0xff]
        %v1717 = vld [vmem:[%s1353 + $0x8c8] sm:$0xff]
        %v1718 = vld [vmem:[%s1353 + $0x8d0] sm:$0xff]
        %v1719 = vld [vmem:[%s1353 + $0x8d8] sm:$0xff]
        %v1720 = vld [vmem:[%s1353 + $0x8e0] sm:$0xff]
        %v1721 = vld [vmem:[%s1353 + $0x8e8] sm:$0xff]
        %v1722 = vld [vmem:[%s1353 + $0x8f0] sm:$0xff]
        %v1723 = vld [vmem:[%s1353 + $0x8f8] sm:$0xff]
        %v1724 = vld [vmem:[%s1353 + $0x900] sm:$0xff]
        %v1725 = vld [vmem:[%s1353 + $0x908] sm:$0xff]
        %v1726 = vld [vmem:[%s1353 + $0x910] sm:$0xff]
        %v1727 = vld [vmem:[%s1353 + $0x918] sm:$0xff]
        %v1728 = vld [vmem:[%s1353 + $0x920] sm:$0xff]
        %v1729 = vld [vmem:[%s1353 + $0x928] sm:$0xff]
        %v1730 = vld [vmem:[%s1353 + $0x930] sm:$0xff]
        %v1731 = vld [vmem:[%s1353 + $0x938] sm:$0xff]
        %v1732 = vld [vmem:[%s1353 + $0x940] sm:$0xff]
        %v1733 = vld [vmem:[%s1353 + $0x948] sm:$0xff]
        %v1734 = vld [vmem:[%s1353 + $0x950] sm:$0xff]
        %v1735 = vld [vmem:[%s1353 + $0x958] sm:$0xff]
        %v1736 = vld [vmem:[%s1353 + $0x960] sm:$0xff]
        %v1737 = vld [vmem:[%s1353 + $0x968] sm:$0xff]
        %v1738 = vld [vmem:[%s1353 + $0x970] sm:$0xff]
        %v1739 = vld [vmem:[%s1353 + $0x978] sm:$0xff]
        %v1740 = vld [vmem:[%s1353 + $0x980] sm:$0xff]
        %v1741 = vld [vmem:[%s1353 + $0x988] sm:$0xff]
        %v1742 = vld [vmem:[%s1353 + $0x990] sm:$0xff]
        %v1743 = vld [vmem:[%s1353 + $0x998] sm:$0xff]
        %v1744 = vld [vmem:[%s1353 + $0x9a0] sm:$0xff]
        %v1745 = vld [vmem:[%s1353 + $0x9a8] sm:$0xff]
        %v1746 = vld [vmem:[%s1353 + $0x9b0] sm:$0xff]
        %v1747 = vld [vmem:[%s1353 + $0x9b8] sm:$0xff]
        %v1748 = vld [vmem:[%s1353 + $0x9c0] sm:$0xff]
        %v1749 = vld [vmem:[%s1353 + $0x9c8] sm:$0xff]
        %v1750 = vld [vmem:[%s1353 + $0x9d0] sm:$0xff]
        %v1751 = vld [vmem:[%s1353 + $0x9d8] sm:$0xff]
        %v1752 = vld [vmem:[%s1353 + $0x9e0] sm:$0xff]
        %v1753 = vld [vmem:[%s1353 + $0x9e8] sm:$0xff]
        %v1754 = vld [vmem:[%s1353 + $0x9f0] sm:$0xff]
        %v1755 = vld [vmem:[%s1353 + $0x9f8] sm:$0xff]
        %v1756 = vld [vmem:[%s1353 + $0xa00] sm:$0xff]
        %v1757 = vld [vmem:[%s1353 + $0xa08] sm:$0xff]
        %v1758 = vld [vmem:[%s1353 + $0xa10] sm:$0xff]
        %v1759 = vld [vmem:[%s1353 + $0xa18] sm:$0xff]
        %v1760 = vld [vmem:[%s1353 + $0xa20] sm:$0xff]
        %v1761 = vld [vmem:[%s1353 + $0xa28] sm:$0xff]
        %v1762 = vld [vmem:[%s1353 + $0xa30] sm:$0xff]
        %v1763 = vld [vmem:[%s1353 + $0xa38] sm:$0xff]
        %v1764 = vld [vmem:[%s1353 + $0xa40] sm:$0xff]
        %v1765 = vld [vmem:[%s1353 + $0xa48] sm:$0xff]
        %v1766 = vld [vmem:[%s1353 + $0xa50] sm:$0xff]
        %v1767 = vld [vmem:[%s1353 + $0xa58] sm:$0xff]
        %v1768 = vld [vmem:[%s1353 + $0xa60] sm:$0xff]
        %v1769 = vld [vmem:[%s1353 + $0xa68] sm:$0xff]
        %v1770 = vld [vmem:[%s1353 + $0xa70] sm:$0xff]
        %v1771 = vld [vmem:[%s1353 + $0xa78] sm:$0xff]
        %v1772 = vld [vmem:[%s1353 + $0xa80] sm:$0xff]
        %v1773 = vld [vmem:[%s1353 + $0xa88] sm:$0xff]
        %v1774 = vld [vmem:[%s1353 + $0xa90] sm:$0xff]
        %v1775 = vld [vmem:[%s1353 + $0xa98] sm:$0xff]
        %v1776 = vld [vmem:[%s1353 + $0xaa0] sm:$0xff]
        %v1777 = vld [vmem:[%s1353 + $0xaa8] sm:$0xff]
        %v1778 = vld [vmem:[%s1353 + $0xab0] sm:$0xff]
        %v1779 = vld [vmem:[%s1353 + $0xab8] sm:$0xff]
        %v1780 = vld [vmem:[%s1353 + $0xac0] sm:$0xff]
        %v1781 = vld [vmem:[%s1353 + $0xac8] sm:$0xff]
        %v1782 = vld [vmem:[%s1353 + $0xad0] sm:$0xff]
        %v1783 = vld [vmem:[%s1353 + $0xad8] sm:$0xff]
        %v1784 = vld [vmem:[%s1353 + $0xae0] sm:$0xff]
        %v1785 = vld [vmem:[%s1353 + $0xae8] sm:$0xff]
        %v1786 = vld [vmem:[%s1353 + $0xaf0] sm:$0xff]
        %v1787 = vld [vmem:[%s1353 + $0xaf8] sm:$0xff]
        %v1788 = vld [vmem:[%s1353 + $0xb00] sm:$0xff]
        %v1789 = vld [vmem:[%s1353 + $0xb08] sm:$0xff]
        %v1790 = vld [vmem:[%s1353 + $0xb10] sm:$0xff]
        %v1791 = vld [vmem:[%s1353 + $0xb18] sm:$0xff]
        %v1792 = vld [vmem:[%s1353 + $0xb20] sm:$0xff]
        %v1793 = vld [vmem:[%s1353 + $0xb28] sm:$0xff]
        %v1794 = vld [vmem:[%s1353 + $0xb30] sm:$0xff]
        %v1795 = vld [vmem:[%s1353 + $0xb38] sm:$0xff]
        %v1796 = vld [vmem:[%s1353 + $0xb40] sm:$0xff]
        %v1797 = vld [vmem:[%s1353 + $0xb48] sm:$0xff]
        %v1798 = vld [vmem:[%s1353 + $0xb50] sm:$0xff]
        %v1799 = vld [vmem:[%s1353 + $0xb58] sm:$0xff]
        %v1800 = vld [vmem:[%s1353 + $0xb60] sm:$0xff]
        %v1801 = vld [vmem:[%s1353 + $0xb68] sm:$0xff]
        %v1802 = vld [vmem:[%s1353 + $0xb70] sm:$0xff]
        %v1803 = vld [vmem:[%s1353 + $0xb78] sm:$0xff]
        %v1804 = vld [vmem:[%s1353 + $0xb80] sm:$0xff]
        %v1805 = vld [vmem:[%s1353 + $0xb88] sm:$0xff]
        %v1806 = vld [vmem:[%s1353 + $0xb90] sm:$0xff]
        %v1807 = vld [vmem:[%s1353 + $0xb98] sm:$0xff]
        %v1808 = vld [vmem:[%s1353 + $0xba0] sm:$0xff]
        %v1809 = vld [vmem:[%s1353 + $0xba8] sm:$0xff]
        %v1810 = vld [vmem:[%s1353 + $0xbb0] sm:$0xff]
        %v1811 = vld [vmem:[%s1353 + $0xbb8] sm:$0xff]
        %v1812 = vld [vmem:[%s1353 + $0xbc0] sm:$0xff]
        %v1813 = vld [vmem:[%s1353 + $0xbc8] sm:$0xff]
        %v1814 = vld [vmem:[%s1353 + $0xbd0] sm:$0xff]
        %v1815 = vld [vmem:[%s1353 + $0xbd8] sm:$0xff]
        %v1816 = vld [vmem:[%s1353 + $0xbe0] sm:$0xff]
        %v1817 = vld [vmem:[%s1353 + $0xbe8] sm:$0xff]
        %v1818 = vld [vmem:[%s1353 + $0xbf0] sm:$0xff]
        %v1819 = vld [vmem:[%s1353 + $0xbf8] sm:$0xff]
        %v1820 = vunpack.c.l.bf16 %v1436
        %v1821 = vunpack.c.h.bf16 %v1436
        %v1822 = vunpack.c.l.bf16 %v1437
        %v1823 = vunpack.c.h.bf16 %v1437
        %v1824 = vunpack.c.l.bf16 %v1438
        %v1825 = vunpack.c.h.bf16 %v1438
        %v1826 = vunpack.c.l.bf16 %v1439
        %v1827 = vunpack.c.h.bf16 %v1439
        %v1828 = vunpack.c.l.bf16 %v1440
        %v1829 = vunpack.c.h.bf16 %v1440
        %v1830 = vunpack.c.l.bf16 %v1441
        %v1831 = vunpack.c.h.bf16 %v1441
        %v1832 = vunpack.c.l.bf16 %v1442
        %v1833 = vunpack.c.h.bf16 %v1442
        %v1834 = vunpack.c.l.bf16 %v1443
        %v1835 = vunpack.c.h.bf16 %v1443
        %v1836 = vunpack.c.l.bf16 %v1444
        %v1837 = vunpack.c.h.bf16 %v1444
        %v1838 = vunpack.c.l.bf16 %v1445
        %v1839 = vunpack.c.h.bf16 %v1445
        %v1840 = vunpack.c.l.bf16 %v1446
        %v1841 = vunpack.c.h.bf16 %v1446
        %v1842 = vunpack.c.l.bf16 %v1447
        %v1843 = vunpack.c.h.bf16 %v1447
        %v1844 = vunpack.c.l.bf16 %v1448
        %v1845 = vunpack.c.h.bf16 %v1448
        %v1846 = vunpack.c.l.bf16 %v1449
        %v1847 = vunpack.c.h.bf16 %v1449
        %v1848 = vunpack.c.l.bf16 %v1450
        %v1849 = vunpack.c.h.bf16 %v1450
        %v1850 = vunpack.c.l.bf16 %v1451
        %v1851 = vunpack.c.h.bf16 %v1451
        %v1852 = vunpack.c.l.bf16 %v1452
        %v1853 = vunpack.c.h.bf16 %v1452
        %v1854 = vunpack.c.l.bf16 %v1453
        %v1855 = vunpack.c.h.bf16 %v1453
        %v1856 = vunpack.c.l.bf16 %v1454
        %v1857 = vunpack.c.h.bf16 %v1454
        %v1858 = vunpack.c.l.bf16 %v1455
        %v1859 = vunpack.c.h.bf16 %v1455
        %v1860 = vunpack.c.l.bf16 %v1456
        %v1861 = vunpack.c.h.bf16 %v1456
        %v1862 = vunpack.c.l.bf16 %v1457
        %v1863 = vunpack.c.h.bf16 %v1457
        %v1864 = vunpack.c.l.bf16 %v1458
        %v1865 = vunpack.c.h.bf16 %v1458
        %v1866 = vunpack.c.l.bf16 %v1459
        %v1867 = vunpack.c.h.bf16 %v1459
        %v1868 = vunpack.c.l.bf16 %v1460
        %v1869 = vunpack.c.h.bf16 %v1460
        %v1870 = vunpack.c.l.bf16 %v1461
        %v1871 = vunpack.c.h.bf16 %v1461
        %v1872 = vunpack.c.l.bf16 %v1462
        %v1873 = vunpack.c.h.bf16 %v1462
        %v1874 = vunpack.c.l.bf16 %v1463
        %v1875 = vunpack.c.h.bf16 %v1463
        %v1876 = vunpack.c.l.bf16 %v1464
        %v1877 = vunpack.c.h.bf16 %v1464
        %v1878 = vunpack.c.l.bf16 %v1465
        %v1879 = vunpack.c.h.bf16 %v1465
        %v1880 = vunpack.c.l.bf16 %v1466
        %v1881 = vunpack.c.h.bf16 %v1466
        %v1882 = vunpack.c.l.bf16 %v1467
        %v1883 = vunpack.c.h.bf16 %v1467
        %v1884 = vunpack.c.l.bf16 %v1468
        %v1885 = vunpack.c.h.bf16 %v1468
        %v1886 = vunpack.c.l.bf16 %v1469
        %v1887 = vunpack.c.h.bf16 %v1469
        %v1888 = vunpack.c.l.bf16 %v1470
        %v1889 = vunpack.c.h.bf16 %v1470
        %v1890 = vunpack.c.l.bf16 %v1471
        %v1891 = vunpack.c.h.bf16 %v1471
        %v1892 = vunpack.c.l.bf16 %v1472
        %v1893 = vunpack.c.h.bf16 %v1472
        %v1894 = vunpack.c.l.bf16 %v1473
        %v1895 = vunpack.c.h.bf16 %v1473
        %v1896 = vunpack.c.l.bf16 %v1474
        %v1897 = vunpack.c.h.bf16 %v1474
        %v1898 = vunpack.c.l.bf16 %v1475
        %v1899 = vunpack.c.h.bf16 %v1475
        %v1900 = vunpack.c.l.bf16 %v1476
        %v1901 = vunpack.c.h.bf16 %v1476
        %v1902 = vunpack.c.l.bf16 %v1477
        %v1903 = vunpack.c.h.bf16 %v1477
        %v1904 = vunpack.c.l.bf16 %v1478
        %v1905 = vunpack.c.h.bf16 %v1478
        %v1906 = vunpack.c.l.bf16 %v1479
        %v1907 = vunpack.c.h.bf16 %v1479
        %v1908 = vunpack.c.l.bf16 %v1480
        %v1909 = vunpack.c.h.bf16 %v1480
        %v1910 = vunpack.c.l.bf16 %v1481
        %v1911 = vunpack.c.h.bf16 %v1481
        %v1912 = vunpack.c.l.bf16 %v1482
        %v1913 = vunpack.c.h.bf16 %v1482
        %v1914 = vunpack.c.l.bf16 %v1483
        %v1915 = vunpack.c.h.bf16 %v1483
        %v1916 = vunpack.c.l.bf16 %v1484
        %v1917 = vunpack.c.h.bf16 %v1484
        %v1918 = vunpack.c.l.bf16 %v1485
        %v1919 = vunpack.c.h.bf16 %v1485
        %v1920 = vunpack.c.l.bf16 %v1486
        %v1921 = vunpack.c.h.bf16 %v1486
        %v1922 = vunpack.c.l.bf16 %v1487
        %v1923 = vunpack.c.h.bf16 %v1487
        %v1924 = vunpack.c.l.bf16 %v1488
        %v1925 = vunpack.c.h.bf16 %v1488
        %v1926 = vunpack.c.l.bf16 %v1489
        %v1927 = vunpack.c.h.bf16 %v1489
        %v1928 = vunpack.c.l.bf16 %v1490
        %v1929 = vunpack.c.h.bf16 %v1490
        %v1930 = vunpack.c.l.bf16 %v1491
        %v1931 = vunpack.c.h.bf16 %v1491
        %v1932 = vunpack.c.l.bf16 %v1492
        %v1933 = vunpack.c.h.bf16 %v1492
        %v1934 = vunpack.c.l.bf16 %v1493
        %v1935 = vunpack.c.h.bf16 %v1493
        %v1936 = vunpack.c.l.bf16 %v1494
        %v1937 = vunpack.c.h.bf16 %v1494
        %v1938 = vunpack.c.l.bf16 %v1495
        %v1939 = vunpack.c.h.bf16 %v1495
        %v1940 = vunpack.c.l.bf16 %v1496
        %v1941 = vunpack.c.h.bf16 %v1496
        %v1942 = vunpack.c.l.bf16 %v1497
        %v1943 = vunpack.c.h.bf16 %v1497
        %v1944 = vunpack.c.l.bf16 %v1498
        %v1945 = vunpack.c.h.bf16 %v1498
        %v1946 = vunpack.c.l.bf16 %v1499
        %v1947 = vunpack.c.h.bf16 %v1499
        %v1948 = vunpack.c.l.bf16 %v1500
        %v1949 = vunpack.c.h.bf16 %v1500
        %v1950 = vunpack.c.l.bf16 %v1501
        %v1951 = vunpack.c.h.bf16 %v1501
        %v1952 = vunpack.c.l.bf16 %v1502
        %v1953 = vunpack.c.h.bf16 %v1502
        %v1954 = vunpack.c.l.bf16 %v1503
        %v1955 = vunpack.c.h.bf16 %v1503
        %v1956 = vunpack.c.l.bf16 %v1504
        %v1957 = vunpack.c.h.bf16 %v1504
        %v1958 = vunpack.c.l.bf16 %v1505
        %v1959 = vunpack.c.h.bf16 %v1505
        %v1960 = vunpack.c.l.bf16 %v1506
        %v1961 = vunpack.c.h.bf16 %v1506
        %v1962 = vunpack.c.l.bf16 %v1507
        %v1963 = vunpack.c.h.bf16 %v1507
        %v1964 = vunpack.c.l.bf16 %v1508
        %v1965 = vunpack.c.h.bf16 %v1508
        %v1966 = vunpack.c.l.bf16 %v1509
        %v1967 = vunpack.c.h.bf16 %v1509
        %v1968 = vunpack.c.l.bf16 %v1510
        %v1969 = vunpack.c.h.bf16 %v1510
        %v1970 = vunpack.c.l.bf16 %v1511
        %v1971 = vunpack.c.h.bf16 %v1511
        %v1972 = vunpack.c.l.bf16 %v1512
        %v1973 = vunpack.c.h.bf16 %v1512
        %v1974 = vunpack.c.l.bf16 %v1513
        %v1975 = vunpack.c.h.bf16 %v1513
        %v1976 = vunpack.c.l.bf16 %v1514
        %v1977 = vunpack.c.h.bf16 %v1514
        %v1978 = vunpack.c.l.bf16 %v1515
        %v1979 = vunpack.c.h.bf16 %v1515
        %v1980 = vunpack.c.l.bf16 %v1516
        %v1981 = vunpack.c.h.bf16 %v1516
        %v1982 = vunpack.c.l.bf16 %v1517
        %v1983 = vunpack.c.h.bf16 %v1517
        %v1984 = vunpack.c.l.bf16 %v1518
        %v1985 = vunpack.c.h.bf16 %v1518
        %v1986 = vunpack.c.l.bf16 %v1519
        %v1987 = vunpack.c.h.bf16 %v1519
        %v1988 = vunpack.c.l.bf16 %v1520
        %v1989 = vunpack.c.h.bf16 %v1520
        %v1990 = vunpack.c.l.bf16 %v1521
        %v1991 = vunpack.c.h.bf16 %v1521
        %v1992 = vunpack.c.l.bf16 %v1522
        %v1993 = vunpack.c.h.bf16 %v1522
        %v1994 = vunpack.c.l.bf16 %v1523
        %v1995 = vunpack.c.h.bf16 %v1523
        %v1996 = vunpack.c.l.bf16 %v1524
        %v1997 = vunpack.c.h.bf16 %v1524
        %v1998 = vunpack.c.l.bf16 %v1525
        %v1999 = vunpack.c.h.bf16 %v1525
        %v2000 = vunpack.c.l.bf16 %v1526
        %v2001 = vunpack.c.h.bf16 %v1526
        %v2002 = vunpack.c.l.bf16 %v1527
        %v2003 = vunpack.c.h.bf16 %v1527
        %v2004 = vunpack.c.l.bf16 %v1528
        %v2005 = vunpack.c.h.bf16 %v1528
        %v2006 = vunpack.c.l.bf16 %v1529
        %v2007 = vunpack.c.h.bf16 %v1529
        %v2008 = vunpack.c.l.bf16 %v1530
        %v2009 = vunpack.c.h.bf16 %v1530
        %v2010 = vunpack.c.l.bf16 %v1531
        %v2011 = vunpack.c.h.bf16 %v1531
        %v2012 = vunpack.c.l.bf16 %v1532
        %v2013 = vunpack.c.h.bf16 %v1532
        %v2014 = vunpack.c.l.bf16 %v1533
        %v2015 = vunpack.c.h.bf16 %v1533
        %v2016 = vunpack.c.l.bf16 %v1534
        %v2017 = vunpack.c.h.bf16 %v1534
        %v2018 = vunpack.c.l.bf16 %v1535
        %v2019 = vunpack.c.h.bf16 %v1535
        %v2020 = vunpack.c.l.bf16 %v1536
        %v2021 = vunpack.c.h.bf16 %v1536
        %v2022 = vunpack.c.l.bf16 %v1537
        %v2023 = vunpack.c.h.bf16 %v1537
        %v2024 = vunpack.c.l.bf16 %v1538
        %v2025 = vunpack.c.h.bf16 %v1538
        %v2026 = vunpack.c.l.bf16 %v1539
        %v2027 = vunpack.c.h.bf16 %v1539
        %v2028 = vunpack.c.l.bf16 %v1540
        %v2029 = vunpack.c.h.bf16 %v1540
        %v2030 = vunpack.c.l.bf16 %v1541
        %v2031 = vunpack.c.h.bf16 %v1541
        %v2032 = vunpack.c.l.bf16 %v1542
        %v2033 = vunpack.c.h.bf16 %v1542
        %v2034 = vunpack.c.l.bf16 %v1543
        %v2035 = vunpack.c.h.bf16 %v1543
        %v2036 = vunpack.c.l.bf16 %v1544
        %v2037 = vunpack.c.h.bf16 %v1544
        %v2038 = vunpack.c.l.bf16 %v1545
        %v2039 = vunpack.c.h.bf16 %v1545
        %v2040 = vunpack.c.l.bf16 %v1546
        %v2041 = vunpack.c.h.bf16 %v1546
        %v2042 = vunpack.c.l.bf16 %v1547
        %v2043 = vunpack.c.h.bf16 %v1547
        %v2044 = vunpack.c.l.bf16 %v1548
        %v2045 = vunpack.c.h.bf16 %v1548
        %v2046 = vunpack.c.l.bf16 %v1549
        %v2047 = vunpack.c.h.bf16 %v1549
        %v2048 = vunpack.c.l.bf16 %v1550
        %v2049 = vunpack.c.h.bf16 %v1550
        %v2050 = vunpack.c.l.bf16 %v1551
        %v2051 = vunpack.c.h.bf16 %v1551
        %v2052 = vunpack.c.l.bf16 %v1552
        %v2053 = vunpack.c.h.bf16 %v1552
        %v2054 = vunpack.c.l.bf16 %v1553
        %v2055 = vunpack.c.h.bf16 %v1553
        %v2056 = vunpack.c.l.bf16 %v1554
        %v2057 = vunpack.c.h.bf16 %v1554
        %v2058 = vunpack.c.l.bf16 %v1555
        %v2059 = vunpack.c.h.bf16 %v1555
        %v2060 = vunpack.c.l.bf16 %v1556
        %v2061 = vunpack.c.h.bf16 %v1556
        %v2062 = vunpack.c.l.bf16 %v1557
        %v2063 = vunpack.c.h.bf16 %v1557
        %v2064 = vunpack.c.l.bf16 %v1558
        %v2065 = vunpack.c.h.bf16 %v1558
        %v2066 = vunpack.c.l.bf16 %v1559
        %v2067 = vunpack.c.h.bf16 %v1559
        %v2068 = vunpack.c.l.bf16 %v1560
        %v2069 = vunpack.c.h.bf16 %v1560
        %v2070 = vunpack.c.l.bf16 %v1561
        %v2071 = vunpack.c.h.bf16 %v1561
        %v2072 = vunpack.c.l.bf16 %v1562
        %v2073 = vunpack.c.h.bf16 %v1562
        %v2074 = vunpack.c.l.bf16 %v1563
        %v2075 = vunpack.c.h.bf16 %v1563
        %v2076 = vunpack.c.l.bf16 %v1564
        %v2077 = vunpack.c.h.bf16 %v1564
        %v2078 = vunpack.c.l.bf16 %v1565
        %v2079 = vunpack.c.h.bf16 %v1565
        %v2080 = vunpack.c.l.bf16 %v1566
        %v2081 = vunpack.c.h.bf16 %v1566
        %v2082 = vunpack.c.l.bf16 %v1567
        %v2083 = vunpack.c.h.bf16 %v1567
        %v2084 = vunpack.c.l.bf16 %v1568
        %v2085 = vunpack.c.h.bf16 %v1568
        %v2086 = vunpack.c.l.bf16 %v1569
        %v2087 = vunpack.c.h.bf16 %v1569
        %v2088 = vunpack.c.l.bf16 %v1570
        %v2089 = vunpack.c.h.bf16 %v1570
        %v2090 = vunpack.c.l.bf16 %v1571
        %v2091 = vunpack.c.h.bf16 %v1571
        %v2092 = vunpack.c.l.bf16 %v1572
        %v2093 = vunpack.c.h.bf16 %v1572
        %v2094 = vunpack.c.l.bf16 %v1573
        %v2095 = vunpack.c.h.bf16 %v1573
        %v2096 = vunpack.c.l.bf16 %v1574
        %v2097 = vunpack.c.h.bf16 %v1574
        %v2098 = vunpack.c.l.bf16 %v1575
        %v2099 = vunpack.c.h.bf16 %v1575
        %v2100 = vunpack.c.l.bf16 %v1576
        %v2101 = vunpack.c.h.bf16 %v1576
        %v2102 = vunpack.c.l.bf16 %v1577
        %v2103 = vunpack.c.h.bf16 %v1577
        %v2104 = vunpack.c.l.bf16 %v1578
        %v2105 = vunpack.c.h.bf16 %v1578
        %v2106 = vunpack.c.l.bf16 %v1579
        %v2107 = vunpack.c.h.bf16 %v1579
        %v2108 = vunpack.c.l.bf16 %v1580
        %v2109 = vunpack.c.h.bf16 %v1580
        %v2110 = vunpack.c.l.bf16 %v1581
        %v2111 = vunpack.c.h.bf16 %v1581
        %v2112 = vunpack.c.l.bf16 %v1582
        %v2113 = vunpack.c.h.bf16 %v1582
        %v2114 = vunpack.c.l.bf16 %v1583
        %v2115 = vunpack.c.h.bf16 %v1583
        %v2116 = vunpack.c.l.bf16 %v1584
        %v2117 = vunpack.c.h.bf16 %v1584
        %v2118 = vunpack.c.l.bf16 %v1585
        %v2119 = vunpack.c.h.bf16 %v1585
        %v2120 = vunpack.c.l.bf16 %v1586
        %v2121 = vunpack.c.h.bf16 %v1586
        %v2122 = vunpack.c.l.bf16 %v1587
        %v2123 = vunpack.c.h.bf16 %v1587
        %v2124 = vunpack.c.l.bf16 %v1588
        %v2125 = vunpack.c.h.bf16 %v1588
        %v2126 = vunpack.c.l.bf16 %v1589
        %v2127 = vunpack.c.h.bf16 %v1589
        %v2128 = vunpack.c.l.bf16 %v1590
        %v2129 = vunpack.c.h.bf16 %v1590
        %v2130 = vunpack.c.l.bf16 %v1591
        %v2131 = vunpack.c.h.bf16 %v1591
        %v2132 = vunpack.c.l.bf16 %v1592
        %v2133 = vunpack.c.h.bf16 %v1592
        %v2134 = vunpack.c.l.bf16 %v1593
        %v2135 = vunpack.c.h.bf16 %v1593
        %v2136 = vunpack.c.l.bf16 %v1594
        %v2137 = vunpack.c.h.bf16 %v1594
        %v2138 = vunpack.c.l.bf16 %v1595
        %v2139 = vunpack.c.h.bf16 %v1595
        %v2140 = vunpack.c.l.bf16 %v1596
        %v2141 = vunpack.c.h.bf16 %v1596
        %v2142 = vunpack.c.l.bf16 %v1597
        %v2143 = vunpack.c.h.bf16 %v1597
        %v2144 = vunpack.c.l.bf16 %v1598
        %v2145 = vunpack.c.h.bf16 %v1598
        %v2146 = vunpack.c.l.bf16 %v1599
        %v2147 = vunpack.c.h.bf16 %v1599
        %v2148 = vunpack.c.l.bf16 %v1600
        %v2149 = vunpack.c.h.bf16 %v1600
        %v2150 = vunpack.c.l.bf16 %v1601
        %v2151 = vunpack.c.h.bf16 %v1601
        %v2152 = vunpack.c.l.bf16 %v1602
        %v2153 = vunpack.c.h.bf16 %v1602
        %v2154 = vunpack.c.l.bf16 %v1603
        %v2155 = vunpack.c.h.bf16 %v1603
        %v2156 = vunpack.c.l.bf16 %v1604
        %v2157 = vunpack.c.h.bf16 %v1604
        %v2158 = vunpack.c.l.bf16 %v1605
        %v2159 = vunpack.c.h.bf16 %v1605
        %v2160 = vunpack.c.l.bf16 %v1606
        %v2161 = vunpack.c.h.bf16 %v1606
        %v2162 = vunpack.c.l.bf16 %v1607
        %v2163 = vunpack.c.h.bf16 %v1607
        %v2164 = vunpack.c.l.bf16 %v1608
        %v2165 = vunpack.c.h.bf16 %v1608
        %v2166 = vunpack.c.l.bf16 %v1609
        %v2167 = vunpack.c.h.bf16 %v1609
        %v2168 = vunpack.c.l.bf16 %v1610
        %v2169 = vunpack.c.h.bf16 %v1610
        %v2170 = vunpack.c.l.bf16 %v1611
        %v2171 = vunpack.c.h.bf16 %v1611
        %v2172 = vunpack.c.l.bf16 %v1612
        %v2173 = vunpack.c.h.bf16 %v1612
        %v2174 = vunpack.c.l.bf16 %v1613
        %v2175 = vunpack.c.h.bf16 %v1613
        %v2176 = vunpack.c.l.bf16 %v1614
        %v2177 = vunpack.c.h.bf16 %v1614
        %v2178 = vunpack.c.l.bf16 %v1615
        %v2179 = vunpack.c.h.bf16 %v1615
        %v2180 = vunpack.c.l.bf16 %v1616
        %v2181 = vunpack.c.h.bf16 %v1616
        %v2182 = vunpack.c.l.bf16 %v1617
        %v2183 = vunpack.c.h.bf16 %v1617
        %v2184 = vunpack.c.l.bf16 %v1618
        %v2185 = vunpack.c.h.bf16 %v1618
        %v2186 = vunpack.c.l.bf16 %v1619
        %v2187 = vunpack.c.h.bf16 %v1619
        %v2188 = vunpack.c.l.bf16 %v1620
        %v2189 = vunpack.c.h.bf16 %v1620
        %v2190 = vunpack.c.l.bf16 %v1621
        %v2191 = vunpack.c.h.bf16 %v1621
        %v2192 = vunpack.c.l.bf16 %v1622
        %v2193 = vunpack.c.h.bf16 %v1622
        %v2194 = vunpack.c.l.bf16 %v1623
        %v2195 = vunpack.c.h.bf16 %v1623
        %v2196 = vunpack.c.l.bf16 %v1624
        %v2197 = vunpack.c.h.bf16 %v1624
        %v2198 = vunpack.c.l.bf16 %v1625
        %v2199 = vunpack.c.h.bf16 %v1625
        %v2200 = vunpack.c.l.bf16 %v1626
        %v2201 = vunpack.c.h.bf16 %v1626
        %v2202 = vunpack.c.l.bf16 %v1627
        %v2203 = vunpack.c.h.bf16 %v1627
        %v2204 = vunpack.c.l.bf16 %v1628
        %v2205 = vunpack.c.h.bf16 %v1628
        %v2206 = vunpack.c.l.bf16 %v1629
        %v2207 = vunpack.c.h.bf16 %v1629
        %v2208 = vunpack.c.l.bf16 %v1630
        %v2209 = vunpack.c.h.bf16 %v1630
        %v2210 = vunpack.c.l.bf16 %v1631
        %v2211 = vunpack.c.h.bf16 %v1631
        %v2212 = vunpack.c.l.bf16 %v1632
        %v2213 = vunpack.c.h.bf16 %v1632
        %v2214 = vunpack.c.l.bf16 %v1633
        %v2215 = vunpack.c.h.bf16 %v1633
        %v2216 = vunpack.c.l.bf16 %v1634
        %v2217 = vunpack.c.h.bf16 %v1634
        %v2218 = vunpack.c.l.bf16 %v1635
        %v2219 = vunpack.c.h.bf16 %v1635
        %v2220 = vunpack.c.l.bf16 %v1636
        %v2221 = vunpack.c.h.bf16 %v1636
        %v2222 = vunpack.c.l.bf16 %v1637
        %v2223 = vunpack.c.h.bf16 %v1637
        %v2224 = vunpack.c.l.bf16 %v1638
        %v2225 = vunpack.c.h.bf16 %v1638
        %v2226 = vunpack.c.l.bf16 %v1639
        %v2227 = vunpack.c.h.bf16 %v1639
        %v2228 = vunpack.c.l.bf16 %v1640
        %v2229 = vunpack.c.h.bf16 %v1640
        %v2230 = vunpack.c.l.bf16 %v1641
        %v2231 = vunpack.c.h.bf16 %v1641
        %v2232 = vunpack.c.l.bf16 %v1642
        %v2233 = vunpack.c.h.bf16 %v1642
        %v2234 = vunpack.c.l.bf16 %v1643
        %v2235 = vunpack.c.h.bf16 %v1643
        %v2236 = vunpack.c.l.bf16 %v1644
        %v2237 = vunpack.c.h.bf16 %v1644
        %v2238 = vunpack.c.l.bf16 %v1645
        %v2239 = vunpack.c.h.bf16 %v1645
        %v2240 = vunpack.c.l.bf16 %v1646
        %v2241 = vunpack.c.h.bf16 %v1646
        %v2242 = vunpack.c.l.bf16 %v1647
        %v2243 = vunpack.c.h.bf16 %v1647
        %v2244 = vunpack.c.l.bf16 %v1648
        %v2245 = vunpack.c.h.bf16 %v1648
        %v2246 = vunpack.c.l.bf16 %v1649
        %v2247 = vunpack.c.h.bf16 %v1649
        %v2248 = vunpack.c.l.bf16 %v1650
        %v2249 = vunpack.c.h.bf16 %v1650
        %v2250 = vunpack.c.l.bf16 %v1651
        %v2251 = vunpack.c.h.bf16 %v1651
        %v2252 = vunpack.c.l.bf16 %v1652
        %v2253 = vunpack.c.h.bf16 %v1652
        %v2254 = vunpack.c.l.bf16 %v1653
        %v2255 = vunpack.c.h.bf16 %v1653
        %v2256 = vunpack.c.l.bf16 %v1654
        %v2257 = vunpack.c.h.bf16 %v1654
        %v2258 = vunpack.c.l.bf16 %v1655
        %v2259 = vunpack.c.h.bf16 %v1655
        %v2260 = vunpack.c.l.bf16 %v1656
        %v2261 = vunpack.c.h.bf16 %v1656
        %v2262 = vunpack.c.l.bf16 %v1657
        %v2263 = vunpack.c.h.bf16 %v1657
        %v2264 = vunpack.c.l.bf16 %v1658
        %v2265 = vunpack.c.h.bf16 %v1658
        %v2266 = vunpack.c.l.bf16 %v1659
        %v2267 = vunpack.c.h.bf16 %v1659
        %v2268 = vunpack.c.l.bf16 %v1660
        %v2269 = vunpack.c.h.bf16 %v1660
        %v2270 = vunpack.c.l.bf16 %v1661
        %v2271 = vunpack.c.h.bf16 %v1661
        %v2272 = vunpack.c.l.bf16 %v1662
        %v2273 = vunpack.c.h.bf16 %v1662
        %v2274 = vunpack.c.l.bf16 %v1663
        %v2275 = vunpack.c.h.bf16 %v1663
        %v2276 = vunpack.c.l.bf16 %v1664
        %v2277 = vunpack.c.h.bf16 %v1664
        %v2278 = vunpack.c.l.bf16 %v1665
        %v2279 = vunpack.c.h.bf16 %v1665
        %v2280 = vunpack.c.l.bf16 %v1666
        %v2281 = vunpack.c.h.bf16 %v1666
        %v2282 = vunpack.c.l.bf16 %v1667
        %v2283 = vunpack.c.h.bf16 %v1667
        %v2284 = vunpack.c.l.bf16 %v1668
        %v2285 = vunpack.c.h.bf16 %v1668
        %v2286 = vunpack.c.l.bf16 %v1669
        %v2287 = vunpack.c.h.bf16 %v1669
        %v2288 = vunpack.c.l.bf16 %v1670
        %v2289 = vunpack.c.h.bf16 %v1670
        %v2290 = vunpack.c.l.bf16 %v1671
        %v2291 = vunpack.c.h.bf16 %v1671
        %v2292 = vunpack.c.l.bf16 %v1672
        %v2293 = vunpack.c.h.bf16 %v1672
        %v2294 = vunpack.c.l.bf16 %v1673
        %v2295 = vunpack.c.h.bf16 %v1673
        %v2296 = vunpack.c.l.bf16 %v1674
        %v2297 = vunpack.c.h.bf16 %v1674
        %v2298 = vunpack.c.l.bf16 %v1675
        %v2299 = vunpack.c.h.bf16 %v1675
        %v2300 = vunpack.c.l.bf16 %v1676
        %v2301 = vunpack.c.h.bf16 %v1676
        %v2302 = vunpack.c.l.bf16 %v1677
        %v2303 = vunpack.c.h.bf16 %v1677
        %v2304 = vunpack.c.l.bf16 %v1678
        %v2305 = vunpack.c.h.bf16 %v1678
        %v2306 = vunpack.c.l.bf16 %v1679
        %v2307 = vunpack.c.h.bf16 %v1679
        %v2308 = vunpack.c.l.bf16 %v1680
        %v2309 = vunpack.c.h.bf16 %v1680
        %v2310 = vunpack.c.l.bf16 %v1681
        %v2311 = vunpack.c.h.bf16 %v1681
        %v2312 = vunpack.c.l.bf16 %v1682
        %v2313 = vunpack.c.h.bf16 %v1682
        %v2314 = vunpack.c.l.bf16 %v1683
        %v2315 = vunpack.c.h.bf16 %v1683
        %v2316 = vunpack.c.l.bf16 %v1684
        %v2317 = vunpack.c.h.bf16 %v1684
        %v2318 = vunpack.c.l.bf16 %v1685
        %v2319 = vunpack.c.h.bf16 %v1685
        %v2320 = vunpack.c.l.bf16 %v1686
        %v2321 = vunpack.c.h.bf16 %v1686
        %v2322 = vunpack.c.l.bf16 %v1687
        %v2323 = vunpack.c.h.bf16 %v1687
        %v2324 = vunpack.c.l.bf16 %v1688
        %v2325 = vunpack.c.h.bf16 %v1688
        %v2326 = vunpack.c.l.bf16 %v1689
        %v2327 = vunpack.c.h.bf16 %v1689
        %v2328 = vunpack.c.l.bf16 %v1690
        %v2329 = vunpack.c.h.bf16 %v1690
        %v2330 = vunpack.c.l.bf16 %v1691
        %v2331 = vunpack.c.h.bf16 %v1691
        %v2332 = vunpack.c.l.bf16 %v1692
        %v2333 = vunpack.c.h.bf16 %v1692
        %v2334 = vunpack.c.l.bf16 %v1693
        %v2335 = vunpack.c.h.bf16 %v1693
        %v2336 = vunpack.c.l.bf16 %v1694
        %v2337 = vunpack.c.h.bf16 %v1694
        %v2338 = vunpack.c.l.bf16 %v1695
        %v2339 = vunpack.c.h.bf16 %v1695
        %v2340 = vunpack.c.l.bf16 %v1696
        %v2341 = vunpack.c.h.bf16 %v1696
        %v2342 = vunpack.c.l.bf16 %v1697
        %v2343 = vunpack.c.h.bf16 %v1697
        %v2344 = vunpack.c.l.bf16 %v1698
        %v2345 = vunpack.c.h.bf16 %v1698
        %v2346 = vunpack.c.l.bf16 %v1699
        %v2347 = vunpack.c.h.bf16 %v1699
        %v2348 = vunpack.c.l.bf16 %v1700
        %v2349 = vunpack.c.h.bf16 %v1700
        %v2350 = vunpack.c.l.bf16 %v1701
        %v2351 = vunpack.c.h.bf16 %v1701
        %v2352 = vunpack.c.l.bf16 %v1702
        %v2353 = vunpack.c.h.bf16 %v1702
        %v2354 = vunpack.c.l.bf16 %v1703
        %v2355 = vunpack.c.h.bf16 %v1703
        %v2356 = vunpack.c.l.bf16 %v1704
        %v2357 = vunpack.c.h.bf16 %v1704
        %v2358 = vunpack.c.l.bf16 %v1705
        %v2359 = vunpack.c.h.bf16 %v1705
        %v2360 = vunpack.c.l.bf16 %v1706
        %v2361 = vunpack.c.h.bf16 %v1706
        %v2362 = vunpack.c.l.bf16 %v1707
        %v2363 = vunpack.c.h.bf16 %v1707
        %v2364 = vunpack.c.l.bf16 %v1708
        %v2365 = vunpack.c.h.bf16 %v1708
        %v2366 = vunpack.c.l.bf16 %v1709
        %v2367 = vunpack.c.h.bf16 %v1709
        %v2368 = vunpack.c.l.bf16 %v1710
        %v2369 = vunpack.c.h.bf16 %v1710
        %v2370 = vunpack.c.l.bf16 %v1711
        %v2371 = vunpack.c.h.bf16 %v1711
        %v2372 = vunpack.c.l.bf16 %v1712
        %v2373 = vunpack.c.h.bf16 %v1712
        %v2374 = vunpack.c.l.bf16 %v1713
        %v2375 = vunpack.c.h.bf16 %v1713
        %v2376 = vunpack.c.l.bf16 %v1714
        %v2377 = vunpack.c.h.bf16 %v1714
        %v2378 = vunpack.c.l.bf16 %v1715
        %v2379 = vunpack.c.h.bf16 %v1715
        %v2380 = vunpack.c.l.bf16 %v1716
        %v2381 = vunpack.c.h.bf16 %v1716
        %v2382 = vunpack.c.l.bf16 %v1717
        %v2383 = vunpack.c.h.bf16 %v1717
        %v2384 = vunpack.c.l.bf16 %v1718
        %v2385 = vunpack.c.h.bf16 %v1718
        %v2386 = vunpack.c.l.bf16 %v1719
        %v2387 = vunpack.c.h.bf16 %v1719
        %v2388 = vunpack.c.l.bf16 %v1720
        %v2389 = vunpack.c.h.bf16 %v1720
        %v2390 = vunpack.c.l.bf16 %v1721
        %v2391 = vunpack.c.h.bf16 %v1721
        %v2392 = vunpack.c.l.bf16 %v1722
        %v2393 = vunpack.c.h.bf16 %v1722
        %v2394 = vunpack.c.l.bf16 %v1723
        %v2395 = vunpack.c.h.bf16 %v1723
        %v2396 = vunpack.c.l.bf16 %v1724
        %v2397 = vunpack.c.h.bf16 %v1724
        %v2398 = vunpack.c.l.bf16 %v1725
        %v2399 = vunpack.c.h.bf16 %v1725
        %v2400 = vunpack.c.l.bf16 %v1726
        %v2401 = vunpack.c.h.bf16 %v1726
        %v2402 = vunpack.c.l.bf16 %v1727
        %v2403 = vunpack.c.h.bf16 %v1727
        %v2404 = vunpack.c.l.bf16 %v1728
        %v2405 = vunpack.c.h.bf16 %v1728
        %v2406 = vunpack.c.l.bf16 %v1729
        %v2407 = vunpack.c.h.bf16 %v1729
        %v2408 = vunpack.c.l.bf16 %v1730
        %v2409 = vunpack.c.h.bf16 %v1730
        %v2410 = vunpack.c.l.bf16 %v1731
        %v2411 = vunpack.c.h.bf16 %v1731
        %v2412 = vunpack.c.l.bf16 %v1732
        %v2413 = vunpack.c.h.bf16 %v1732
        %v2414 = vunpack.c.l.bf16 %v1733
        %v2415 = vunpack.c.h.bf16 %v1733
        %v2416 = vunpack.c.l.bf16 %v1734
        %v2417 = vunpack.c.h.bf16 %v1734
        %v2418 = vunpack.c.l.bf16 %v1735
        %v2419 = vunpack.c.h.bf16 %v1735
        %v2420 = vunpack.c.l.bf16 %v1736
        %v2421 = vunpack.c.h.bf16 %v1736
        %v2422 = vunpack.c.l.bf16 %v1737
        %v2423 = vunpack.c.h.bf16 %v1737
        %v2424 = vunpack.c.l.bf16 %v1738
        %v2425 = vunpack.c.h.bf16 %v1738
        %v2426 = vunpack.c.l.bf16 %v1739
        %v2427 = vunpack.c.h.bf16 %v1739
        %v2428 = vunpack.c.l.bf16 %v1740
        %v2429 = vunpack.c.h.bf16 %v1740
        %v2430 = vunpack.c.l.bf16 %v1741
        %v2431 = vunpack.c.h.bf16 %v1741
        %v2432 = vunpack.c.l.bf16 %v1742
        %v2433 = vunpack.c.h.bf16 %v1742
        %v2434 = vunpack.c.l.bf16 %v1743
        %v2435 = vunpack.c.h.bf16 %v1743
        %v2436 = vunpack.c.l.bf16 %v1744
        %v2437 = vunpack.c.h.bf16 %v1744
        %v2438 = vunpack.c.l.bf16 %v1745
        %v2439 = vunpack.c.h.bf16 %v1745
        %v2440 = vunpack.c.l.bf16 %v1746
        %v2441 = vunpack.c.h.bf16 %v1746
        %v2442 = vunpack.c.l.bf16 %v1747
        %v2443 = vunpack.c.h.bf16 %v1747
        %v2444 = vunpack.c.l.bf16 %v1748
        %v2445 = vunpack.c.h.bf16 %v1748
        %v2446 = vunpack.c.l.bf16 %v1749
        %v2447 = vunpack.c.h.bf16 %v1749
        %v2448 = vunpack.c.l.bf16 %v1750
        %v2449 = vunpack.c.h.bf16 %v1750
        %v2450 = vunpack.c.l.bf16 %v1751
        %v2451 = vunpack.c.h.bf16 %v1751
        %v2452 = vunpack.c.l.bf16 %v1752
        %v2453 = vunpack.c.h.bf16 %v1752
        %v2454 = vunpack.c.l.bf16 %v1753
        %v2455 = vunpack.c.h.bf16 %v1753
        %v2456 = vunpack.c.l.bf16 %v1754
        %v2457 = vunpack.c.h.bf16 %v1754
        %v2458 = vunpack.c.l.bf16 %v1755
        %v2459 = vunpack.c.h.bf16 %v1755
        %v2460 = vunpack.c.l.bf16 %v1756
        %v2461 = vunpack.c.h.bf16 %v1756
        %v2462 = vunpack.c.l.bf16 %v1757
        %v2463 = vunpack.c.h.bf16 %v1757
        %v2464 = vunpack.c.l.bf16 %v1758
        %v2465 = vunpack.c.h.bf16 %v1758
        %v2466 = vunpack.c.l.bf16 %v1759
        %v2467 = vunpack.c.h.bf16 %v1759
        %v2468 = vunpack.c.l.bf16 %v1760
        %v2469 = vunpack.c.h.bf16 %v1760
        %v2470 = vunpack.c.l.bf16 %v1761
        %v2471 = vunpack.c.h.bf16 %v1761
        %v2472 = vunpack.c.l.bf16 %v1762
        %v2473 = vunpack.c.h.bf16 %v1762
        %v2474 = vunpack.c.l.bf16 %v1763
        %v2475 = vunpack.c.h.bf16 %v1763
        %v2476 = vunpack.c.l.bf16 %v1764
        %v2477 = vunpack.c.h.bf16 %v1764
        %v2478 = vunpack.c.l.bf16 %v1765
        %v2479 = vunpack.c.h.bf16 %v1765
        %v2480 = vunpack.c.l.bf16 %v1766
        %v2481 = vunpack.c.h.bf16 %v1766
        %v2482 = vunpack.c.l.bf16 %v1767
        %v2483 = vunpack.c.h.bf16 %v1767
        %v2484 = vunpack.c.l.bf16 %v1768
        %v2485 = vunpack.c.h.bf16 %v1768
        %v2486 = vunpack.c.l.bf16 %v1769
        %v2487 = vunpack.c.h.bf16 %v1769
        %v2488 = vunpack.c.l.bf16 %v1770
        %v2489 = vunpack.c.h.bf16 %v1770
        %v2490 = vunpack.c.l.bf16 %v1771
        %v2491 = vunpack.c.h.bf16 %v1771
        %v2492 = vunpack.c.l.bf16 %v1772
        %v2493 = vunpack.c.h.bf16 %v1772
        %v2494 = vunpack.c.l.bf16 %v1773
        %v2495 = vunpack.c.h.bf16 %v1773
        %v2496 = vunpack.c.l.bf16 %v1774
        %v2497 = vunpack.c.h.bf16 %v1774
        %v2498 = vunpack.c.l.bf16 %v1775
        %v2499 = vunpack.c.h.bf16 %v1775
        %v2500 = vunpack.c.l.bf16 %v1776
        %v2501 = vunpack.c.h.bf16 %v1776
        %v2502 = vunpack.c.l.bf16 %v1777
        %v2503 = vunpack.c.h.bf16 %v1777
        %v2504 = vunpack.c.l.bf16 %v1778
        %v2505 = vunpack.c.h.bf16 %v1778
        %v2506 = vunpack.c.l.bf16 %v1779
        %v2507 = vunpack.c.h.bf16 %v1779
        %v2508 = vunpack.c.l.bf16 %v1780
        %v2509 = vunpack.c.h.bf16 %v1780
        %v2510 = vunpack.c.l.bf16 %v1781
        %v2511 = vunpack.c.h.bf16 %v1781
        %v2512 = vunpack.c.l.bf16 %v1782
        %v2513 = vunpack.c.h.bf16 %v1782
        %v2514 = vunpack.c.l.bf16 %v1783
        %v2515 = vunpack.c.h.bf16 %v1783
        %v2516 = vunpack.c.l.bf16 %v1784
        %v2517 = vunpack.c.h.bf16 %v1784
        %v2518 = vunpack.c.l.bf16 %v1785
        %v2519 = vunpack.c.h.bf16 %v1785
        %v2520 = vunpack.c.l.bf16 %v1786
        %v2521 = vunpack.c.h.bf16 %v1786
        %v2522 = vunpack.c.l.bf16 %v1787
        %v2523 = vunpack.c.h.bf16 %v1787
        %v2524 = vunpack.c.l.bf16 %v1788
        %v2525 = vunpack.c.h.bf16 %v1788
        %v2526 = vunpack.c.l.bf16 %v1789
        %v2527 = vunpack.c.h.bf16 %v1789
        %v2528 = vunpack.c.l.bf16 %v1790
        %v2529 = vunpack.c.h.bf16 %v1790
        %v2530 = vunpack.c.l.bf16 %v1791
        %v2531 = vunpack.c.h.bf16 %v1791
        %v2532 = vunpack.c.l.bf16 %v1792
        %v2533 = vunpack.c.h.bf16 %v1792
        %v2534 = vunpack.c.l.bf16 %v1793
        %v2535 = vunpack.c.h.bf16 %v1793
        %v2536 = vunpack.c.l.bf16 %v1794
        %v2537 = vunpack.c.h.bf16 %v1794
        %v2538 = vunpack.c.l.bf16 %v1795
        %v2539 = vunpack.c.h.bf16 %v1795
        %v2540 = vunpack.c.l.bf16 %v1796
        %v2541 = vunpack.c.h.bf16 %v1796
        %v2542 = vunpack.c.l.bf16 %v1797
        %v2543 = vunpack.c.h.bf16 %v1797
        %v2544 = vunpack.c.l.bf16 %v1798
        %v2545 = vunpack.c.h.bf16 %v1798
        %v2546 = vunpack.c.l.bf16 %v1799
        %v2547 = vunpack.c.h.bf16 %v1799
        %v2548 = vunpack.c.l.bf16 %v1800
        %v2549 = vunpack.c.h.bf16 %v1800
        %v2550 = vunpack.c.l.bf16 %v1801
        %v2551 = vunpack.c.h.bf16 %v1801
        %v2552 = vunpack.c.l.bf16 %v1802
        %v2553 = vunpack.c.h.bf16 %v1802
        %v2554 = vunpack.c.l.bf16 %v1803
        %v2555 = vunpack.c.h.bf16 %v1803
        %v2556 = vunpack.c.l.bf16 %v1804
        %v2557 = vunpack.c.h.bf16 %v1804
        %v2558 = vunpack.c.l.bf16 %v1805
        %v2559 = vunpack.c.h.bf16 %v1805
        %v2560 = vunpack.c.l.bf16 %v1806
        %v2561 = vunpack.c.h.bf16 %v1806
        %v2562 = vunpack.c.l.bf16 %v1807
        %v2563 = vunpack.c.h.bf16 %v1807
        %v2564 = vunpack.c.l.bf16 %v1808
        %v2565 = vunpack.c.h.bf16 %v1808
        %v2566 = vunpack.c.l.bf16 %v1809
        %v2567 = vunpack.c.h.bf16 %v1809
        %v2568 = vunpack.c.l.bf16 %v1810
        %v2569 = vunpack.c.h.bf16 %v1810
        %v2570 = vunpack.c.l.bf16 %v1811
        %v2571 = vunpack.c.h.bf16 %v1811
        %v2572 = vunpack.c.l.bf16 %v1812
        %v2573 = vunpack.c.h.bf16 %v1812
        %v2574 = vunpack.c.l.bf16 %v1813
        %v2575 = vunpack.c.h.bf16 %v1813
        %v2576 = vunpack.c.l.bf16 %v1814
        %v2577 = vunpack.c.h.bf16 %v1814
        %v2578 = vunpack.c.l.bf16 %v1815
        %v2579 = vunpack.c.h.bf16 %v1815
        %v2580 = vunpack.c.l.bf16 %v1816
        %v2581 = vunpack.c.h.bf16 %v1816
        %v2582 = vunpack.c.l.bf16 %v1817
        %v2583 = vunpack.c.h.bf16 %v1817
        %v2584 = vunpack.c.l.bf16 %v1818
        %v2585 = vunpack.c.h.bf16 %v1818
        %v2586 = vunpack.c.l.bf16 %v1819
        %v2587 = vunpack.c.h.bf16 %v1819
        %v2588 = vld [vmem:[#allocation2] sm:$0x1]
        %v2589 = vadd.f32 %v1820, %v1821
        %v2590 = vadd.f32 %v2589, %v1822
        %v2591 = vadd.f32 %v2590, %v1823
        %v2592 = vadd.f32 %v2591, %v1824
        %v2593 = vadd.f32 %v2592, %v1825
        %v2594 = vadd.f32 %v2593, %v1826
        %v2595 = vadd.f32 %v2594, %v1827
        %v2596 = vadd.f32 %v2595, %v1828
        %v2597 = vadd.f32 %v2596, %v1829
        %v2598 = vadd.f32 %v2597, %v1830
        %v2599 = vadd.f32 %v2598, %v1831
        %v2600 = vadd.f32 %v2599, %v1832
        %v2601 = vadd.f32 %v2600, %v1833
        %v2602 = vadd.f32 %v2601, %v1834
        %v2603 = vadd.f32 %v2602, %v1835
        %v2604 = vadd.f32 %v2603, %v1836
        %v2605 = vadd.f32 %v2604, %v1837
        %v2606 = vadd.f32 %v2605, %v1838
        %v2607 = vadd.f32 %v2606, %v1839
        %v2608 = vadd.f32 %v2607, %v1840
        %v2609 = vadd.f32 %v2608, %v1841
        %v2610 = vadd.f32 %v2609, %v1842
        %v2611 = vadd.f32 %v2610, %v1843
        %v2612 = vadd.f32 %v2611, %v1844
        %v2613 = vadd.f32 %v2612, %v1845
        %v2614 = vadd.f32 %v2613, %v1846
        %v2615 = vadd.f32 %v2614, %v1847
        %v2616 = vadd.f32 %v2615, %v1848
        %v2617 = vadd.f32 %v2616, %v1849
        %v2618 = vadd.f32 %v2617, %v1850
        %v2619 = vadd.f32 %v2618, %v1851
        %v2620 = vadd.f32 %v2619, %v1852
        %v2621 = vadd.f32 %v2620, %v1853
        %v2622 = vadd.f32 %v2621, %v1854
        %v2623 = vadd.f32 %v2622, %v1855
        %v2624 = vadd.f32 %v2623, %v1856
        %v2625 = vadd.f32 %v2624, %v1857
        %v2626 = vadd.f32 %v2625, %v1858
        %v2627 = vadd.f32 %v2626, %v1859
        %v2628 = vadd.f32 %v2627, %v1860
        %v2629 = vadd.f32 %v2628, %v1861
        %v2630 = vadd.f32 %v2629, %v1862
        %v2631 = vadd.f32 %v2630, %v1863
        %v2632 = vadd.f32 %v2631, %v1864
        %v2633 = vadd.f32 %v2632, %v1865
        %v2634 = vadd.f32 %v2633, %v1866
        %v2635 = vadd.f32 %v2634, %v1867
        %v2636 = vadd.f32 %v2635, %v1868
        %v2637 = vadd.f32 %v2636, %v1869
        %v2638 = vadd.f32 %v2637, %v1870
        %v2639 = vadd.f32 %v2638, %v1871
        %v2640 = vadd.f32 %v2639, %v1872
        %v2641 = vadd.f32 %v2640, %v1873
        %v2642 = vadd.f32 %v2641, %v1874
        %v2643 = vadd.f32 %v2642, %v1875
        %v2644 = vadd.f32 %v2643, %v1876
        %v2645 = vadd.f32 %v2644, %v1877
        %v2646 = vadd.f32 %v2645, %v1878
        %v2647 = vadd.f32 %v2646, %v1879
        %v2648 = vadd.f32 %v2647, %v1880
        %v2649 = vadd.f32 %v2648, %v1881
        %v2650 = vadd.f32 %v2649, %v1882
        %v2651 = vadd.f32 %v2650, %v1883
        %v2652 = vadd.f32 %v2651, %v1884
        %v2653 = vadd.f32 %v2652, %v1885
        %v2654 = vadd.f32 %v2653, %v1886
        %v2655 = vadd.f32 %v2654, %v1887
        %v2656 = vadd.f32 %v2655, %v1888
        %v2657 = vadd.f32 %v2656, %v1889
        %v2658 = vadd.f32 %v2657, %v1890
        %v2659 = vadd.f32 %v2658, %v1891
        %v2660 = vadd.f32 %v2659, %v1892
        %v2661 = vadd.f32 %v2660, %v1893
        %v2662 = vadd.f32 %v2661, %v1894
        %v2663 = vadd.f32 %v2662, %v1895
        %v2664 = vadd.f32 %v2663, %v1896
        %v2665 = vadd.f32 %v2664, %v1897
        %v2666 = vadd.f32 %v2665, %v1898
        %v2667 = vadd.f32 %v2666, %v1899
        %v2668 = vadd.f32 %v2667, %v1900
        %v2669 = vadd.f32 %v2668, %v1901
        %v2670 = vadd.f32 %v2669, %v1902
        %v2671 = vadd.f32 %v2670, %v1903
        %v2672 = vadd.f32 %v2671, %v1904
        %v2673 = vadd.f32 %v2672, %v1905
        %v2674 = vadd.f32 %v2673, %v1906
        %v2675 = vadd.f32 %v2674, %v1907
        %v2676 = vadd.f32 %v2675, %v1908
        %v2677 = vadd.f32 %v2676, %v1909
        %v2678 = vadd.f32 %v2677, %v1910
        %v2679 = vadd.f32 %v2678, %v1911
        %v2680 = vadd.f32 %v2679, %v1912
        %v2681 = vadd.f32 %v2680, %v1913
        %v2682 = vadd.f32 %v2681, %v1914
        %v2683 = vadd.f32 %v2682, %v1915
        %v2684 = vadd.f32 %v2683, %v1916
        %v2685 = vadd.f32 %v2684, %v1917
        %v2686 = vadd.f32 %v2685, %v1918
        %v2687 = vadd.f32 %v2686, %v1919
        %v2688 = vadd.f32 %v2687, %v1920
        %v2689 = vadd.f32 %v2688, %v1921
        %v2690 = vadd.f32 %v2689, %v1922
        %v2691 = vadd.f32 %v2690, %v1923
        %v2692 = vadd.f32 %v2691, %v1924
        %v2693 = vadd.f32 %v2692, %v1925
        %v2694 = vadd.f32 %v2693, %v1926
        %v2695 = vadd.f32 %v2694, %v1927
        %v2696 = vadd.f32 %v2695, %v1928
        %v2697 = vadd.f32 %v2696, %v1929
        %v2698 = vadd.f32 %v2697, %v1930
        %v2699 = vadd.f32 %v2698, %v1931
        %v2700 = vadd.f32 %v2699, %v1932
        %v2701 = vadd.f32 %v2700, %v1933
        %v2702 = vadd.f32 %v2701, %v1934
        %v2703 = vadd.f32 %v2702, %v1935
        %v2704 = vadd.f32 %v2703, %v1936
        %v2705 = vadd.f32 %v2704, %v1937
        %v2706 = vadd.f32 %v2705, %v1938
        %v2707 = vadd.f32 %v2706, %v1939
        %v2708 = vadd.f32 %v2707, %v1940
        %v2709 = vadd.f32 %v2708, %v1941
        %v2710 = vadd.f32 %v2709, %v1942
        %v2711 = vadd.f32 %v2710, %v1943
        %v2712 = vadd.f32 %v2711, %v1944
        %v2713 = vadd.f32 %v2712, %v1945
        %v2714 = vadd.f32 %v2713, %v1946
        %v2715 = vadd.f32 %v2714, %v1947
        %2716 = vadd.xlane.f32.xlu0 %v2715
        %v2717 = vpop.xlane.xlu0 %2716
        %v2718 = vadd.f32 %v1948, %v1949
        %v2719 = vadd.f32 %v2718, %v1950
        %v2720 = vadd.f32 %v2719, %v1951
        %v2721 = vadd.f32 %v2720, %v1952
        %v2722 = vadd.f32 %v2721, %v1953
        %v2723 = vadd.f32 %v2722, %v1954
        %v2724 = vadd.f32 %v2723, %v1955
        %v2725 = vadd.f32 %v2724, %v1956
        %v2726 = vadd.f32 %v2725, %v1957
        %v2727 = vadd.f32 %v2726, %v1958
        %v2728 = vadd.f32 %v2727, %v1959
        %v2729 = vadd.f32 %v2728, %v1960
        %v2730 = vadd.f32 %v2729, %v1961
        %v2731 = vadd.f32 %v2730, %v1962
        %v2732 = vadd.f32 %v2731, %v1963
        %v2733 = vadd.f32 %v2732, %v1964
        %v2734 = vadd.f32 %v2733, %v1965
        %v2735 = vadd.f32 %v2734, %v1966
        %v2736 = vadd.f32 %v2735, %v1967
        %v2737 = vadd.f32 %v2736, %v1968
        %v2738 = vadd.f32 %v2737, %v1969
        %v2739 = vadd.f32 %v2738, %v1970
        %v2740 = vadd.f32 %v2739, %v1971
        %v2741 = vadd.f32 %v2740, %v1972
        %v2742 = vadd.f32 %v2741, %v1973
        %v2743 = vadd.f32 %v2742, %v1974
        %v2744 = vadd.f32 %v2743, %v1975
        %v2745 = vadd.f32 %v2744, %v1976
        %v2746 = vadd.f32 %v2745, %v1977
        %v2747 = vadd.f32 %v2746, %v1978
        %v2748 = vadd.f32 %v2747, %v1979
        %v2749 = vadd.f32 %v2748, %v1980
        %v2750 = vadd.f32 %v2749, %v1981
        %v2751 = vadd.f32 %v2750, %v1982
        %v2752 = vadd.f32 %v2751, %v1983
        %v2753 = vadd.f32 %v2752, %v1984
        %v2754 = vadd.f32 %v2753, %v1985
        %v2755 = vadd.f32 %v2754, %v1986
        %v2756 = vadd.f32 %v2755, %v1987
        %v2757 = vadd.f32 %v2756, %v1988
        %v2758 = vadd.f32 %v2757, %v1989
        %v2759 = vadd.f32 %v2758, %v1990
        %v2760 = vadd.f32 %v2759, %v1991
        %v2761 = vadd.f32 %v2760, %v1992
        %v2762 = vadd.f32 %v2761, %v1993
        %v2763 = vadd.f32 %v2762, %v1994
        %v2764 = vadd.f32 %v2763, %v1995
        %v2765 = vadd.f32 %v2764, %v1996
        %v2766 = vadd.f32 %v2765, %v1997
        %v2767 = vadd.f32 %v2766, %v1998
        %v2768 = vadd.f32 %v2767, %v1999
        %v2769 = vadd.f32 %v2768, %v2000
        %v2770 = vadd.f32 %v2769, %v2001
        %v2771 = vadd.f32 %v2770, %v2002
        %v2772 = vadd.f32 %v2771, %v2003
        %v2773 = vadd.f32 %v2772, %v2004
        %v2774 = vadd.f32 %v2773, %v2005
        %v2775 = vadd.f32 %v2774, %v2006
        %v2776 = vadd.f32 %v2775, %v2007
        %v2777 = vadd.f32 %v2776, %v2008
        %v2778 = vadd.f32 %v2777, %v2009
        %v2779 = vadd.f32 %v2778, %v2010
        %v2780 = vadd.f32 %v2779, %v2011
        %v2781 = vadd.f32 %v2780, %v2012
        %v2782 = vadd.f32 %v2781, %v2013
        %v2783 = vadd.f32 %v2782, %v2014
        %v2784 = vadd.f32 %v2783, %v2015
        %v2785 = vadd.f32 %v2784, %v2016
        %v2786 = vadd.f32 %v2785, %v2017
        %v2787 = vadd.f32 %v2786, %v2018
        %v2788 = vadd.f32 %v2787, %v2019
        %v2789 = vadd.f32 %v2788, %v2020
        %v2790 = vadd.f32 %v2789, %v2021
        %v2791 = vadd.f32 %v2790, %v2022
        %v2792 = vadd.f32 %v2791, %v2023
        %v2793 = vadd.f32 %v2792, %v2024
        %v2794 = vadd.f32 %v2793, %v2025
        %v2795 = vadd.f32 %v2794, %v2026
        %v2796 = vadd.f32 %v2795, %v2027
        %v2797 = vadd.f32 %v2796, %v2028
        %v2798 = vadd.f32 %v2797, %v2029
        %v2799 = vadd.f32 %v2798, %v2030
        %v2800 = vadd.f32 %v2799, %v2031
        %v2801 = vadd.f32 %v2800, %v2032
        %v2802 = vadd.f32 %v2801, %v2033
        %v2803 = vadd.f32 %v2802, %v2034
        %v2804 = vadd.f32 %v2803, %v2035
        %v2805 = vadd.f32 %v2804, %v2036
        %v2806 = vadd.f32 %v2805, %v2037
        %v2807 = vadd.f32 %v2806, %v2038
        %v2808 = vadd.f32 %v2807, %v2039
        %v2809 = vadd.f32 %v2808, %v2040
        %v2810 = vadd.f32 %v2809, %v2041
        %v2811 = vadd.f32 %v2810, %v2042
        %v2812 = vadd.f32 %v2811, %v2043
        %v2813 = vadd.f32 %v2812, %v2044
        %v2814 = vadd.f32 %v2813, %v2045
        %v2815 = vadd.f32 %v2814, %v2046
        %v2816 = vadd.f32 %v2815, %v2047
        %v2817 = vadd.f32 %v2816, %v2048
        %v2818 = vadd.f32 %v2817, %v2049
        %v2819 = vadd.f32 %v2818, %v2050
        %v2820 = vadd.f32 %v2819, %v2051
        %v2821 = vadd.f32 %v2820, %v2052
        %v2822 = vadd.f32 %v2821, %v2053
        %v2823 = vadd.f32 %v2822, %v2054
        %v2824 = vadd.f32 %v2823, %v2055
        %v2825 = vadd.f32 %v2824, %v2056
        %v2826 = vadd.f32 %v2825, %v2057
        %v2827 = vadd.f32 %v2826, %v2058
        %v2828 = vadd.f32 %v2827, %v2059
        %v2829 = vadd.f32 %v2828, %v2060
        %v2830 = vadd.f32 %v2829, %v2061
        %v2831 = vadd.f32 %v2830, %v2062
        %v2832 = vadd.f32 %v2831, %v2063
        %v2833 = vadd.f32 %v2832, %v2064
        %v2834 = vadd.f32 %v2833, %v2065
        %v2835 = vadd.f32 %v2834, %v2066
        %v2836 = vadd.f32 %v2835, %v2067
        %v2837 = vadd.f32 %v2836, %v2068
        %v2838 = vadd.f32 %v2837, %v2069
        %v2839 = vadd.f32 %v2838, %v2070
        %v2840 = vadd.f32 %v2839, %v2071
        %v2841 = vadd.f32 %v2840, %v2072
        %v2842 = vadd.f32 %v2841, %v2073
        %v2843 = vadd.f32 %v2842, %v2074
        %v2844 = vadd.f32 %v2843, %v2075
        %2845 = vadd.xlane.f32.xlu0 %v2844
        %v2846 = vpop.xlane.xlu0 %2845
        %v2847 = vadd.f32 %v2076, %v2077
        %v2848 = vadd.f32 %v2847, %v2078
        %v2849 = vadd.f32 %v2848, %v2079
        %v2850 = vadd.f32 %v2849, %v2080
        %v2851 = vadd.f32 %v2850, %v2081
        %v2852 = vadd.f32 %v2851, %v2082
        %v2853 = vadd.f32 %v2852, %v2083
        %v2854 = vadd.f32 %v2853, %v2084
        %v2855 = vadd.f32 %v2854, %v2085
        %v2856 = vadd.f32 %v2855, %v2086
        %v2857 = vadd.f32 %v2856, %v2087
        %v2858 = vadd.f32 %v2857, %v2088
        %v2859 = vadd.f32 %v2858, %v2089
        %v2860 = vadd.f32 %v2859, %v2090
        %v2861 = vadd.f32 %v2860, %v2091
        %v2862 = vadd.f32 %v2861, %v2092
        %v2863 = vadd.f32 %v2862, %v2093
        %v2864 = vadd.f32 %v2863, %v2094
        %v2865 = vadd.f32 %v2864, %v2095
        %v2866 = vadd.f32 %v2865, %v2096
        %v2867 = vadd.f32 %v2866, %v2097
        %v2868 = vadd.f32 %v2867, %v2098
        %v2869 = vadd.f32 %v2868, %v2099
        %v2870 = vadd.f32 %v2869, %v2100
        %v2871 = vadd.f32 %v2870, %v2101
        %v2872 = vadd.f32 %v2871, %v2102
        %v2873 = vadd.f32 %v2872, %v2103
        %v2874 = vadd.f32 %v2873, %v2104
        %v2875 = vadd.f32 %v2874, %v2105
        %v2876 = vadd.f32 %v2875, %v2106
        %v2877 = vadd.f32 %v2876, %v2107
        %v2878 = vadd.f32 %v2877, %v2108
        %v2879 = vadd.f32 %v2878, %v2109
        %v2880 = vadd.f32 %v2879, %v2110
        %v2881 = vadd.f32 %v2880, %v2111
        %v2882 = vadd.f32 %v2881, %v2112
        %v2883 = vadd.f32 %v2882, %v2113
        %v2884 = vadd.f32 %v2883, %v2114
        %v2885 = vadd.f32 %v2884, %v2115
        %v2886 = vadd.f32 %v2885, %v2116
        %v2887 = vadd.f32 %v2886, %v2117
        %v2888 = vadd.f32 %v2887, %v2118
        %v2889 = vadd.f32 %v2888, %v2119
        %v2890 = vadd.f32 %v2889, %v2120
        %v2891 = vadd.f32 %v2890, %v2121
        %v2892 = vadd.f32 %v2891, %v2122
        %v2893 = vadd.f32 %v2892, %v2123
        %v2894 = vadd.f32 %v2893, %v2124
        %v2895 = vadd.f32 %v2894, %v2125
        %v2896 = vadd.f32 %v2895, %v2126
        %v2897 = vadd.f32 %v2896, %v2127
        %v2898 = vadd.f32 %v2897, %v2128
        %v2899 = vadd.f32 %v2898, %v2129
        %v2900 = vadd.f32 %v2899, %v2130
        %v2901 = vadd.f32 %v2900, %v2131
        %v2902 = vadd.f32 %v2901, %v2132
        %v2903 = vadd.f32 %v2902, %v2133
        %v2904 = vadd.f32 %v2903, %v2134
        %v2905 = vadd.f32 %v2904, %v2135
        %v2906 = vadd.f32 %v2905, %v2136
        %v2907 = vadd.f32 %v2906, %v2137
        %v2908 = vadd.f32 %v2907, %v2138
        %v2909 = vadd.f32 %v2908, %v2139
        %v2910 = vadd.f32 %v2909, %v2140
        %v2911 = vadd.f32 %v2910, %v2141
        %v2912 = vadd.f32 %v2911, %v2142
        %v2913 = vadd.f32 %v2912, %v2143
        %v2914 = vadd.f32 %v2913, %v2144
        %v2915 = vadd.f32 %v2914, %v2145
        %v2916 = vadd.f32 %v2915, %v2146
        %v2917 = vadd.f32 %v2916, %v2147
        %v2918 = vadd.f32 %v2917, %v2148
        %v2919 = vadd.f32 %v2918, %v2149
        %v2920 = vadd.f32 %v2919, %v2150
        %v2921 = vadd.f32 %v2920, %v2151
        %v2922 = vadd.f32 %v2921, %v2152
        %v2923 = vadd.f32 %v2922, %v2153
        %v2924 = vadd.f32 %v2923, %v2154
        %v2925 = vadd.f32 %v2924, %v2155
        %v2926 = vadd.f32 %v2925, %v2156
        %v2927 = vadd.f32 %v2926, %v2157
        %v2928 = vadd.f32 %v2927, %v2158
        %v2929 = vadd.f32 %v2928, %v2159
        %v2930 = vadd.f32 %v2929, %v2160
        %v2931 = vadd.f32 %v2930, %v2161
        %v2932 = vadd.f32 %v2931, %v2162
        %v2933 = vadd.f32 %v2932, %v2163
        %v2934 = vadd.f32 %v2933, %v2164
        %v2935 = vadd.f32 %v2934, %v2165
        %v2936 = vadd.f32 %v2935, %v2166
        %v2937 = vadd.f32 %v2936, %v2167
        %v2938 = vadd.f32 %v2937, %v2168
        %v2939 = vadd.f32 %v2938, %v2169
        %v2940 = vadd.f32 %v2939, %v2170
        %v2941 = vadd.f32 %v2940, %v2171
        %v2942 = vadd.f32 %v2941, %v2172
        %v2943 = vadd.f32 %v2942, %v2173
        %v2944 = vadd.f32 %v2943, %v2174
        %v2945 = vadd.f32 %v2944, %v2175
        %v2946 = vadd.f32 %v2945, %v2176
        %v2947 = vadd.f32 %v2946, %v2177
        %v2948 = vadd.f32 %v2947, %v2178
        %v2949 = vadd.f32 %v2948, %v2179
        %v2950 = vadd.f32 %v2949, %v2180
        %v2951 = vadd.f32 %v2950, %v2181
        %v2952 = vadd.f32 %v2951, %v2182
        %v2953 = vadd.f32 %v2952, %v2183
        %v2954 = vadd.f32 %v2953, %v2184
        %v2955 = vadd.f32 %v2954, %v2185
        %v2956 = vadd.f32 %v2955, %v2186
        %v2957 = vadd.f32 %v2956, %v2187
        %v2958 = vadd.f32 %v2957, %v2188
        %v2959 = vadd.f32 %v2958, %v2189
        %v2960 = vadd.f32 %v2959, %v2190
        %v2961 = vadd.f32 %v2960, %v2191
        %v2962 = vadd.f32 %v2961, %v2192
        %v2963 = vadd.f32 %v2962, %v2193
        %v2964 = vadd.f32 %v2963, %v2194
        %v2965 = vadd.f32 %v2964, %v2195
        %v2966 = vadd.f32 %v2965, %v2196
        %v2967 = vadd.f32 %v2966, %v2197
        %v2968 = vadd.f32 %v2967, %v2198
        %v2969 = vadd.f32 %v2968, %v2199
        %v2970 = vadd.f32 %v2969, %v2200
        %v2971 = vadd.f32 %v2970, %v2201
        %v2972 = vadd.f32 %v2971, %v2202
        %v2973 = vadd.f32 %v2972, %v2203
        %2974 = vadd.xlane.f32.xlu0 %v2973
        %v2975 = vpop.xlane.xlu0 %2974
        %v2976 = vadd.f32 %v2204, %v2205
        %v2977 = vadd.f32 %v2976, %v2206
        %v2978 = vadd.f32 %v2977, %v2207
        %v2979 = vadd.f32 %v2978, %v2208
        %v2980 = vadd.f32 %v2979, %v2209
        %v2981 = vadd.f32 %v2980, %v2210
        %v2982 = vadd.f32 %v2981, %v2211
        %v2983 = vadd.f32 %v2982, %v2212
        %v2984 = vadd.f32 %v2983, %v2213
        %v2985 = vadd.f32 %v2984, %v2214
        %v2986 = vadd.f32 %v2985, %v2215
        %v2987 = vadd.f32 %v2986, %v2216
        %v2988 = vadd.f32 %v2987, %v2217
        %v2989 = vadd.f32 %v2988, %v2218
        %v2990 = vadd.f32 %v2989, %v2219
        %v2991 = vadd.f32 %v2990, %v2220
        %v2992 = vadd.f32 %v2991, %v2221
        %v2993 = vadd.f32 %v2992, %v2222
        %v2994 = vadd.f32 %v2993, %v2223
        %v2995 = vadd.f32 %v2994, %v2224
        %v2996 = vadd.f32 %v2995, %v2225
        %v2997 = vadd.f32 %v2996, %v2226
        %v2998 = vadd.f32 %v2997, %v2227
        %v2999 = vadd.f32 %v2998, %v2228
        %v3000 = vadd.f32 %v2999, %v2229
        %v3001 = vadd.f32 %v3000, %v2230
        %v3002 = vadd.f32 %v3001, %v2231
        %v3003 = vadd.f32 %v3002, %v2232
        %v3004 = vadd.f32 %v3003, %v2233
        %v3005 = vadd.f32 %v3004, %v2234
        %v3006 = vadd.f32 %v3005, %v2235
        %v3007 = vadd.f32 %v3006, %v2236
        %v3008 = vadd.f32 %v3007, %v2237
        %v3009 = vadd.f32 %v3008, %v2238
        %v3010 = vadd.f32 %v3009, %v2239
        %v3011 = vadd.f32 %v3010, %v2240
        %v3012 = vadd.f32 %v3011, %v2241
        %v3013 = vadd.f32 %v3012, %v2242
        %v3014 = vadd.f32 %v3013, %v2243
        %v3015 = vadd.f32 %v3014, %v2244
        %v3016 = vadd.f32 %v3015, %v2245
        %v3017 = vadd.f32 %v3016, %v2246
        %v3018 = vadd.f32 %v3017, %v2247
        %v3019 = vadd.f32 %v3018, %v2248
        %v3020 = vadd.f32 %v3019, %v2249
        %v3021 = vadd.f32 %v3020, %v2250
        %v3022 = vadd.f32 %v3021, %v2251
        %v3023 = vadd.f32 %v3022, %v2252
        %v3024 = vadd.f32 %v3023, %v2253
        %v3025 = vadd.f32 %v3024, %v2254
        %v3026 = vadd.f32 %v3025, %v2255
        %v3027 = vadd.f32 %v3026, %v2256
        %v3028 = vadd.f32 %v3027, %v2257
        %v3029 = vadd.f32 %v3028, %v2258
        %v3030 = vadd.f32 %v3029, %v2259
        %v3031 = vadd.f32 %v3030, %v2260
        %v3032 = vadd.f32 %v3031, %v2261
        %v3033 = vadd.f32 %v3032, %v2262
        %v3034 = vadd.f32 %v3033, %v2263
        %v3035 = vadd.f32 %v3034, %v2264
        %v3036 = vadd.f32 %v3035, %v2265
        %v3037 = vadd.f32 %v3036, %v2266
        %v3038 = vadd.f32 %v3037, %v2267
        %v3039 = vadd.f32 %v3038, %v2268
        %v3040 = vadd.f32 %v3039, %v2269
        %v3041 = vadd.f32 %v3040, %v2270
        %v3042 = vadd.f32 %v3041, %v2271
        %v3043 = vadd.f32 %v3042, %v2272
        %v3044 = vadd.f32 %v3043, %v2273
        %v3045 = vadd.f32 %v3044, %v2274
        %v3046 = vadd.f32 %v3045, %v2275
        %v3047 = vadd.f32 %v3046, %v2276
        %v3048 = vadd.f32 %v3047, %v2277
        %v3049 = vadd.f32 %v3048, %v2278
        %v3050 = vadd.f32 %v3049, %v2279
        %v3051 = vadd.f32 %v3050, %v2280
        %v3052 = vadd.f32 %v3051, %v2281
        %v3053 = vadd.f32 %v3052, %v2282
        %v3054 = vadd.f32 %v3053, %v2283
        %v3055 = vadd.f32 %v3054, %v2284
        %v3056 = vadd.f32 %v3055, %v2285
        %v3057 = vadd.f32 %v3056, %v2286
        %v3058 = vadd.f32 %v3057, %v2287
        %v3059 = vadd.f32 %v3058, %v2288
        %v3060 = vadd.f32 %v3059, %v2289
        %v3061 = vadd.f32 %v3060, %v2290
        %v3062 = vadd.f32 %v3061, %v2291
        %v3063 = vadd.f32 %v3062, %v2292
        %v3064 = vadd.f32 %v3063, %v2293
        %v3065 = vadd.f32 %v3064, %v2294
        %v3066 = vadd.f32 %v3065, %v2295
        %v3067 = vadd.f32 %v3066, %v2296
        %v3068 = vadd.f32 %v3067, %v2297
        %v3069 = vadd.f32 %v3068, %v2298
        %v3070 = vadd.f32 %v3069, %v2299
        %v3071 = vadd.f32 %v3070, %v2300
        %v3072 = vadd.f32 %v3071, %v2301
        %v3073 = vadd.f32 %v3072, %v2302
        %v3074 = vadd.f32 %v3073, %v2303
        %v3075 = vadd.f32 %v3074, %v2304
        %v3076 = vadd.f32 %v3075, %v2305
        %v3077 = vadd.f32 %v3076, %v2306
        %v3078 = vadd.f32 %v3077, %v2307
        %v3079 = vadd.f32 %v3078, %v2308
        %v3080 = vadd.f32 %v3079, %v2309
        %v3081 = vadd.f32 %v3080, %v2310
        %v3082 = vadd.f32 %v3081, %v2311
        %v3083 = vadd.f32 %v3082, %v2312
        %v3084 = vadd.f32 %v3083, %v2313
        %v3085 = vadd.f32 %v3084, %v2314
        %v3086 = vadd.f32 %v3085, %v2315
        %v3087 = vadd.f32 %v3086, %v2316
        %v3088 = vadd.f32 %v3087, %v2317
        %v3089 = vadd.f32 %v3088, %v2318
        %v3090 = vadd.f32 %v3089, %v2319
        %v3091 = vadd.f32 %v3090, %v2320
        %v3092 = vadd.f32 %v3091, %v2321
        %v3093 = vadd.f32 %v3092, %v2322
        %v3094 = vadd.f32 %v3093, %v2323
        %v3095 = vadd.f32 %v3094, %v2324
        %v3096 = vadd.f32 %v3095, %v2325
        %v3097 = vadd.f32 %v3096, %v2326
        %v3098 = vadd.f32 %v3097, %v2327
        %v3099 = vadd.f32 %v3098, %v2328
        %v3100 = vadd.f32 %v3099, %v2329
        %v3101 = vadd.f32 %v3100, %v2330
        %v3102 = vadd.f32 %v3101, %v2331
        %3103 = vadd.xlane.f32.xlu0 %v3102
        %v3104 = vpop.xlane.xlu0 %3103
        %v3105 = vadd.f32 %v2332, %v2333
        %v3106 = vadd.f32 %v3105, %v2334
        %v3107 = vadd.f32 %v3106, %v2335
        %v3108 = vadd.f32 %v3107, %v2336
        %v3109 = vadd.f32 %v3108, %v2337
        %v3110 = vadd.f32 %v3109, %v2338
        %v3111 = vadd.f32 %v3110, %v2339
        %v3112 = vadd.f32 %v3111, %v2340
        %v3113 = vadd.f32 %v3112, %v2341
        %v3114 = vadd.f32 %v3113, %v2342
        %v3115 = vadd.f32 %v3114, %v2343
        %v3116 = vadd.f32 %v3115, %v2344
        %v3117 = vadd.f32 %v3116, %v2345
        %v3118 = vadd.f32 %v3117, %v2346
        %v3119 = vadd.f32 %v3118, %v2347
        %v3120 = vadd.f32 %v3119, %v2348
        %v3121 = vadd.f32 %v3120, %v2349
        %v3122 = vadd.f32 %v3121, %v2350
        %v3123 = vadd.f32 %v3122, %v2351
        %v3124 = vadd.f32 %v3123, %v2352
        %v3125 = vadd.f32 %v3124, %v2353
        %v3126 = vadd.f32 %v3125, %v2354
        %v3127 = vadd.f32 %v3126, %v2355
        %v3128 = vadd.f32 %v3127, %v2356
        %v3129 = vadd.f32 %v3128, %v2357
        %v3130 = vadd.f32 %v3129, %v2358
        %v3131 = vadd.f32 %v3130, %v2359
        %v3132 = vadd.f32 %v3131, %v2360
        %v3133 = vadd.f32 %v3132, %v2361
        %v3134 = vadd.f32 %v3133, %v2362
        %v3135 = vadd.f32 %v3134, %v2363
        %v3136 = vadd.f32 %v3135, %v2364
        %v3137 = vadd.f32 %v3136, %v2365
        %v3138 = vadd.f32 %v3137, %v2366
        %v3139 = vadd.f32 %v3138, %v2367
        %v3140 = vadd.f32 %v3139, %v2368
        %v3141 = vadd.f32 %v3140, %v2369
        %v3142 = vadd.f32 %v3141, %v2370
        %v3143 = vadd.f32 %v3142, %v2371
        %v3144 = vadd.f32 %v3143, %v2372
        %v3145 = vadd.f32 %v3144, %v2373
        %v3146 = vadd.f32 %v3145, %v2374
        %v3147 = vadd.f32 %v3146, %v2375
        %v3148 = vadd.f32 %v3147, %v2376
        %v3149 = vadd.f32 %v3148, %v2377
        %v3150 = vadd.f32 %v3149, %v2378
        %v3151 = vadd.f32 %v3150, %v2379
        %v3152 = vadd.f32 %v3151, %v2380
        %v3153 = vadd.f32 %v3152, %v2381
        %v3154 = vadd.f32 %v3153, %v2382
        %v3155 = vadd.f32 %v3154, %v2383
        %v3156 = vadd.f32 %v3155, %v2384
        %v3157 = vadd.f32 %v3156, %v2385
        %v3158 = vadd.f32 %v3157, %v2386
        %v3159 = vadd.f32 %v3158, %v2387
        %v3160 = vadd.f32 %v3159, %v2388
        %v3161 = vadd.f32 %v3160, %v2389
        %v3162 = vadd.f32 %v3161, %v2390
        %v3163 = vadd.f32 %v3162, %v2391
        %v3164 = vadd.f32 %v3163, %v2392
        %v3165 = vadd.f32 %v3164, %v2393
        %v3166 = vadd.f32 %v3165, %v2394
        %v3167 = vadd.f32 %v3166, %v2395
        %v3168 = vadd.f32 %v3167, %v2396
        %v3169 = vadd.f32 %v3168, %v2397
        %v3170 = vadd.f32 %v3169, %v2398
        %v3171 = vadd.f32 %v3170, %v2399
        %v3172 = vadd.f32 %v3171, %v2400
        %v3173 = vadd.f32 %v3172, %v2401
        %v3174 = vadd.f32 %v3173, %v2402
        %v3175 = vadd.f32 %v3174, %v2403
        %v3176 = vadd.f32 %v3175, %v2404
        %v3177 = vadd.f32 %v3176, %v2405
        %v3178 = vadd.f32 %v3177, %v2406
        %v3179 = vadd.f32 %v3178, %v2407
        %v3180 = vadd.f32 %v3179, %v2408
        %v3181 = vadd.f32 %v3180, %v2409
        %v3182 = vadd.f32 %v3181, %v2410
        %v3183 = vadd.f32 %v3182, %v2411
        %v3184 = vadd.f32 %v3183, %v2412
        %v3185 = vadd.f32 %v3184, %v2413
        %v3186 = vadd.f32 %v3185, %v2414
        %v3187 = vadd.f32 %v3186, %v2415
        %v3188 = vadd.f32 %v3187, %v2416
        %v3189 = vadd.f32 %v3188, %v2417
        %v3190 = vadd.f32 %v3189, %v2418
        %v3191 = vadd.f32 %v3190, %v2419
        %v3192 = vadd.f32 %v3191, %v2420
        %v3193 = vadd.f32 %v3192, %v2421
        %v3194 = vadd.f32 %v3193, %v2422
        %v3195 = vadd.f32 %v3194, %v2423
        %v3196 = vadd.f32 %v3195, %v2424
        %v3197 = vadd.f32 %v3196, %v2425
        %v3198 = vadd.f32 %v3197, %v2426
        %v3199 = vadd.f32 %v3198, %v2427
        %v3200 = vadd.f32 %v3199, %v2428
        %v3201 = vadd.f32 %v3200, %v2429
        %v3202 = vadd.f32 %v3201, %v2430
        %v3203 = vadd.f32 %v3202, %v2431
        %v3204 = vadd.f32 %v3203, %v2432
        %v3205 = vadd.f32 %v3204, %v2433
        %v3206 = vadd.f32 %v3205, %v2434
        %v3207 = vadd.f32 %v3206, %v2435
        %v3208 = vadd.f32 %v3207, %v2436
        %v3209 = vadd.f32 %v3208, %v2437
        %v3210 = vadd.f32 %v3209, %v2438
        %v3211 = vadd.f32 %v3210, %v2439
        %v3212 = vadd.f32 %v3211, %v2440
        %v3213 = vadd.f32 %v3212, %v2441
        %v3214 = vadd.f32 %v3213, %v2442
        %v3215 = vadd.f32 %v3214, %v2443
        %v3216 = vadd.f32 %v3215, %v2444
        %v3217 = vadd.f32 %v3216, %v2445
        %v3218 = vadd.f32 %v3217, %v2446
        %v3219 = vadd.f32 %v3218, %v2447
        %v3220 = vadd.f32 %v3219, %v2448
        %v3221 = vadd.f32 %v3220, %v2449
        %v3222 = vadd.f32 %v3221, %v2450
        %v3223 = vadd.f32 %v3222, %v2451
        %v3224 = vadd.f32 %v3223, %v2452
        %v3225 = vadd.f32 %v3224, %v2453
        %v3226 = vadd.f32 %v3225, %v2454
        %v3227 = vadd.f32 %v3226, %v2455
        %v3228 = vadd.f32 %v3227, %v2456
        %v3229 = vadd.f32 %v3228, %v2457
        %v3230 = vadd.f32 %v3229, %v2458
        %v3231 = vadd.f32 %v3230, %v2459
        %3232 = vadd.xlane.f32.xlu0 %v3231
        %v3233 = vpop.xlane.xlu0 %3232
        %v3234 = vadd.f32 %v2460, %v2461
        %v3235 = vadd.f32 %v3234, %v2462
        %v3236 = vadd.f32 %v3235, %v2463
        %v3237 = vadd.f32 %v3236, %v2464
        %v3238 = vadd.f32 %v3237, %v2465
        %v3239 = vadd.f32 %v3238, %v2466
        %v3240 = vadd.f32 %v3239, %v2467
        %v3241 = vadd.f32 %v3240, %v2468
        %v3242 = vadd.f32 %v3241, %v2469
        %v3243 = vadd.f32 %v3242, %v2470
        %v3244 = vadd.f32 %v3243, %v2471
        %v3245 = vadd.f32 %v3244, %v2472
        %v3246 = vadd.f32 %v3245, %v2473
        %v3247 = vadd.f32 %v3246, %v2474
        %v3248 = vadd.f32 %v3247, %v2475
        %v3249 = vadd.f32 %v3248, %v2476
        %v3250 = vadd.f32 %v3249, %v2477
        %v3251 = vadd.f32 %v3250, %v2478
        %v3252 = vadd.f32 %v3251, %v2479
        %v3253 = vadd.f32 %v3252, %v2480
        %v3254 = vadd.f32 %v3253, %v2481
        %v3255 = vadd.f32 %v3254, %v2482
        %v3256 = vadd.f32 %v3255, %v2483
        %v3257 = vadd.f32 %v3256, %v2484
        %v3258 = vadd.f32 %v3257, %v2485
        %v3259 = vadd.f32 %v3258, %v2486
        %v3260 = vadd.f32 %v3259, %v2487
        %v3261 = vadd.f32 %v3260, %v2488
        %v3262 = vadd.f32 %v3261, %v2489
        %v3263 = vadd.f32 %v3262, %v2490
        %v3264 = vadd.f32 %v3263, %v2491
        %v3265 = vadd.f32 %v3264, %v2492
        %v3266 = vadd.f32 %v3265, %v2493
        %v3267 = vadd.f32 %v3266, %v2494
        %v3268 = vadd.f32 %v3267, %v2495
        %v3269 = vadd.f32 %v3268, %v2496
        %v3270 = vadd.f32 %v3269, %v2497
        %v3271 = vadd.f32 %v3270, %v2498
        %v3272 = vadd.f32 %v3271, %v2499
        %v3273 = vadd.f32 %v3272, %v2500
        %v3274 = vadd.f32 %v3273, %v2501
        %v3275 = vadd.f32 %v3274, %v2502
        %v3276 = vadd.f32 %v3275, %v2503
        %v3277 = vadd.f32 %v3276, %v2504
        %v3278 = vadd.f32 %v3277, %v2505
        %v3279 = vadd.f32 %v3278, %v2506
        %v3280 = vadd.f32 %v3279, %v2507
        %v3281 = vadd.f32 %v3280, %v2508
        %v3282 = vadd.f32 %v3281, %v2509
        %v3283 = vadd.f32 %v3282, %v2510
        %v3284 = vadd.f32 %v3283, %v2511
        %v3285 = vadd.f32 %v3284, %v2512
        %v3286 = vadd.f32 %v3285, %v2513
        %v3287 = vadd.f32 %v3286, %v2514
        %v3288 = vadd.f32 %v3287, %v2515
        %v3289 = vadd.f32 %v3288, %v2516
        %v3290 = vadd.f32 %v3289, %v2517
        %v3291 = vadd.f32 %v3290, %v2518
        %v3292 = vadd.f32 %v3291, %v2519
        %v3293 = vadd.f32 %v3292, %v2520
        %v3294 = vadd.f32 %v3293, %v2521
        %v3295 = vadd.f32 %v3294, %v2522
        %v3296 = vadd.f32 %v3295, %v2523
        %v3297 = vadd.f32 %v3296, %v2524
        %v3298 = vadd.f32 %v3297, %v2525
        %v3299 = vadd.f32 %v3298, %v2526
        %v3300 = vadd.f32 %v3299, %v2527
        %v3301 = vadd.f32 %v3300, %v2528
        %v3302 = vadd.f32 %v3301, %v2529
        %v3303 = vadd.f32 %v3302, %v2530
        %v3304 = vadd.f32 %v3303, %v2531
        %v3305 = vadd.f32 %v3304, %v2532
        %v3306 = vadd.f32 %v3305, %v2533
        %v3307 = vadd.f32 %v3306, %v2534
        %v3308 = vadd.f32 %v3307, %v2535
        %v3309 = vadd.f32 %v3308, %v2536
        %v3310 = vadd.f32 %v3309, %v2537
        %v3311 = vadd.f32 %v3310, %v2538
        %v3312 = vadd.f32 %v3311, %v2539
        %v3313 = vadd.f32 %v3312, %v2540
        %v3314 = vadd.f32 %v3313, %v2541
        %v3315 = vadd.f32 %v3314, %v2542
        %v3316 = vadd.f32 %v3315, %v2543
        %v3317 = vadd.f32 %v3316, %v2544
        %v3318 = vadd.f32 %v3317, %v2545
        %v3319 = vadd.f32 %v3318, %v2546
        %v3320 = vadd.f32 %v3319, %v2547
        %v3321 = vadd.f32 %v3320, %v2548
        %v3322 = vadd.f32 %v3321, %v2549
        %v3323 = vadd.f32 %v3322, %v2550
        %v3324 = vadd.f32 %v3323, %v2551
        %v3325 = vadd.f32 %v3324, %v2552
        %v3326 = vadd.f32 %v3325, %v2553
        %v3327 = vadd.f32 %v3326, %v2554
        %v3328 = vadd.f32 %v3327, %v2555
        %v3329 = vadd.f32 %v3328, %v2556
        %v3330 = vadd.f32 %v3329, %v2557
        %v3331 = vadd.f32 %v3330, %v2558
        %v3332 = vadd.f32 %v3331, %v2559
        %v3333 = vadd.f32 %v3332, %v2560
        %v3334 = vadd.f32 %v3333, %v2561
        %v3335 = vadd.f32 %v3334, %v2562
        %v3336 = vadd.f32 %v3335, %v2563
        %v3337 = vadd.f32 %v3336, %v2564
        %v3338 = vadd.f32 %v3337, %v2565
        %v3339 = vadd.f32 %v3338, %v2566
        %v3340 = vadd.f32 %v3339, %v2567
        %v3341 = vadd.f32 %v3340, %v2568
        %v3342 = vadd.f32 %v3341, %v2569
        %v3343 = vadd.f32 %v3342, %v2570
        %v3344 = vadd.f32 %v3343, %v2571
        %v3345 = vadd.f32 %v3344, %v2572
        %v3346 = vadd.f32 %v3345, %v2573
        %v3347 = vadd.f32 %v3346, %v2574
        %v3348 = vadd.f32 %v3347, %v2575
        %v3349 = vadd.f32 %v3348, %v2576
        %v3350 = vadd.f32 %v3349, %v2577
        %v3351 = vadd.f32 %v3350, %v2578
        %v3352 = vadd.f32 %v3351, %v2579
        %v3353 = vadd.f32 %v3352, %v2580
        %v3354 = vadd.f32 %v3353, %v2581
        %v3355 = vadd.f32 %v3354, %v2582
        %v3356 = vadd.f32 %v3355, %v2583
        %v3357 = vadd.f32 %v3356, %v2584
        %v3358 = vadd.f32 %v3357, %v2585
        %v3359 = vadd.f32 %v3358, %v2586
        %v3360 = vadd.f32 %v3359, %v2587
        %3361 = vadd.xlane.f32.xlu0 %v3360
        %v3362 = vpop.xlane.xlu0 %3361
        %v3369 = vlaneseq
        %v3370 = vshrl.u32 %v3369, 7
        %v3371 = vsub.s32 0, %v3370
        %v3372 = vrot.slane %v2717, %v3371
        %v3373 = vlaneseq
        %v3374 = vshrl.u32 %v3373, 7
        %v3375 = vsub.s32 1, %v3374
        %v3376 = vrot.slane %v2717, %v3375
        %v3377 = vlaneseq
        %v3378 = vshrl.u32 %v3377, 7
        %v3379 = vsub.s32 2, %v3378
        %v3380 = vrot.slane %v2717, %v3379
        %v3381 = vlaneseq
        %v3382 = vshrl.u32 %v3381, 7
        %v3383 = vsub.s32 3, %v3382
        %v3384 = vrot.slane %v2717, %v3383
        %v3385 = vlaneseq
        %v3386 = vshrl.u32 %v3385, 7
        %v3387 = vsub.s32 4, %v3386
        %v3388 = vrot.slane %v2717, %v3387
        %v3389 = vlaneseq
        %v3390 = vshrl.u32 %v3389, 7
        %v3391 = vsub.s32 5, %v3390
        %v3392 = vrot.slane %v2717, %v3391
        %v3393 = vlaneseq
        %v3394 = vshrl.u32 %v3393, 7
        %v3395 = vsub.s32 6, %v3394
        %v3396 = vrot.slane %v2717, %v3395
        %v3397 = vlaneseq
        %v3398 = vshrl.u32 %v3397, 7
        %v3399 = vsub.s32 7, %v3398
        %v3400 = vrot.slane %v2717, %v3399
        %v3401 = vlaneseq
        %v3402 = vshrl.u32 %v3401, 7
        %v3403 = vsub.s32 0, %v3402
        %v3404 = vrot.slane %v2846, %v3403
        %v3405 = vlaneseq
        %v3406 = vshrl.u32 %v3405, 7
        %v3407 = vsub.s32 1, %v3406
        %v3408 = vrot.slane %v2846, %v3407
        %v3409 = vlaneseq
        %v3410 = vshrl.u32 %v3409, 7
        %v3411 = vsub.s32 2, %v3410
        %v3412 = vrot.slane %v2846, %v3411
        %v3413 = vlaneseq
        %v3414 = vshrl.u32 %v3413, 7
        %v3415 = vsub.s32 3, %v3414
        %v3416 = vrot.slane %v2846, %v3415
        %v3417 = vlaneseq
        %v3418 = vshrl.u32 %v3417, 7
        %v3419 = vsub.s32 4, %v3418
        %v3420 = vrot.slane %v2846, %v3419
        %v3421 = vlaneseq
        %v3422 = vshrl.u32 %v3421, 7
        %v3423 = vsub.s32 5, %v3422
        %v3424 = vrot.slane %v2846, %v3423
        %v3425 = vlaneseq
        %v3426 = vshrl.u32 %v3425, 7
        %v3427 = vsub.s32 6, %v3426
        %v3428 = vrot.slane %v2846, %v3427
        %v3429 = vlaneseq
        %v3430 = vshrl.u32 %v3429, 7
        %v3431 = vsub.s32 7, %v3430
        %v3432 = vrot.slane %v2846, %v3431
        %v3433 = vlaneseq
        %v3434 = vshrl.u32 %v3433, 7
        %v3435 = vsub.s32 0, %v3434
        %v3436 = vrot.slane %v2975, %v3435
        %v3437 = vlaneseq
        %v3438 = vshrl.u32 %v3437, 7
        %v3439 = vsub.s32 1, %v3438
        %v3440 = vrot.slane %v2975, %v3439
        %v3441 = vlaneseq
        %v3442 = vshrl.u32 %v3441, 7
        %v3443 = vsub.s32 2, %v3442
        %v3444 = vrot.slane %v2975, %v3443
        %v3445 = vlaneseq
        %v3446 = vshrl.u32 %v3445, 7
        %v3447 = vsub.s32 3, %v3446
        %v3448 = vrot.slane %v2975, %v3447
        %v3449 = vlaneseq
        %v3450 = vshrl.u32 %v3449, 7
        %v3451 = vsub.s32 4, %v3450
        %v3452 = vrot.slane %v2975, %v3451
        %v3453 = vlaneseq
        %v3454 = vshrl.u32 %v3453, 7
        %v3455 = vsub.s32 5, %v3454
        %v3456 = vrot.slane %v2975, %v3455
        %v3457 = vlaneseq
        %v3458 = vshrl.u32 %v3457, 7
        %v3459 = vsub.s32 6, %v3458
        %v3460 = vrot.slane %v2975, %v3459
        %v3461 = vlaneseq
        %v3462 = vshrl.u32 %v3461, 7
        %v3463 = vsub.s32 7, %v3462
        %v3464 = vrot.slane %v2975, %v3463
        %v3465 = vlaneseq
        %v3466 = vshrl.u32 %v3465, 7
        %v3467 = vsub.s32 0, %v3466
        %v3468 = vrot.slane %v3104, %v3467
        %v3469 = vlaneseq
        %v3470 = vshrl.u32 %v3469, 7
        %v3471 = vsub.s32 1, %v3470
        %v3472 = vrot.slane %v3104, %v3471
        %v3473 = vlaneseq
        %v3474 = vshrl.u32 %v3473, 7
        %v3475 = vsub.s32 2, %v3474
        %v3476 = vrot.slane %v3104, %v3475
        %v3477 = vlaneseq
        %v3478 = vshrl.u32 %v3477, 7
        %v3479 = vsub.s32 3, %v3478
        %v3480 = vrot.slane %v3104, %v3479
        %v3481 = vlaneseq
        %v3482 = vshrl.u32 %v3481, 7
        %v3483 = vsub.s32 4, %v3482
        %v3484 = vrot.slane %v3104, %v3483
        %v3485 = vlaneseq
        %v3486 = vshrl.u32 %v3485, 7
        %v3487 = vsub.s32 5, %v3486
        %v3488 = vrot.slane %v3104, %v3487
        %v3489 = vlaneseq
        %v3490 = vshrl.u32 %v3489, 7
        %v3491 = vsub.s32 6, %v3490
        %v3492 = vrot.slane %v3104, %v3491
        %v3493 = vlaneseq
        %v3494 = vshrl.u32 %v3493, 7
        %v3495 = vsub.s32 7, %v3494
        %v3496 = vrot.slane %v3104, %v3495
        %v3497 = vlaneseq
        %v3498 = vshrl.u32 %v3497, 7
        %v3499 = vsub.s32 0, %v3498
        %v3500 = vrot.slane %v3233, %v3499
        %v3501 = vlaneseq
        %v3502 = vshrl.u32 %v3501, 7
        %v3503 = vsub.s32 1, %v3502
        %v3504 = vrot.slane %v3233, %v3503
        %v3505 = vlaneseq
        %v3506 = vshrl.u32 %v3505, 7
        %v3507 = vsub.s32 2, %v3506
        %v3508 = vrot.slane %v3233, %v3507
        %v3509 = vlaneseq
        %v3510 = vshrl.u32 %v3509, 7
        %v3511 = vsub.s32 3, %v3510
        %v3512 = vrot.slane %v3233, %v3511
        %v3513 = vlaneseq
        %v3514 = vshrl.u32 %v3513, 7
        %v3515 = vsub.s32 4, %v3514
        %v3516 = vrot.slane %v3233, %v3515
        %v3517 = vlaneseq
        %v3518 = vshrl.u32 %v3517, 7
        %v3519 = vsub.s32 5, %v3518
        %v3520 = vrot.slane %v3233, %v3519
        %v3521 = vlaneseq
        %v3522 = vshrl.u32 %v3521, 7
        %v3523 = vsub.s32 6, %v3522
        %v3524 = vrot.slane %v3233, %v3523
        %v3525 = vlaneseq
        %v3526 = vshrl.u32 %v3525, 7
        %v3527 = vsub.s32 7, %v3526
        %v3528 = vrot.slane %v3233, %v3527
        %v3529 = vlaneseq
        %v3530 = vshrl.u32 %v3529, 7
        %v3531 = vsub.s32 0, %v3530
        %v3532 = vrot.slane %v3362, %v3531
        %v3533 = vlaneseq
        %v3534 = vshrl.u32 %v3533, 7
        %v3535 = vsub.s32 1, %v3534
        %v3536 = vrot.slane %v3362, %v3535
        %v3537 = vlaneseq
        %v3538 = vshrl.u32 %v3537, 7
        %v3539 = vsub.s32 2, %v3538
        %v3540 = vrot.slane %v3362, %v3539
        %v3541 = vlaneseq
        %v3542 = vshrl.u32 %v3541, 7
        %v3543 = vsub.s32 3, %v3542
        %v3544 = vrot.slane %v3362, %v3543
        %v3545 = vlaneseq
        %v3546 = vshrl.u32 %v3545, 7
        %v3547 = vsub.s32 4, %v3546
        %v3548 = vrot.slane %v3362, %v3547
        %v3549 = vlaneseq
        %v3550 = vshrl.u32 %v3549, 7
        %v3551 = vsub.s32 5, %v3550
        %v3552 = vrot.slane %v3362, %v3551
        %v3553 = vlaneseq
        %v3554 = vshrl.u32 %v3553, 7
        %v3555 = vsub.s32 6, %v3554
        %v3556 = vrot.slane %v3362, %v3555
        %v3557 = vlaneseq
        %v3558 = vshrl.u32 %v3557, 7
        %v3559 = vsub.s32 7, %v3558
        %v3560 = vrot.slane %v3362, %v3559
        %v3561 = vcombine.low %v3372, %v3376
        %v3562 = vcombine.low %v3380, %v3384
        %v3563 = vcombine.low %v3388, %v3392
        %v3564 = vcombine.low %v3396, %v3400
        %v3566 = vunpack.c.l.s4 1966171168
        %v3567 = vunpack.c.0.s8 %v3566
        %v3568 = vlaneseq
        %v3569 = vshrl.u32 %v3568, 7
        %v3570 = vsub.s32 %v3567, %v3569
        %v3571 = vrot.slane %v3561, %v3570
        %v3573 = vunpack.c.l.s4 1966171168
        %v3574 = vunpack.c.0.s8 %v3573
        %v3575 = vlaneseq
        %v3576 = vshrl.u32 %v3575, 7
        %v3577 = vsub.s32 %v3574, %v3576
        %v3578 = vrot.slane %v3562, %v3577
        %v3580 = vunpack.c.l.s4 1966171168
        %v3581 = vunpack.c.0.s8 %v3580
        %v3582 = vlaneseq
        %v3583 = vshrl.u32 %v3582, 7
        %v3584 = vsub.s32 %v3581, %v3583
        %v3585 = vrot.slane %v3563, %v3584
        %v3587 = vunpack.c.l.s4 1966171168
        %v3588 = vunpack.c.0.s8 %v3587
        %v3589 = vlaneseq
        %v3590 = vshrl.u32 %v3589, 7
        %v3591 = vsub.s32 %v3588, %v3590
        %v3592 = vrot.slane %v3564, %v3591
        %v3593 = vcombine.low %v3571, %v3578
        %v3594 = vcombine.low %v3585, %v3592
        %v3596 = vunpack.c.l.s4 1966171168
        %v3597 = vunpack.c.0.s8 %v3596
        %v3598 = vlaneseq
        %v3599 = vshrl.u32 %v3598, 7
        %v3600 = vsub.s32 %v3597, %v3599
        %v3601 = vrot.slane %v3593, %v3600
        %v3603 = vunpack.c.l.s4 1966171168
        %v3604 = vunpack.c.0.s8 %v3603
        %v3605 = vlaneseq
        %v3606 = vshrl.u32 %v3605, 7
        %v3607 = vsub.s32 %v3604, %v3606
        %v3608 = vrot.slane %v3594, %v3607
        %v3609 = vcombine.low %v3601, %v3608
        %v3610 = vcombine.low %v3404, %v3408
        %v3611 = vcombine.low %v3412, %v3416
        %v3612 = vcombine.low %v3420, %v3424
        %v3613 = vcombine.low %v3428, %v3432
        %v3615 = vunpack.c.l.s4 1966171168
        %v3616 = vunpack.c.0.s8 %v3615
        %v3617 = vlaneseq
        %v3618 = vshrl.u32 %v3617, 7
        %v3619 = vsub.s32 %v3616, %v3618
        %v3620 = vrot.slane %v3610, %v3619
        %v3622 = vunpack.c.l.s4 1966171168
        %v3623 = vunpack.c.0.s8 %v3622
        %v3624 = vlaneseq
        %v3625 = vshrl.u32 %v3624, 7
        %v3626 = vsub.s32 %v3623, %v3625
        %v3627 = vrot.slane %v3611, %v3626
        %v3629 = vunpack.c.l.s4 1966171168
        %v3630 = vunpack.c.0.s8 %v3629
        %v3631 = vlaneseq
        %v3632 = vshrl.u32 %v3631, 7
        %v3633 = vsub.s32 %v3630, %v3632
        %v3634 = vrot.slane %v3612, %v3633
        %v3636 = vunpack.c.l.s4 1966171168
        %v3637 = vunpack.c.0.s8 %v3636
        %v3638 = vlaneseq
        %v3639 = vshrl.u32 %v3638, 7
        %v3640 = vsub.s32 %v3637, %v3639
        %v3641 = vrot.slane %v3613, %v3640
        %v3642 = vcombine.low %v3620, %v3627
        %v3643 = vcombine.low %v3634, %v3641
        %v3645 = vunpack.c.l.s4 1966171168
        %v3646 = vunpack.c.0.s8 %v3645
        %v3647 = vlaneseq
        %v3648 = vshrl.u32 %v3647, 7
        %v3649 = vsub.s32 %v3646, %v3648
        %v3650 = vrot.slane %v3642, %v3649
        %v3652 = vunpack.c.l.s4 1966171168
        %v3653 = vunpack.c.0.s8 %v3652
        %v3654 = vlaneseq
        %v3655 = vshrl.u32 %v3654, 7
        %v3656 = vsub.s32 %v3653, %v3655
        %v3657 = vrot.slane %v3643, %v3656
        %v3658 = vcombine.low %v3650, %v3657
        %v3659 = vcombine.low %v3436, %v3440
        %v3660 = vcombine.low %v3444, %v3448
        %v3661 = vcombine.low %v3452, %v3456
        %v3662 = vcombine.low %v3460, %v3464
        %v3664 = vunpack.c.l.s4 1966171168
        %v3665 = vunpack.c.0.s8 %v3664
        %v3666 = vlaneseq
        %v3667 = vshrl.u32 %v3666, 7
        %v3668 = vsub.s32 %v3665, %v3667
        %v3669 = vrot.slane %v3659, %v3668
        %v3671 = vunpack.c.l.s4 1966171168
        %v3672 = vunpack.c.0.s8 %v3671
        %v3673 = vlaneseq
        %v3674 = vshrl.u32 %v3673, 7
        %v3675 = vsub.s32 %v3672, %v3674
        %v3676 = vrot.slane %v3660, %v3675
        %v3678 = vunpack.c.l.s4 1966171168
        %v3679 = vunpack.c.0.s8 %v3678
        %v3680 = vlaneseq
        %v3681 = vshrl.u32 %v3680, 7
        %v3682 = vsub.s32 %v3679, %v3681
        %v3683 = vrot.slane %v3661, %v3682
        %v3685 = vunpack.c.l.s4 1966171168
        %v3686 = vunpack.c.0.s8 %v3685
        %v3687 = vlaneseq
        %v3688 = vshrl.u32 %v3687, 7
        %v3689 = vsub.s32 %v3686, %v3688
        %v3690 = vrot.slane %v3662, %v3689
        %v3691 = vcombine.low %v3669, %v3676
        %v3692 = vcombine.low %v3683, %v3690
        %v3694 = vunpack.c.l.s4 1966171168
        %v3695 = vunpack.c.0.s8 %v3694
        %v3696 = vlaneseq
        %v3697 = vshrl.u32 %v3696, 7
        %v3698 = vsub.s32 %v3695, %v3697
        %v3699 = vrot.slane %v3691, %v3698
        %v3701 = vunpack.c.l.s4 1966171168
        %v3702 = vunpack.c.0.s8 %v3701
        %v3703 = vlaneseq
        %v3704 = vshrl.u32 %v3703, 7
        %v3705 = vsub.s32 %v3702, %v3704
        %v3706 = vrot.slane %v3692, %v3705
        %v3707 = vcombine.low %v3699, %v3706
        %v3708 = vcombine.low %v3468, %v3472
        %v3709 = vcombine.low %v3476, %v3480
        %v3710 = vcombine.low %v3484, %v3488
        %v3711 = vcombine.low %v3492, %v3496
        %v3713 = vunpack.c.l.s4 1966171168
        %v3714 = vunpack.c.0.s8 %v3713
        %v3715 = vlaneseq
        %v3716 = vshrl.u32 %v3715, 7
        %v3717 = vsub.s32 %v3714, %v3716
        %v3718 = vrot.slane %v3708, %v3717
        %v3720 = vunpack.c.l.s4 1966171168
        %v3721 = vunpack.c.0.s8 %v3720
        %v3722 = vlaneseq
        %v3723 = vshrl.u32 %v3722, 7
        %v3724 = vsub.s32 %v3721, %v3723
        %v3725 = vrot.slane %v3709, %v3724
        %v3727 = vunpack.c.l.s4 1966171168
        %v3728 = vunpack.c.0.s8 %v3727
        %v3729 = vlaneseq
        %v3730 = vshrl.u32 %v3729, 7
        %v3731 = vsub.s32 %v3728, %v3730
        %v3732 = vrot.slane %v3710, %v3731
        %v3734 = vunpack.c.l.s4 1966171168
        %v3735 = vunpack.c.0.s8 %v3734
        %v3736 = vlaneseq
        %v3737 = vshrl.u32 %v3736, 7
        %v3738 = vsub.s32 %v3735, %v3737
        %v3739 = vrot.slane %v3711, %v3738
        %v3740 = vcombine.low %v3718, %v3725
        %v3741 = vcombine.low %v3732, %v3739
        %v3743 = vunpack.c.l.s4 1966171168
        %v3744 = vunpack.c.0.s8 %v3743
        %v3745 = vlaneseq
        %v3746 = vshrl.u32 %v3745, 7
        %v3747 = vsub.s32 %v3744, %v3746
        %v3748 = vrot.slane %v3740, %v3747
        %v3750 = vunpack.c.l.s4 1966171168
        %v3751 = vunpack.c.0.s8 %v3750
        %v3752 = vlaneseq
        %v3753 = vshrl.u32 %v3752, 7
        %v3754 = vsub.s32 %v3751, %v3753
        %v3755 = vrot.slane %v3741, %v3754
        %v3756 = vcombine.low %v3748, %v3755
        %v3757 = vcombine.low %v3500, %v3504
        %v3758 = vcombine.low %v3508, %v3512
        %v3759 = vcombine.low %v3516, %v3520
        %v3760 = vcombine.low %v3524, %v3528
        %v3762 = vunpack.c.l.s4 1966171168
        %v3763 = vunpack.c.0.s8 %v3762
        %v3764 = vlaneseq
        %v3765 = vshrl.u32 %v3764, 7
        %v3766 = vsub.s32 %v3763, %v3765
        %v3767 = vrot.slane %v3757, %v3766
        %v3769 = vunpack.c.l.s4 1966171168
        %v3770 = vunpack.c.0.s8 %v3769
        %v3771 = vlaneseq
        %v3772 = vshrl.u32 %v3771, 7
        %v3773 = vsub.s32 %v3770, %v3772
        %v3774 = vrot.slane %v3758, %v3773
        %v3776 = vunpack.c.l.s4 1966171168
        %v3777 = vunpack.c.0.s8 %v3776
        %v3778 = vlaneseq
        %v3779 = vshrl.u32 %v3778, 7
        %v3780 = vsub.s32 %v3777, %v3779
        %v3781 = vrot.slane %v3759, %v3780
        %v3783 = vunpack.c.l.s4 1966171168
        %v3784 = vunpack.c.0.s8 %v3783
        %v3785 = vlaneseq
        %v3786 = vshrl.u32 %v3785, 7
        %v3787 = vsub.s32 %v3784, %v3786
        %v3788 = vrot.slane %v3760, %v3787
        %v3789 = vcombine.low %v3767, %v3774
        %v3790 = vcombine.low %v3781, %v3788
        %v3792 = vunpack.c.l.s4 1966171168
        %v3793 = vunpack.c.0.s8 %v3792
        %v3794 = vlaneseq
        %v3795 = vshrl.u32 %v3794, 7
        %v3796 = vsub.s32 %v3793, %v3795
        %v3797 = vrot.slane %v3789, %v3796
        %v3799 = vunpack.c.l.s4 1966171168
        %v3800 = vunpack.c.0.s8 %v3799
        %v3801 = vlaneseq
        %v3802 = vshrl.u32 %v3801, 7
        %v3803 = vsub.s32 %v3800, %v3802
        %v3804 = vrot.slane %v3790, %v3803
        %v3805 = vcombine.low %v3797, %v3804
        %v3806 = vcombine.low %v3532, %v3536
        %v3807 = vcombine.low %v3540, %v3544
        %v3808 = vcombine.low %v3548, %v3552
        %v3809 = vcombine.low %v3556, %v3560
        %v3811 = vunpack.c.l.s4 1966171168
        %v3812 = vunpack.c.0.s8 %v3811
        %v3813 = vlaneseq
        %v3814 = vshrl.u32 %v3813, 7
        %v3815 = vsub.s32 %v3812, %v3814
        %v3816 = vrot.slane %v3806, %v3815
        %v3818 = vunpack.c.l.s4 1966171168
        %v3819 = vunpack.c.0.s8 %v3818
        %v3820 = vlaneseq
        %v3821 = vshrl.u32 %v3820, 7
        %v3822 = vsub.s32 %v3819, %v3821
        %v3823 = vrot.slane %v3807, %v3822
        %v3825 = vunpack.c.l.s4 1966171168
        %v3826 = vunpack.c.0.s8 %v3825
        %v3827 = vlaneseq
        %v3828 = vshrl.u32 %v3827, 7
        %v3829 = vsub.s32 %v3826, %v3828
        %v3830 = vrot.slane %v3808, %v3829
        %v3832 = vunpack.c.l.s4 1966171168
        %v3833 = vunpack.c.0.s8 %v3832
        %v3834 = vlaneseq
        %v3835 = vshrl.u32 %v3834, 7
        %v3836 = vsub.s32 %v3833, %v3835
        %v3837 = vrot.slane %v3809, %v3836
        %v3838 = vcombine.low %v3816, %v3823
        %v3839 = vcombine.low %v3830, %v3837
        %v3841 = vunpack.c.l.s4 1966171168
        %v3842 = vunpack.c.0.s8 %v3841
        %v3843 = vlaneseq
        %v3844 = vshrl.u32 %v3843, 7
        %v3845 = vsub.s32 %v3842, %v3844
        %v3846 = vrot.slane %v3838, %v3845
        %v3848 = vunpack.c.l.s4 1966171168
        %v3849 = vunpack.c.0.s8 %v3848
        %v3850 = vlaneseq
        %v3851 = vshrl.u32 %v3850, 7
        %v3852 = vsub.s32 %v3849, %v3851
        %v3853 = vrot.slane %v3839, %v3852
        %v3854 = vcombine.low %v3846, %v3853
        %3855 = vset.pattern.permute.xlu0 0
        %3856 = vperm.xlu0 %3855, %v3609
        %v3857 = vpop.permute.xlu0 %3856
        %3858 = vset.pattern.permute.xlu0 0
        %3859 = vperm.xlu0 %3858, %v3658
        %v3860 = vpop.permute.xlu0 %3859
        %3861 = vset.pattern.permute.xlu0 0
        %3862 = vperm.xlu0 %3861, %v3707
        %v3863 = vpop.permute.xlu0 %3862
        %3864 = vset.pattern.permute.xlu0 0
        %3865 = vperm.xlu0 %3864, %v3756
        %v3866 = vpop.permute.xlu0 %3865
        %3867 = vset.pattern.permute.xlu0 0
        %3868 = vperm.xlu0 %3867, %v3805
        %v3869 = vpop.permute.xlu0 %3868
        %3870 = vset.pattern.permute.xlu0 0
        %3871 = vperm.xlu0 %3870, %v3854
        %v3872 = vpop.permute.xlu0 %3871
        %v3873 = vlaneseq
        %v3874 = vand.u32 %v3873, 127
        %v3875 = vlaneseq
        %v3876 = vshrl.u32 %v3875, 7
        %v3877 = vsub.s32 %v3874, %v3876
        %v3878 = vrot.slane %v3857, %v3877
        %v3879 = vadd.s32 %v3874, 4294967288
        %v3880 = vlaneseq
        %v3881 = vshrl.u32 %v3880, 7
        %v3882 = vsub.s32 %v3879, %v3881
        %v3883 = vrot.slane %v3860, %v3882
        %vm3884 = vcmask 130112
        %v3885 = vsel %vm3884, %v3883, %v3878
        %v3886 = vadd.s32 %v3874, 4294967280
        %v3887 = vlaneseq
        %v3888 = vshrl.u32 %v3887, 7
        %v3889 = vsub.s32 %v3886, %v3888
        %v3890 = vrot.slane %v3863, %v3889
        %vm3891 = vcmask 195712
        %v3892 = vsel %vm3891, %v3890, %v3885
        %v3893 = vadd.s32 %v3874, 4294967272
        %v3894 = vlaneseq
        %v3895 = vshrl.u32 %v3894, 7
        %v3896 = vsub.s32 %v3893, %v3895
        %v3897 = vrot.slane %v3866, %v3896
        %vm3898 = vcmask 261312
        %v3899 = vsel %vm3898, %v3897, %v3892
        %v3900 = vadd.s32 %v3874, 4294967264
        %v3901 = vlaneseq
        %v3902 = vshrl.u32 %v3901, 7
        %v3903 = vsub.s32 %v3900, %v3902
        %v3904 = vrot.slane %v3869, %v3903
        %vm3905 = vcmask 326912
        %v3906 = vsel %vm3905, %v3904, %v3899
        %v3907 = vadd.s32 %v3874, 4294967256
        %v3908 = vlaneseq
        %v3909 = vshrl.u32 %v3908, 7
        %v3910 = vsub.s32 %v3907, %v3909
        %v3911 = vrot.slane %v3872, %v3910
        %vm3912 = vcmask 392512
        %v3913 = vsel %vm3912, %v3911, %v3906
        %v3915 = vunpack.c.l.s4 1966171168
        %v3916 = vunpack.c.0.s8 %v3915
        %v3917 = vlaneseq
        %v3918 = vshrl.u32 %v3917, 7
        %v3919 = vsub.s32 %v3916, %v3918
        %v3920 = vrot.slane %v3913, %v3919
        %v3922 = vunpack.c.l.s4 1966171168
        %v3923 = vunpack.c.0.s8 %v3922
        %v3924 = vlaneseq
        %v3925 = vshrl.u32 %v3924, 7
        %v3926 = vsub.s32 %v3923, %v3925
        %v3927 = vrot.slane %v3920, %v3926
        %v3929 = vadd.f32 %v2588, %v3927
        %vm3930 = vcmask 385024
        %3931 = vst.msk [vmem:[#allocation2] sm:$0x1] %vm3930, %v3929
        %v3932 = vld [vmem:[%s1360] sm:$0xff]
        %v3933 = vld [vmem:[%s1360 + $0x8] sm:$0xff]
        %v3934 = vld [vmem:[%s1360 + $0x10] sm:$0xff]
        %v3935 = vld [vmem:[%s1360 + $0x18] sm:$0xff]
        %v3936 = vld [vmem:[%s1360 + $0x20] sm:$0xff]
        %v3937 = vld [vmem:[%s1360 + $0x28] sm:$0xff]
        %v3938 = vld [vmem:[%s1360 + $0x30] sm:$0xff]
        %v3939 = vld [vmem:[%s1360 + $0x38] sm:$0xff]
        %v3940 = vld [vmem:[%s1360 + $0x40] sm:$0xff]
        %v3941 = vld [vmem:[%s1360 + $0x48] sm:$0xff]
        %v3942 = vld [vmem:[%s1360 + $0x50] sm:$0xff]
        %v3943 = vld [vmem:[%s1360 + $0x58] sm:$0xff]
        %v3944 = vld [vmem:[%s1360 + $0x60] sm:$0xff]
        %v3945 = vld [vmem:[%s1360 + $0x68] sm:$0xff]
        %v3946 = vld [vmem:[%s1360 + $0x70] sm:$0xff]
        %v3947 = vld [vmem:[%s1360 + $0x78] sm:$0xff]
        %v3948 = vld [vmem:[%s1360 + $0x80] sm:$0xff]
        %v3949 = vld [vmem:[%s1360 + $0x88] sm:$0xff]
        %v3950 = vld [vmem:[%s1360 + $0x90] sm:$0xff]
        %v3951 = vld [vmem:[%s1360 + $0x98] sm:$0xff]
        %v3952 = vld [vmem:[%s1360 + $0xa0] sm:$0xff]
        %v3953 = vld [vmem:[%s1360 + $0xa8] sm:$0xff]
        %v3954 = vld [vmem:[%s1360 + $0xb0] sm:$0xff]
        %v3955 = vld [vmem:[%s1360 + $0xb8] sm:$0xff]
        %v3956 = vld [vmem:[%s1360 + $0xc0] sm:$0xff]
        %v3957 = vld [vmem:[%s1360 + $0xc8] sm:$0xff]
        %v3958 = vld [vmem:[%s1360 + $0xd0] sm:$0xff]
        %v3959 = vld [vmem:[%s1360 + $0xd8] sm:$0xff]
        %v3960 = vld [vmem:[%s1360 + $0xe0] sm:$0xff]
        %v3961 = vld [vmem:[%s1360 + $0xe8] sm:$0xff]
        %v3962 = vld [vmem:[%s1360 + $0xf0] sm:$0xff]
        %v3963 = vld [vmem:[%s1360 + $0xf8] sm:$0xff]
        %v3964 = vld [vmem:[%s1360 + $0x100] sm:$0xff]
        %v3965 = vld [vmem:[%s1360 + $0x108] sm:$0xff]
        %v3966 = vld [vmem:[%s1360 + $0x110] sm:$0xff]
        %v3967 = vld [vmem:[%s1360 + $0x118] sm:$0xff]
        %v3968 = vld [vmem:[%s1360 + $0x120] sm:$0xff]
        %v3969 = vld [vmem:[%s1360 + $0x128] sm:$0xff]
        %v3970 = vld [vmem:[%s1360 + $0x130] sm:$0xff]
        %v3971 = vld [vmem:[%s1360 + $0x138] sm:$0xff]
        %v3972 = vld [vmem:[%s1360 + $0x140] sm:$0xff]
        %v3973 = vld [vmem:[%s1360 + $0x148] sm:$0xff]
        %v3974 = vld [vmem:[%s1360 + $0x150] sm:$0xff]
        %v3975 = vld [vmem:[%s1360 + $0x158] sm:$0xff]
        %v3976 = vld [vmem:[%s1360 + $0x160] sm:$0xff]
        %v3977 = vld [vmem:[%s1360 + $0x168] sm:$0xff]
        %v3978 = vld [vmem:[%s1360 + $0x170] sm:$0xff]
        %v3979 = vld [vmem:[%s1360 + $0x178] sm:$0xff]
        %v3980 = vld [vmem:[%s1360 + $0x180] sm:$0xff]
        %v3981 = vld [vmem:[%s1360 + $0x188] sm:$0xff]
        %v3982 = vld [vmem:[%s1360 + $0x190] sm:$0xff]
        %v3983 = vld [vmem:[%s1360 + $0x198] sm:$0xff]
        %v3984 = vld [vmem:[%s1360 + $0x1a0] sm:$0xff]
        %v3985 = vld [vmem:[%s1360 + $0x1a8] sm:$0xff]
        %v3986 = vld [vmem:[%s1360 + $0x1b0] sm:$0xff]
        %v3987 = vld [vmem:[%s1360 + $0x1b8] sm:$0xff]
        %v3988 = vld [vmem:[%s1360 + $0x1c0] sm:$0xff]
        %v3989 = vld [vmem:[%s1360 + $0x1c8] sm:$0xff]
        %v3990 = vld [vmem:[%s1360 + $0x1d0] sm:$0xff]
        %v3991 = vld [vmem:[%s1360 + $0x1d8] sm:$0xff]
        %v3992 = vld [vmem:[%s1360 + $0x1e0] sm:$0xff]
        %v3993 = vld [vmem:[%s1360 + $0x1e8] sm:$0xff]
        %v3994 = vld [vmem:[%s1360 + $0x1f0] sm:$0xff]
        %v3995 = vld [vmem:[%s1360 + $0x1f8] sm:$0xff]
        %v3996 = vld [vmem:[%s1360 + $0x200] sm:$0xff]
        %v3997 = vld [vmem:[%s1360 + $0x208] sm:$0xff]
        %v3998 = vld [vmem:[%s1360 + $0x210] sm:$0xff]
        %v3999 = vld [vmem:[%s1360 + $0x218] sm:$0xff]
        %v4000 = vld [vmem:[%s1360 + $0x220] sm:$0xff]
        %v4001 = vld [vmem:[%s1360 + $0x228] sm:$0xff]
        %v4002 = vld [vmem:[%s1360 + $0x230] sm:$0xff]
        %v4003 = vld [vmem:[%s1360 + $0x238] sm:$0xff]
        %v4004 = vld [vmem:[%s1360 + $0x240] sm:$0xff]
        %v4005 = vld [vmem:[%s1360 + $0x248] sm:$0xff]
        %v4006 = vld [vmem:[%s1360 + $0x250] sm:$0xff]
        %v4007 = vld [vmem:[%s1360 + $0x258] sm:$0xff]
        %v4008 = vld [vmem:[%s1360 + $0x260] sm:$0xff]
        %v4009 = vld [vmem:[%s1360 + $0x268] sm:$0xff]
        %v4010 = vld [vmem:[%s1360 + $0x270] sm:$0xff]
        %v4011 = vld [vmem:[%s1360 + $0x278] sm:$0xff]
        %v4012 = vld [vmem:[%s1360 + $0x280] sm:$0xff]
        %v4013 = vld [vmem:[%s1360 + $0x288] sm:$0xff]
        %v4014 = vld [vmem:[%s1360 + $0x290] sm:$0xff]
        %v4015 = vld [vmem:[%s1360 + $0x298] sm:$0xff]
        %v4016 = vld [vmem:[%s1360 + $0x2a0] sm:$0xff]
        %v4017 = vld [vmem:[%s1360 + $0x2a8] sm:$0xff]
        %v4018 = vld [vmem:[%s1360 + $0x2b0] sm:$0xff]
        %v4019 = vld [vmem:[%s1360 + $0x2b8] sm:$0xff]
        %v4020 = vld [vmem:[%s1360 + $0x2c0] sm:$0xff]
        %v4021 = vld [vmem:[%s1360 + $0x2c8] sm:$0xff]
        %v4022 = vld [vmem:[%s1360 + $0x2d0] sm:$0xff]
        %v4023 = vld [vmem:[%s1360 + $0x2d8] sm:$0xff]
        %v4024 = vld [vmem:[%s1360 + $0x2e0] sm:$0xff]
        %v4025 = vld [vmem:[%s1360 + $0x2e8] sm:$0xff]
        %v4026 = vld [vmem:[%s1360 + $0x2f0] sm:$0xff]
        %v4027 = vld [vmem:[%s1360 + $0x2f8] sm:$0xff]
        %v4028 = vunpack.c.l.bf16 %v3932
        %v4029 = vunpack.c.h.bf16 %v3932
        %v4030 = vunpack.c.l.bf16 %v3933
        %v4031 = vunpack.c.h.bf16 %v3933
        %v4032 = vunpack.c.l.bf16 %v3934
        %v4033 = vunpack.c.h.bf16 %v3934
        %v4034 = vunpack.c.l.bf16 %v3935
        %v4035 = vunpack.c.h.bf16 %v3935
        %v4036 = vunpack.c.l.bf16 %v3936
        %v4037 = vunpack.c.h.bf16 %v3936
        %v4038 = vunpack.c.l.bf16 %v3937
        %v4039 = vunpack.c.h.bf16 %v3937
        %v4040 = vunpack.c.l.bf16 %v3938
        %v4041 = vunpack.c.h.bf16 %v3938
        %v4042 = vunpack.c.l.bf16 %v3939
        %v4043 = vunpack.c.h.bf16 %v3939
        %v4044 = vunpack.c.l.bf16 %v3940
        %v4045 = vunpack.c.h.bf16 %v3940
        %v4046 = vunpack.c.l.bf16 %v3941
        %v4047 = vunpack.c.h.bf16 %v3941
        %v4048 = vunpack.c.l.bf16 %v3942
        %v4049 = vunpack.c.h.bf16 %v3942
        %v4050 = vunpack.c.l.bf16 %v3943
        %v4051 = vunpack.c.h.bf16 %v3943
        %v4052 = vunpack.c.l.bf16 %v3944
        %v4053 = vunpack.c.h.bf16 %v3944
        %v4054 = vunpack.c.l.bf16 %v3945
        %v4055 = vunpack.c.h.bf16 %v3945
        %v4056 = vunpack.c.l.bf16 %v3946
        %v4057 = vunpack.c.h.bf16 %v3946
        %v4058 = vunpack.c.l.bf16 %v3947
        %v4059 = vunpack.c.h.bf16 %v3947
        %v4060 = vunpack.c.l.bf16 %v3948
        %v4061 = vunpack.c.h.bf16 %v3948
        %v4062 = vunpack.c.l.bf16 %v3949
        %v4063 = vunpack.c.h.bf16 %v3949
        %v4064 = vunpack.c.l.bf16 %v3950
        %v4065 = vunpack.c.h.bf16 %v3950
        %v4066 = vunpack.c.l.bf16 %v3951
        %v4067 = vunpack.c.h.bf16 %v3951
        %v4068 = vunpack.c.l.bf16 %v3952
        %v4069 = vunpack.c.h.bf16 %v3952
        %v4070 = vunpack.c.l.bf16 %v3953
        %v4071 = vunpack.c.h.bf16 %v3953
        %v4072 = vunpack.c.l.bf16 %v3954
        %v4073 = vunpack.c.h.bf16 %v3954
        %v4074 = vunpack.c.l.bf16 %v3955
        %v4075 = vunpack.c.h.bf16 %v3955
        %v4076 = vunpack.c.l.bf16 %v3956
        %v4077 = vunpack.c.h.bf16 %v3956
        %v4078 = vunpack.c.l.bf16 %v3957
        %v4079 = vunpack.c.h.bf16 %v3957
        %v4080 = vunpack.c.l.bf16 %v3958
        %v4081 = vunpack.c.h.bf16 %v3958
        %v4082 = vunpack.c.l.bf16 %v3959
        %v4083 = vunpack.c.h.bf16 %v3959
        %v4084 = vunpack.c.l.bf16 %v3960
        %v4085 = vunpack.c.h.bf16 %v3960
        %v4086 = vunpack.c.l.bf16 %v3961
        %v4087 = vunpack.c.h.bf16 %v3961
        %v4088 = vunpack.c.l.bf16 %v3962
        %v4089 = vunpack.c.h.bf16 %v3962
        %v4090 = vunpack.c.l.bf16 %v3963
        %v4091 = vunpack.c.h.bf16 %v3963
        %v4092 = vunpack.c.l.bf16 %v3964
        %v4093 = vunpack.c.h.bf16 %v3964
        %v4094 = vunpack.c.l.bf16 %v3965
        %v4095 = vunpack.c.h.bf16 %v3965
        %v4096 = vunpack.c.l.bf16 %v3966
        %v4097 = vunpack.c.h.bf16 %v3966
        %v4098 = vunpack.c.l.bf16 %v3967
        %v4099 = vunpack.c.h.bf16 %v3967
        %v4100 = vunpack.c.l.bf16 %v3968
        %v4101 = vunpack.c.h.bf16 %v3968
        %v4102 = vunpack.c.l.bf16 %v3969
        %v4103 = vunpack.c.h.bf16 %v3969
        %v4104 = vunpack.c.l.bf16 %v3970
        %v4105 = vunpack.c.h.bf16 %v3970
        %v4106 = vunpack.c.l.bf16 %v3971
        %v4107 = vunpack.c.h.bf16 %v3971
        %v4108 = vunpack.c.l.bf16 %v3972
        %v4109 = vunpack.c.h.bf16 %v3972
        %v4110 = vunpack.c.l.bf16 %v3973
        %v4111 = vunpack.c.h.bf16 %v3973
        %v4112 = vunpack.c.l.bf16 %v3974
        %v4113 = vunpack.c.h.bf16 %v3974
        %v4114 = vunpack.c.l.bf16 %v3975
        %v4115 = vunpack.c.h.bf16 %v3975
        %v4116 = vunpack.c.l.bf16 %v3976
        %v4117 = vunpack.c.h.bf16 %v3976
        %v4118 = vunpack.c.l.bf16 %v3977
        %v4119 = vunpack.c.h.bf16 %v3977
        %v4120 = vunpack.c.l.bf16 %v3978
        %v4121 = vunpack.c.h.bf16 %v3978
        %v4122 = vunpack.c.l.bf16 %v3979
        %v4123 = vunpack.c.h.bf16 %v3979
        %v4124 = vunpack.c.l.bf16 %v3980
        %v4125 = vunpack.c.h.bf16 %v3980
        %v4126 = vunpack.c.l.bf16 %v3981
        %v4127 = vunpack.c.h.bf16 %v3981
        %v4128 = vunpack.c.l.bf16 %v3982
        %v4129 = vunpack.c.h.bf16 %v3982
        %v4130 = vunpack.c.l.bf16 %v3983
        %v4131 = vunpack.c.h.bf16 %v3983
        %v4132 = vunpack.c.l.bf16 %v3984
        %v4133 = vunpack.c.h.bf16 %v3984
        %v4134 = vunpack.c.l.bf16 %v3985
        %v4135 = vunpack.c.h.bf16 %v3985
        %v4136 = vunpack.c.l.bf16 %v3986
        %v4137 = vunpack.c.h.bf16 %v3986
        %v4138 = vunpack.c.l.bf16 %v3987
        %v4139 = vunpack.c.h.bf16 %v3987
        %v4140 = vunpack.c.l.bf16 %v3988
        %v4141 = vunpack.c.h.bf16 %v3988
        %v4142 = vunpack.c.l.bf16 %v3989
        %v4143 = vunpack.c.h.bf16 %v3989
        %v4144 = vunpack.c.l.bf16 %v3990
        %v4145 = vunpack.c.h.bf16 %v3990
        %v4146 = vunpack.c.l.bf16 %v3991
        %v4147 = vunpack.c.h.bf16 %v3991
        %v4148 = vunpack.c.l.bf16 %v3992
        %v4149 = vunpack.c.h.bf16 %v3992
        %v4150 = vunpack.c.l.bf16 %v3993
        %v4151 = vunpack.c.h.bf16 %v3993
        %v4152 = vunpack.c.l.bf16 %v3994
        %v4153 = vunpack.c.h.bf16 %v3994
        %v4154 = vunpack.c.l.bf16 %v3995
        %v4155 = vunpack.c.h.bf16 %v3995
        %v4156 = vunpack.c.l.bf16 %v3996
        %v4157 = vunpack.c.h.bf16 %v3996
        %v4158 = vunpack.c.l.bf16 %v3997
        %v4159 = vunpack.c.h.bf16 %v3997
        %v4160 = vunpack.c.l.bf16 %v3998
        %v4161 = vunpack.c.h.bf16 %v3998
        %v4162 = vunpack.c.l.bf16 %v3999
        %v4163 = vunpack.c.h.bf16 %v3999
        %v4164 = vunpack.c.l.bf16 %v4000
        %v4165 = vunpack.c.h.bf16 %v4000
        %v4166 = vunpack.c.l.bf16 %v4001
        %v4167 = vunpack.c.h.bf16 %v4001
        %v4168 = vunpack.c.l.bf16 %v4002
        %v4169 = vunpack.c.h.bf16 %v4002
        %v4170 = vunpack.c.l.bf16 %v4003
        %v4171 = vunpack.c.h.bf16 %v4003
        %v4172 = vunpack.c.l.bf16 %v4004
        %v4173 = vunpack.c.h.bf16 %v4004
        %v4174 = vunpack.c.l.bf16 %v4005
        %v4175 = vunpack.c.h.bf16 %v4005
        %v4176 = vunpack.c.l.bf16 %v4006
        %v4177 = vunpack.c.h.bf16 %v4006
        %v4178 = vunpack.c.l.bf16 %v4007
        %v4179 = vunpack.c.h.bf16 %v4007
        %v4180 = vunpack.c.l.bf16 %v4008
        %v4181 = vunpack.c.h.bf16 %v4008
        %v4182 = vunpack.c.l.bf16 %v4009
        %v4183 = vunpack.c.h.bf16 %v4009
        %v4184 = vunpack.c.l.bf16 %v4010
        %v4185 = vunpack.c.h.bf16 %v4010
        %v4186 = vunpack.c.l.bf16 %v4011
        %v4187 = vunpack.c.h.bf16 %v4011
        %v4188 = vunpack.c.l.bf16 %v4012
        %v4189 = vunpack.c.h.bf16 %v4012
        %v4190 = vunpack.c.l.bf16 %v4013
        %v4191 = vunpack.c.h.bf16 %v4013
        %v4192 = vunpack.c.l.bf16 %v4014
        %v4193 = vunpack.c.h.bf16 %v4014
        %v4194 = vunpack.c.l.bf16 %v4015
        %v4195 = vunpack.c.h.bf16 %v4015
        %v4196 = vunpack.c.l.bf16 %v4016
        %v4197 = vunpack.c.h.bf16 %v4016
        %v4198 = vunpack.c.l.bf16 %v4017
        %v4199 = vunpack.c.h.bf16 %v4017
        %v4200 = vunpack.c.l.bf16 %v4018
        %v4201 = vunpack.c.h.bf16 %v4018
        %v4202 = vunpack.c.l.bf16 %v4019
        %v4203 = vunpack.c.h.bf16 %v4019
        %v4204 = vunpack.c.l.bf16 %v4020
        %v4205 = vunpack.c.h.bf16 %v4020
        %v4206 = vunpack.c.l.bf16 %v4021
        %v4207 = vunpack.c.h.bf16 %v4021
        %v4208 = vunpack.c.l.bf16 %v4022
        %v4209 = vunpack.c.h.bf16 %v4022
        %v4210 = vunpack.c.l.bf16 %v4023
        %v4211 = vunpack.c.h.bf16 %v4023
        %v4212 = vunpack.c.l.bf16 %v4024
        %v4213 = vunpack.c.h.bf16 %v4024
        %v4214 = vunpack.c.l.bf16 %v4025
        %v4215 = vunpack.c.h.bf16 %v4025
        %v4216 = vunpack.c.l.bf16 %v4026
        %v4217 = vunpack.c.h.bf16 %v4026
        %v4218 = vunpack.c.l.bf16 %v4027
        %v4219 = vunpack.c.h.bf16 %v4027
        %v4220 = vld [vmem:[#allocation3] sm:$0x1]
        %v4221 = vadd.f32 %v4028, %v4029
        %v4222 = vadd.f32 %v4221, %v4030
        %v4223 = vadd.f32 %v4222, %v4031
        %v4224 = vadd.f32 %v4223, %v4032
        %v4225 = vadd.f32 %v4224, %v4033
        %v4226 = vadd.f32 %v4225, %v4034
        %v4227 = vadd.f32 %v4226, %v4035
        %v4228 = vadd.f32 %v4227, %v4036
        %v4229 = vadd.f32 %v4228, %v4037
        %v4230 = vadd.f32 %v4229, %v4038
        %v4231 = vadd.f32 %v4230, %v4039
        %v4232 = vadd.f32 %v4231, %v4040
        %v4233 = vadd.f32 %v4232, %v4041
        %v4234 = vadd.f32 %v4233, %v4042
        %v4235 = vadd.f32 %v4234, %v4043
        %4236 = vadd.xlane.f32.xlu0 %v4235
        %v4237 = vpop.xlane.xlu0 %4236
        %v4238 = vadd.f32 %v4044, %v4045
        %v4239 = vadd.f32 %v4238, %v4046
        %v4240 = vadd.f32 %v4239, %v4047
        %v4241 = vadd.f32 %v4240, %v4048
        %v4242 = vadd.f32 %v4241, %v4049
        %v4243 = vadd.f32 %v4242, %v4050
        %v4244 = vadd.f32 %v4243, %v4051
        %v4245 = vadd.f32 %v4244, %v4052
        %v4246 = vadd.f32 %v4245, %v4053
        %v4247 = vadd.f32 %v4246, %v4054
        %v4248 = vadd.f32 %v4247, %v4055
        %v4249 = vadd.f32 %v4248, %v4056
        %v4250 = vadd.f32 %v4249, %v4057
        %v4251 = vadd.f32 %v4250, %v4058
        %v4252 = vadd.f32 %v4251, %v4059
        %4253 = vadd.xlane.f32.xlu0 %v4252
        %v4254 = vpop.xlane.xlu0 %4253
        %v4255 = vadd.f32 %v4060, %v4061
        %v4256 = vadd.f32 %v4255, %v4062
        %v4257 = vadd.f32 %v4256, %v4063
        %v4258 = vadd.f32 %v4257, %v4064
        %v4259 = vadd.f32 %v4258, %v4065
        %v4260 = vadd.f32 %v4259, %v4066
        %v4261 = vadd.f32 %v4260, %v4067
        %v4262 = vadd.f32 %v4261, %v4068
        %v4263 = vadd.f32 %v4262, %v4069
        %v4264 = vadd.f32 %v4263, %v4070
        %v4265 = vadd.f32 %v4264, %v4071
        %v4266 = vadd.f32 %v4265, %v4072
        %v4267 = vadd.f32 %v4266, %v4073
        %v4268 = vadd.f32 %v4267, %v4074
        %v4269 = vadd.f32 %v4268, %v4075
        %4270 = vadd.xlane.f32.xlu0 %v4269
        %v4271 = vpop.xlane.xlu0 %4270
        %v4272 = vadd.f32 %v4076, %v4077
        %v4273 = vadd.f32 %v4272, %v4078
        %v4274 = vadd.f32 %v4273, %v4079
        %v4275 = vadd.f32 %v4274, %v4080
        %v4276 = vadd.f32 %v4275, %v4081
        %v4277 = vadd.f32 %v4276, %v4082
        %v4278 = vadd.f32 %v4277, %v4083
        %v4279 = vadd.f32 %v4278, %v4084
        %v4280 = vadd.f32 %v4279, %v4085
        %v4281 = vadd.f32 %v4280, %v4086
        %v4282 = vadd.f32 %v4281, %v4087
        %v4283 = vadd.f32 %v4282, %v4088
        %v4284 = vadd.f32 %v4283, %v4089
        %v4285 = vadd.f32 %v4284, %v4090
        %v4286 = vadd.f32 %v4285, %v4091
        %4287 = vadd.xlane.f32.xlu0 %v4286
        %v4288 = vpop.xlane.xlu0 %4287
        %v4289 = vadd.f32 %v4092, %v4093
        %v4290 = vadd.f32 %v4289, %v4094
        %v4291 = vadd.f32 %v4290, %v4095
        %v4292 = vadd.f32 %v4291, %v4096
        %v4293 = vadd.f32 %v4292, %v4097
        %v4294 = vadd.f32 %v4293, %v4098
        %v4295 = vadd.f32 %v4294, %v4099
        %v4296 = vadd.f32 %v4295, %v4100
        %v4297 = vadd.f32 %v4296, %v4101
        %v4298 = vadd.f32 %v4297, %v4102
        %v4299 = vadd.f32 %v4298, %v4103
        %v4300 = vadd.f32 %v4299, %v4104
        %v4301 = vadd.f32 %v4300, %v4105
        %v4302 = vadd.f32 %v4301, %v4106
        %v4303 = vadd.f32 %v4302, %v4107
        %4304 = vadd.xlane.f32.xlu0 %v4303
        %v4305 = vpop.xlane.xlu0 %4304
        %v4306 = vadd.f32 %v4108, %v4109
        %v4307 = vadd.f32 %v4306, %v4110
        %v4308 = vadd.f32 %v4307, %v4111
        %v4309 = vadd.f32 %v4308, %v4112
        %v4310 = vadd.f32 %v4309, %v4113
        %v4311 = vadd.f32 %v4310, %v4114
        %v4312 = vadd.f32 %v4311, %v4115
        %v4313 = vadd.f32 %v4312, %v4116
        %v4314 = vadd.f32 %v4313, %v4117
        %v4315 = vadd.f32 %v4314, %v4118
        %v4316 = vadd.f32 %v4315, %v4119
        %v4317 = vadd.f32 %v4316, %v4120
        %v4318 = vadd.f32 %v4317, %v4121
        %v4319 = vadd.f32 %v4318, %v4122
        %v4320 = vadd.f32 %v4319, %v4123
        %4321 = vadd.xlane.f32.xlu0 %v4320
        %v4322 = vpop.xlane.xlu0 %4321
        %v4323 = vadd.f32 %v4124, %v4125
        %v4324 = vadd.f32 %v4323, %v4126
        %v4325 = vadd.f32 %v4324, %v4127
        %v4326 = vadd.f32 %v4325, %v4128
        %v4327 = vadd.f32 %v4326, %v4129
        %v4328 = vadd.f32 %v4327, %v4130
        %v4329 = vadd.f32 %v4328, %v4131
        %v4330 = vadd.f32 %v4329, %v4132
        %v4331 = vadd.f32 %v4330, %v4133
        %v4332 = vadd.f32 %v4331, %v4134
        %v4333 = vadd.f32 %v4332, %v4135
        %v4334 = vadd.f32 %v4333, %v4136
        %v4335 = vadd.f32 %v4334, %v4137
        %v4336 = vadd.f32 %v4335, %v4138
        %v4337 = vadd.f32 %v4336, %v4139
        %4338 = vadd.xlane.f32.xlu0 %v4337
        %v4339 = vpop.xlane.xlu0 %4338
        %v4340 = vadd.f32 %v4140, %v4141
        %v4341 = vadd.f32 %v4340, %v4142
        %v4342 = vadd.f32 %v4341, %v4143
        %v4343 = vadd.f32 %v4342, %v4144
        %v4344 = vadd.f32 %v4343, %v4145
        %v4345 = vadd.f32 %v4344, %v4146
        %v4346 = vadd.f32 %v4345, %v4147
        %v4347 = vadd.f32 %v4346, %v4148
        %v4348 = vadd.f32 %v4347, %v4149
        %v4349 = vadd.f32 %v4348, %v4150
        %v4350 = vadd.f32 %v4349, %v4151
        %v4351 = vadd.f32 %v4350, %v4152
        %v4352 = vadd.f32 %v4351, %v4153
        %v4353 = vadd.f32 %v4352, %v4154
        %v4354 = vadd.f32 %v4353, %v4155
        %4355 = vadd.xlane.f32.xlu0 %v4354
        %v4356 = vpop.xlane.xlu0 %4355
        %v4357 = vadd.f32 %v4156, %v4157
        %v4358 = vadd.f32 %v4357, %v4158
        %v4359 = vadd.f32 %v4358, %v4159
        %v4360 = vadd.f32 %v4359, %v4160
        %v4361 = vadd.f32 %v4360, %v4161
        %v4362 = vadd.f32 %v4361, %v4162
        %v4363 = vadd.f32 %v4362, %v4163
        %v4364 = vadd.f32 %v4363, %v4164
        %v4365 = vadd.f32 %v4364, %v4165
        %v4366 = vadd.f32 %v4365, %v4166
        %v4367 = vadd.f32 %v4366, %v4167
        %v4368 = vadd.f32 %v4367, %v4168
        %v4369 = vadd.f32 %v4368, %v4169
        %v4370 = vadd.f32 %v4369, %v4170
        %v4371 = vadd.f32 %v4370, %v4171
        %4372 = vadd.xlane.f32.xlu0 %v4371
        %v4373 = vpop.xlane.xlu0 %4372
        %v4374 = vadd.f32 %v4172, %v4173
        %v4375 = vadd.f32 %v4374, %v4174
        %v4376 = vadd.f32 %v4375, %v4175
        %v4377 = vadd.f32 %v4376, %v4176
        %v4378 = vadd.f32 %v4377, %v4177
        %v4379 = vadd.f32 %v4378, %v4178
        %v4380 = vadd.f32 %v4379, %v4179
        %v4381 = vadd.f32 %v4380, %v4180
        %v4382 = vadd.f32 %v4381, %v4181
        %v4383 = vadd.f32 %v4382, %v4182
        %v4384 = vadd.f32 %v4383, %v4183
        %v4385 = vadd.f32 %v4384, %v4184
        %v4386 = vadd.f32 %v4385, %v4185
        %v4387 = vadd.f32 %v4386, %v4186
        %v4388 = vadd.f32 %v4387, %v4187
        %4389 = vadd.xlane.f32.xlu0 %v4388
        %v4390 = vpop.xlane.xlu0 %4389
        %v4391 = vadd.f32 %v4188, %v4189
        %v4392 = vadd.f32 %v4391, %v4190
        %v4393 = vadd.f32 %v4392, %v4191
        %v4394 = vadd.f32 %v4393, %v4192
        %v4395 = vadd.f32 %v4394, %v4193
        %v4396 = vadd.f32 %v4395, %v4194
        %v4397 = vadd.f32 %v4396, %v4195
        %v4398 = vadd.f32 %v4397, %v4196
        %v4399 = vadd.f32 %v4398, %v4197
        %v4400 = vadd.f32 %v4399, %v4198
        %v4401 = vadd.f32 %v4400, %v4199
        %v4402 = vadd.f32 %v4401, %v4200
        %v4403 = vadd.f32 %v4402, %v4201
        %v4404 = vadd.f32 %v4403, %v4202
        %v4405 = vadd.f32 %v4404, %v4203
        %4406 = vadd.xlane.f32.xlu0 %v4405
        %v4407 = vpop.xlane.xlu0 %4406
        %v4408 = vadd.f32 %v4204, %v4205
        %v4409 = vadd.f32 %v4408, %v4206
        %v4410 = vadd.f32 %v4409, %v4207
        %v4411 = vadd.f32 %v4410, %v4208
        %v4412 = vadd.f32 %v4411, %v4209
        %v4413 = vadd.f32 %v4412, %v4210
        %v4414 = vadd.f32 %v4413, %v4211
        %v4415 = vadd.f32 %v4414, %v4212
        %v4416 = vadd.f32 %v4415, %v4213
        %v4417 = vadd.f32 %v4416, %v4214
        %v4418 = vadd.f32 %v4417, %v4215
        %v4419 = vadd.f32 %v4418, %v4216
        %v4420 = vadd.f32 %v4419, %v4217
        %v4421 = vadd.f32 %v4420, %v4218
        %v4422 = vadd.f32 %v4421, %v4219
        %4423 = vadd.xlane.f32.xlu0 %v4422
        %v4424 = vpop.xlane.xlu0 %4423
        %v4437 = vlaneseq
        %v4438 = vshrl.u32 %v4437, 7
        %v4439 = vsub.s32 0, %v4438
        %v4440 = vrot.slane %v4237, %v4439
        %v4441 = vlaneseq
        %v4442 = vshrl.u32 %v4441, 7
        %v4443 = vsub.s32 1, %v4442
        %v4444 = vrot.slane %v4237, %v4443
        %v4445 = vlaneseq
        %v4446 = vshrl.u32 %v4445, 7
        %v4447 = vsub.s32 2, %v4446
        %v4448 = vrot.slane %v4237, %v4447
        %v4449 = vlaneseq
        %v4450 = vshrl.u32 %v4449, 7
        %v4451 = vsub.s32 3, %v4450
        %v4452 = vrot.slane %v4237, %v4451
        %v4453 = vlaneseq
        %v4454 = vshrl.u32 %v4453, 7
        %v4455 = vsub.s32 4, %v4454
        %v4456 = vrot.slane %v4237, %v4455
        %v4457 = vlaneseq
        %v4458 = vshrl.u32 %v4457, 7
        %v4459 = vsub.s32 5, %v4458
        %v4460 = vrot.slane %v4237, %v4459
        %v4461 = vlaneseq
        %v4462 = vshrl.u32 %v4461, 7
        %v4463 = vsub.s32 6, %v4462
        %v4464 = vrot.slane %v4237, %v4463
        %v4465 = vlaneseq
        %v4466 = vshrl.u32 %v4465, 7
        %v4467 = vsub.s32 7, %v4466
        %v4468 = vrot.slane %v4237, %v4467
        %v4469 = vlaneseq
        %v4470 = vshrl.u32 %v4469, 7
        %v4471 = vsub.s32 0, %v4470
        %v4472 = vrot.slane %v4254, %v4471
        %v4473 = vlaneseq
        %v4474 = vshrl.u32 %v4473, 7
        %v4475 = vsub.s32 1, %v4474
        %v4476 = vrot.slane %v4254, %v4475
        %v4477 = vlaneseq
        %v4478 = vshrl.u32 %v4477, 7
        %v4479 = vsub.s32 2, %v4478
        %v4480 = vrot.slane %v4254, %v4479
        %v4481 = vlaneseq
        %v4482 = vshrl.u32 %v4481, 7
        %v4483 = vsub.s32 3, %v4482
        %v4484 = vrot.slane %v4254, %v4483
        %v4485 = vlaneseq
        %v4486 = vshrl.u32 %v4485, 7
        %v4487 = vsub.s32 4, %v4486
        %v4488 = vrot.slane %v4254, %v4487
        %v4489 = vlaneseq
        %v4490 = vshrl.u32 %v4489, 7
        %v4491 = vsub.s32 5, %v4490
        %v4492 = vrot.slane %v4254, %v4491
        %v4493 = vlaneseq
        %v4494 = vshrl.u32 %v4493, 7
        %v4495 = vsub.s32 6, %v4494
        %v4496 = vrot.slane %v4254, %v4495
        %v4497 = vlaneseq
        %v4498 = vshrl.u32 %v4497, 7
        %v4499 = vsub.s32 7, %v4498
        %v4500 = vrot.slane %v4254, %v4499
        %v4501 = vlaneseq
        %v4502 = vshrl.u32 %v4501, 7
        %v4503 = vsub.s32 0, %v4502
        %v4504 = vrot.slane %v4271, %v4503
        %v4505 = vlaneseq
        %v4506 = vshrl.u32 %v4505, 7
        %v4507 = vsub.s32 1, %v4506
        %v4508 = vrot.slane %v4271, %v4507
        %v4509 = vlaneseq
        %v4510 = vshrl.u32 %v4509, 7
        %v4511 = vsub.s32 2, %v4510
        %v4512 = vrot.slane %v4271, %v4511
        %v4513 = vlaneseq
        %v4514 = vshrl.u32 %v4513, 7
        %v4515 = vsub.s32 3, %v4514
        %v4516 = vrot.slane %v4271, %v4515
        %v4517 = vlaneseq
        %v4518 = vshrl.u32 %v4517, 7
        %v4519 = vsub.s32 4, %v4518
        %v4520 = vrot.slane %v4271, %v4519
        %v4521 = vlaneseq
        %v4522 = vshrl.u32 %v4521, 7
        %v4523 = vsub.s32 5, %v4522
        %v4524 = vrot.slane %v4271, %v4523
        %v4525 = vlaneseq
        %v4526 = vshrl.u32 %v4525, 7
        %v4527 = vsub.s32 6, %v4526
        %v4528 = vrot.slane %v4271, %v4527
        %v4529 = vlaneseq
        %v4530 = vshrl.u32 %v4529, 7
        %v4531 = vsub.s32 7, %v4530
        %v4532 = vrot.slane %v4271, %v4531
        %v4533 = vlaneseq
        %v4534 = vshrl.u32 %v4533, 7
        %v4535 = vsub.s32 0, %v4534
        %v4536 = vrot.slane %v4288, %v4535
        %v4537 = vlaneseq
        %v4538 = vshrl.u32 %v4537, 7
        %v4539 = vsub.s32 1, %v4538
        %v4540 = vrot.slane %v4288, %v4539
        %v4541 = vlaneseq
        %v4542 = vshrl.u32 %v4541, 7
        %v4543 = vsub.s32 2, %v4542
        %v4544 = vrot.slane %v4288, %v4543
        %v4545 = vlaneseq
        %v4546 = vshrl.u32 %v4545, 7
        %v4547 = vsub.s32 3, %v4546
        %v4548 = vrot.slane %v4288, %v4547
        %v4549 = vlaneseq
        %v4550 = vshrl.u32 %v4549, 7
        %v4551 = vsub.s32 4, %v4550
        %v4552 = vrot.slane %v4288, %v4551
        %v4553 = vlaneseq
        %v4554 = vshrl.u32 %v4553, 7
        %v4555 = vsub.s32 5, %v4554
        %v4556 = vrot.slane %v4288, %v4555
        %v4557 = vlaneseq
        %v4558 = vshrl.u32 %v4557, 7
        %v4559 = vsub.s32 6, %v4558
        %v4560 = vrot.slane %v4288, %v4559
        %v4561 = vlaneseq
        %v4562 = vshrl.u32 %v4561, 7
        %v4563 = vsub.s32 7, %v4562
        %v4564 = vrot.slane %v4288, %v4563
        %v4565 = vlaneseq
        %v4566 = vshrl.u32 %v4565, 7
        %v4567 = vsub.s32 0, %v4566
        %v4568 = vrot.slane %v4305, %v4567
        %v4569 = vlaneseq
        %v4570 = vshrl.u32 %v4569, 7
        %v4571 = vsub.s32 1, %v4570
        %v4572 = vrot.slane %v4305, %v4571
        %v4573 = vlaneseq
        %v4574 = vshrl.u32 %v4573, 7
        %v4575 = vsub.s32 2, %v4574
        %v4576 = vrot.slane %v4305, %v4575
        %v4577 = vlaneseq
        %v4578 = vshrl.u32 %v4577, 7
        %v4579 = vsub.s32 3, %v4578
        %v4580 = vrot.slane %v4305, %v4579
        %v4581 = vlaneseq
        %v4582 = vshrl.u32 %v4581, 7
        %v4583 = vsub.s32 4, %v4582
        %v4584 = vrot.slane %v4305, %v4583
        %v4585 = vlaneseq
        %v4586 = vshrl.u32 %v4585, 7
        %v4587 = vsub.s32 5, %v4586
        %v4588 = vrot.slane %v4305, %v4587
        %v4589 = vlaneseq
        %v4590 = vshrl.u32 %v4589, 7
        %v4591 = vsub.s32 6, %v4590
        %v4592 = vrot.slane %v4305, %v4591
        %v4593 = vlaneseq
        %v4594 = vshrl.u32 %v4593, 7
        %v4595 = vsub.s32 7, %v4594
        %v4596 = vrot.slane %v4305, %v4595
        %v4597 = vlaneseq
        %v4598 = vshrl.u32 %v4597, 7
        %v4599 = vsub.s32 0, %v4598
        %v4600 = vrot.slane %v4322, %v4599
        %v4601 = vlaneseq
        %v4602 = vshrl.u32 %v4601, 7
        %v4603 = vsub.s32 1, %v4602
        %v4604 = vrot.slane %v4322, %v4603
        %v4605 = vlaneseq
        %v4606 = vshrl.u32 %v4605, 7
        %v4607 = vsub.s32 2, %v4606
        %v4608 = vrot.slane %v4322, %v4607
        %v4609 = vlaneseq
        %v4610 = vshrl.u32 %v4609, 7
        %v4611 = vsub.s32 3, %v4610
        %v4612 = vrot.slane %v4322, %v4611
        %v4613 = vlaneseq
        %v4614 = vshrl.u32 %v4613, 7
        %v4615 = vsub.s32 4, %v4614
        %v4616 = vrot.slane %v4322, %v4615
        %v4617 = vlaneseq
        %v4618 = vshrl.u32 %v4617, 7
        %v4619 = vsub.s32 5, %v4618
        %v4620 = vrot.slane %v4322, %v4619
        %v4621 = vlaneseq
        %v4622 = vshrl.u32 %v4621, 7
        %v4623 = vsub.s32 6, %v4622
        %v4624 = vrot.slane %v4322, %v4623
        %v4625 = vlaneseq
        %v4626 = vshrl.u32 %v4625, 7
        %v4627 = vsub.s32 7, %v4626
        %v4628 = vrot.slane %v4322, %v4627
        %v4629 = vlaneseq
        %v4630 = vshrl.u32 %v4629, 7
        %v4631 = vsub.s32 0, %v4630
        %v4632 = vrot.slane %v4339, %v4631
        %v4633 = vlaneseq
        %v4634 = vshrl.u32 %v4633, 7
        %v4635 = vsub.s32 1, %v4634
        %v4636 = vrot.slane %v4339, %v4635
        %v4637 = vlaneseq
        %v4638 = vshrl.u32 %v4637, 7
        %v4639 = vsub.s32 2, %v4638
        %v4640 = vrot.slane %v4339, %v4639
        %v4641 = vlaneseq
        %v4642 = vshrl.u32 %v4641, 7
        %v4643 = vsub.s32 3, %v4642
        %v4644 = vrot.slane %v4339, %v4643
        %v4645 = vlaneseq
        %v4646 = vshrl.u32 %v4645, 7
        %v4647 = vsub.s32 4, %v4646
        %v4648 = vrot.slane %v4339, %v4647
        %v4649 = vlaneseq
        %v4650 = vshrl.u32 %v4649, 7
        %v4651 = vsub.s32 5, %v4650
        %v4652 = vrot.slane %v4339, %v4651
        %v4653 = vlaneseq
        %v4654 = vshrl.u32 %v4653, 7
        %v4655 = vsub.s32 6, %v4654
        %v4656 = vrot.slane %v4339, %v4655
        %v4657 = vlaneseq
        %v4658 = vshrl.u32 %v4657, 7
        %v4659 = vsub.s32 7, %v4658
        %v4660 = vrot.slane %v4339, %v4659
        %v4661 = vlaneseq
        %v4662 = vshrl.u32 %v4661, 7
        %v4663 = vsub.s32 0, %v4662
        %v4664 = vrot.slane %v4356, %v4663
        %v4665 = vlaneseq
        %v4666 = vshrl.u32 %v4665, 7
        %v4667 = vsub.s32 1, %v4666
        %v4668 = vrot.slane %v4356, %v4667
        %v4669 = vlaneseq
        %v4670 = vshrl.u32 %v4669, 7
        %v4671 = vsub.s32 2, %v4670
        %v4672 = vrot.slane %v4356, %v4671
        %v4673 = vlaneseq
        %v4674 = vshrl.u32 %v4673, 7
        %v4675 = vsub.s32 3, %v4674
        %v4676 = vrot.slane %v4356, %v4675
        %v4677 = vlaneseq
        %v4678 = vshrl.u32 %v4677, 7
        %v4679 = vsub.s32 4, %v4678
        %v4680 = vrot.slane %v4356, %v4679
        %v4681 = vlaneseq
        %v4682 = vshrl.u32 %v4681, 7
        %v4683 = vsub.s32 5, %v4682
        %v4684 = vrot.slane %v4356, %v4683
        %v4685 = vlaneseq
        %v4686 = vshrl.u32 %v4685, 7
        %v4687 = vsub.s32 6, %v4686
        %v4688 = vrot.slane %v4356, %v4687
        %v4689 = vlaneseq
        %v4690 = vshrl.u32 %v4689, 7
        %v4691 = vsub.s32 7, %v4690
        %v4692 = vrot.slane %v4356, %v4691
        %v4693 = vlaneseq
        %v4694 = vshrl.u32 %v4693, 7
        %v4695 = vsub.s32 0, %v4694
        %v4696 = vrot.slane %v4373, %v4695
        %v4697 = vlaneseq
        %v4698 = vshrl.u32 %v4697, 7
        %v4699 = vsub.s32 1, %v4698
        %v4700 = vrot.slane %v4373, %v4699
        %v4701 = vlaneseq
        %v4702 = vshrl.u32 %v4701, 7
        %v4703 = vsub.s32 2, %v4702
        %v4704 = vrot.slane %v4373, %v4703
        %v4705 = vlaneseq
        %v4706 = vshrl.u32 %v4705, 7
        %v4707 = vsub.s32 3, %v4706
        %v4708 = vrot.slane %v4373, %v4707
        %v4709 = vlaneseq
        %v4710 = vshrl.u32 %v4709, 7
        %v4711 = vsub.s32 4, %v4710
        %v4712 = vrot.slane %v4373, %v4711
        %v4713 = vlaneseq
        %v4714 = vshrl.u32 %v4713, 7
        %v4715 = vsub.s32 5, %v4714
        %v4716 = vrot.slane %v4373, %v4715
        %v4717 = vlaneseq
        %v4718 = vshrl.u32 %v4717, 7
        %v4719 = vsub.s32 6, %v4718
        %v4720 = vrot.slane %v4373, %v4719
        %v4721 = vlaneseq
        %v4722 = vshrl.u32 %v4721, 7
        %v4723 = vsub.s32 7, %v4722
        %v4724 = vrot.slane %v4373, %v4723
        %v4725 = vlaneseq
        %v4726 = vshrl.u32 %v4725, 7
        %v4727 = vsub.s32 0, %v4726
        %v4728 = vrot.slane %v4390, %v4727
        %v4729 = vlaneseq
        %v4730 = vshrl.u32 %v4729, 7
        %v4731 = vsub.s32 1, %v4730
        %v4732 = vrot.slane %v4390, %v4731
        %v4733 = vlaneseq
        %v4734 = vshrl.u32 %v4733, 7
        %v4735 = vsub.s32 2, %v4734
        %v4736 = vrot.slane %v4390, %v4735
        %v4737 = vlaneseq
        %v4738 = vshrl.u32 %v4737, 7
        %v4739 = vsub.s32 3, %v4738
        %v4740 = vrot.slane %v4390, %v4739
        %v4741 = vlaneseq
        %v4742 = vshrl.u32 %v4741, 7
        %v4743 = vsub.s32 4, %v4742
        %v4744 = vrot.slane %v4390, %v4743
        %v4745 = vlaneseq
        %v4746 = vshrl.u32 %v4745, 7
        %v4747 = vsub.s32 5, %v4746
        %v4748 = vrot.slane %v4390, %v4747
        %v4749 = vlaneseq
        %v4750 = vshrl.u32 %v4749, 7
        %v4751 = vsub.s32 6, %v4750
        %v4752 = vrot.slane %v4390, %v4751
        %v4753 = vlaneseq
        %v4754 = vshrl.u32 %v4753, 7
        %v4755 = vsub.s32 7, %v4754
        %v4756 = vrot.slane %v4390, %v4755
        %v4757 = vlaneseq
        %v4758 = vshrl.u32 %v4757, 7
        %v4759 = vsub.s32 0, %v4758
        %v4760 = vrot.slane %v4407, %v4759
        %v4761 = vlaneseq
        %v4762 = vshrl.u32 %v4761, 7
        %v4763 = vsub.s32 1, %v4762
        %v4764 = vrot.slane %v4407, %v4763
        %v4765 = vlaneseq
        %v4766 = vshrl.u32 %v4765, 7
        %v4767 = vsub.s32 2, %v4766
        %v4768 = vrot.slane %v4407, %v4767
        %v4769 = vlaneseq
        %v4770 = vshrl.u32 %v4769, 7
        %v4771 = vsub.s32 3, %v4770
        %v4772 = vrot.slane %v4407, %v4771
        %v4773 = vlaneseq
        %v4774 = vshrl.u32 %v4773, 7
        %v4775 = vsub.s32 4, %v4774
        %v4776 = vrot.slane %v4407, %v4775
        %v4777 = vlaneseq
        %v4778 = vshrl.u32 %v4777, 7
        %v4779 = vsub.s32 5, %v4778
        %v4780 = vrot.slane %v4407, %v4779
        %v4781 = vlaneseq
        %v4782 = vshrl.u32 %v4781, 7
        %v4783 = vsub.s32 6, %v4782
        %v4784 = vrot.slane %v4407, %v4783
        %v4785 = vlaneseq
        %v4786 = vshrl.u32 %v4785, 7
        %v4787 = vsub.s32 7, %v4786
        %v4788 = vrot.slane %v4407, %v4787
        %v4789 = vlaneseq
        %v4790 = vshrl.u32 %v4789, 7
        %v4791 = vsub.s32 0, %v4790
        %v4792 = vrot.slane %v4424, %v4791
        %v4793 = vlaneseq
        %v4794 = vshrl.u32 %v4793, 7
        %v4795 = vsub.s32 1, %v4794
        %v4796 = vrot.slane %v4424, %v4795
        %v4797 = vlaneseq
        %v4798 = vshrl.u32 %v4797, 7
        %v4799 = vsub.s32 2, %v4798
        %v4800 = vrot.slane %v4424, %v4799
        %v4801 = vlaneseq
        %v4802 = vshrl.u32 %v4801, 7
        %v4803 = vsub.s32 3, %v4802
        %v4804 = vrot.slane %v4424, %v4803
        %v4805 = vlaneseq
        %v4806 = vshrl.u32 %v4805, 7
        %v4807 = vsub.s32 4, %v4806
        %v4808 = vrot.slane %v4424, %v4807
        %v4809 = vlaneseq
        %v4810 = vshrl.u32 %v4809, 7
        %v4811 = vsub.s32 5, %v4810
        %v4812 = vrot.slane %v4424, %v4811
        %v4813 = vlaneseq
        %v4814 = vshrl.u32 %v4813, 7
        %v4815 = vsub.s32 6, %v4814
        %v4816 = vrot.slane %v4424, %v4815
        %v4817 = vlaneseq
        %v4818 = vshrl.u32 %v4817, 7
        %v4819 = vsub.s32 7, %v4818
        %v4820 = vrot.slane %v4424, %v4819
        %v4821 = vcombine.low %v4440, %v4444
        %v4822 = vcombine.low %v4448, %v4452
        %v4823 = vcombine.low %v4456, %v4460
        %v4824 = vcombine.low %v4464, %v4468
        %v4826 = vunpack.c.l.s4 1966171168
        %v4827 = vunpack.c.0.s8 %v4826
        %v4828 = vlaneseq
        %v4829 = vshrl.u32 %v4828, 7
        %v4830 = vsub.s32 %v4827, %v4829
        %v4831 = vrot.slane %v4821, %v4830
        %v4833 = vunpack.c.l.s4 1966171168
        %v4834 = vunpack.c.0.s8 %v4833
        %v4835 = vlaneseq
        %v4836 = vshrl.u32 %v4835, 7
        %v4837 = vsub.s32 %v4834, %v4836
        %v4838 = vrot.slane %v4822, %v4837
        %v4840 = vunpack.c.l.s4 1966171168
        %v4841 = vunpack.c.0.s8 %v4840
        %v4842 = vlaneseq
        %v4843 = vshrl.u32 %v4842, 7
        %v4844 = vsub.s32 %v4841, %v4843
        %v4845 = vrot.slane %v4823, %v4844
        %v4847 = vunpack.c.l.s4 1966171168
        %v4848 = vunpack.c.0.s8 %v4847
        %v4849 = vlaneseq
        %v4850 = vshrl.u32 %v4849, 7
        %v4851 = vsub.s32 %v4848, %v4850
        %v4852 = vrot.slane %v4824, %v4851
        %v4853 = vcombine.low %v4831, %v4838
        %v4854 = vcombine.low %v4845, %v4852
        %v4856 = vunpack.c.l.s4 1966171168
        %v4857 = vunpack.c.0.s8 %v4856
        %v4858 = vlaneseq
        %v4859 = vshrl.u32 %v4858, 7
        %v4860 = vsub.s32 %v4857, %v4859
        %v4861 = vrot.slane %v4853, %v4860
        %v4863 = vunpack.c.l.s4 1966171168
        %v4864 = vunpack.c.0.s8 %v4863
        %v4865 = vlaneseq
        %v4866 = vshrl.u32 %v4865, 7
        %v4867 = vsub.s32 %v4864, %v4866
        %v4868 = vrot.slane %v4854, %v4867
        %v4869 = vcombine.low %v4861, %v4868
        %v4870 = vcombine.low %v4472, %v4476
        %v4871 = vcombine.low %v4480, %v4484
        %v4872 = vcombine.low %v4488, %v4492
        %v4873 = vcombine.low %v4496, %v4500
        %v4875 = vunpack.c.l.s4 1966171168
        %v4876 = vunpack.c.0.s8 %v4875
        %v4877 = vlaneseq
        %v4878 = vshrl.u32 %v4877, 7
        %v4879 = vsub.s32 %v4876, %v4878
        %v4880 = vrot.slane %v4870, %v4879
        %v4882 = vunpack.c.l.s4 1966171168
        %v4883 = vunpack.c.0.s8 %v4882
        %v4884 = vlaneseq
        %v4885 = vshrl.u32 %v4884, 7
        %v4886 = vsub.s32 %v4883, %v4885
        %v4887 = vrot.slane %v4871, %v4886
        %v4889 = vunpack.c.l.s4 1966171168
        %v4890 = vunpack.c.0.s8 %v4889
        %v4891 = vlaneseq
        %v4892 = vshrl.u32 %v4891, 7
        %v4893 = vsub.s32 %v4890, %v4892
        %v4894 = vrot.slane %v4872, %v4893
        %v4896 = vunpack.c.l.s4 1966171168
        %v4897 = vunpack.c.0.s8 %v4896
        %v4898 = vlaneseq
        %v4899 = vshrl.u32 %v4898, 7
        %v4900 = vsub.s32 %v4897, %v4899
        %v4901 = vrot.slane %v4873, %v4900
        %v4902 = vcombine.low %v4880, %v4887
        %v4903 = vcombine.low %v4894, %v4901
        %v4905 = vunpack.c.l.s4 1966171168
        %v4906 = vunpack.c.0.s8 %v4905
        %v4907 = vlaneseq
        %v4908 = vshrl.u32 %v4907, 7
        %v4909 = vsub.s32 %v4906, %v4908
        %v4910 = vrot.slane %v4902, %v4909
        %v4912 = vunpack.c.l.s4 1966171168
        %v4913 = vunpack.c.0.s8 %v4912
        %v4914 = vlaneseq
        %v4915 = vshrl.u32 %v4914, 7
        %v4916 = vsub.s32 %v4913, %v4915
        %v4917 = vrot.slane %v4903, %v4916
        %v4918 = vcombine.low %v4910, %v4917
        %v4919 = vcombine.low %v4504, %v4508
        %v4920 = vcombine.low %v4512, %v4516
        %v4921 = vcombine.low %v4520, %v4524
        %v4922 = vcombine.low %v4528, %v4532
        %v4924 = vunpack.c.l.s4 1966171168
        %v4925 = vunpack.c.0.s8 %v4924
        %v4926 = vlaneseq
        %v4927 = vshrl.u32 %v4926, 7
        %v4928 = vsub.s32 %v4925, %v4927
        %v4929 = vrot.slane %v4919, %v4928
        %v4931 = vunpack.c.l.s4 1966171168
        %v4932 = vunpack.c.0.s8 %v4931
        %v4933 = vlaneseq
        %v4934 = vshrl.u32 %v4933, 7
        %v4935 = vsub.s32 %v4932, %v4934
        %v4936 = vrot.slane %v4920, %v4935
        %v4938 = vunpack.c.l.s4 1966171168
        %v4939 = vunpack.c.0.s8 %v4938
        %v4940 = vlaneseq
        %v4941 = vshrl.u32 %v4940, 7
        %v4942 = vsub.s32 %v4939, %v4941
        %v4943 = vrot.slane %v4921, %v4942
        %v4945 = vunpack.c.l.s4 1966171168
        %v4946 = vunpack.c.0.s8 %v4945
        %v4947 = vlaneseq
        %v4948 = vshrl.u32 %v4947, 7
        %v4949 = vsub.s32 %v4946, %v4948
        %v4950 = vrot.slane %v4922, %v4949
        %v4951 = vcombine.low %v4929, %v4936
        %v4952 = vcombine.low %v4943, %v4950
        %v4954 = vunpack.c.l.s4 1966171168
        %v4955 = vunpack.c.0.s8 %v4954
        %v4956 = vlaneseq
        %v4957 = vshrl.u32 %v4956, 7
        %v4958 = vsub.s32 %v4955, %v4957
        %v4959 = vrot.slane %v4951, %v4958
        %v4961 = vunpack.c.l.s4 1966171168
        %v4962 = vunpack.c.0.s8 %v4961
        %v4963 = vlaneseq
        %v4964 = vshrl.u32 %v4963, 7
        %v4965 = vsub.s32 %v4962, %v4964
        %v4966 = vrot.slane %v4952, %v4965
        %v4967 = vcombine.low %v4959, %v4966
        %v4968 = vcombine.low %v4536, %v4540
        %v4969 = vcombine.low %v4544, %v4548
        %v4970 = vcombine.low %v4552, %v4556
        %v4971 = vcombine.low %v4560, %v4564
        %v4973 = vunpack.c.l.s4 1966171168
        %v4974 = vunpack.c.0.s8 %v4973
        %v4975 = vlaneseq
        %v4976 = vshrl.u32 %v4975, 7
        %v4977 = vsub.s32 %v4974, %v4976
        %v4978 = vrot.slane %v4968, %v4977
        %v4980 = vunpack.c.l.s4 1966171168
        %v4981 = vunpack.c.0.s8 %v4980
        %v4982 = vlaneseq
        %v4983 = vshrl.u32 %v4982, 7
        %v4984 = vsub.s32 %v4981, %v4983
        %v4985 = vrot.slane %v4969, %v4984
        %v4987 = vunpack.c.l.s4 1966171168
        %v4988 = vunpack.c.0.s8 %v4987
        %v4989 = vlaneseq
        %v4990 = vshrl.u32 %v4989, 7
        %v4991 = vsub.s32 %v4988, %v4990
        %v4992 = vrot.slane %v4970, %v4991
        %v4994 = vunpack.c.l.s4 1966171168
        %v4995 = vunpack.c.0.s8 %v4994
        %v4996 = vlaneseq
        %v4997 = vshrl.u32 %v4996, 7
        %v4998 = vsub.s32 %v4995, %v4997
        %v4999 = vrot.slane %v4971, %v4998
        %v5000 = vcombine.low %v4978, %v4985
        %v5001 = vcombine.low %v4992, %v4999
        %v5003 = vunpack.c.l.s4 1966171168
        %v5004 = vunpack.c.0.s8 %v5003
        %v5005 = vlaneseq
        %v5006 = vshrl.u32 %v5005, 7
        %v5007 = vsub.s32 %v5004, %v5006
        %v5008 = vrot.slane %v5000, %v5007
        %v5010 = vunpack.c.l.s4 1966171168
        %v5011 = vunpack.c.0.s8 %v5010
        %v5012 = vlaneseq
        %v5013 = vshrl.u32 %v5012, 7
        %v5014 = vsub.s32 %v5011, %v5013
        %v5015 = vrot.slane %v5001, %v5014
        %v5016 = vcombine.low %v5008, %v5015
        %v5017 = vcombine.low %v4568, %v4572
        %v5018 = vcombine.low %v4576, %v4580
        %v5019 = vcombine.low %v4584, %v4588
        %v5020 = vcombine.low %v4592, %v4596
        %v5022 = vunpack.c.l.s4 1966171168
        %v5023 = vunpack.c.0.s8 %v5022
        %v5024 = vlaneseq
        %v5025 = vshrl.u32 %v5024, 7
        %v5026 = vsub.s32 %v5023, %v5025
        %v5027 = vrot.slane %v5017, %v5026
        %v5029 = vunpack.c.l.s4 1966171168
        %v5030 = vunpack.c.0.s8 %v5029
        %v5031 = vlaneseq
        %v5032 = vshrl.u32 %v5031, 7
        %v5033 = vsub.s32 %v5030, %v5032
        %v5034 = vrot.slane %v5018, %v5033
        %v5036 = vunpack.c.l.s4 1966171168
        %v5037 = vunpack.c.0.s8 %v5036
        %v5038 = vlaneseq
        %v5039 = vshrl.u32 %v5038, 7
        %v5040 = vsub.s32 %v5037, %v5039
        %v5041 = vrot.slane %v5019, %v5040
        %v5043 = vunpack.c.l.s4 1966171168
        %v5044 = vunpack.c.0.s8 %v5043
        %v5045 = vlaneseq
        %v5046 = vshrl.u32 %v5045, 7
        %v5047 = vsub.s32 %v5044, %v5046
        %v5048 = vrot.slane %v5020, %v5047
        %v5049 = vcombine.low %v5027, %v5034
        %v5050 = vcombine.low %v5041, %v5048
        %v5052 = vunpack.c.l.s4 1966171168
        %v5053 = vunpack.c.0.s8 %v5052
        %v5054 = vlaneseq
        %v5055 = vshrl.u32 %v5054, 7
        %v5056 = vsub.s32 %v5053, %v5055
        %v5057 = vrot.slane %v5049, %v5056
        %v5059 = vunpack.c.l.s4 1966171168
        %v5060 = vunpack.c.0.s8 %v5059
        %v5061 = vlaneseq
        %v5062 = vshrl.u32 %v5061, 7
        %v5063 = vsub.s32 %v5060, %v5062
        %v5064 = vrot.slane %v5050, %v5063
        %v5065 = vcombine.low %v5057, %v5064
        %v5066 = vcombine.low %v4600, %v4604
        %v5067 = vcombine.low %v4608, %v4612
        %v5068 = vcombine.low %v4616, %v4620
        %v5069 = vcombine.low %v4624, %v4628
        %v5071 = vunpack.c.l.s4 1966171168
        %v5072 = vunpack.c.0.s8 %v5071
        %v5073 = vlaneseq
        %v5074 = vshrl.u32 %v5073, 7
        %v5075 = vsub.s32 %v5072, %v5074
        %v5076 = vrot.slane %v5066, %v5075
        %v5078 = vunpack.c.l.s4 1966171168
        %v5079 = vunpack.c.0.s8 %v5078
        %v5080 = vlaneseq
        %v5081 = vshrl.u32 %v5080, 7
        %v5082 = vsub.s32 %v5079, %v5081
        %v5083 = vrot.slane %v5067, %v5082
        %v5085 = vunpack.c.l.s4 1966171168
        %v5086 = vunpack.c.0.s8 %v5085
        %v5087 = vlaneseq
        %v5088 = vshrl.u32 %v5087, 7
        %v5089 = vsub.s32 %v5086, %v5088
        %v5090 = vrot.slane %v5068, %v5089
        %v5092 = vunpack.c.l.s4 1966171168
        %v5093 = vunpack.c.0.s8 %v5092
        %v5094 = vlaneseq
        %v5095 = vshrl.u32 %v5094, 7
        %v5096 = vsub.s32 %v5093, %v5095
        %v5097 = vrot.slane %v5069, %v5096
        %v5098 = vcombine.low %v5076, %v5083
        %v5099 = vcombine.low %v5090, %v5097
        %v5101 = vunpack.c.l.s4 1966171168
        %v5102 = vunpack.c.0.s8 %v5101
        %v5103 = vlaneseq
        %v5104 = vshrl.u32 %v5103, 7
        %v5105 = vsub.s32 %v5102, %v5104
        %v5106 = vrot.slane %v5098, %v5105
        %v5108 = vunpack.c.l.s4 1966171168
        %v5109 = vunpack.c.0.s8 %v5108
        %v5110 = vlaneseq
        %v5111 = vshrl.u32 %v5110, 7
        %v5112 = vsub.s32 %v5109, %v5111
        %v5113 = vrot.slane %v5099, %v5112
        %v5114 = vcombine.low %v5106, %v5113
        %v5115 = vcombine.low %v4632, %v4636
        %v5116 = vcombine.low %v4640, %v4644
        %v5117 = vcombine.low %v4648, %v4652
        %v5118 = vcombine.low %v4656, %v4660
        %v5120 = vunpack.c.l.s4 1966171168
        %v5121 = vunpack.c.0.s8 %v5120
        %v5122 = vlaneseq
        %v5123 = vshrl.u32 %v5122, 7
        %v5124 = vsub.s32 %v5121, %v5123
        %v5125 = vrot.slane %v5115, %v5124
        %v5127 = vunpack.c.l.s4 1966171168
        %v5128 = vunpack.c.0.s8 %v5127
        %v5129 = vlaneseq
        %v5130 = vshrl.u32 %v5129, 7
        %v5131 = vsub.s32 %v5128, %v5130
        %v5132 = vrot.slane %v5116, %v5131
        %v5134 = vunpack.c.l.s4 1966171168
        %v5135 = vunpack.c.0.s8 %v5134
        %v5136 = vlaneseq
        %v5137 = vshrl.u32 %v5136, 7
        %v5138 = vsub.s32 %v5135, %v5137
        %v5139 = vrot.slane %v5117, %v5138
        %v5141 = vunpack.c.l.s4 1966171168
        %v5142 = vunpack.c.0.s8 %v5141
        %v5143 = vlaneseq
        %v5144 = vshrl.u32 %v5143, 7
        %v5145 = vsub.s32 %v5142, %v5144
        %v5146 = vrot.slane %v5118, %v5145
        %v5147 = vcombine.low %v5125, %v5132
        %v5148 = vcombine.low %v5139, %v5146
        %v5150 = vunpack.c.l.s4 1966171168
        %v5151 = vunpack.c.0.s8 %v5150
        %v5152 = vlaneseq
        %v5153 = vshrl.u32 %v5152, 7
        %v5154 = vsub.s32 %v5151, %v5153
        %v5155 = vrot.slane %v5147, %v5154
        %v5157 = vunpack.c.l.s4 1966171168
        %v5158 = vunpack.c.0.s8 %v5157
        %v5159 = vlaneseq
        %v5160 = vshrl.u32 %v5159, 7
        %v5161 = vsub.s32 %v5158, %v5160
        %v5162 = vrot.slane %v5148, %v5161
        %v5163 = vcombine.low %v5155, %v5162
        %v5164 = vcombine.low %v4664, %v4668
        %v5165 = vcombine.low %v4672, %v4676
        %v5166 = vcombine.low %v4680, %v4684
        %v5167 = vcombine.low %v4688, %v4692
        %v5169 = vunpack.c.l.s4 1966171168
        %v5170 = vunpack.c.0.s8 %v5169
        %v5171 = vlaneseq
        %v5172 = vshrl.u32 %v5171, 7
        %v5173 = vsub.s32 %v5170, %v5172
        %v5174 = vrot.slane %v5164, %v5173
        %v5176 = vunpack.c.l.s4 1966171168
        %v5177 = vunpack.c.0.s8 %v5176
        %v5178 = vlaneseq
        %v5179 = vshrl.u32 %v5178, 7
        %v5180 = vsub.s32 %v5177, %v5179
        %v5181 = vrot.slane %v5165, %v5180
        %v5183 = vunpack.c.l.s4 1966171168
        %v5184 = vunpack.c.0.s8 %v5183
        %v5185 = vlaneseq
        %v5186 = vshrl.u32 %v5185, 7
        %v5187 = vsub.s32 %v5184, %v5186
        %v5188 = vrot.slane %v5166, %v5187
        %v5190 = vunpack.c.l.s4 1966171168
        %v5191 = vunpack.c.0.s8 %v5190
        %v5192 = vlaneseq
        %v5193 = vshrl.u32 %v5192, 7
        %v5194 = vsub.s32 %v5191, %v5193
        %v5195 = vrot.slane %v5167, %v5194
        %v5196 = vcombine.low %v5174, %v5181
        %v5197 = vcombine.low %v5188, %v5195
        %v5199 = vunpack.c.l.s4 1966171168
        %v5200 = vunpack.c.0.s8 %v5199
        %v5201 = vlaneseq
        %v5202 = vshrl.u32 %v5201, 7
        %v5203 = vsub.s32 %v5200, %v5202
        %v5204 = vrot.slane %v5196, %v5203
        %v5206 = vunpack.c.l.s4 1966171168
        %v5207 = vunpack.c.0.s8 %v5206
        %v5208 = vlaneseq
        %v5209 = vshrl.u32 %v5208, 7
        %v5210 = vsub.s32 %v5207, %v5209
        %v5211 = vrot.slane %v5197, %v5210
        %v5212 = vcombine.low %v5204, %v5211
        %v5213 = vcombine.low %v4696, %v4700
        %v5214 = vcombine.low %v4704, %v4708
        %v5215 = vcombine.low %v4712, %v4716
        %v5216 = vcombine.low %v4720, %v4724
        %v5218 = vunpack.c.l.s4 1966171168
        %v5219 = vunpack.c.0.s8 %v5218
        %v5220 = vlaneseq
        %v5221 = vshrl.u32 %v5220, 7
        %v5222 = vsub.s32 %v5219, %v5221
        %v5223 = vrot.slane %v5213, %v5222
        %v5225 = vunpack.c.l.s4 1966171168
        %v5226 = vunpack.c.0.s8 %v5225
        %v5227 = vlaneseq
        %v5228 = vshrl.u32 %v5227, 7
        %v5229 = vsub.s32 %v5226, %v5228
        %v5230 = vrot.slane %v5214, %v5229
        %v5232 = vunpack.c.l.s4 1966171168
        %v5233 = vunpack.c.0.s8 %v5232
        %v5234 = vlaneseq
        %v5235 = vshrl.u32 %v5234, 7
        %v5236 = vsub.s32 %v5233, %v5235
        %v5237 = vrot.slane %v5215, %v5236
        %v5239 = vunpack.c.l.s4 1966171168
        %v5240 = vunpack.c.0.s8 %v5239
        %v5241 = vlaneseq
        %v5242 = vshrl.u32 %v5241, 7
        %v5243 = vsub.s32 %v5240, %v5242
        %v5244 = vrot.slane %v5216, %v5243
        %v5245 = vcombine.low %v5223, %v5230
        %v5246 = vcombine.low %v5237, %v5244
        %v5248 = vunpack.c.l.s4 1966171168
        %v5249 = vunpack.c.0.s8 %v5248
        %v5250 = vlaneseq
        %v5251 = vshrl.u32 %v5250, 7
        %v5252 = vsub.s32 %v5249, %v5251
        %v5253 = vrot.slane %v5245, %v5252
        %v5255 = vunpack.c.l.s4 1966171168
        %v5256 = vunpack.c.0.s8 %v5255
        %v5257 = vlaneseq
        %v5258 = vshrl.u32 %v5257, 7
        %v5259 = vsub.s32 %v5256, %v5258
        %v5260 = vrot.slane %v5246, %v5259
        %v5261 = vcombine.low %v5253, %v5260
        %v5262 = vcombine.low %v4728, %v4732
        %v5263 = vcombine.low %v4736, %v4740
        %v5264 = vcombine.low %v4744, %v4748
        %v5265 = vcombine.low %v4752, %v4756
        %v5267 = vunpack.c.l.s4 1966171168
        %v5268 = vunpack.c.0.s8 %v5267
        %v5269 = vlaneseq
        %v5270 = vshrl.u32 %v5269, 7
        %v5271 = vsub.s32 %v5268, %v5270
        %v5272 = vrot.slane %v5262, %v5271
        %v5274 = vunpack.c.l.s4 1966171168
        %v5275 = vunpack.c.0.s8 %v5274
        %v5276 = vlaneseq
        %v5277 = vshrl.u32 %v5276, 7
        %v5278 = vsub.s32 %v5275, %v5277
        %v5279 = vrot.slane %v5263, %v5278
        %v5281 = vunpack.c.l.s4 1966171168
        %v5282 = vunpack.c.0.s8 %v5281
        %v5283 = vlaneseq
        %v5284 = vshrl.u32 %v5283, 7
        %v5285 = vsub.s32 %v5282, %v5284
        %v5286 = vrot.slane %v5264, %v5285
        %v5288 = vunpack.c.l.s4 1966171168
        %v5289 = vunpack.c.0.s8 %v5288
        %v5290 = vlaneseq
        %v5291 = vshrl.u32 %v5290, 7
        %v5292 = vsub.s32 %v5289, %v5291
        %v5293 = vrot.slane %v5265, %v5292
        %v5294 = vcombine.low %v5272, %v5279
        %v5295 = vcombine.low %v5286, %v5293
        %v5297 = vunpack.c.l.s4 1966171168
        %v5298 = vunpack.c.0.s8 %v5297
        %v5299 = vlaneseq
        %v5300 = vshrl.u32 %v5299, 7
        %v5301 = vsub.s32 %v5298, %v5300
        %v5302 = vrot.slane %v5294, %v5301
        %v5304 = vunpack.c.l.s4 1966171168
        %v5305 = vunpack.c.0.s8 %v5304
        %v5306 = vlaneseq
        %v5307 = vshrl.u32 %v5306, 7
        %v5308 = vsub.s32 %v5305, %v5307
        %v5309 = vrot.slane %v5295, %v5308
        %v5310 = vcombine.low %v5302, %v5309
        %v5311 = vcombine.low %v4760, %v4764
        %v5312 = vcombine.low %v4768, %v4772
        %v5313 = vcombine.low %v4776, %v4780
        %v5314 = vcombine.low %v4784, %v4788
        %v5316 = vunpack.c.l.s4 1966171168
        %v5317 = vunpack.c.0.s8 %v5316
        %v5318 = vlaneseq
        %v5319 = vshrl.u32 %v5318, 7
        %v5320 = vsub.s32 %v5317, %v5319
        %v5321 = vrot.slane %v5311, %v5320
        %v5323 = vunpack.c.l.s4 1966171168
        %v5324 = vunpack.c.0.s8 %v5323
        %v5325 = vlaneseq
        %v5326 = vshrl.u32 %v5325, 7
        %v5327 = vsub.s32 %v5324, %v5326
        %v5328 = vrot.slane %v5312, %v5327
        %v5330 = vunpack.c.l.s4 1966171168
        %v5331 = vunpack.c.0.s8 %v5330
        %v5332 = vlaneseq
        %v5333 = vshrl.u32 %v5332, 7
        %v5334 = vsub.s32 %v5331, %v5333
        %v5335 = vrot.slane %v5313, %v5334
        %v5337 = vunpack.c.l.s4 1966171168
        %v5338 = vunpack.c.0.s8 %v5337
        %v5339 = vlaneseq
        %v5340 = vshrl.u32 %v5339, 7
        %v5341 = vsub.s32 %v5338, %v5340
        %v5342 = vrot.slane %v5314, %v5341
        %v5343 = vcombine.low %v5321, %v5328
        %v5344 = vcombine.low %v5335, %v5342
        %v5346 = vunpack.c.l.s4 1966171168
        %v5347 = vunpack.c.0.s8 %v5346
        %v5348 = vlaneseq
        %v5349 = vshrl.u32 %v5348, 7
        %v5350 = vsub.s32 %v5347, %v5349
        %v5351 = vrot.slane %v5343, %v5350
        %v5353 = vunpack.c.l.s4 1966171168
        %v5354 = vunpack.c.0.s8 %v5353
        %v5355 = vlaneseq
        %v5356 = vshrl.u32 %v5355, 7
        %v5357 = vsub.s32 %v5354, %v5356
        %v5358 = vrot.slane %v5344, %v5357
        %v5359 = vcombine.low %v5351, %v5358
        %v5360 = vcombine.low %v4792, %v4796
        %v5361 = vcombine.low %v4800, %v4804
        %v5362 = vcombine.low %v4808, %v4812
        %v5363 = vcombine.low %v4816, %v4820
        %v5365 = vunpack.c.l.s4 1966171168
        %v5366 = vunpack.c.0.s8 %v5365
        %v5367 = vlaneseq
        %v5368 = vshrl.u32 %v5367, 7
        %v5369 = vsub.s32 %v5366, %v5368
        %v5370 = vrot.slane %v5360, %v5369
        %v5372 = vunpack.c.l.s4 1966171168
        %v5373 = vunpack.c.0.s8 %v5372
        %v5374 = vlaneseq
        %v5375 = vshrl.u32 %v5374, 7
        %v5376 = vsub.s32 %v5373, %v5375
        %v5377 = vrot.slane %v5361, %v5376
        %v5379 = vunpack.c.l.s4 1966171168
        %v5380 = vunpack.c.0.s8 %v5379
        %v5381 = vlaneseq
        %v5382 = vshrl.u32 %v5381, 7
        %v5383 = vsub.s32 %v5380, %v5382
        %v5384 = vrot.slane %v5362, %v5383
        %v5386 = vunpack.c.l.s4 1966171168
        %v5387 = vunpack.c.0.s8 %v5386
        %v5388 = vlaneseq
        %v5389 = vshrl.u32 %v5388, 7
        %v5390 = vsub.s32 %v5387, %v5389
        %v5391 = vrot.slane %v5363, %v5390
        %v5392 = vcombine.low %v5370, %v5377
        %v5393 = vcombine.low %v5384, %v5391
        %v5395 = vunpack.c.l.s4 1966171168
        %v5396 = vunpack.c.0.s8 %v5395
        %v5397 = vlaneseq
        %v5398 = vshrl.u32 %v5397, 7
        %v5399 = vsub.s32 %v5396, %v5398
        %v5400 = vrot.slane %v5392, %v5399
        %v5402 = vunpack.c.l.s4 1966171168
        %v5403 = vunpack.c.0.s8 %v5402
        %v5404 = vlaneseq
        %v5405 = vshrl.u32 %v5404, 7
        %v5406 = vsub.s32 %v5403, %v5405
        %v5407 = vrot.slane %v5393, %v5406
        %v5408 = vcombine.low %v5400, %v5407
        %5409 = vset.pattern.permute.xlu0 0
        %5410 = vperm.xlu0 %5409, %v4869
        %v5411 = vpop.permute.xlu0 %5410
        %5412 = vset.pattern.permute.xlu0 0
        %5413 = vperm.xlu0 %5412, %v4918
        %v5414 = vpop.permute.xlu0 %5413
        %5415 = vset.pattern.permute.xlu0 0
        %5416 = vperm.xlu0 %5415, %v4967
        %v5417 = vpop.permute.xlu0 %5416
        %5418 = vset.pattern.permute.xlu0 0
        %5419 = vperm.xlu0 %5418, %v5016
        %v5420 = vpop.permute.xlu0 %5419
        %5421 = vset.pattern.permute.xlu0 0
        %5422 = vperm.xlu0 %5421, %v5065
        %v5423 = vpop.permute.xlu0 %5422
        %5424 = vset.pattern.permute.xlu0 0
        %5425 = vperm.xlu0 %5424, %v5114
        %v5426 = vpop.permute.xlu0 %5425
        %5427 = vset.pattern.permute.xlu0 0
        %5428 = vperm.xlu0 %5427, %v5163
        %v5429 = vpop.permute.xlu0 %5428
        %5430 = vset.pattern.permute.xlu0 0
        %5431 = vperm.xlu0 %5430, %v5212
        %v5432 = vpop.permute.xlu0 %5431
        %5433 = vset.pattern.permute.xlu0 0
        %5434 = vperm.xlu0 %5433, %v5261
        %v5435 = vpop.permute.xlu0 %5434
        %5436 = vset.pattern.permute.xlu0 0
        %5437 = vperm.xlu0 %5436, %v5310
        %v5438 = vpop.permute.xlu0 %5437
        %5439 = vset.pattern.permute.xlu0 0
        %5440 = vperm.xlu0 %5439, %v5359
        %v5441 = vpop.permute.xlu0 %5440
        %5442 = vset.pattern.permute.xlu0 0
        %5443 = vperm.xlu0 %5442, %v5408
        %v5444 = vpop.permute.xlu0 %5443
        %v5445 = vlaneseq
        %v5446 = vshrl.u32 %v5445, 7
        %v5447 = vsub.s32 %v3874, %v5446
        %v5448 = vrot.slane %v5411, %v5447
        %v5449 = vlaneseq
        %v5450 = vshrl.u32 %v5449, 7
        %v5451 = vsub.s32 %v3879, %v5450
        %v5452 = vrot.slane %v5414, %v5451
        %v5453 = vsel %vm3884, %v5452, %v5448
        %v5454 = vlaneseq
        %v5455 = vshrl.u32 %v5454, 7
        %v5456 = vsub.s32 %v3886, %v5455
        %v5457 = vrot.slane %v5417, %v5456
        %v5458 = vsel %vm3891, %v5457, %v5453
        %v5459 = vlaneseq
        %v5460 = vshrl.u32 %v5459, 7
        %v5461 = vsub.s32 %v3893, %v5460
        %v5462 = vrot.slane %v5420, %v5461
        %v5463 = vsel %vm3898, %v5462, %v5458
        %v5464 = vlaneseq
        %v5465 = vshrl.u32 %v5464, 7
        %v5466 = vsub.s32 %v3900, %v5465
        %v5467 = vrot.slane %v5423, %v5466
        %v5468 = vsel %vm3905, %v5467, %v5463
        %v5469 = vlaneseq
        %v5470 = vshrl.u32 %v5469, 7
        %v5471 = vsub.s32 %v3907, %v5470
        %v5472 = vrot.slane %v5426, %v5471
        %v5473 = vsel %vm3912, %v5472, %v5468
        %v5474 = vadd.s32 %v3874, 4294967248
        %v5475 = vlaneseq
        %v5476 = vshrl.u32 %v5475, 7
        %v5477 = vsub.s32 %v5474, %v5476
        %v5478 = vrot.slane %v5429, %v5477
        %vm5479 = vcmask 458112
        %v5480 = vsel %vm5479, %v5478, %v5473
        %v5481 = vadd.s32 %v3874, 4294967240
        %v5482 = vlaneseq
        %v5483 = vshrl.u32 %v5482, 7
        %v5484 = vsub.s32 %v5481, %v5483
        %v5485 = vrot.slane %v5432, %v5484
        %vm5486 = vcmask 523712
        %v5487 = vsel %vm5486, %v5485, %v5480
        %v5488 = vadd.s32 %v3874, 4294967232
        %v5489 = vlaneseq
        %v5490 = vshrl.u32 %v5489, 7
        %v5491 = vsub.s32 %v5488, %v5490
        %v5492 = vrot.slane %v5435, %v5491
        %vm5493 = vcmask 589312
        %v5494 = vsel %vm5493, %v5492, %v5487
        %v5495 = vadd.s32 %v3874, 4294967224
        %v5496 = vlaneseq
        %v5497 = vshrl.u32 %v5496, 7
        %v5498 = vsub.s32 %v5495, %v5497
        %v5499 = vrot.slane %v5438, %v5498
        %vm5500 = vcmask 654912
        %v5501 = vsel %vm5500, %v5499, %v5494
        %v5502 = vadd.s32 %v3874, 4294967216
        %v5503 = vlaneseq
        %v5504 = vshrl.u32 %v5503, 7
        %v5505 = vsub.s32 %v5502, %v5504
        %v5506 = vrot.slane %v5441, %v5505
        %vm5507 = vcmask 720512
        %v5508 = vsel %vm5507, %v5506, %v5501
        %v5509 = vadd.s32 %v3874, 4294967208
        %v5510 = vlaneseq
        %v5511 = vshrl.u32 %v5510, 7
        %v5512 = vsub.s32 %v5509, %v5511
        %v5513 = vrot.slane %v5444, %v5512
        %vm5514 = vcmask 786112
        %v5515 = vsel %vm5514, %v5513, %v5508
        %v5517 = vunpack.c.l.s4 1966171168
        %v5518 = vunpack.c.0.s8 %v5517
        %v5519 = vlaneseq
        %v5520 = vshrl.u32 %v5519, 7
        %v5521 = vsub.s32 %v5518, %v5520
        %v5522 = vrot.slane %v5515, %v5521
        %v5524 = vunpack.c.l.s4 1966171168
        %v5525 = vunpack.c.0.s8 %v5524
        %v5526 = vlaneseq
        %v5527 = vshrl.u32 %v5526, 7
        %v5528 = vsub.s32 %v5525, %v5527
        %v5529 = vrot.slane %v5522, %v5528
        %v5531 = vadd.f32 %v4220, %v5529
        %vm5532 = vcmask 778240
        %5533 = vst.msk [vmem:[#allocation3] sm:$0x1] %vm5532, %v5531
        %p5534 = scmp.eq.s32.totalorder %s28, 1
        // Predicated region
        $region107: #{swinvit_mlp_v3_forward.1} parent=93 // pred_check
          %p5535 = pneg %p5534
        $region108: #{swinvit_mlp_v3_forward.1} parent=93 // pred_check_branch
          %5537 = sbr.rel (%p5535) target = $region110
        $region109: #{swinvit_mlp_v3_forward.1} parent=93 // pred_region
          %v5538 = vld [vmem:[%s1427] sm:$0xff]
          %v5539 = vld [vmem:[%s1427 + $0x8] sm:$0xff]
          %v5540 = vld [vmem:[%s1427 + $0x10] sm:$0xff]
          %v5541 = vld [vmem:[%s1427 + $0x18] sm:$0xff]
          %v5542 = vld [vmem:[%s1427 + $0x20] sm:$0xff]
          %v5543 = vld [vmem:[%s1427 + $0x28] sm:$0xff]
          %v5544 = vrot.slane %v5538, 4
          %v5545 = vadd.f32 %v5538, %v5544
          %v5546 = vrot.slane %v5545, 2
          %v5547 = vadd.f32 %v5545, %v5546
          %v5548 = vrot.slane %v5547, 1
          %v5549 = vadd.f32 %v5547, %v5548
          %v5550 = vrot.slane %v5539, 4
          %v5551 = vadd.f32 %v5539, %v5550
          %v5552 = vrot.slane %v5551, 2
          %v5553 = vadd.f32 %v5551, %v5552
          %v5554 = vrot.slane %v5553, 1
          %v5555 = vadd.f32 %v5553, %v5554
          %v5556 = vrot.slane %v5540, 4
          %v5557 = vadd.f32 %v5540, %v5556
          %v5558 = vrot.slane %v5557, 2
          %v5559 = vadd.f32 %v5557, %v5558
          %v5560 = vrot.slane %v5559, 1
          %v5561 = vadd.f32 %v5559, %v5560
          %v5562 = vrot.slane %v5541, 4
          %v5563 = vadd.f32 %v5541, %v5562
          %v5564 = vrot.slane %v5563, 2
          %v5565 = vadd.f32 %v5563, %v5564
          %v5566 = vrot.slane %v5565, 1
          %v5567 = vadd.f32 %v5565, %v5566
          %v5568 = vrot.slane %v5542, 4
          %v5569 = vadd.f32 %v5542, %v5568
          %v5570 = vrot.slane %v5569, 2
          %v5571 = vadd.f32 %v5569, %v5570
          %v5572 = vrot.slane %v5571, 1
          %v5573 = vadd.f32 %v5571, %v5572
          %v5574 = vrot.slane %v5543, 4
          %v5575 = vadd.f32 %v5543, %v5574
          %v5576 = vrot.slane %v5575, 2
          %v5577 = vadd.f32 %v5575, %v5576
          %v5578 = vrot.slane %v5577, 1
          %v5579 = vadd.f32 %v5577, %v5578
          %v5580 = vrcp.pop 8.0
          %v5581 = vmul.f32 %v5549, %v5580
          %v5582 = vmul.f32 %v5555, %v5580
          %v5583 = vmul.f32 %v5561, %v5580
          %v5584 = vmul.f32 %v5567, %v5580
          %v5585 = vmul.f32 %v5573, %v5580
          %v5586 = vmul.f32 %v5579, %v5580
          %v5587 = vld [vmem:[%s1422] sm:$0xff]
          %v5588 = vld [vmem:[%s1422 + $0x8] sm:$0xff]
          %v5589 = vld [vmem:[%s1422 + $0x10] sm:$0xff]
          %v5590 = vld [vmem:[%s1422 + $0x18] sm:$0xff]
          %v5591 = vld [vmem:[%s1422 + $0x20] sm:$0xff]
          %v5592 = vld [vmem:[%s1422 + $0x28] sm:$0xff]
          %v5593 = vld [vmem:[%s1422 + $0x30] sm:$0xff]
          %v5594 = vld [vmem:[%s1422 + $0x38] sm:$0xff]
          %v5595 = vld [vmem:[%s1422 + $0x40] sm:$0xff]
          %v5596 = vld [vmem:[%s1422 + $0x48] sm:$0xff]
          %v5597 = vld [vmem:[%s1422 + $0x50] sm:$0xff]
          %v5598 = vld [vmem:[%s1422 + $0x58] sm:$0xff]
          %v5599 = vld [vmem:[%s1422 + $0x60] sm:$0xff]
          %v5600 = vld [vmem:[%s1422 + $0x68] sm:$0xff]
          %v5601 = vld [vmem:[%s1422 + $0x70] sm:$0xff]
          %v5602 = vld [vmem:[%s1422 + $0x78] sm:$0xff]
          %v5603 = vld [vmem:[%s1422 + $0x80] sm:$0xff]
          %v5604 = vld [vmem:[%s1422 + $0x88] sm:$0xff]
          %v5605 = vld [vmem:[%s1422 + $0x90] sm:$0xff]
          %v5606 = vld [vmem:[%s1422 + $0x98] sm:$0xff]
          %v5607 = vld [vmem:[%s1422 + $0xa0] sm:$0xff]
          %v5608 = vld [vmem:[%s1422 + $0xa8] sm:$0xff]
          %v5609 = vld [vmem:[%s1422 + $0xb0] sm:$0xff]
          %v5610 = vld [vmem:[%s1422 + $0xb8] sm:$0xff]
          %v5611 = vadd.f32 %v5587, %v5590
          %v5612 = vadd.f32 %v5611, %v5593
          %v5613 = vadd.f32 %v5612, %v5596
          %v5614 = vadd.f32 %v5613, %v5599
          %v5615 = vadd.f32 %v5614, %v5602
          %v5616 = vadd.f32 %v5615, %v5605
          %v5617 = vadd.f32 %v5616, %v5608
          %v5618 = vrot.slane %v5617, 4
          %v5619 = vadd.f32 %v5617, %v5618
          %v5620 = vrot.slane %v5619, 2
          %v5621 = vadd.f32 %v5619, %v5620
          %v5622 = vrot.slane %v5621, 1
          %v5623 = vadd.f32 %v5621, %v5622
          %v5624 = vadd.f32 %v5588, %v5591
          %v5625 = vadd.f32 %v5624, %v5594
          %v5626 = vadd.f32 %v5625, %v5597
          %v5627 = vadd.f32 %v5626, %v5600
          %v5628 = vadd.f32 %v5627, %v5603
          %v5629 = vadd.f32 %v5628, %v5606
          %v5630 = vadd.f32 %v5629, %v5609
          %v5631 = vrot.slane %v5630, 4
          %v5632 = vadd.f32 %v5630, %v5631
          %v5633 = vrot.slane %v5632, 2
          %v5634 = vadd.f32 %v5632, %v5633
          %v5635 = vrot.slane %v5634, 1
          %v5636 = vadd.f32 %v5634, %v5635
          %v5637 = vadd.f32 %v5589, %v5592
          %v5638 = vadd.f32 %v5637, %v5595
          %v5639 = vadd.f32 %v5638, %v5598
          %v5640 = vadd.f32 %v5639, %v5601
          %v5641 = vadd.f32 %v5640, %v5604
          %v5642 = vadd.f32 %v5641, %v5607
          %v5643 = vadd.f32 %v5642, %v5610
          %v5644 = vrot.slane %v5643, 4
          %v5645 = vadd.f32 %v5643, %v5644
          %v5646 = vrot.slane %v5645, 2
          %v5647 = vadd.f32 %v5645, %v5646
          %v5648 = vrot.slane %v5647, 1
          %v5649 = vadd.f32 %v5647, %v5648
          %v5650 = vrcp.pop 64.0
          %v5651 = vmul.f32 %v5623, %v5650
          %v5652 = vmul.f32 %v5636, %v5650
          %v5653 = vmul.f32 %v5649, %v5650
          %v5654 = vld [vmem:[%s1417] sm:$0xff]
          %v5655 = vld [vmem:[%s1417 + $0x8] sm:$0xff]
          %v5656 = vld [vmem:[%s1417 + $0x10] sm:$0xff]
          %v5657 = vld [vmem:[%s1417 + $0x18] sm:$0xff]
          %v5658 = vld [vmem:[%s1417 + $0x20] sm:$0xff]
          %v5659 = vld [vmem:[%s1417 + $0x28] sm:$0xff]
          %v5660 = vld [vmem:[%s1417 + $0x30] sm:$0xff]
          %v5661 = vld [vmem:[%s1417 + $0x38] sm:$0xff]
          %v5662 = vld [vmem:[%s1417 + $0x40] sm:$0xff]
          %v5663 = vld [vmem:[%s1417 + $0x48] sm:$0xff]
          %v5664 = vld [vmem:[%s1417 + $0x50] sm:$0xff]
          %v5665 = vld [vmem:[%s1417 + $0x58] sm:$0xff]
          %v5666 = vld [vmem:[%s1417 + $0x60] sm:$0xff]
          %v5667 = vld [vmem:[%s1417 + $0x68] sm:$0xff]
          %v5668 = vld [vmem:[%s1417 + $0x70] sm:$0xff]
          %v5669 = vld [vmem:[%s1417 + $0x78] sm:$0xff]
          %v5670 = vld [vmem:[%s1417 + $0x80] sm:$0xff]
          %v5671 = vld [vmem:[%s1417 + $0x88] sm:$0xff]
          %v5672 = vld [vmem:[%s1417 + $0x90] sm:$0xff]
          %v5673 = vld [vmem:[%s1417 + $0x98] sm:$0xff]
          %v5674 = vld [vmem:[%s1417 + $0xa0] sm:$0xff]
          %v5675 = vld [vmem:[%s1417 + $0xa8] sm:$0xff]
          %v5676 = vld [vmem:[%s1417 + $0xb0] sm:$0xff]
          %v5677 = vld [vmem:[%s1417 + $0xb8] sm:$0xff]
          %v5678 = vld [vmem:[%s1417 + $0xc0] sm:$0xff]
          %v5679 = vld [vmem:[%s1417 + $0xc8] sm:$0xff]
          %v5680 = vld [vmem:[%s1417 + $0xd0] sm:$0xff]
          %v5681 = vld [vmem:[%s1417 + $0xd8] sm:$0xff]
          %v5682 = vld [vmem:[%s1417 + $0xe0] sm:$0xff]
          %v5683 = vld [vmem:[%s1417 + $0xe8] sm:$0xff]
          %v5684 = vld [vmem:[%s1417 + $0xf0] sm:$0xff]
          %v5685 = vld [vmem:[%s1417 + $0xf8] sm:$0xff]
          %v5686 = vld [vmem:[%s1417 + $0x100] sm:$0xff]
          %v5687 = vld [vmem:[%s1417 + $0x108] sm:$0xff]
          %v5688 = vld [vmem:[%s1417 + $0x110] sm:$0xff]
          %v5689 = vld [vmem:[%s1417 + $0x118] sm:$0xff]
          %v5690 = vld [vmem:[%s1417 + $0x120] sm:$0xff]
          %v5691 = vld [vmem:[%s1417 + $0x128] sm:$0xff]
          %v5692 = vld [vmem:[%s1417 + $0x130] sm:$0xff]
          %v5693 = vld [vmem:[%s1417 + $0x138] sm:$0xff]
          %v5694 = vld [vmem:[%s1417 + $0x140] sm:$0xff]
          %v5695 = vld [vmem:[%s1417 + $0x148] sm:$0xff]
          %v5696 = vld [vmem:[%s1417 + $0x150] sm:$0xff]
          %v5697 = vld [vmem:[%s1417 + $0x158] sm:$0xff]
          %v5698 = vld [vmem:[%s1417 + $0x160] sm:$0xff]
          %v5699 = vld [vmem:[%s1417 + $0x168] sm:$0xff]
          %v5700 = vld [vmem:[%s1417 + $0x170] sm:$0xff]
          %v5701 = vld [vmem:[%s1417 + $0x178] sm:$0xff]
          %v5702 = vld [vmem:[%s1417 + $0x180] sm:$0xff]
          %v5703 = vld [vmem:[%s1417 + $0x188] sm:$0xff]
          %v5704 = vld [vmem:[%s1417 + $0x190] sm:$0xff]
          %v5705 = vld [vmem:[%s1417 + $0x198] sm:$0xff]
          %v5706 = vld [vmem:[%s1417 + $0x1a0] sm:$0xff]
          %v5707 = vld [vmem:[%s1417 + $0x1a8] sm:$0xff]
          %v5708 = vld [vmem:[%s1417 + $0x1b0] sm:$0xff]
          %v5709 = vld [vmem:[%s1417 + $0x1b8] sm:$0xff]
          %v5710 = vld [vmem:[%s1417 + $0x1c0] sm:$0xff]
          %v5711 = vld [vmem:[%s1417 + $0x1c8] sm:$0xff]
          %v5712 = vld [vmem:[%s1417 + $0x1d0] sm:$0xff]
          %v5713 = vld [vmem:[%s1417 + $0x1d8] sm:$0xff]
          %v5714 = vld [vmem:[%s1417 + $0x1e0] sm:$0xff]
          %v5715 = vld [vmem:[%s1417 + $0x1e8] sm:$0xff]
          %v5716 = vld [vmem:[%s1417 + $0x1f0] sm:$0xff]
          %v5717 = vld [vmem:[%s1417 + $0x1f8] sm:$0xff]
          %v5718 = vld [vmem:[%s1417 + $0x200] sm:$0xff]
          %v5719 = vld [vmem:[%s1417 + $0x208] sm:$0xff]
          %v5720 = vld [vmem:[%s1417 + $0x210] sm:$0xff]
          %v5721 = vld [vmem:[%s1417 + $0x218] sm:$0xff]
          %v5722 = vld [vmem:[%s1417 + $0x220] sm:$0xff]
          %v5723 = vld [vmem:[%s1417 + $0x228] sm:$0xff]
          %v5724 = vld [vmem:[%s1417 + $0x230] sm:$0xff]
          %v5725 = vld [vmem:[%s1417 + $0x238] sm:$0xff]
          %v5726 = vld [vmem:[%s1417 + $0x240] sm:$0xff]
          %v5727 = vld [vmem:[%s1417 + $0x248] sm:$0xff]
          %v5728 = vld [vmem:[%s1417 + $0x250] sm:$0xff]
          %v5729 = vld [vmem:[%s1417 + $0x258] sm:$0xff]
          %v5730 = vld [vmem:[%s1417 + $0x260] sm:$0xff]
          %v5731 = vld [vmem:[%s1417 + $0x268] sm:$0xff]
          %v5732 = vld [vmem:[%s1417 + $0x270] sm:$0xff]
          %v5733 = vld [vmem:[%s1417 + $0x278] sm:$0xff]
          %v5734 = vld [vmem:[%s1417 + $0x280] sm:$0xff]
          %v5735 = vld [vmem:[%s1417 + $0x288] sm:$0xff]
          %v5736 = vld [vmem:[%s1417 + $0x290] sm:$0xff]
          %v5737 = vld [vmem:[%s1417 + $0x298] sm:$0xff]
          %v5738 = vld [vmem:[%s1417 + $0x2a0] sm:$0xff]
          %v5739 = vld [vmem:[%s1417 + $0x2a8] sm:$0xff]
          %v5740 = vld [vmem:[%s1417 + $0x2b0] sm:$0xff]
          %v5741 = vld [vmem:[%s1417 + $0x2b8] sm:$0xff]
          %v5742 = vld [vmem:[%s1417 + $0x2c0] sm:$0xff]
          %v5743 = vld [vmem:[%s1417 + $0x2c8] sm:$0xff]
          %v5744 = vld [vmem:[%s1417 + $0x2d0] sm:$0xff]
          %v5745 = vld [vmem:[%s1417 + $0x2d8] sm:$0xff]
          %v5746 = vld [vmem:[%s1417 + $0x2e0] sm:$0xff]
          %v5747 = vld [vmem:[%s1417 + $0x2e8] sm:$0xff]
          %v5748 = vld [vmem:[%s1417 + $0x2f0] sm:$0xff]
          %v5749 = vld [vmem:[%s1417 + $0x2f8] sm:$0xff]
          %v5750 = vadd.f32 %v5654, %v5655
          %v5751 = vadd.f32 %v5750, %v5656
          %v5752 = vadd.f32 %v5751, %v5657
          %5753 = vadd.xlane.f32.xlu0 %v5752
          %v5754 = vpop.xlane.xlu0 %5753
          %v5755 = vadd.f32 %v5658, %v5659
          %v5756 = vadd.f32 %v5755, %v5660
          %v5757 = vadd.f32 %v5756, %v5661
          %5758 = vadd.xlane.f32.xlu0 %v5757
          %v5759 = vpop.xlane.xlu0 %5758
          %v5760 = vadd.f32 %v5662, %v5663
          %v5761 = vadd.f32 %v5760, %v5664
          %v5762 = vadd.f32 %v5761, %v5665
          %5763 = vadd.xlane.f32.xlu0 %v5762
          %v5764 = vpop.xlane.xlu0 %5763
          %v5765 = vadd.f32 %v5666, %v5667
          %v5766 = vadd.f32 %v5765, %v5668
          %v5767 = vadd.f32 %v5766, %v5669
          %5768 = vadd.xlane.f32.xlu0 %v5767
          %v5769 = vpop.xlane.xlu0 %5768
          %v5770 = vadd.f32 %v5670, %v5671
          %v5771 = vadd.f32 %v5770, %v5672
          %v5772 = vadd.f32 %v5771, %v5673
          %5773 = vadd.xlane.f32.xlu0 %v5772
          %v5774 = vpop.xlane.xlu0 %5773
          %v5775 = vadd.f32 %v5674, %v5675
          %v5776 = vadd.f32 %v5775, %v5676
          %v5777 = vadd.f32 %v5776, %v5677
          %5778 = vadd.xlane.f32.xlu0 %v5777
          %v5779 = vpop.xlane.xlu0 %5778
          %v5780 = vadd.f32 %v5678, %v5679
          %v5781 = vadd.f32 %v5780, %v5680
          %v5782 = vadd.f32 %v5781, %v5681
          %5783 = vadd.xlane.f32.xlu0 %v5782
          %v5784 = vpop.xlane.xlu0 %5783
          %v5785 = vadd.f32 %v5682, %v5683
          %v5786 = vadd.f32 %v5785, %v5684
          %v5787 = vadd.f32 %v5786, %v5685
          %5788 = vadd.xlane.f32.xlu0 %v5787
          %v5789 = vpop.xlane.xlu0 %5788
          %v5790 = vadd.f32 %v5686, %v5687
          %v5791 = vadd.f32 %v5790, %v5688
          %v5792 = vadd.f32 %v5791, %v5689
          %5793 = vadd.xlane.f32.xlu0 %v5792
          %v5794 = vpop.xlane.xlu0 %5793
          %v5795 = vadd.f32 %v5690, %v5691
          %v5796 = vadd.f32 %v5795, %v5692
          %v5797 = vadd.f32 %v5796, %v5693
          %5798 = vadd.xlane.f32.xlu0 %v5797
          %v5799 = vpop.xlane.xlu0 %5798
          %v5800 = vadd.f32 %v5694, %v5695
          %v5801 = vadd.f32 %v5800, %v5696
          %v5802 = vadd.f32 %v5801, %v5697
          %5803 = vadd.xlane.f32.xlu0 %v5802
          %v5804 = vpop.xlane.xlu0 %5803
          %v5805 = vadd.f32 %v5698, %v5699
          %v5806 = vadd.f32 %v5805, %v5700
          %v5807 = vadd.f32 %v5806, %v5701
          %5808 = vadd.xlane.f32.xlu0 %v5807
          %v5809 = vpop.xlane.xlu0 %5808
          %v5810 = vadd.f32 %v5702, %v5703
          %v5811 = vadd.f32 %v5810, %v5704
          %v5812 = vadd.f32 %v5811, %v5705
          %5813 = vadd.xlane.f32.xlu0 %v5812
          %v5814 = vpop.xlane.xlu0 %5813
          %v5815 = vadd.f32 %v5706, %v5707
          %v5816 = vadd.f32 %v5815, %v5708
          %v5817 = vadd.f32 %v5816, %v5709
          %5818 = vadd.xlane.f32.xlu0 %v5817
          %v5819 = vpop.xlane.xlu0 %5818
          %v5820 = vadd.f32 %v5710, %v5711
          %v5821 = vadd.f32 %v5820, %v5712
          %v5822 = vadd.f32 %v5821, %v5713
          %5823 = vadd.xlane.f32.xlu0 %v5822
          %v5824 = vpop.xlane.xlu0 %5823
          %v5825 = vadd.f32 %v5714, %v5715
          %v5826 = vadd.f32 %v5825, %v5716
          %v5827 = vadd.f32 %v5826, %v5717
          %5828 = vadd.xlane.f32.xlu0 %v5827
          %v5829 = vpop.xlane.xlu0 %5828
          %v5830 = vadd.f32 %v5718, %v5719
          %v5831 = vadd.f32 %v5830, %v5720
          %v5832 = vadd.f32 %v5831, %v5721
          %5833 = vadd.xlane.f32.xlu0 %v5832
          %v5834 = vpop.xlane.xlu0 %5833
          %v5835 = vadd.f32 %v5722, %v5723
          %v5836 = vadd.f32 %v5835, %v5724
          %v5837 = vadd.f32 %v5836, %v5725
          %5838 = vadd.xlane.f32.xlu0 %v5837
          %v5839 = vpop.xlane.xlu0 %5838
          %v5840 = vadd.f32 %v5726, %v5727
          %v5841 = vadd.f32 %v5840, %v5728
          %v5842 = vadd.f32 %v5841, %v5729
          %5843 = vadd.xlane.f32.xlu0 %v5842
          %v5844 = vpop.xlane.xlu0 %5843
          %v5845 = vadd.f32 %v5730, %v5731
          %v5846 = vadd.f32 %v5845, %v5732
          %v5847 = vadd.f32 %v5846, %v5733
          %5848 = vadd.xlane.f32.xlu0 %v5847
          %v5849 = vpop.xlane.xlu0 %5848
          %v5850 = vadd.f32 %v5734, %v5735
          %v5851 = vadd.f32 %v5850, %v5736
          %v5852 = vadd.f32 %v5851, %v5737
          %5853 = vadd.xlane.f32.xlu0 %v5852
          %v5854 = vpop.xlane.xlu0 %5853
          %v5855 = vadd.f32 %v5738, %v5739
          %v5856 = vadd.f32 %v5855, %v5740
          %v5857 = vadd.f32 %v5856, %v5741
          %5858 = vadd.xlane.f32.xlu0 %v5857
          %v5859 = vpop.xlane.xlu0 %5858
          %v5860 = vadd.f32 %v5742, %v5743
          %v5861 = vadd.f32 %v5860, %v5744
          %v5862 = vadd.f32 %v5861, %v5745
          %5863 = vadd.xlane.f32.xlu0 %v5862
          %v5864 = vpop.xlane.xlu0 %5863
          %v5865 = vadd.f32 %v5746, %v5747
          %v5866 = vadd.f32 %v5865, %v5748
          %v5867 = vadd.f32 %v5866, %v5749
          %5868 = vadd.xlane.f32.xlu0 %v5867
          %v5869 = vpop.xlane.xlu0 %5868
          %v5870 = vrcp.pop 512.0
          %v5871 = vmul.f32 %v5754, %v5870
          %v5872 = vmul.f32 %v5759, %v5870
          %v5873 = vmul.f32 %v5764, %v5870
          %v5874 = vmul.f32 %v5769, %v5870
          %v5875 = vmul.f32 %v5774, %v5870
          %v5876 = vmul.f32 %v5779, %v5870
          %v5877 = vmul.f32 %v5784, %v5870
          %v5878 = vmul.f32 %v5789, %v5870
          %v5879 = vmul.f32 %v5794, %v5870
          %v5880 = vmul.f32 %v5799, %v5870
          %v5881 = vmul.f32 %v5804, %v5870
          %v5882 = vmul.f32 %v5809, %v5870
          %v5883 = vmul.f32 %v5814, %v5870
          %v5884 = vmul.f32 %v5819, %v5870
          %v5885 = vmul.f32 %v5824, %v5870
          %v5886 = vmul.f32 %v5829, %v5870
          %v5887 = vmul.f32 %v5834, %v5870
          %v5888 = vmul.f32 %v5839, %v5870
          %v5889 = vmul.f32 %v5844, %v5870
          %v5890 = vmul.f32 %v5849, %v5870
          %v5891 = vmul.f32 %v5854, %v5870
          %v5892 = vmul.f32 %v5859, %v5870
          %v5893 = vmul.f32 %v5864, %v5870
          %v5894 = vmul.f32 %v5869, %v5870
          %v5895 = vld [vmem:[#allocation3] sm:$0x1]
          %v5896 = vmul.f32 %v5895, 0.00024414063
          %v5897 = vld [vmem:[#allocation2] sm:$0x1]
          %v5898 = vmul.f32 %v5897, 3.0517578e-05
          %v5899 = vld [vmem:[%s5] sm:$0xff]
          %v5900 = vld [vmem:[%s5 + $0x8] sm:$0xff]
          %v5901 = vld [vmem:[%s5 + $0x10] sm:$0xff]
          %v5902 = vld [vmem:[%s5 + $0x18] sm:$0xff]
          %v5903 = vld [vmem:[%s5 + $0x20] sm:$0xff]
          %v5904 = vld [vmem:[%s5 + $0x28] sm:$0xff]
          %v5905 = vld [vmem:[%s5 + $0x30] sm:$0xff]
          %v5906 = vld [vmem:[%s5 + $0x38] sm:$0xff]
          %v5907 = vld [vmem:[%s5 + $0x40] sm:$0xff]
          %v5908 = vld [vmem:[%s5 + $0x48] sm:$0xff]
          %v5909 = vld [vmem:[%s5 + $0x50] sm:$0xff]
          %v5910 = vld [vmem:[%s5 + $0x58] sm:$0xff]
          %v5911 = vld [vmem:[%s5 + $0x60] sm:$0xff]
          %v5912 = vld [vmem:[%s5 + $0x68] sm:$0xff]
          %v5913 = vld [vmem:[%s5 + $0x70] sm:$0xff]
          %v5914 = vld [vmem:[%s5 + $0x78] sm:$0xff]
          %v5915 = vld [vmem:[%s5 + $0x80] sm:$0xff]
          %v5916 = vld [vmem:[%s5 + $0x88] sm:$0xff]
          %v5917 = vld [vmem:[%s5 + $0x90] sm:$0xff]
          %v5918 = vld [vmem:[%s5 + $0x98] sm:$0xff]
          %v5919 = vld [vmem:[%s5 + $0xa0] sm:$0xff]
          %v5920 = vld [vmem:[%s5 + $0xa8] sm:$0xff]
          %v5921 = vld [vmem:[%s5 + $0xb0] sm:$0xff]
          %v5922 = vld [vmem:[%s5 + $0xb8] sm:$0xff]
          %v5923 = vld [vmem:[%s5 + $0xc0] sm:$0xff]
          %v5924 = vld [vmem:[%s5 + $0xc8] sm:$0xff]
          %v5925 = vld [vmem:[%s5 + $0xd0] sm:$0xff]
          %v5926 = vld [vmem:[%s5 + $0xd8] sm:$0xff]
          %v5927 = vld [vmem:[%s5 + $0xe0] sm:$0xff]
          %v5928 = vld [vmem:[%s5 + $0xe8] sm:$0xff]
          %v5929 = vld [vmem:[%s5 + $0xf0] sm:$0xff]
          %v5930 = vld [vmem:[%s5 + $0xf8] sm:$0xff]
          %v5931 = vld [vmem:[%s5 + $0x100] sm:$0xff]
          %v5932 = vld [vmem:[%s5 + $0x108] sm:$0xff]
          %v5933 = vld [vmem:[%s5 + $0x110] sm:$0xff]
          %v5934 = vld [vmem:[%s5 + $0x118] sm:$0xff]
          %v5935 = vld [vmem:[%s5 + $0x120] sm:$0xff]
          %v5936 = vld [vmem:[%s5 + $0x128] sm:$0xff]
          %v5937 = vld [vmem:[%s5 + $0x130] sm:$0xff]
          %v5938 = vld [vmem:[%s5 + $0x138] sm:$0xff]
          %v5939 = vld [vmem:[%s5 + $0x140] sm:$0xff]
          %v5940 = vld [vmem:[%s5 + $0x148] sm:$0xff]
          %v5941 = vld [vmem:[%s5 + $0x150] sm:$0xff]
          %v5942 = vld [vmem:[%s5 + $0x158] sm:$0xff]
          %v5943 = vld [vmem:[%s5 + $0x160] sm:$0xff]
          %v5944 = vld [vmem:[%s5 + $0x168] sm:$0xff]
          %v5945 = vld [vmem:[%s5 + $0x170] sm:$0xff]
          %v5946 = vld [vmem:[%s5 + $0x178] sm:$0xff]
          %v5947 = vld [vmem:[%s5 + $0x180] sm:$0xff]
          %v5948 = vld [vmem:[%s5 + $0x188] sm:$0xff]
          %v5949 = vld [vmem:[%s5 + $0x190] sm:$0xff]
          %v5950 = vld [vmem:[%s5 + $0x198] sm:$0xff]
          %v5951 = vld [vmem:[%s5 + $0x1a0] sm:$0xff]
          %v5952 = vld [vmem:[%s5 + $0x1a8] sm:$0xff]
          %v5953 = vld [vmem:[%s5 + $0x1b0] sm:$0xff]
          %v5954 = vld [vmem:[%s5 + $0x1b8] sm:$0xff]
          %v5955 = vld [vmem:[%s5 + $0x1c0] sm:$0xff]
          %v5956 = vld [vmem:[%s5 + $0x1c8] sm:$0xff]
          %v5957 = vld [vmem:[%s5 + $0x1d0] sm:$0xff]
          %v5958 = vld [vmem:[%s5 + $0x1d8] sm:$0xff]
          %v5959 = vld [vmem:[%s5 + $0x1e0] sm:$0xff]
          %v5960 = vld [vmem:[%s5 + $0x1e8] sm:$0xff]
          %v5961 = vld [vmem:[%s5 + $0x1f0] sm:$0xff]
          %v5962 = vld [vmem:[%s5 + $0x1f8] sm:$0xff]
          %v5963 = vld [vmem:[%s5 + $0x200] sm:$0xff]
          %v5964 = vld [vmem:[%s5 + $0x208] sm:$0xff]
          %v5965 = vld [vmem:[%s5 + $0x210] sm:$0xff]
          %v5966 = vld [vmem:[%s5 + $0x218] sm:$0xff]
          %v5967 = vld [vmem:[%s5 + $0x220] sm:$0xff]
          %v5968 = vld [vmem:[%s5 + $0x228] sm:$0xff]
          %v5969 = vld [vmem:[%s5 + $0x230] sm:$0xff]
          %v5970 = vld [vmem:[%s5 + $0x238] sm:$0xff]
          %v5971 = vld [vmem:[%s5 + $0x240] sm:$0xff]
          %v5972 = vld [vmem:[%s5 + $0x248] sm:$0xff]
          %v5973 = vld [vmem:[%s5 + $0x250] sm:$0xff]
          %v5974 = vld [vmem:[%s5 + $0x258] sm:$0xff]
          %v5975 = vld [vmem:[%s5 + $0x260] sm:$0xff]
          %v5976 = vld [vmem:[%s5 + $0x268] sm:$0xff]
          %v5977 = vld [vmem:[%s5 + $0x270] sm:$0xff]
          %v5978 = vld [vmem:[%s5 + $0x278] sm:$0xff]
          %v5979 = vld [vmem:[%s5 + $0x280] sm:$0xff]
          %v5980 = vld [vmem:[%s5 + $0x288] sm:$0xff]
          %v5981 = vld [vmem:[%s5 + $0x290] sm:$0xff]
          %v5982 = vld [vmem:[%s5 + $0x298] sm:$0xff]
          %v5983 = vld [vmem:[%s5 + $0x2a0] sm:$0xff]
          %v5984 = vld [vmem:[%s5 + $0x2a8] sm:$0xff]
          %v5985 = vld [vmem:[%s5 + $0x2b0] sm:$0xff]
          %v5986 = vld [vmem:[%s5 + $0x2b8] sm:$0xff]
          %v5987 = vld [vmem:[%s5 + $0x2c0] sm:$0xff]
          %v5988 = vld [vmem:[%s5 + $0x2c8] sm:$0xff]
          %v5989 = vld [vmem:[%s5 + $0x2d0] sm:$0xff]
          %v5990 = vld [vmem:[%s5 + $0x2d8] sm:$0xff]
          %v5991 = vld [vmem:[%s5 + $0x2e0] sm:$0xff]
          %v5992 = vld [vmem:[%s5 + $0x2e8] sm:$0xff]
          %v5993 = vld [vmem:[%s5 + $0x2f0] sm:$0xff]
          %v5994 = vld [vmem:[%s5 + $0x2f8] sm:$0xff]
          %v5995 = vld [vmem:[%s6] sm:$0x1]
          %5996 = vmatprep.subr.mxu0 0.0
          %5997 = vmatpush1.msra.mxu0 %v5899
          %5998 = vmatprep.subr.mxu0 0.0
          %5999 = vmatpush1.msra.mxu0 %v5900
          %6000 = vmatprep.subr.mxu0 0.0
          %6001 = vmatpush1.msra.mxu0 %v5901
          %6002 = vmatprep.subr.mxu0 0.0
          %6003 = vmatpush1.msra.mxu0 %v5902
          %6004 = vmatprep.subr.mxu0 0.0
          %6005 = vmatpush1.msra.mxu0 %v5903
          %6006 = vmatprep.subr.mxu0 0.0
          %6007 = vmatpush1.msra.mxu0 %v5904
          %6008 = vmatprep.subr.mxu0 0.0
          %6009 = vmatpush1.msra.mxu0 %v5905
          %6010 = vmatprep.subr.mxu0 0.0
          %6011 = vmatpush1.msra.mxu0 %v5906
          %6012 = vmatprep.subr.mxu0 0.0
          %6013 = vmatpush1.msra.mxu0 %v5907
          %6014 = vmatprep.subr.mxu0 0.0
          %6015 = vmatpush1.msra.mxu0 %v5908
          %6016 = vmatprep.subr.mxu0 0.0
          %6017 = vmatpush1.msra.mxu0 %v5909
          %6018 = vmatprep.subr.mxu0 0.0
          %6019 = vmatpush1.msra.mxu0 %v5910
          %6020 = vmatprep.subr.mxu0 0.0
          %6021 = vmatpush1.msra.mxu0 %v5911
          %6022 = vmatprep.subr.mxu0 0.0
          %6023 = vmatpush1.msra.mxu0 %v5912
          %6024 = vmatprep.subr.mxu0 0.0
          %6025 = vmatpush1.msra.mxu0 %v5913
          %6026 = vmatprep.subr.mxu0 0.0
          %6027 = vmatpush1.msra.mxu0 %v5914
          %6028 = vmatprep.subr.mxu0 0.0
          %6029 = vmatpush1.msra.mxu0 %v5915
          %6030 = vmatprep.subr.mxu0 0.0
          %6031 = vmatpush1.msra.mxu0 %v5916
          %6032 = vmatprep.subr.mxu0 0.0
          %6033 = vmatpush1.msra.mxu0 %v5917
          %6034 = vmatprep.subr.mxu0 0.0
          %6035 = vmatpush1.msra.mxu0 %v5918
          %6036 = vmatprep.subr.mxu0 0.0
          %6037 = vmatpush1.msra.mxu0 %v5919
          %6038 = vmatprep.subr.mxu0 0.0
          %6039 = vmatpush1.msra.mxu0 %v5920
          %6040 = vmatprep.subr.mxu0 0.0
          %6041 = vmatpush1.msra.mxu0 %v5921
          %6042 = vmatprep.subr.mxu0 0.0
          %6043 = vmatpush1.msra.mxu0 %v5922
          %6044 = vmatprep.subr.mxu0 0.0
          %6045 = vmatpush1.msra.mxu0 %v5923
          %6046 = vmatprep.subr.mxu0 0.0
          %6047 = vmatpush1.msra.mxu0 %v5924
          %6048 = vmatprep.subr.mxu0 0.0
          %6049 = vmatpush1.msra.mxu0 %v5925
          %6050 = vmatprep.subr.mxu0 0.0
          %6051 = vmatpush1.msra.mxu0 %v5926
          %6052 = vmatprep.subr.mxu0 0.0
          %6053 = vmatpush1.msra.mxu0 %v5927
          %6054 = vmatprep.subr.mxu0 0.0
          %6055 = vmatpush1.msra.mxu0 %v5928
          %6056 = vmatprep.subr.mxu0 0.0
          %6057 = vmatpush1.msra.mxu0 %v5929
          %6058 = vmatprep.subr.mxu0 0.0
          %6059 = vmatpush1.msra.mxu0 %v5930
          %6060 = vmatprep.mubr.f32.mxu0 %v5582
          %6061 = vmatmul.mubr.f32.gmra.mrb[0].mxu0 %v5581
          %v6062 = vpop.f32.mrb[0].mxu0
          %v6063 = vadd.f32 %v5995, %v6062
          %v6064 = vpop.f32.mrb[0].mxu0
          %6065 = vdwg.mxu0
          %6066 = vmatprep.subr.mxu0 0.0
          %6067 = vmatpush1.msra.mxu0 %v5931
          %6068 = vmatprep.subr.mxu0 0.0
          %6069 = vmatpush1.msra.mxu0 %v5932
          %6070 = vmatprep.subr.mxu0 0.0
          %6071 = vmatpush1.msra.mxu0 %v5933
          %6072 = vmatprep.subr.mxu0 0.0
          %6073 = vmatpush1.msra.mxu0 %v5934
          %6074 = vmatprep.subr.mxu0 0.0
          %6075 = vmatpush1.msra.mxu0 %v5935
          %6076 = vmatprep.subr.mxu0 0.0
          %6077 = vmatpush1.msra.mxu0 %v5936
          %6078 = vmatprep.subr.mxu0 0.0
          %6079 = vmatpush1.msra.mxu0 %v5937
          %6080 = vmatprep.subr.mxu0 0.0
          %6081 = vmatpush1.msra.mxu0 %v5938
          %6082 = vmatprep.subr.mxu0 0.0
          %6083 = vmatpush1.msra.mxu0 %v5939
          %6084 = vmatprep.subr.mxu0 0.0
          %6085 = vmatpush1.msra.mxu0 %v5940
          %6086 = vmatprep.subr.mxu0 0.0
          %6087 = vmatpush1.msra.mxu0 %v5941
          %6088 = vmatprep.subr.mxu0 0.0
          %6089 = vmatpush1.msra.mxu0 %v5942
          %6090 = vmatprep.subr.mxu0 0.0
          %6091 = vmatpush1.msra.mxu0 %v5943
          %6092 = vmatprep.subr.mxu0 0.0
          %6093 = vmatpush1.msra.mxu0 %v5944
          %6094 = vmatprep.subr.mxu0 0.0
          %6095 = vmatpush1.msra.mxu0 %v5945
          %6096 = vmatprep.subr.mxu0 0.0
          %6097 = vmatpush1.msra.mxu0 %v5946
          %6098 = vmatprep.subr.mxu0 0.0
          %6099 = vmatpush1.msra.mxu0 %v5947
          %6100 = vmatprep.subr.mxu0 0.0
          %6101 = vmatpush1.msra.mxu0 %v5948
          %6102 = vmatprep.subr.mxu0 0.0
          %6103 = vmatpush1.msra.mxu0 %v5949
          %6104 = vmatprep.subr.mxu0 0.0
          %6105 = vmatpush1.msra.mxu0 %v5950
          %6106 = vmatprep.subr.mxu0 0.0
          %6107 = vmatpush1.msra.mxu0 %v5951
          %6108 = vmatprep.subr.mxu0 0.0
          %6109 = vmatpush1.msra.mxu0 %v5952
          %6110 = vmatprep.subr.mxu0 0.0
          %6111 = vmatpush1.msra.mxu0 %v5953
          %6112 = vmatprep.subr.mxu0 0.0
          %6113 = vmatpush1.msra.mxu0 %v5954
          %6114 = vmatprep.subr.mxu0 0.0
          %6115 = vmatpush1.msra.mxu0 %v5955
          %6116 = vmatprep.subr.mxu0 0.0
          %6117 = vmatpush1.msra.mxu0 %v5956
          %6118 = vmatprep.subr.mxu0 0.0
          %6119 = vmatpush1.msra.mxu0 %v5957
          %6120 = vmatprep.subr.mxu0 0.0
          %6121 = vmatpush1.msra.mxu0 %v5958
          %6122 = vmatprep.subr.mxu0 0.0
          %6123 = vmatpush1.msra.mxu0 %v5959
          %6124 = vmatprep.subr.mxu0 0.0
          %6125 = vmatpush1.msra.mxu0 %v5960
          %6126 = vmatprep.subr.mxu0 0.0
          %6127 = vmatpush1.msra.mxu0 %v5961
          %6128 = vmatprep.subr.mxu0 0.0
          %6129 = vmatpush1.msra.mxu0 %v5962
          %6130 = vmatprep.mubr.f32.mxu0 %v5584
          %6131 = vmatmul.mubr.f32.gmra.mrb[0].mxu0 %v5583
          %v6132 = vpop.f32.mrb[0].mxu0
          %v6133 = vadd.f32 %v6063, %v6132
          %v6134 = vpop.f32.mrb[0].mxu0
          %6135 = vdwg.mxu0
          %6136 = vmatprep.subr.mxu0 0.0
          %6137 = vmatpush1.msra.mxu0 %v5963
          %6138 = vmatprep.subr.mxu0 0.0
          %6139 = vmatpush1.msra.mxu0 %v5964
          %6140 = vmatprep.subr.mxu0 0.0
          %6141 = vmatpush1.msra.mxu0 %v5965
          %6142 = vmatprep.subr.mxu0 0.0
          %6143 = vmatpush1.msra.mxu0 %v5966
          %6144 = vmatprep.subr.mxu0 0.0
          %6145 = vmatpush1.msra.mxu0 %v5967
          %6146 = vmatprep.subr.mxu0 0.0
          %6147 = vmatpush1.msra.mxu0 %v5968
          %6148 = vmatprep.subr.mxu0 0.0
          %6149 = vmatpush1.msra.mxu0 %v5969
          %6150 = vmatprep.subr.mxu0 0.0
          %6151 = vmatpush1.msra.mxu0 %v5970
          %6152 = vmatprep.subr.mxu0 0.0
          %6153 = vmatpush1.msra.mxu0 %v5971
          %6154 = vmatprep.subr.mxu0 0.0
          %6155 = vmatpush1.msra.mxu0 %v5972
          %6156 = vmatprep.subr.mxu0 0.0
          %6157 = vmatpush1.msra.mxu0 %v5973
          %6158 = vmatprep.subr.mxu0 0.0
          %6159 = vmatpush1.msra.mxu0 %v5974
          %6160 = vmatprep.subr.mxu0 0.0
          %6161 = vmatpush1.msra.mxu0 %v5975
          %6162 = vmatprep.subr.mxu0 0.0
          %6163 = vmatpush1.msra.mxu0 %v5976
          %6164 = vmatprep.subr.mxu0 0.0
          %6165 = vmatpush1.msra.mxu0 %v5977
          %6166 = vmatprep.subr.mxu0 0.0
          %6167 = vmatpush1.msra.mxu0 %v5978
          %6168 = vmatprep.subr.mxu0 0.0
          %6169 = vmatpush1.msra.mxu0 %v5979
          %6170 = vmatprep.subr.mxu0 0.0
          %6171 = vmatpush1.msra.mxu0 %v5980
          %6172 = vmatprep.subr.mxu0 0.0
          %6173 = vmatpush1.msra.mxu0 %v5981
          %6174 = vmatprep.subr.mxu0 0.0
          %6175 = vmatpush1.msra.mxu0 %v5982
          %6176 = vmatprep.subr.mxu0 0.0
          %6177 = vmatpush1.msra.mxu0 %v5983
          %6178 = vmatprep.subr.mxu0 0.0
          %6179 = vmatpush1.msra.mxu0 %v5984
          %6180 = vmatprep.subr.mxu0 0.0
          %6181 = vmatpush1.msra.mxu0 %v5985
          %6182 = vmatprep.subr.mxu0 0.0
          %6183 = vmatpush1.msra.mxu0 %v5986
          %6184 = vmatprep.subr.mxu0 0.0
          %6185 = vmatpush1.msra.mxu0 %v5987
          %6186 = vmatprep.subr.mxu0 0.0
          %6187 = vmatpush1.msra.mxu0 %v5988
          %6188 = vmatprep.subr.mxu0 0.0
          %6189 = vmatpush1.msra.mxu0 %v5989
          %6190 = vmatprep.subr.mxu0 0.0
          %6191 = vmatpush1.msra.mxu0 %v5990
          %6192 = vmatprep.subr.mxu0 0.0
          %6193 = vmatpush1.msra.mxu0 %v5991
          %6194 = vmatprep.subr.mxu0 0.0
          %6195 = vmatpush1.msra.mxu0 %v5992
          %6196 = vmatprep.subr.mxu0 0.0
          %6197 = vmatpush1.msra.mxu0 %v5993
          %6198 = vmatprep.subr.mxu0 0.0
          %6199 = vmatpush1.msra.mxu0 %v5994
          %6200 = vmatprep.mubr.f32.mxu0 %v5586
          %6201 = vmatmul.mubr.f32.gmra.mrb[0].mxu0 %v5585
          %v6202 = vpop.f32.mrb[0].mxu0
          %v6203 = vadd.f32 %v6133, %v6202
          %v6204 = vpop.f32.mrb[0].mxu0
          %6205 = vdwg.mxu0
          %v6206 = vmul.f32 %v6203, 0.5
          %v6207 = vtanh.pop %v6206
          %v6208 = vadd.f32 %v6207, 1.0
          %v6209 = vmul.f32 %v6208, 0.5
          %v6210 = vmul.f32 %v6203, %v6209
          %v6211 = vld [vmem:[%s5 + $0x300] sm:$0xff]
          %v6212 = vld [vmem:[%s5 + $0x308] sm:$0xff]
          %v6213 = vld [vmem:[%s5 + $0x310] sm:$0xff]
          %v6214 = vld [vmem:[%s5 + $0x318] sm:$0xff]
          %v6215 = vld [vmem:[%s5 + $0x320] sm:$0xff]
          %v6216 = vld [vmem:[%s5 + $0x328] sm:$0xff]
          %v6217 = vld [vmem:[%s5 + $0x330] sm:$0xff]
          %v6218 = vld [vmem:[%s5 + $0x338] sm:$0xff]
          %v6219 = vld [vmem:[%s5 + $0x340] sm:$0xff]
          %v6220 = vld [vmem:[%s5 + $0x348] sm:$0xff]
          %v6221 = vld [vmem:[%s5 + $0x350] sm:$0xff]
          %v6222 = vld [vmem:[%s5 + $0x358] sm:$0xff]
          %v6223 = vld [vmem:[%s5 + $0x360] sm:$0xff]
          %v6224 = vld [vmem:[%s5 + $0x368] sm:$0xff]
          %v6225 = vld [vmem:[%s5 + $0x370] sm:$0xff]
          %v6226 = vld [vmem:[%s5 + $0x378] sm:$0xff]
          %v6227 = vld [vmem:[%s5 + $0x380] sm:$0xff]
          %v6228 = vld [vmem:[%s5 + $0x388] sm:$0xff]
          %v6229 = vld [vmem:[%s5 + $0x390] sm:$0xff]
          %v6230 = vld [vmem:[%s5 + $0x398] sm:$0xff]
          %v6231 = vld [vmem:[%s5 + $0x3a0] sm:$0xff]
          %v6232 = vld [vmem:[%s5 + $0x3a8] sm:$0xff]
          %v6233 = vld [vmem:[%s5 + $0x3b0] sm:$0xff]
          %v6234 = vld [vmem:[%s5 + $0x3b8] sm:$0xff]
          %v6235 = vld [vmem:[%s5 + $0x3c0] sm:$0xff]
          %v6236 = vld [vmem:[%s5 + $0x3c8] sm:$0xff]
          %v6237 = vld [vmem:[%s5 + $0x3d0] sm:$0xff]
          %v6238 = vld [vmem:[%s5 + $0x3d8] sm:$0xff]
          %v6239 = vld [vmem:[%s5 + $0x3e0] sm:$0xff]
          %v6240 = vld [vmem:[%s5 + $0x3e8] sm:$0xff]
          %v6241 = vld [vmem:[%s5 + $0x3f0] sm:$0xff]
          %v6242 = vld [vmem:[%s5 + $0x3f8] sm:$0xff]
          %v6243 = vld [vmem:[%s5 + $0x400] sm:$0xff]
          %v6244 = vld [vmem:[%s5 + $0x408] sm:$0xff]
          %v6245 = vld [vmem:[%s5 + $0x410] sm:$0xff]
          %v6246 = vld [vmem:[%s5 + $0x418] sm:$0xff]
          %v6247 = vld [vmem:[%s5 + $0x420] sm:$0xff]
          %v6248 = vld [vmem:[%s5 + $0x428] sm:$0xff]
          %v6249 = vld [vmem:[%s5 + $0x430] sm:$0xff]
          %v6250 = vld [vmem:[%s5 + $0x438] sm:$0xff]
          %v6251 = vld [vmem:[%s5 + $0x440] sm:$0xff]
          %v6252 = vld [vmem:[%s5 + $0x448] sm:$0xff]
          %v6253 = vld [vmem:[%s5 + $0x450] sm:$0xff]
          %v6254 = vld [vmem:[%s5 + $0x458] sm:$0xff]
          %v6255 = vld [vmem:[%s5 + $0x460] sm:$0xff]
          %v6256 = vld [vmem:[%s5 + $0x468] sm:$0xff]
          %v6257 = vld [vmem:[%s5 + $0x470] sm:$0xff]
          %v6258 = vld [vmem:[%s5 + $0x478] sm:$0xff]
          %v6259 = vld [vmem:[%s6 + $0x1] sm:$0x1]
          %6260 = vmatprep.subr.mxu0 0.0
          %6261 = vmatpush1.msra.mxu0 %v6211
          %6262 = vmatprep.subr.mxu0 0.0
          %6263 = vmatpush1.msra.mxu0 %v6212
          %6264 = vmatprep.subr.mxu0 0.0
          %6265 = vmatpush1.msra.mxu0 %v6213
          %6266 = vmatprep.subr.mxu0 0.0
          %6267 = vmatpush1.msra.mxu0 %v6214
          %6268 = vmatprep.subr.mxu0 0.0
          %6269 = vmatpush1.msra.mxu0 %v6215
          %6270 = vmatprep.subr.mxu0 0.0
          %6271 = vmatpush1.msra.mxu0 %v6216
          %6272 = vmatprep.subr.mxu0 0.0
          %6273 = vmatpush1.msra.mxu0 %v6217
          %6274 = vmatprep.subr.mxu0 0.0
          %6275 = vmatpush1.msra.mxu0 %v6218
          %6276 = vmatprep.subr.mxu0 0.0
          %6277 = vmatpush1.msra.mxu0 %v6219
          %6278 = vmatprep.subr.mxu0 0.0
          %6279 = vmatpush1.msra.mxu0 %v6220
          %6280 = vmatprep.subr.mxu0 0.0
          %6281 = vmatpush1.msra.mxu0 %v6221
          %6282 = vmatprep.subr.mxu0 0.0
          %6283 = vmatpush1.msra.mxu0 %v6222
          %6284 = vmatprep.subr.mxu0 0.0
          %6285 = vmatpush1.msra.mxu0 %v6223
          %6286 = vmatprep.subr.mxu0 0.0
          %6287 = vmatpush1.msra.mxu0 %v6224
          %6288 = vmatprep.subr.mxu0 0.0
          %6289 = vmatpush1.msra.mxu0 %v6225
          %6290 = vmatprep.subr.mxu0 0.0
          %6291 = vmatpush1.msra.mxu0 %v6226
          %6292 = vmatprep.subr.mxu0 0.0
          %6293 = vmatpush1.msra.mxu0 %v6227
          %6294 = vmatprep.subr.mxu0 0.0
          %6295 = vmatpush1.msra.mxu0 %v6228
          %6296 = vmatprep.subr.mxu0 0.0
          %6297 = vmatpush1.msra.mxu0 %v6229
          %6298 = vmatprep.subr.mxu0 0.0
          %6299 = vmatpush1.msra.mxu0 %v6230
          %6300 = vmatprep.subr.mxu0 0.0
          %6301 = vmatpush1.msra.mxu0 %v6231
          %6302 = vmatprep.subr.mxu0 0.0
          %6303 = vmatpush1.msra.mxu0 %v6232
          %6304 = vmatprep.subr.mxu0 0.0
          %6305 = vmatpush1.msra.mxu0 %v6233
          %6306 = vmatprep.subr.mxu0 0.0
          %6307 = vmatpush1.msra.mxu0 %v6234
          %6308 = vmatprep.subr.mxu0 0.0
          %6309 = vmatpush1.msra.mxu0 %v6235
          %6310 = vmatprep.subr.mxu0 0.0
          %6311 = vmatpush1.msra.mxu0 %v6236
          %6312 = vmatprep.subr.mxu0 0.0
          %6313 = vmatpush1.msra.mxu0 %v6237
          %6314 = vmatprep.subr.mxu0 0.0
          %6315 = vmatpush1.msra.mxu0 %v6238
          %6316 = vmatprep.subr.mxu0 0.0
          %6317 = vmatpush1.msra.mxu0 %v6239
          %6318 = vmatprep.subr.mxu0 0.0
          %6319 = vmatpush1.msra.mxu0 %v6240
          %6320 = vmatprep.subr.mxu0 0.0
          %6321 = vmatpush1.msra.mxu0 %v6241
          %6322 = vmatprep.subr.mxu0 0.0
          %6323 = vmatpush1.msra.mxu0 %v6242
          %6324 = vmatprep.mubr.f32.mxu0 %v5652
          %6325 = vmatmul.mubr.f32.gmra.mrb[0].mxu0 %v5651
          %v6326 = vpop.f32.mrb[0].mxu0
          %v6327 = vadd.f32 %v6259, %v6326
          %v6328 = vpop.f32.mrb[0].mxu0
          %6329 = vdwg.mxu0
          %6330 = vmatprep.subr.mxu0 0.0
          %6331 = vmatpush1.msra.mxu0 %v6243
          %6332 = vmatprep.subr.mxu0 0.0
          %6333 = vmatpush1.msra.mxu0 %v6244
          %6334 = vmatprep.subr.mxu0 0.0
          %6335 = vmatpush1.msra.mxu0 %v6245
          %6336 = vmatprep.subr.mxu0 0.0
          %6337 = vmatpush1.msra.mxu0 %v6246
          %6338 = vmatprep.subr.mxu0 0.0
          %6339 = vmatpush1.msra.mxu0 %v6247
          %6340 = vmatprep.subr.mxu0 0.0
          %6341 = vmatpush1.msra.mxu0 %v6248
          %6342 = vmatprep.subr.mxu0 0.0
          %6343 = vmatpush1.msra.mxu0 %v6249
          %6344 = vmatprep.subr.mxu0 0.0
          %6345 = vmatpush1.msra.mxu0 %v6250
          %6346 = vmatprep.subr.mxu0 0.0
          %6347 = vmatpush1.msra.mxu0 %v6251
          %6348 = vmatprep.subr.mxu0 0.0
          %6349 = vmatpush1.msra.mxu0 %v6252
          %6350 = vmatprep.subr.mxu0 0.0
          %6351 = vmatpush1.msra.mxu0 %v6253
          %6352 = vmatprep.subr.mxu0 0.0
          %6353 = vmatpush1.msra.mxu0 %v6254
          %6354 = vmatprep.subr.mxu0 0.0
          %6355 = vmatpush1.msra.mxu0 %v6255
          %6356 = vmatprep.subr.mxu0 0.0
          %6357 = vmatpush1.msra.mxu0 %v6256
          %6358 = vmatprep.subr.mxu0 0.0
          %6359 = vmatpush1.msra.mxu0 %v6257
          %6360 = vmatprep.subr.mxu0 0.0
          %6361 = vmatpush1.msra.mxu0 %v6258
          %6362 = vmatprep.subr.mxu0 0.0
          %6363 = vmatpush1.msra.mxu0 0.0
          %6364 = vmatprep.subr.mxu0 0.0
          %6365 = vmatpush1.msra.mxu0 0.0
          %6366 = vmatprep.subr.mxu0 0.0
          %6367 = vmatpush1.msra.mxu0 0.0
          %6368 = vmatprep.subr.mxu0 0.0
          %6369 = vmatpush1.msra.mxu0 0.0
          %6370 = vmatprep.subr.mxu0 0.0
          %6371 = vmatpush1.msra.mxu0 0.0
          %6372 = vmatprep.subr.mxu0 0.0
          %6373 = vmatpush1.msra.mxu0 0.0
          %6374 = vmatprep.subr.mxu0 0.0
          %6375 = vmatpush1.msra.mxu0 0.0
          %6376 = vmatprep.subr.mxu0 0.0
          %6377 = vmatpush1.msra.mxu0 0.0
          %6378 = vmatprep.subr.mxu0 0.0
          %6379 = vmatpush1.msra.mxu0 0.0
          %6380 = vmatprep.subr.mxu0 0.0
          %6381 = vmatpush1.msra.mxu0 0.0
          %6382 = vmatprep.subr.mxu0 0.0
          %6383 = vmatpush1.msra.mxu0 0.0
          %6384 = vmatprep.subr.mxu0 0.0
          %6385 = vmatpush1.msra.mxu0 0.0
          %6386 = vmatprep.subr.mxu0 0.0
          %6387 = vmatpush1.msra.mxu0 0.0
          %6388 = vmatprep.subr.mxu0 0.0
          %6389 = vmatpush1.msra.mxu0 0.0
          %6390 = vmatprep.subr.mxu0 0.0
          %6391 = vmatpush1.msra.mxu0 0.0
          %6392 = vmatprep.subr.mxu0 0.0
          %6393 = vmatpush1.msra.mxu0 0.0
          %6394 = vmatprep.mubr.f32.mxu0 0.0
          %6395 = vmatmul.mubr.f32.gmra.mrb[0].mxu0 %v5653
          %v6396 = vpop.f32.mrb[0].mxu0
          %v6397 = vadd.f32 %v6327, %v6396
          %v6398 = vpop.f32.mrb[0].mxu0
          %6399 = vdwg.mxu0
          %v6400 = vmul.f32 %v6397, 0.5
          %v6401 = vtanh.pop %v6400
          %v6402 = vadd.f32 %v6401, 1.0
          %v6403 = vmul.f32 %v6402, 0.5
          %v6404 = vmul.f32 %v6397, %v6403
          %v6405 = vld [vmem:[%s5 + $0x480] sm:$0xff]
          %v6406 = vld [vmem:[%s5 + $0x488] sm:$0xff]
          %v6407 = vld [vmem:[%s5 + $0x490] sm:$0xff]
          %v6408 = vld [vmem:[%s5 + $0x498] sm:$0xff]
          %v6409 = vld [vmem:[%s5 + $0x4a0] sm:$0xff]
          %v6410 = vld [vmem:[%s5 + $0x4a8] sm:$0xff]
          %v6411 = vld [vmem:[%s5 + $0x4b0] sm:$0xff]
          %v6412 = vld [vmem:[%s5 + $0x4b8] sm:$0xff]
          %v6413 = vld [vmem:[%s5 + $0x4c0] sm:$0xff]
          %v6414 = vld [vmem:[%s5 + $0x4c8] sm:$0xff]
          %v6415 = vld [vmem:[%s5 + $0x4d0] sm:$0xff]
          %v6416 = vld [vmem:[%s5 + $0x4d8] sm:$0xff]
          %v6417 = vld [vmem:[%s5 + $0x4e0] sm:$0xff]
          %v6418 = vld [vmem:[%s5 + $0x4e8] sm:$0xff]
          %v6419 = vld [vmem:[%s5 + $0x4f0] sm:$0xff]
          %v6420 = vld [vmem:[%s5 + $0x4f8] sm:$0xff]
          %v6421 = vld [vmem:[%s5 + $0x500] sm:$0xff]
          %v6422 = vld [vmem:[%s5 + $0x508] sm:$0xff]
          %v6423 = vld [vmem:[%s5 + $0x510] sm:$0xff]
          %v6424 = vld [vmem:[%s5 + $0x518] sm:$0xff]
          %v6425 = vld [vmem:[%s5 + $0x520] sm:$0xff]
          %v6426 = vld [vmem:[%s5 + $0x528] sm:$0xff]
          %v6427 = vld [vmem:[%s5 + $0x530] sm:$0xff]
          %v6428 = vld [vmem:[%s5 + $0x538] sm:$0xff]
          %v6429 = vld [vmem:[%s6 + $0x2] sm:$0x1]
          %v6454 = vlaneseq
          %v6455 = vshrl.u32 %v6454, 7
          %v6456 = vsub.s32 %v3874, %v6455
          %v6457 = vrot.slane %v5871, %v6456
          %v6458 = vlaneseq
          %v6459 = vshrl.u32 %v6458, 7
          %v6460 = vsub.s32 %v3879, %v6459
          %v6461 = vrot.slane %v5872, %v6460
          %v6462 = vsel %vm3884, %v6461, %v6457
          %v6463 = vlaneseq
          %v6464 = vshrl.u32 %v6463, 7
          %v6465 = vsub.s32 %v3886, %v6464
          %v6466 = vrot.slane %v5873, %v6465
          %v6467 = vsel %vm3891, %v6466, %v6462
          %v6468 = vlaneseq
          %v6469 = vshrl.u32 %v6468, 7
          %v6470 = vsub.s32 %v3893, %v6469
          %v6471 = vrot.slane %v5874, %v6470
          %v6472 = vsel %vm3898, %v6471, %v6467
          %v6473 = vlaneseq
          %v6474 = vshrl.u32 %v6473, 7
          %v6475 = vsub.s32 %v3900, %v6474
          %v6476 = vrot.slane %v5875, %v6475
          %v6477 = vsel %vm3905, %v6476, %v6472
          %v6478 = vlaneseq
          %v6479 = vshrl.u32 %v6478, 7
          %v6480 = vsub.s32 %v3907, %v6479
          %v6481 = vrot.slane %v5876, %v6480
          %v6482 = vsel %vm3912, %v6481, %v6477
          %v6483 = vlaneseq
          %v6484 = vshrl.u32 %v6483, 7
          %v6485 = vsub.s32 %v5474, %v6484
          %v6486 = vrot.slane %v5877, %v6485
          %v6487 = vsel %vm5479, %v6486, %v6482
          %v6488 = vlaneseq
          %v6489 = vshrl.u32 %v6488, 7
          %v6490 = vsub.s32 %v5481, %v6489
          %v6491 = vrot.slane %v5878, %v6490
          %v6492 = vsel %vm5486, %v6491, %v6487
          %v6493 = vlaneseq
          %v6494 = vshrl.u32 %v6493, 7
          %v6495 = vsub.s32 %v5488, %v6494
          %v6496 = vrot.slane %v5879, %v6495
          %v6497 = vsel %vm5493, %v6496, %v6492
          %v6498 = vlaneseq
          %v6499 = vshrl.u32 %v6498, 7
          %v6500 = vsub.s32 %v5495, %v6499
          %v6501 = vrot.slane %v5880, %v6500
          %v6502 = vsel %vm5500, %v6501, %v6497
          %v6503 = vlaneseq
          %v6504 = vshrl.u32 %v6503, 7
          %v6505 = vsub.s32 %v5502, %v6504
          %v6506 = vrot.slane %v5881, %v6505
          %v6507 = vsel %vm5507, %v6506, %v6502
          %v6508 = vlaneseq
          %v6509 = vshrl.u32 %v6508, 7
          %v6510 = vsub.s32 %v5509, %v6509
          %v6511 = vrot.slane %v5882, %v6510
          %v6512 = vsel %vm5514, %v6511, %v6507
          %v6513 = vadd.s32 %v3874, 4294967200
          %v6514 = vlaneseq
          %v6515 = vshrl.u32 %v6514, 7
          %v6516 = vsub.s32 %v6513, %v6515
          %v6517 = vrot.slane %v5883, %v6516
          %vm6518 = vcmask 851712
          %v6519 = vsel %vm6518, %v6517, %v6512
          %v6520 = vadd.s32 %v3874, 4294967192
          %v6521 = vlaneseq
          %v6522 = vshrl.u32 %v6521, 7
          %v6523 = vsub.s32 %v6520, %v6522
          %v6524 = vrot.slane %v5884, %v6523
          %vm6525 = vcmask 917312
          %v6526 = vsel %vm6525, %v6524, %v6519
          %v6527 = vadd.s32 %v3874, 4294967184
          %v6528 = vlaneseq
          %v6529 = vshrl.u32 %v6528, 7
          %v6530 = vsub.s32 %v6527, %v6529
          %v6531 = vrot.slane %v5885, %v6530
          %vm6532 = vcmask 982912
          %v6533 = vsel %vm6532, %v6531, %v6526
          %v6534 = vadd.s32 %v3874, 4294967176
          %v6535 = vlaneseq
          %v6536 = vshrl.u32 %v6535, 7
          %v6537 = vsub.s32 %v6534, %v6536
          %v6538 = vrot.slane %v5886, %v6537
          %vm6539 = vcmask 1048512
          %v6540 = vsel %vm6539, %v6538, %v6533
          %v6541 = vlaneseq
          %v6542 = vshrl.u32 %v6541, 7
          %v6543 = vsub.s32 %v3874, %v6542
          %v6544 = vrot.slane %v5887, %v6543
          %v6545 = vlaneseq
          %v6546 = vshrl.u32 %v6545, 7
          %v6547 = vsub.s32 %v3879, %v6546
          %v6548 = vrot.slane %v5888, %v6547
          %v6549 = vsel %vm3884, %v6548, %v6544
          %v6550 = vlaneseq
          %v6551 = vshrl.u32 %v6550, 7
          %v6552 = vsub.s32 %v3886, %v6551
          %v6553 = vrot.slane %v5889, %v6552
          %v6554 = vsel %vm3891, %v6553, %v6549
          %v6555 = vlaneseq
          %v6556 = vshrl.u32 %v6555, 7
          %v6557 = vsub.s32 %v3893, %v6556
          %v6558 = vrot.slane %v5890, %v6557
          %v6559 = vsel %vm3898, %v6558, %v6554
          %v6560 = vlaneseq
          %v6561 = vshrl.u32 %v6560, 7
          %v6562 = vsub.s32 %v3900, %v6561
          %v6563 = vrot.slane %v5891, %v6562
          %v6564 = vsel %vm3905, %v6563, %v6559
          %v6565 = vlaneseq
          %v6566 = vshrl.u32 %v6565, 7
          %v6567 = vsub.s32 %v3907, %v6566
          %v6568 = vrot.slane %v5892, %v6567
          %v6569 = vsel %vm3912, %v6568, %v6564
          %v6570 = vlaneseq
          %v6571 = vshrl.u32 %v6570, 7
          %v6572 = vsub.s32 %v5474, %v6571
          %v6573 = vrot.slane %v5893, %v6572
          %v6574 = vsel %vm5479, %v6573, %v6569
          %v6575 = vlaneseq
          %v6576 = vshrl.u32 %v6575, 7
          %v6577 = vsub.s32 %v5481, %v6576
          %v6578 = vrot.slane %v5894, %v6577
          %v6579 = vsel %vm5486, %v6578, %v6574
          %vm6581 = vcmask 523264
          %v6582 = vsel %vm6581, %v6579, 0
          %6584 = vmatprep.subr.mxu0 0.0
          %6585 = vmatpush1.msra.mxu0 %v6405
          %6586 = vmatprep.subr.mxu0 0.0
          %6587 = vmatpush1.msra.mxu0 %v6406
          %6588 = vmatprep.subr.mxu0 0.0
          %6589 = vmatpush1.msra.mxu0 %v6407
          %6590 = vmatprep.subr.mxu0 0.0
          %6591 = vmatpush1.msra.mxu0 %v6408
          %6592 = vmatprep.subr.mxu0 0.0
          %6593 = vmatpush1.msra.mxu0 %v6409
          %6594 = vmatprep.subr.mxu0 0.0
          %6595 = vmatpush1.msra.mxu0 %v6410
          %6596 = vmatprep.subr.mxu0 0.0
          %6597 = vmatpush1.msra.mxu0 %v6411
          %6598 = vmatprep.subr.mxu0 0.0
          %6599 = vmatpush1.msra.mxu0 %v6412
          %6600 = vmatprep.subr.mxu0 0.0
          %6601 = vmatpush1.msra.mxu0 %v6413
          %6602 = vmatprep.subr.mxu0 0.0
          %6603 = vmatpush1.msra.mxu0 %v6414
          %6604 = vmatprep.subr.mxu0 0.0
          %6605 = vmatpush1.msra.mxu0 %v6415
          %6606 = vmatprep.subr.mxu0 0.0
          %6607 = vmatpush1.msra.mxu0 %v6416
          %6608 = vmatprep.subr.mxu0 0.0
          %6609 = vmatpush1.msra.mxu0 %v6417
          %6610 = vmatprep.subr.mxu0 0.0
          %6611 = vmatpush1.msra.mxu0 %v6418
          %6612 = vmatprep.subr.mxu0 0.0
          %6613 = vmatpush1.msra.mxu0 %v6419
          %6614 = vmatprep.subr.mxu0 0.0
          %6615 = vmatpush1.msra.mxu0 %v6420
          %6616 = vmatprep.subr.mxu0 0.0
          %6617 = vmatpush1.msra.mxu0 %v6421
          %6618 = vmatprep.subr.mxu0 0.0
          %6619 = vmatpush1.msra.mxu0 %v6422
          %6620 = vmatprep.subr.mxu0 0.0
          %6621 = vmatpush1.msra.mxu0 %v6423
          %6622 = vmatprep.subr.mxu0 0.0
          %6623 = vmatpush1.msra.mxu0 %v6424
          %6624 = vmatprep.subr.mxu0 0.0
          %6625 = vmatpush1.msra.mxu0 %v6425
          %6626 = vmatprep.subr.mxu0 0.0
          %6627 = vmatpush1.msra.mxu0 %v6426
          %6628 = vmatprep.subr.mxu0 0.0
          %6629 = vmatpush1.msra.mxu0 %v6427
          %6630 = vmatprep.subr.mxu0 0.0
          %6631 = vmatpush1.msra.mxu0 %v6428
          %6632 = vmatprep.subr.mxu0 0.0
          %6633 = vmatpush1.msra.mxu0 0.0
          %6634 = vmatprep.subr.mxu0 0.0
          %6635 = vmatpush1.msra.mxu0 0.0
          %6636 = vmatprep.subr.mxu0 0.0
          %6637 = vmatpush1.msra.mxu0 0.0
          %6638 = vmatprep.subr.mxu0 0.0
          %6639 = vmatpush1.msra.mxu0 0.0
          %6640 = vmatprep.subr.mxu0 0.0
          %6641 = vmatpush1.msra.mxu0 0.0
          %6642 = vmatprep.subr.mxu0 0.0
          %6643 = vmatpush1.msra.mxu0 0.0
          %6644 = vmatprep.subr.mxu0 0.0
          %6645 = vmatpush1.msra.mxu0 0.0
          %6646 = vmatprep.subr.mxu0 0.0
          %6647 = vmatpush1.msra.mxu0 0.0
          %6648 = vmatprep.mubr.f32.mxu0 %v6582
          %6649 = vmatmul.mubr.f32.gmra.mrb[0].mxu0 %v6540
          %v6650 = vpop.f32.mrb[0].mxu0
          %v6651 = vadd.f32 %v6429, %v6650
          %v6652 = vpop.f32.mrb[0].mxu0
          %6653 = vdwg.mxu0
          %v6654 = vmul.f32 %v6651, 0.5
          %v6655 = vtanh.pop %v6654
          %v6656 = vadd.f32 %v6655, 1.0
          %v6657 = vmul.f32 %v6656, 0.5
          %v6658 = vmul.f32 %v6651, %v6657
          %v6659 = vld [vmem:[%s5 + $0x540] sm:$0xff]
          %v6660 = vld [vmem:[%s5 + $0x548] sm:$0xff]
          %v6661 = vld [vmem:[%s5 + $0x550] sm:$0xff]
          %v6662 = vld [vmem:[%s5 + $0x558] sm:$0xff]
          %v6663 = vld [vmem:[%s5 + $0x560] sm:$0xff]
          %v6664 = vld [vmem:[%s5 + $0x568] sm:$0xff]
          %v6665 = vld [vmem:[%s5 + $0x570] sm:$0xff]
          %v6666 = vld [vmem:[%s5 + $0x578] sm:$0xff]
          %v6667 = vld [vmem:[%s5 + $0x580] sm:$0xff]
          %v6668 = vld [vmem:[%s5 + $0x588] sm:$0xff]
          %v6669 = vld [vmem:[%s5 + $0x590] sm:$0xff]
          %v6670 = vld [vmem:[%s5 + $0x598] sm:$0xff]
          %v6671 = vld [vmem:[%s6 + $0x3] sm:$0x1]
          %vm6672 = vcmask 785408
          %v6674 = vsel %vm6672, %v5896, 0
          %6676 = vmatprep.subr.mxu0 0.0
          %6677 = vmatpush1.msra.mxu0 %v6659
          %6678 = vmatprep.subr.mxu0 0.0
          %6679 = vmatpush1.msra.mxu0 %v6660
          %6680 = vmatprep.subr.mxu0 0.0
          %6681 = vmatpush1.msra.mxu0 %v6661
          %6682 = vmatprep.subr.mxu0 0.0
          %6683 = vmatpush1.msra.mxu0 %v6662
          %6684 = vmatprep.subr.mxu0 0.0
          %6685 = vmatpush1.msra.mxu0 %v6663
          %6686 = vmatprep.subr.mxu0 0.0
          %6687 = vmatpush1.msra.mxu0 %v6664
          %6688 = vmatprep.subr.mxu0 0.0
          %6689 = vmatpush1.msra.mxu0 %v6665
          %6690 = vmatprep.subr.mxu0 0.0
          %6691 = vmatpush1.msra.mxu0 %v6666
          %6692 = vmatprep.subr.mxu0 0.0
          %6693 = vmatpush1.msra.mxu0 %v6667
          %6694 = vmatprep.subr.mxu0 0.0
          %6695 = vmatpush1.msra.mxu0 %v6668
          %6696 = vmatprep.subr.mxu0 0.0
          %6697 = vmatpush1.msra.mxu0 %v6669
          %6698 = vmatprep.subr.mxu0 0.0
          %6699 = vmatpush1.msra.mxu0 %v6670
          %6700 = vmatprep.subr.mxu0 0.0
          %6701 = vmatpush1.msra.mxu0 0.0
          %6702 = vmatprep.subr.mxu0 0.0
          %6703 = vmatpush1.msra.mxu0 0.0
          %6704 = vmatprep.subr.mxu0 0.0
          %6705 = vmatpush1.msra.mxu0 0.0
          %6706 = vmatprep.subr.mxu0 0.0
          %6707 = vmatpush1.msra.mxu0 0.0
          %6708 = vmatprep.subr.mxu0 0.0
          %6709 = vmatpush1.msra.mxu0 0.0
          %6710 = vmatprep.subr.mxu0 0.0
          %6711 = vmatpush1.msra.mxu0 0.0
          %6712 = vmatprep.subr.mxu0 0.0
          %6713 = vmatpush1.msra.mxu0 0.0
          %6714 = vmatprep.subr.mxu0 0.0
          %6715 = vmatpush1.msra.mxu0 0.0
          %6716 = vmatprep.subr.mxu0 0.0
          %6717 = vmatpush1.msra.mxu0 0.0
          %6718 = vmatprep.subr.mxu0 0.0
          %6719 = vmatpush1.msra.mxu0 0.0
          %6720 = vmatprep.subr.mxu0 0.0
          %6721 = vmatpush1.msra.mxu0 0.0
          %6722 = vmatprep.subr.mxu0 0.0
          %6723 = vmatpush1.msra.mxu0 0.0
          %6724 = vmatprep.subr.mxu0 0.0
          %6725 = vmatpush1.msra.mxu0 0.0
          %6726 = vmatprep.subr.mxu0 0.0
          %6727 = vmatpush1.msra.mxu0 0.0
          %6728 = vmatprep.subr.mxu0 0.0
          %6729 = vmatpush1.msra.mxu0 0.0
          %6730 = vmatprep.subr.mxu0 0.0
          %6731 = vmatpush1.msra.mxu0 0.0
          %6732 = vmatprep.subr.mxu0 0.0
          %6733 = vmatpush1.msra.mxu0 0.0
          %6734 = vmatprep.subr.mxu0 0.0
          %6735 = vmatpush1.msra.mxu0 0.0
          %6736 = vmatprep.subr.mxu0 0.0
          %6737 = vmatpush1.msra.mxu0 0.0
          %6738 = vmatprep.subr.mxu0 0.0
          %6739 = vmatpush1.msra.mxu0 0.0
          %6740 = vmatprep.mubr.f32.mxu0 0.0
          %6741 = vmatmul.mubr.f32.gmra.mrb[0].mxu0 %v6674
          %v6742 = vpop.f32.mrb[0].mxu0
          %v6743 = vadd.f32 %v6671, %v6742
          %v6744 = vpop.f32.mrb[0].mxu0
          %6745 = vdwg.mxu0
          %v6746 = vmul.f32 %v6743, 0.5
          %v6747 = vtanh.pop %v6746
          %v6748 = vadd.f32 %v6747, 1.0
          %v6749 = vmul.f32 %v6748, 0.5
          %v6750 = vmul.f32 %v6743, %v6749
          %v6751 = vld [vmem:[%s6 + $0x4] sm:$0x1]
          %v6752 = vld [vmem:[%s5 + $0x5a0] sm:$0xff]
          %v6753 = vld [vmem:[%s5 + $0x5a8] sm:$0xff]
          %v6754 = vld [vmem:[%s5 + $0x5b0] sm:$0xff]
          %v6755 = vld [vmem:[%s5 + $0x5b8] sm:$0xff]
          %v6756 = vld [vmem:[%s5 + $0x5c0] sm:$0xff]
          %v6757 = vld [vmem:[%s5 + $0x5c8] sm:$0xff]
          %vm6758 = vcmask 392192
          %v6760 = vsel %vm6758, %v6210, 0
          %6762 = vmatprep.subr.mxu0 0.0
          %6763 = vmatpush1.msra.mxu0 %v6752
          %6764 = vmatprep.subr.mxu0 0.0
          %6765 = vmatpush1.msra.mxu0 %v6753
          %6766 = vmatprep.subr.mxu0 0.0
          %6767 = vmatpush1.msra.mxu0 %v6754
          %6768 = vmatprep.subr.mxu0 0.0
          %6769 = vmatpush1.msra.mxu0 %v6755
          %6770 = vmatprep.subr.mxu0 0.0
          %6771 = vmatpush1.msra.mxu0 %v6756
          %6772 = vmatprep.subr.mxu0 0.0
          %6773 = vmatpush1.msra.mxu0 %v6757
          %6774 = vmatprep.subr.mxu0 0.0
          %6775 = vmatpush1.msra.mxu0 0.0
          %6776 = vmatprep.subr.mxu0 0.0
          %6777 = vmatpush1.msra.mxu0 0.0
          %6778 = vmatprep.subr.mxu0 0.0
          %6779 = vmatpush1.msra.mxu0 0.0
          %6780 = vmatprep.subr.mxu0 0.0
          %6781 = vmatpush1.msra.mxu0 0.0
          %6782 = vmatprep.subr.mxu0 0.0
          %6783 = vmatpush1.msra.mxu0 0.0
          %6784 = vmatprep.subr.mxu0 0.0
          %6785 = vmatpush1.msra.mxu0 0.0
          %6786 = vmatprep.subr.mxu0 0.0
          %6787 = vmatpush1.msra.mxu0 0.0
          %6788 = vmatprep.subr.mxu0 0.0
          %6789 = vmatpush1.msra.mxu0 0.0
          %6790 = vmatprep.subr.mxu0 0.0
          %6791 = vmatpush1.msra.mxu0 0.0
          %6792 = vmatprep.subr.mxu0 0.0
          %6793 = vmatpush1.msra.mxu0 0.0
          %6794 = vmatprep.subr.mxu0 0.0
          %6795 = vmatpush1.msra.mxu0 0.0
          %6796 = vmatprep.subr.mxu0 0.0
          %6797 = vmatpush1.msra.mxu0 0.0
          %6798 = vmatprep.subr.mxu0 0.0
          %6799 = vmatpush1.msra.mxu0 0.0
          %6800 = vmatprep.subr.mxu0 0.0
          %6801 = vmatpush1.msra.mxu0 0.0
          %6802 = vmatprep.subr.mxu0 0.0
          %6803 = vmatpush1.msra.mxu0 0.0
          %6804 = vmatprep.subr.mxu0 0.0
          %6805 = vmatpush1.msra.mxu0 0.0
          %6806 = vmatprep.subr.mxu0 0.0
          %6807 = vmatpush1.msra.mxu0 0.0
          %6808 = vmatprep.subr.mxu0 0.0
          %6809 = vmatpush1.msra.mxu0 0.0
          %6810 = vmatprep.subr.mxu0 0.0
          %6811 = vmatpush1.msra.mxu0 0.0
          %6812 = vmatprep.subr.mxu0 0.0
          %6813 = vmatpush1.msra.mxu0 0.0
          %6814 = vmatprep.subr.mxu0 0.0
          %6815 = vmatpush1.msra.mxu0 0.0
          %6816 = vmatprep.subr.mxu0 0.0
          %6817 = vmatpush1.msra.mxu0 0.0
          %6818 = vmatprep.subr.mxu0 0.0
          %6819 = vmatpush1.msra.mxu0 0.0
          %6820 = vmatprep.subr.mxu0 0.0
          %6821 = vmatpush1.msra.mxu0 0.0
          %6822 = vmatprep.subr.mxu0 0.0
          %6823 = vmatpush1.msra.mxu0 0.0
          %6824 = vmatprep.subr.mxu0 0.0
          %6825 = vmatpush1.msra.mxu0 0.0
          %6826 = vmatprep.mubr.f32.mxu0 0.0
          %6827 = vmatmul.mubr.f32.gmra.mrb[0].mxu0 %v6760
          %v6828 = vpop.f32.mrb[0].mxu0
          %v6829 = vadd.f32 0.0, %v6828
          %v6830 = vpop.f32.mrb[0].mxu0
          %6831 = vdwg.mxu0
          %v6832 = vadd.f32 %v6751, %v6829
          %v6833 = vld [vmem:[%s5 + $0x5d0] sm:$0xff]
          %v6834 = vld [vmem:[%s5 + $0x5d8] sm:$0xff]
          %v6835 = vld [vmem:[%s5 + $0x5e0] sm:$0xff]
          %v6836 = vld [vmem:[%s5 + $0x5e8] sm:$0xff]
          %v6837 = vld [vmem:[%s5 + $0x5f0] sm:$0xff]
          %v6838 = vld [vmem:[%s5 + $0x5f8] sm:$0xff]
          %v6840 = vsel %vm6758, %v6404, 0
          %6842 = vmatprep.subr.mxu0 0.0
          %6843 = vmatpush1.msra.mxu0 %v6833
          %6844 = vmatprep.subr.mxu0 0.0
          %6845 = vmatpush1.msra.mxu0 %v6834
          %6846 = vmatprep.subr.mxu0 0.0
          %6847 = vmatpush1.msra.mxu0 %v6835
          %6848 = vmatprep.subr.mxu0 0.0
          %6849 = vmatpush1.msra.mxu0 %v6836
          %6850 = vmatprep.subr.mxu0 0.0
          %6851 = vmatpush1.msra.mxu0 %v6837
          %6852 = vmatprep.subr.mxu0 0.0
          %6853 = vmatpush1.msra.mxu0 %v6838
          %6854 = vmatprep.subr.mxu0 0.0
          %6855 = vmatpush1.msra.mxu0 0.0
          %6856 = vmatprep.subr.mxu0 0.0
          %6857 = vmatpush1.msra.mxu0 0.0
          %6858 = vmatprep.subr.mxu0 0.0
          %6859 = vmatpush1.msra.mxu0 0.0
          %6860 = vmatprep.subr.mxu0 0.0
          %6861 = vmatpush1.msra.mxu0 0.0
          %6862 = vmatprep.subr.mxu0 0.0
          %6863 = vmatpush1.msra.mxu0 0.0
          %6864 = vmatprep.subr.mxu0 0.0
          %6865 = vmatpush1.msra.mxu0 0.0
          %6866 = vmatprep.subr.mxu0 0.0
          %6867 = vmatpush1.msra.mxu0 0.0
          %6868 = vmatprep.subr.mxu0 0.0
          %6869 = vmatpush1.msra.mxu0 0.0
          %6870 = vmatprep.subr.mxu0 0.0
          %6871 = vmatpush1.msra.mxu0 0.0
          %6872 = vmatprep.subr.mxu0 0.0
          %6873 = vmatpush1.msra.mxu0 0.0
          %6874 = vmatprep.subr.mxu0 0.0
          %6875 = vmatpush1.msra.mxu0 0.0
          %6876 = vmatprep.subr.mxu0 0.0
          %6877 = vmatpush1.msra.mxu0 0.0
          %6878 = vmatprep.subr.mxu0 0.0
          %6879 = vmatpush1.msra.mxu0 0.0
          %6880 = vmatprep.subr.mxu0 0.0
          %6881 = vmatpush1.msra.mxu0 0.0
          %6882 = vmatprep.subr.mxu0 0.0
          %6883 = vmatpush1.msra.mxu0 0.0
          %6884 = vmatprep.subr.mxu0 0.0
          %6885 = vmatpush1.msra.mxu0 0.0
          %6886 = vmatprep.subr.mxu0 0.0
          %6887 = vmatpush1.msra.mxu0 0.0
          %6888 = vmatprep.subr.mxu0 0.0
          %6889 = vmatpush1.msra.mxu0 0.0
          %6890 = vmatprep.subr.mxu0 0.0
          %6891 = vmatpush1.msra.mxu0 0.0
          %6892 = vmatprep.subr.mxu0 0.0
          %6893 = vmatpush1.msra.mxu0 0.0
          %6894 = vmatprep.subr.mxu0 0.0
          %6895 = vmatpush1.msra.mxu0 0.0
          %6896 = vmatprep.subr.mxu0 0.0
          %6897 = vmatpush1.msra.mxu0 0.0
          %6898 = vmatprep.subr.mxu0 0.0
          %6899 = vmatpush1.msra.mxu0 0.0
          %6900 = vmatprep.subr.mxu0 0.0
          %6901 = vmatpush1.msra.mxu0 0.0
          %6902 = vmatprep.subr.mxu0 0.0
          %6903 = vmatpush1.msra.mxu0 0.0
          %6904 = vmatprep.subr.mxu0 0.0
          %6905 = vmatpush1.msra.mxu0 0.0
          %6906 = vmatprep.mubr.f32.mxu0 0.0
          %6907 = vmatmul.mubr.f32.gmra.mrb[0].mxu0 %v6840
          %v6908 = vpop.f32.mrb[0].mxu0
          %v6909 = vadd.f32 0.0, %v6908
          %v6910 = vpop.f32.mrb[0].mxu0
          %6911 = vdwg.mxu0
          %v6912 = vadd.f32 %v6832, %v6909
          %v6913 = vld [vmem:[%s5 + $0x600] sm:$0xff]
          %v6914 = vld [vmem:[%s5 + $0x608] sm:$0xff]
          %v6915 = vld [vmem:[%s5 + $0x610] sm:$0xff]
          %v6916 = vld [vmem:[%s5 + $0x618] sm:$0xff]
          %v6917 = vld [vmem:[%s5 + $0x620] sm:$0xff]
          %v6918 = vld [vmem:[%s5 + $0x628] sm:$0xff]
          %v6920 = vsel %vm6758, %v6658, 0
          %6922 = vmatprep.subr.mxu0 0.0
          %6923 = vmatpush1.msra.mxu0 %v6913
          %6924 = vmatprep.subr.mxu0 0.0
          %6925 = vmatpush1.msra.mxu0 %v6914
          %6926 = vmatprep.subr.mxu0 0.0
          %6927 = vmatpush1.msra.mxu0 %v6915
          %6928 = vmatprep.subr.mxu0 0.0
          %6929 = vmatpush1.msra.mxu0 %v6916
          %6930 = vmatprep.subr.mxu0 0.0
          %6931 = vmatpush1.msra.mxu0 %v6917
          %6932 = vmatprep.subr.mxu0 0.0
          %6933 = vmatpush1.msra.mxu0 %v6918
          %6934 = vmatprep.subr.mxu0 0.0
          %6935 = vmatpush1.msra.mxu0 0.0
          %6936 = vmatprep.subr.mxu0 0.0
          %6937 = vmatpush1.msra.mxu0 0.0
          %6938 = vmatprep.subr.mxu0 0.0
          %6939 = vmatpush1.msra.mxu0 0.0
          %6940 = vmatprep.subr.mxu0 0.0
          %6941 = vmatpush1.msra.mxu0 0.0
          %6942 = vmatprep.subr.mxu0 0.0
          %6943 = vmatpush1.msra.mxu0 0.0
          %6944 = vmatprep.subr.mxu0 0.0
          %6945 = vmatpush1.msra.mxu0 0.0
          %6946 = vmatprep.subr.mxu0 0.0
          %6947 = vmatpush1.msra.mxu0 0.0
          %6948 = vmatprep.subr.mxu0 0.0
          %6949 = vmatpush1.msra.mxu0 0.0
          %6950 = vmatprep.subr.mxu0 0.0
          %6951 = vmatpush1.msra.mxu0 0.0
          %6952 = vmatprep.subr.mxu0 0.0
          %6953 = vmatpush1.msra.mxu0 0.0
          %6954 = vmatprep.subr.mxu0 0.0
          %6955 = vmatpush1.msra.mxu0 0.0
          %6956 = vmatprep.subr.mxu0 0.0
          %6957 = vmatpush1.msra.mxu0 0.0
          %6958 = vmatprep.subr.mxu0 0.0
          %6959 = vmatpush1.msra.mxu0 0.0
          %6960 = vmatprep.subr.mxu0 0.0
          %6961 = vmatpush1.msra.mxu0 0.0
          %6962 = vmatprep.subr.mxu0 0.0
          %6963 = vmatpush1.msra.mxu0 0.0
          %6964 = vmatprep.subr.mxu0 0.0
          %6965 = vmatpush1.msra.mxu0 0.0
          %6966 = vmatprep.subr.mxu0 0.0
          %6967 = vmatpush1.msra.mxu0 0.0
          %6968 = vmatprep.subr.mxu0 0.0
          %6969 = vmatpush1.msra.mxu0 0.0
          %6970 = vmatprep.subr.mxu0 0.0
          %6971 = vmatpush1.msra.mxu0 0.0
          %6972 = vmatprep.subr.mxu0 0.0
          %6973 = vmatpush1.msra.mxu0 0.0
          %6974 = vmatprep.subr.mxu0 0.0
          %6975 = vmatpush1.msra.mxu0 0.0
          %6976 = vmatprep.subr.mxu0 0.0
          %6977 = vmatpush1.msra.mxu0 0.0
          %6978 = vmatprep.subr.mxu0 0.0
          %6979 = vmatpush1.msra.mxu0 0.0
          %6980 = vmatprep.subr.mxu0 0.0
          %6981 = vmatpush1.msra.mxu0 0.0
          %6982 = vmatprep.subr.mxu0 0.0
          %6983 = vmatpush1.msra.mxu0 0.0
          %6984 = vmatprep.subr.mxu0 0.0
          %6985 = vmatpush1.msra.mxu0 0.0
          %6986 = vmatprep.mubr.f32.mxu0 0.0
          %6987 = vmatmul.mubr.f32.gmra.mrb[0].mxu0 %v6920
          %v6988 = vpop.f32.mrb[0].mxu0
          %v6989 = vadd.f32 0.0, %v6988
          %v6990 = vpop.f32.mrb[0].mxu0
          %6991 = vdwg.mxu0
          %v6992 = vadd.f32 %v6912, %v6989
          %v6993 = vld [vmem:[%s5 + $0x630] sm:$0xff]
          %v6994 = vld [vmem:[%s5 + $0x638] sm:$0xff]
          %v6995 = vld [vmem:[%s5 + $0x640] sm:$0xff]
          %v6996 = vld [vmem:[%s5 + $0x648] sm:$0xff]
          %v6997 = vld [vmem:[%s5 + $0x650] sm:$0xff]
          %v6998 = vld [vmem:[%s5 + $0x658] sm:$0xff]
          %v7000 = vsel %vm6758, %v6750, 0
          %7002 = vmatprep.subr.mxu0 0.0
          %7003 = vmatpush1.msra.mxu0 %v6993
          %7004 = vmatprep.subr.mxu0 0.0
          %7005 = vmatpush1.msra.mxu0 %v6994
          %7006 = vmatprep.subr.mxu0 0.0
          %7007 = vmatpush1.msra.mxu0 %v6995
          %7008 = vmatprep.subr.mxu0 0.0
          %7009 = vmatpush1.msra.mxu0 %v6996
          %7010 = vmatprep.subr.mxu0 0.0
          %7011 = vmatpush1.msra.mxu0 %v6997
          %7012 = vmatprep.subr.mxu0 0.0
          %7013 = vmatpush1.msra.mxu0 %v6998
          %7014 = vmatprep.subr.mxu0 0.0
          %7015 = vmatpush1.msra.mxu0 0.0
          %7016 = vmatprep.subr.mxu0 0.0
          %7017 = vmatpush1.msra.mxu0 0.0
          %7018 = vmatprep.subr.mxu0 0.0
          %7019 = vmatpush1.msra.mxu0 0.0
          %7020 = vmatprep.subr.mxu0 0.0
          %7021 = vmatpush1.msra.mxu0 0.0
          %7022 = vmatprep.subr.mxu0 0.0
          %7023 = vmatpush1.msra.mxu0 0.0
          %7024 = vmatprep.subr.mxu0 0.0
          %7025 = vmatpush1.msra.mxu0 0.0
          %7026 = vmatprep.subr.mxu0 0.0
          %7027 = vmatpush1.msra.mxu0 0.0
          %7028 = vmatprep.subr.mxu0 0.0
          %7029 = vmatpush1.msra.mxu0 0.0
          %7030 = vmatprep.subr.mxu0 0.0
          %7031 = vmatpush1.msra.mxu0 0.0
          %7032 = vmatprep.subr.mxu0 0.0
          %7033 = vmatpush1.msra.mxu0 0.0
          %7034 = vmatprep.subr.mxu0 0.0
          %7035 = vmatpush1.msra.mxu0 0.0
          %7036 = vmatprep.subr.mxu0 0.0
          %7037 = vmatpush1.msra.mxu0 0.0
          %7038 = vmatprep.subr.mxu0 0.0
          %7039 = vmatpush1.msra.mxu0 0.0
          %7040 = vmatprep.subr.mxu0 0.0
          %7041 = vmatpush1.msra.mxu0 0.0
          %7042 = vmatprep.subr.mxu0 0.0
          %7043 = vmatpush1.msra.mxu0 0.0
          %7044 = vmatprep.subr.mxu0 0.0
          %7045 = vmatpush1.msra.mxu0 0.0
          %7046 = vmatprep.subr.mxu0 0.0
          %7047 = vmatpush1.msra.mxu0 0.0
          %7048 = vmatprep.subr.mxu0 0.0
          %7049 = vmatpush1.msra.mxu0 0.0
          %7050 = vmatprep.subr.mxu0 0.0
          %7051 = vmatpush1.msra.mxu0 0.0
          %7052 = vmatprep.subr.mxu0 0.0
          %7053 = vmatpush1.msra.mxu0 0.0
          %7054 = vmatprep.subr.mxu0 0.0
          %7055 = vmatpush1.msra.mxu0 0.0
          %7056 = vmatprep.subr.mxu0 0.0
          %7057 = vmatpush1.msra.mxu0 0.0
          %7058 = vmatprep.subr.mxu0 0.0
          %7059 = vmatpush1.msra.mxu0 0.0
          %7060 = vmatprep.subr.mxu0 0.0
          %7061 = vmatpush1.msra.mxu0 0.0
          %7062 = vmatprep.subr.mxu0 0.0
          %7063 = vmatpush1.msra.mxu0 0.0
          %7064 = vmatprep.subr.mxu0 0.0
          %7065 = vmatpush1.msra.mxu0 0.0
          %7066 = vmatprep.mubr.f32.mxu0 0.0
          %7067 = vmatmul.mubr.f32.gmra.mrb[0].mxu0 %v7000
          %v7068 = vpop.f32.mrb[0].mxu0
          %v7069 = vadd.f32 0.0, %v7068
          %v7070 = vpop.f32.mrb[0].mxu0
          %7071 = vdwg.mxu0
          %v7072 = vadd.f32 %v6992, %v7069
          %v7073 = vld [vmem:[%s5 + $0x660] sm:$0xff]
          %v7074 = vld [vmem:[%s5 + $0x668] sm:$0xff]
          %v7075 = vld [vmem:[%s5 + $0x670] sm:$0xff]
          %v7076 = vld [vmem:[%s5 + $0x678] sm:$0xff]
          %v7077 = vld [vmem:[%s5 + $0x680] sm:$0xff]
          %v7078 = vld [vmem:[%s5 + $0x688] sm:$0xff]
          %v7080 = vsel %vm6758, %v5898, 0
          %7082 = vmatprep.subr.mxu0 0.0
          %7083 = vmatpush1.msra.mxu0 %v7073
          %7084 = vmatprep.subr.mxu0 0.0
          %7085 = vmatpush1.msra.mxu0 %v7074
          %7086 = vmatprep.subr.mxu0 0.0
          %7087 = vmatpush1.msra.mxu0 %v7075
          %7088 = vmatprep.subr.mxu0 0.0
          %7089 = vmatpush1.msra.mxu0 %v7076
          %7090 = vmatprep.subr.mxu0 0.0
          %7091 = vmatpush1.msra.mxu0 %v7077
          %7092 = vmatprep.subr.mxu0 0.0
          %7093 = vmatpush1.msra.mxu0 %v7078
          %7094 = vmatprep.subr.mxu0 0.0
          %7095 = vmatpush1.msra.mxu0 0.0
          %7096 = vmatprep.subr.mxu0 0.0
          %7097 = vmatpush1.msra.mxu0 0.0
          %7098 = vmatprep.subr.mxu0 0.0
          %7099 = vmatpush1.msra.mxu0 0.0
          %7100 = vmatprep.subr.mxu0 0.0
          %7101 = vmatpush1.msra.mxu0 0.0
          %7102 = vmatprep.subr.mxu0 0.0
          %7103 = vmatpush1.msra.mxu0 0.0
          %7104 = vmatprep.subr.mxu0 0.0
          %7105 = vmatpush1.msra.mxu0 0.0
          %7106 = vmatprep.subr.mxu0 0.0
          %7107 = vmatpush1.msra.mxu0 0.0
          %7108 = vmatprep.subr.mxu0 0.0
          %7109 = vmatpush1.msra.mxu0 0.0
          %7110 = vmatprep.subr.mxu0 0.0
          %7111 = vmatpush1.msra.mxu0 0.0
          %7112 = vmatprep.subr.mxu0 0.0
          %7113 = vmatpush1.msra.mxu0 0.0
          %7114 = vmatprep.subr.mxu0 0.0
          %7115 = vmatpush1.msra.mxu0 0.0
          %7116 = vmatprep.subr.mxu0 0.0
          %7117 = vmatpush1.msra.mxu0 0.0
          %7118 = vmatprep.subr.mxu0 0.0
          %7119 = vmatpush1.msra.mxu0 0.0
          %7120 = vmatprep.subr.mxu0 0.0
          %7121 = vmatpush1.msra.mxu0 0.0
          %7122 = vmatprep.subr.mxu0 0.0
          %7123 = vmatpush1.msra.mxu0 0.0
          %7124 = vmatprep.subr.mxu0 0.0
          %7125 = vmatpush1.msra.mxu0 0.0
          %7126 = vmatprep.subr.mxu0 0.0
          %7127 = vmatpush1.msra.mxu0 0.0
          %7128 = vmatprep.subr.mxu0 0.0
          %7129 = vmatpush1.msra.mxu0 0.0
          %7130 = vmatprep.subr.mxu0 0.0
          %7131 = vmatpush1.msra.mxu0 0.0
          %7132 = vmatprep.subr.mxu0 0.0
          %7133 = vmatpush1.msra.mxu0 0.0
          %7134 = vmatprep.subr.mxu0 0.0
          %7135 = vmatpush1.msra.mxu0 0.0
          %7136 = vmatprep.subr.mxu0 0.0
          %7137 = vmatpush1.msra.mxu0 0.0
          %7138 = vmatprep.subr.mxu0 0.0
          %7139 = vmatpush1.msra.mxu0 0.0
          %7140 = vmatprep.subr.mxu0 0.0
          %7141 = vmatpush1.msra.mxu0 0.0
          %7142 = vmatprep.subr.mxu0 0.0
          %7143 = vmatpush1.msra.mxu0 0.0
          %7144 = vmatprep.subr.mxu0 0.0
          %7145 = vmatpush1.msra.mxu0 0.0
          %7146 = vmatprep.mubr.f32.mxu0 0.0
          %7147 = vmatmul.mubr.f32.gmra.mrb[0].mxu0 %v7080
          %v7148 = vpop.f32.mrb[0].mxu0
          %v7149 = vadd.f32 0.0, %v7148
          %v7150 = vpop.f32.mrb[0].mxu0
          %7151 = vdwg.mxu0
          %v7152 = vadd.f32 %v7072, %v7149
          %v7153 = vmul.f32 %v7152, 0.5
          %v7154 = vtanh.pop %v7153
          %v7155 = vadd.f32 %v7154, 1.0
          %v7156 = vmul.f32 %v7155, 0.5
          %v7157 = vmul.f32 %v7152, %v7156
          %v7158 = vld [vmem:[%s7] sm:$0xff]
          %v7159 = vld [vmem:[%s7 + $0x8] sm:$0xff]
          %v7160 = vld [vmem:[%s7 + $0x10] sm:$0xff]
          %v7161 = vld [vmem:[%s7 + $0x18] sm:$0xff]
          %v7162 = vld [vmem:[%s7 + $0x20] sm:$0xff]
          %v7163 = vld [vmem:[%s7 + $0x28] sm:$0xff]
          %v7164 = vld [vmem:[%s8] sm:$0x1]
          %v7166 = vsel %vm6758, %v7157, 0
          %7168 = vmatprep.subr.mxu0 0.0
          %7169 = vmatpush1.msra.mxu0 %v7158
          %7170 = vmatprep.subr.mxu0 0.0
          %7171 = vmatpush1.msra.mxu0 %v7159
          %7172 = vmatprep.subr.mxu0 0.0
          %7173 = vmatpush1.msra.mxu0 %v7160
          %7174 = vmatprep.subr.mxu0 0.0
          %7175 = vmatpush1.msra.mxu0 %v7161
          %7176 = vmatprep.subr.mxu0 0.0
          %7177 = vmatpush1.msra.mxu0 %v7162
          %7178 = vmatprep.subr.mxu0 0.0
          %7179 = vmatpush1.msra.mxu0 %v7163
          %7180 = vmatprep.subr.mxu0 0.0
          %7181 = vmatpush1.msra.mxu0 0.0
          %7182 = vmatprep.subr.mxu0 0.0
          %7183 = vmatpush1.msra.mxu0 0.0
          %7184 = vmatprep.subr.mxu0 0.0
          %7185 = vmatpush1.msra.mxu0 0.0
          %7186 = vmatprep.subr.mxu0 0.0
          %7187 = vmatpush1.msra.mxu0 0.0
          %7188 = vmatprep.subr.mxu0 0.0
          %7189 = vmatpush1.msra.mxu0 0.0
          %7190 = vmatprep.subr.mxu0 0.0
          %7191 = vmatpush1.msra.mxu0 0.0
          %7192 = vmatprep.subr.mxu0 0.0
          %7193 = vmatpush1.msra.mxu0 0.0
          %7194 = vmatprep.subr.mxu0 0.0
          %7195 = vmatpush1.msra.mxu0 0.0
          %7196 = vmatprep.subr.mxu0 0.0
          %7197 = vmatpush1.msra.mxu0 0.0
          %7198 = vmatprep.subr.mxu0 0.0
          %7199 = vmatpush1.msra.mxu0 0.0
          %7200 = vmatprep.subr.mxu0 0.0
          %7201 = vmatpush1.msra.mxu0 0.0
          %7202 = vmatprep.subr.mxu0 0.0
          %7203 = vmatpush1.msra.mxu0 0.0
          %7204 = vmatprep.subr.mxu0 0.0
          %7205 = vmatpush1.msra.mxu0 0.0
          %7206 = vmatprep.subr.mxu0 0.0
          %7207 = vmatpush1.msra.mxu0 0.0
          %7208 = vmatprep.subr.mxu0 0.0
          %7209 = vmatpush1.msra.mxu0 0.0
          %7210 = vmatprep.subr.mxu0 0.0
          %7211 = vmatpush1.msra.mxu0 0.0
          %7212 = vmatprep.subr.mxu0 0.0
          %7213 = vmatpush1.msra.mxu0 0.0
          %7214 = vmatprep.subr.mxu0 0.0
          %7215 = vmatpush1.msra.mxu0 0.0
          %7216 = vmatprep.subr.mxu0 0.0
          %7217 = vmatpush1.msra.mxu0 0.0
          %7218 = vmatprep.subr.mxu0 0.0
          %7219 = vmatpush1.msra.mxu0 0.0
          %7220 = vmatprep.subr.mxu0 0.0
          %7221 = vmatpush1.msra.mxu0 0.0
          %7222 = vmatprep.subr.mxu0 0.0
          %7223 = vmatpush1.msra.mxu0 0.0
          %7224 = vmatprep.subr.mxu0 0.0
          %7225 = vmatpush1.msra.mxu0 0.0
          %7226 = vmatprep.subr.mxu0 0.0
          %7227 = vmatpush1.msra.mxu0 0.0
          %7228 = vmatprep.subr.mxu0 0.0
          %7229 = vmatpush1.msra.mxu0 0.0
          %7230 = vmatprep.subr.mxu0 0.0
          %7231 = vmatpush1.msra.mxu0 0.0
          %7232 = vmatprep.mubr.f32.mxu0 0.0
          %7233 = vmatmul.mubr.f32.gmra.mrb[0].mxu0 %v7166
          %v7234 = vpop.f32.mrb[0].mxu0
          %v7235 = vadd.f32 %v7164, %v7234
          %v7236 = vpop.f32.mrb[0].mxu0
          %7237 = vdwg.mxu0
          %vm7238 = vcmask 8192
          %7239 = vst.msk [vmem:[%s1410] sm:$0x1] %vm7238, %v7235
        $region110: #{swinvit_mlp_v3_forward.1} parent=93 // pred_fallthru
          _
        %s7240 = sand.u32 %s261, 1
        %s7241 = scalar_lea.sflag [#allocation7], %s7240
        %s7242 = sand.u32 %s261, 1
        %s7243 = scalar_lea.vmem [#allocation6], %s7242
        // Predicated region
        $region111: #{swinvit_mlp_v3_forward.1} parent=93 // pred_check
          %p7244 = pneg %p271
        $region112: #{swinvit_mlp_v3_forward.1} parent=93 // pred_check_branch
          %7246 = sbr.rel (%p7244) target = $region114
        $region113: #{swinvit_mlp_v3_forward.1} parent=93 // pred_region
          %s7248 = ssub.s32 16, 16
          %7249 = vsyncadd %s7241, %s7248
          %s7250 = smul.addr %s27, 16
          %s7251 = scalar_lea.hbm %s9, %s7250
          %s7253 = sshll.u32 %s7243, 4
          %s7254 = int_to_ptr.vmem [resolvable:$true] %s7253
          %7256 = dma.vmem_to_hbm [thread:$0]  %s7254, 16, %s7251, %s7241
        $region114: #{swinvit_mlp_v3_forward.1} parent=93 // pred_fallthru
          _
      $region94: #{swinvit_mlp_v3_forward.1} parent=5 // pred_fallthru
        _
      %p7257 = scmp.le.s32.totalorder 2, %s18
      // Predicated region
      $region115: #{swinvit_mlp_v3_forward.1} parent=5 // pred_check
        %p7258 = pneg %p7257
      $region116: #{swinvit_mlp_v3_forward.1} parent=5 // pred_check_branch
        %7260 = sbr.rel (%p7258) target = $region118
      $region117: #{swinvit_mlp_v3_forward.1} parent=5 // pred_region
        %s7261 = ssub.s32 %s18, 2
        // Predicated region
        $region119: #{swinvit_mlp_v3_forward.1} parent=117 // pred_check
          %p7262 = pneg %p277
        $region120: #{swinvit_mlp_v3_forward.1} parent=117 // pred_check_branch
          %7264 = sbr.rel (%p7262) target = $region122
        $region121: #{swinvit_mlp_v3_forward.1} parent=117 // pred_region
          %s7265 = sand.u32 %s262, 1
          %s7266 = scalar_lea.sflag [#allocation7], %s7265
          %s7267 = sand.u32 %s262, 1
          %s7268 = scalar_lea.vmem [#allocation6], %s7267
          %7269 = dma.done %s7266, 16
        $region122: #{swinvit_mlp_v3_forward.1} parent=117 // pred_fallthru
          _
      $region118: #{swinvit_mlp_v3_forward.1} parent=5 // pred_fallthru
        _
    $region6: #{swinvit_mlp_v3_forward.1} parent=1 // loop_footer
      %s22 = sadd.s32 1, %s18
    $region7: #{swinvit_mlp_v3_forward.1} parent=1 // loop_footer_branch
      %17 = sbr.rel target = $region3
    $region8: #{swinvit_mlp_v3_forward.1} parent=1 // loop_exit
      _
    %7270 = vsyncpa [#allocation7], 1
    %s7271 = scalar_lea.sflag [#allocation7], 1
    %7272 = vsyncpa %s7271, 1

</llo_original>
